<compile_context>
chip_gen: v7x
topology: tpu7x:2x2x1
jax: 0.10.0
libtpu: 0.0.40
codegen_flags: <defaults>
</compile_context>

<pallas_src>
import functools

import jax
import jax.numpy as jnp
from jax.experimental import pallas as pl
from jax.experimental.pallas import tpu as pltpu

Z_DIM = 10
N_SENS = 1


def _round_up(x, m):
    return ((x + m - 1) // m) * m


# ----------------------------------------------------------------------------
# Pallas kernels
# ----------------------------------------------------------------------------
def _bmm_kernel(x_ref, w_ref, b_ref, o_ref, *, relu):
    """One (phase, M-tile) step of a batched matmul + bias (+ReLU)."""
    acc = jnp.dot(x_ref[0], w_ref[0], preferred_element_type=jnp.float32)
    acc = acc + b_ref[0]
    if relu:
        acc = jnp.maximum(acc, 0.0)
    o_ref[0] = acc.astype(o_ref.dtype)


def batched_matmul_bias(x, w, b, *, relu, out_dtype):
    """x: (P, M, K), w: (P, K, N), b: (N,) -> (P, M, N) in out_dtype.

    bf16 MXU operands, f32 accumulate/epilogue, lane-dense (128-padded N)
    output stores, fixed M tile with zero-padded tail.
    """
    P, M, K = x.shape
    N = w.shape[-1]
    Np = _round_up(N, 128)                 # lane-dense output block
    tm = min(512, _round_up(M, 16))        # fits 32 MiB scoped VMEM on v7x too
    Mp = _round_up(M, tm)

    xb = x.astype(jnp.bfloat16)
    if Mp != M:
        xb = jnp.pad(xb, ((0, 0), (0, Mp - M), (0, 0)))
    wb = w.astype(jnp.bfloat16)
    bb = b.astype(jnp.float32)
    if Np != N:
        wb = jnp.pad(wb, ((0, 0), (0, 0), (0, Np - N)))
        bb = jnp.pad(bb, (0, Np - N))
    bb = bb.reshape(1, 1, Np)

    out = pl.pallas_call(
        functools.partial(_bmm_kernel, relu=relu),
        out_shape=jax.ShapeDtypeStruct((P, Mp, Np), out_dtype),
        grid_spec=pltpu.PrefetchScalarGridSpec(
            num_scalar_prefetch=0,
            grid=(P, Mp // tm),
            in_specs=[
                pl.BlockSpec((1, tm, K), lambda p, i: (p, i, 0)),
                pl.BlockSpec((1, K, Np), lambda p, i: (p, 0, 0)),
                pl.BlockSpec((1, 1, Np), lambda p, i: (0, 0, 0)),
            ],
            out_specs=pl.BlockSpec((1, tm, Np), lambda p, i: (p, i, 0)),
        ),
        compiler_params=pltpu.CompilerParams(
            dimension_semantics=("parallel", "parallel"),
            vmem_limit_bytes=32 * 1024 * 1024,
        ),
    )(xb, wb, bb)
    if Mp != M or Np != N:
        out = out[:, :M, :N]
    return out


def _enc_head_kernel(h_ref, w5_ref, b5_ref, wmu_ref, bmu_ref, wlv_ref, blv_ref,
                     eps_ref, mu_ref, lv_ref, zb_ref):
    """Fused e5 (4x4 valid conv) + e6 (1x1 conv, split mu/logvar) + reparam."""
    h5 = jnp.dot(h_ref[...], w5_ref[...], preferred_element_type=jnp.float32)
    h5 = jnp.maximum(h5 + b5_ref[...], 0.0).astype(jnp.bfloat16)
    mu = jnp.dot(h5, wmu_ref[...], preferred_element_type=jnp.float32) + bmu_ref[...]
    lv = jnp.dot(h5, wlv_ref[...], preferred_element_type=jnp.float32) + blv_ref[...]
    mu_ref[...] = mu
    lv_ref[...] = lv
    # eps has zeros in the sensitive slots, so zb = [eps*std + mu_n, b_logits].
    zb_ref[...] = eps_ref[...] * jnp.exp(0.5 * lv) + mu


def _dec_head_kernel(zb_ref, w1_ref, b1_ref, w2_ref, b2_ref, o_ref):
    """Fused d1 (1x1 conv) + d2 (ConvTranspose2d(256,64,4) on a 1x1 map)."""
    h = jnp.dot(zb_ref[...], w1_ref[...], preferred_element_type=jnp.float32)
    h = jnp.maximum(h + b1_ref[...], 0.0)
    o = jnp.dot(h.astype(jnp.bfloat16), w2_ref[...],
                preferred_element_type=jnp.float32)
    o = jnp.maximum(o + b2_ref[...], 0.0)
    o_ref[...] = o.astype(o_ref.dtype)


# ----------------------------------------------------------------------------
# Conv layers built on the batched Pallas matmul (NHWC activations)
# ----------------------------------------------------------------------------
def conv2d(x, weight, bias, *, stride, padding, relu, out_dtype):
    """NHWC Conv2d with PyTorch weight layout (Cout, Cin, kh, kw)."""
    B, H, W, Cin = x.shape
    Cout, _, kh, kw = weight.shape
    xp = jnp.pad(x, ((0, 0), (padding, padding), (padding, padding), (0, 0)))
    OH = (H + 2 * padding - kh) // stride + 1
    OW = (W + 2 * padding - kw) // stride + 1
    taps = [xp[:, dh:dh + stride * (OH - 1) + 1:stride,
               dw:dw + stride * (OW - 1) + 1:stride, :]
            for dh in range(kh) for dw in range(kw)]
    cols = jnp.stack(taps, axis=3).reshape(B * OH * OW, kh * kw * Cin)
    wmat = weight.transpose(2, 3, 1, 0).reshape(kh * kw * Cin, Cout)
    out = batched_matmul_bias(cols[None], wmat[None], bias,
                              relu=relu, out_dtype=out_dtype)[0]
    return out.reshape(B, OH, OW, Cout)


# Phase decomposition tables for ConvTranspose2d(k=4, stride=2, padding=1):
#   y[2m]   = x[m-1]*W[kh=3] + x[m]  *W[kh=1]
#   y[2m+1] = x[m]  *W[kh=2] + x[m+1]*W[kh=0]
_T_OFF = (0, 1)
_T_KSEL = ((3, 1), (2, 0))


def conv_transpose2d_s2(x, weight, bias, *, relu, out_dtype):
    """NHWC ConvTranspose2d(kernel=4, stride=2, padding=1), PyTorch weight
    layout (Cin, Cout, 4, 4), via sub-pixel phase decomposition."""
    B, H, W, Cin = x.shape
    Cout = weight.shape[1]
    xp = jnp.pad(x, ((0, 0), (1, 1), (1, 1), (0, 0)))
    cols_list, w_list = [], []
    for rh in (0, 1):
        for rw in (0, 1):
            taps = [xp[:, _T_OFF[rh] + dh:_T_OFF[rh] + dh + H,
                       _T_OFF[rw] + dw:_T_OFF[rw] + dw + W, :]
                    for dh in (0, 1) for dw in (0, 1)]
            cols_list.append(jnp.stack(taps, axis=3).reshape(B * H * W, 4 * Cin))
            wsub = weight[:, :, list(_T_KSEL[rh]), :][:, :, :, list(_T_KSEL[rw])]
            w_list.append(wsub.transpose(2, 3, 0, 1).reshape(4 * Cin, Cout))
    cols = jnp.stack(cols_list, axis=0)          # (4, B*H*W, 4*Cin)
    wmat = jnp.stack(w_list, axis=0)             # (4, 4*Cin, Cout)
    out = batched_matmul_bias(cols, wmat, bias, relu=relu, out_dtype=out_dtype)
    # Interleave the four phases: y[b, 2m+rh, 2n+rw, :] = phase[rh][rw][b, m, n, :]
    out = out.reshape(2, 2, B, H, W, Cout).transpose(2, 3, 0, 4, 1, 5)
    return out.reshape(B, 2 * H, 2 * W, Cout)


def encoder_head(h4, w5, b5, w6, b6, eps10):
    """Fused e5 + e6 + reparametrization.  h4: (B, 4, 4, 64) NHWC."""
    B = h4.shape[0]
    cols = h4.reshape(B, -1).astype(jnp.bfloat16)                       # (kh,kw,ci)
    w5m = w5.transpose(2, 3, 1, 0).reshape(-1, w5.shape[0]).astype(jnp.bfloat16)
    w6m = w6.reshape(w6.shape[0], w6.shape[1])                           # (2Z, 256)
    wmu = w6m[:Z_DIM].T.astype(jnp.bfloat16)                             # (256, Z)
    wlv = w6m[Z_DIM:].T.astype(jnp.bfloat16)                             # (256, Z)
    bmu = b6[:Z_DIM].reshape(1, -1).astype(jnp.float32)
    blv = b6[Z_DIM:].reshape(1, -1).astype(jnp.float32)
    mu, lv, zb = pl.pallas_call(
        _enc_head_kernel,
        out_shape=(jax.ShapeDtypeStruct((B, Z_DIM), jnp.float32),
                   jax.ShapeDtypeStruct((B, Z_DIM), jnp.float32),
                   jax.ShapeDtypeStruct((B, Z_DIM), jnp.float32)),
    )(cols, w5m, b5.reshape(1, -1).astype(jnp.float32), wmu, bmu, wlv, blv, eps10)
    return mu, lv, zb


def decoder_head(zb, w1, b1, w2, b2):
    """Fused d1 + d2.  zb: (B, Z_DIM) -> (B, 4, 4, 64) NHWC."""
    B = zb.shape[0]
    w1m = w1.reshape(w1.shape[0], w1.shape[1]).T.astype(jnp.bfloat16)    # (Z, 256)
    w2m = w2.transpose(0, 2, 3, 1).reshape(w2.shape[0], -1).astype(jnp.bfloat16)
    b2full = jnp.tile(b2, 16).reshape(1, -1).astype(jnp.float32)         # (1, 16*64)
    out = pl.pallas_call(
        _dec_head_kernel,
        out_shape=jax.ShapeDtypeStruct((B, 4 * 4 * 64), jnp.bfloat16),
    )(zb.astype(jnp.bfloat16), w1m, b1.reshape(1, -1).astype(jnp.float32),
      w2m, b2full)
    return out.reshape(B, 4, 4, 64)


# ----------------------------------------------------------------------------
# FFVAE parameters (PyTorch `normal_init`: W ~ N(0, 0.02), b = 0)
# ----------------------------------------------------------------------------
def init_params(key):
    shapes = {
        # encoder (Conv2d weight: (Cout, Cin, kh, kw))
        "e1": (32, 3, 4, 4), "e2": (32, 32, 4, 4), "e3": (64, 32, 4, 4),
        "e4": (64, 64, 4, 4), "e5": (256, 64, 4, 4), "e6": (2 * Z_DIM, 256, 1, 1),
        # decoder: d1 is Conv2d, d2..d6 are ConvTranspose2d ((Cin, Cout, kh, kw))
        "d1": (256, Z_DIM, 1, 1), "d2": (256, 64, 4, 4), "d3": (64, 64, 4, 4),
        "d4": (64, 32, 4, 4), "d5": (32, 32, 4, 4), "d6": (32, 3, 4, 4),
    }
    bias_ch = {"e1": 32, "e2": 32, "e3": 64, "e4": 64, "e5": 256, "e6": 2 * Z_DIM,
               "d1": 256, "d2": 64, "d3": 64, "d4": 32, "d5": 32, "d6": 3}
    params = {}
    keys = jax.random.split(key, len(shapes))
    for k, (name, shp) in zip(keys, sorted(shapes.items())):
        params[name + "_w"] = 0.02 * jax.random.normal(k, shp, jnp.float32)
        params[name + "_b"] = jnp.zeros((bias_ch[name],), jnp.float32)
    return params


# ----------------------------------------------------------------------------
# FFVAE forward
# ----------------------------------------------------------------------------
def ffvae_forward(params, x, eps_key, no_dec=False):
    p = params
    B = x.shape[0]
    # NCHW -> NHWC once at the boundary; bf16 activations internally.
    h = x.transpose(0, 2, 3, 1).astype(jnp.bfloat16)
    h = conv2d(h, p["e1_w"], p["e1_b"], stride=2, padding=1, relu=True,
               out_dtype=jnp.bfloat16)
    h = conv2d(h, p["e2_w"], p["e2_b"], stride=2, padding=1, relu=True,
               out_dtype=jnp.bfloat16)
    h = conv2d(h, p["e3_w"], p["e3_b"], stride=2, padding=1, relu=True,
               out_dtype=jnp.bfloat16)
    h = conv2d(h, p["e4_w"], p["e4_b"], stride=2, padding=1, relu=True,
               out_dtype=jnp.bfloat16)                       # (B, 4, 4, 64)

    eps = jax.random.normal(eps_key, (B, Z_DIM - N_SENS), jnp.float32)
    eps10 = jnp.pad(eps, ((0, 0), (0, N_SENS)))              # sens dims: no noise
    mu, logvar, zb = encoder_head(h, p["e5_w"], p["e5_b"], p["e6_w"], p["e6_b"],
                                  eps10)

    mu_n = mu[:, :Z_DIM - N_SENS].reshape(B, Z_DIM - N_SENS, 1, 1)
    logvar_n = logvar[:, :Z_DIM - N_SENS].reshape(B, Z_DIM - N_SENS, 1, 1)
    b_logits = mu[:, Z_DIM - N_SENS:Z_DIM]                   # (B, 1)

    if no_dec:
        return jnp.squeeze(zb)

    d = decoder_head(zb, p["d1_w"], p["d1_b"], p["d2_w"], p["d2_b"])   # (B,4,4,64)
    d = conv_transpose2d_s2(d, p["d3_w"], p["d3_b"], relu=True,
                            out_dtype=jnp.bfloat16)
    d = conv_transpose2d_s2(d, p["d4_w"], p["d4_b"], relu=True,
                            out_dtype=jnp.bfloat16)
    d = conv_transpose2d_s2(d, p["d5_w"], p["d5_b"], relu=True,
                            out_dtype=jnp.bfloat16)
    xr = conv_transpose2d_s2(d, p["d6_w"], p["d6_b"], relu=False,
                             out_dtype=jnp.float32)
    x_recon = xr.transpose(0, 3, 1, 2)                       # NHWC -> NCHW

    return x_recon, mu_n, logvar_n, jnp.squeeze(zb), b_logits


# ----------------------------------------------------------------------------
if __name__ == "__main__":
    key = jax.random.PRNGKey(0)
    k_param, k_x, k_eps = jax.random.split(key, 3)

    params = init_params(k_param)
    # Encoder (4x stride-2 convs + 4x4 valid conv) implies a 64x64 input.
    x = jax.random.normal(k_x, (2, 3, 64, 64), jnp.float32)

    fwd = jax.jit(functools.partial(ffvae_forward, no_dec=False))
    x_recon, mu_n, logvar_n, zb, b_logits = fwd(params, x, k_eps)
    jax.block_until_ready((x_recon, mu_n, logvar_n, zb, b_logits))

    assert x_recon.shape == (2, 3, 64, 64)
    assert mu_n.shape == (2, Z_DIM - N_SENS, 1, 1)
    assert logvar_n.shape == (2, Z_DIM - N_SENS, 1, 1)
    assert zb.shape == (2, Z_DIM)
    assert b_logits.shape == (2, 1)

    print("KERNEL_OK")
</pallas_src>

<mosaic_0001>
module attributes {stable_mosaic.version = 11 : i64} {
  func.func @_bmm_kernel(%arg0: i32, %arg1: i32, %arg2: memref<1x512x48xbf16, #tpu.memory_space<vmem>>, %arg3: memref<1x48x128xbf16, #tpu.memory_space<vmem>>, %arg4: memref<1x1x128xf32, #tpu.memory_space<vmem>>, %arg5: memref<1x512x128xbf16, #tpu.memory_space<vmem>>) attributes {dimension_semantics = [#tpu.dimension_semantics<parallel>, #tpu.dimension_semantics<parallel>], iteration_bounds = array<i64: 1, 4>, scalar_prefetch = 0 : i64, scratch_operands = 0 : i64, tpu.core_type = #tpu.core_type<tc>, window_params = [{transform_indices = @transform_0, window_bounds = array<i64: 1, 512, 48>}, {transform_indices = @transform_1, window_bounds = array<i64: 1, 48, 128>}, {pipeline_mode = #tpu.pipeline_mode<synchronous>, transform_indices = @transform_2, window_bounds = array<i64: 1, 1, 128>}, {transform_indices = @transform_3, window_bounds = array<i64: 1, 512, 128>}]} {
    %c0 = arith.constant 0 : index
    %c0_0 = arith.constant 0 : index
    %c0_1 = arith.constant 0 : index
    %0 = vector.load %arg2[%c0, %c0_0, %c0_1] : memref<1x512x48xbf16, #tpu.memory_space<vmem>>, vector<1x512x48xbf16>
    %1 = vector.shape_cast %0 : vector<1x512x48xbf16> to vector<512x48xbf16>
    %c0_2 = arith.constant 0 : index
    %c0_3 = arith.constant 0 : index
    %c0_4 = arith.constant 0 : index
    %2 = vector.load %arg3[%c0_2, %c0_3, %c0_4] : memref<1x48x128xbf16, #tpu.memory_space<vmem>>, vector<1x48x128xbf16>
    %3 = vector.shape_cast %2 : vector<1x48x128xbf16> to vector<48x128xbf16>
    %cst = arith.constant dense<0.000000e+00> : vector<512x128xf32>
    %4 = tpu.matmul %1, %3, %cst {dimension_numbers = #tpu.dot_dimension_numbers<[1], [0], [0], [1], [0, 0, 1, 1], [], []>} : vector<512x48xbf16>, vector<48x128xbf16>, vector<512x128xf32> -> vector<512x128xf32>
    %c0_5 = arith.constant 0 : index
    %c0_6 = arith.constant 0 : index
    %c0_7 = arith.constant 0 : index
    %5 = vector.load %arg4[%c0_5, %c0_6, %c0_7] : memref<1x1x128xf32, #tpu.memory_space<vmem>>, vector<1x1x128xf32>
    %6 = vector.shape_cast %5 : vector<1x1x128xf32> to vector<1x128xf32>
    %7 = vector.broadcast %6 : vector<1x128xf32> to vector<512x128xf32>
    %8 = arith.addf %4, %7 : vector<512x128xf32>
    %cst_8 = arith.constant 0.000000e+00 : f32
    %9 = vector.broadcast %cst_8 : f32 to vector<512x128xf32>
    %10 = arith.maximumf %8, %9 : vector<512x128xf32>
    %11 = arith.truncf %10 : vector<512x128xf32> to vector<512x128xbf16>
    %c0_9 = arith.constant 0 : index
    %c0_10 = arith.constant 0 : index
    %c0_11 = arith.constant 0 : index
    %12 = vector.load %arg5[%c0_9, %c0_10, %c0_11] : memref<1x512x128xbf16, #tpu.memory_space<vmem>>, vector<1x512x128xbf16>
    %13 = vector.shape_cast %12 : vector<1x512x128xbf16> to vector<512x128xbf16>
    %14 = vector.shape_cast %11 : vector<512x128xbf16> to vector<1x512x128xbf16>
    tpu.vector_store %arg5[%c0_9, %c0_10, %c0_11], %14 {strides = array<i32>} : memref<1x512x128xbf16, #tpu.memory_space<vmem>>, vector<1x512x128xbf16>,
    return
  }
  func.func @transform_0(%arg0: i32, %arg1: i32) -> (i32, i32, i32) {
    %c0_i32 = arith.constant 0 : i32
    %c0_i32_0 = arith.constant 0 : i32
    return %arg0, %arg1, %c0_i32 : i32, i32, i32
  }
  func.func @transform_1(%arg0: i32, %arg1: i32) -> (i32, i32, i32) {
    %c0_i32 = arith.constant 0 : i32
    %c0_i32_0 = arith.constant 0 : i32
    %c0_i32_1 = arith.constant 0 : i32
    return %arg0, %c0_i32, %c0_i32_0 : i32, i32, i32
  }
  func.func @transform_2(%arg0: i32, %arg1: i32) -> (i32, i32, i32) {
    %c0_i32 = arith.constant 0 : i32
    %c0_i32_0 = arith.constant 0 : i32
    %c0_i32_1 = arith.constant 0 : i32
    %c0_i32_2 = arith.constant 0 : i32
    return %c0_i32, %c0_i32_0, %c0_i32_1 : i32, i32, i32
  }
  func.func @transform_3(%arg0: i32, %arg1: i32) -> (i32, i32, i32) {
    %c0_i32 = arith.constant 0 : i32
    %c0_i32_0 = arith.constant 0 : i32
    return %arg0, %arg1, %c0_i32 : i32, i32, i32
  }
}

module attributes {stable_mosaic.version = 11 : i64} {
  func.func @_bmm_kernel(%arg0: i32, %arg1: i32, %arg2: memref<1x512x512xbf16, #tpu.memory_space<vmem>>, %arg3: memref<1x512x128xbf16, #tpu.memory_space<vmem>>, %arg4: memref<1x1x128xf32, #tpu.memory_space<vmem>>, %arg5: memref<1x512x128xbf16, #tpu.memory_space<vmem>>) attributes {dimension_semantics = [#tpu.dimension_semantics<parallel>, #tpu.dimension_semantics<parallel>], iteration_bounds = array<i64: 1, 1>, scalar_prefetch = 0 : i64, scratch_operands = 0 : i64, tpu.core_type = #tpu.core_type<tc>, window_params = [{transform_indices = @transform_0, window_bounds = array<i64: 1, 512, 512>}, {transform_indices = @transform_1, window_bounds = array<i64: 1, 512, 128>}, {pipeline_mode = #tpu.pipeline_mode<synchronous>, transform_indices = @transform_2, window_bounds = array<i64: 1, 1, 128>}, {transform_indices = @transform_3, window_bounds = array<i64: 1, 512, 128>}]} {
    %c0 = arith.constant 0 : index
    %c0_0 = arith.constant 0 : index
    %c0_1 = arith.constant 0 : index
    %0 = vector.load %arg2[%c0, %c0_0, %c0_1] : memref<1x512x512xbf16, #tpu.memory_space<vmem>>, vector<1x512x512xbf16>
    %1 = vector.shape_cast %0 : vector<1x512x512xbf16> to vector<512x512xbf16>
    %c0_2 = arith.constant 0 : index
    %c0_3 = arith.constant 0 : index
    %c0_4 = arith.constant 0 : index
    %2 = vector.load %arg3[%c0_2, %c0_3, %c0_4] : memref<1x512x128xbf16, #tpu.memory_space<vmem>>, vector<1x512x128xbf16>
    %3 = vector.shape_cast %2 : vector<1x512x128xbf16> to vector<512x128xbf16>
    %cst = arith.constant dense<0.000000e+00> : vector<512x128xf32>
    %4 = tpu.matmul %1, %3, %cst {dimension_numbers = #tpu.dot_dimension_numbers<[1], [0], [0], [1], [0, 0, 1, 1], [], []>} : vector<512x512xbf16>, vector<512x128xbf16>, vector<512x128xf32> -> vector<512x128xf32>
    %c0_5 = arith.constant 0 : index
    %c0_6 = arith.constant 0 : index
    %c0_7 = arith.constant 0 : index
    %5 = vector.load %arg4[%c0_5, %c0_6, %c0_7] : memref<1x1x128xf32, #tpu.memory_space<vmem>>, vector<1x1x128xf32>
    %6 = vector.shape_cast %5 : vector<1x1x128xf32> to vector<1x128xf32>
    %7 = vector.broadcast %6 : vector<1x128xf32> to vector<512x128xf32>
    %8 = arith.addf %4, %7 : vector<512x128xf32>
    %cst_8 = arith.constant 0.000000e+00 : f32
    %9 = vector.broadcast %cst_8 : f32 to vector<512x128xf32>
    %10 = arith.maximumf %8, %9 : vector<512x128xf32>
    %11 = arith.truncf %10 : vector<512x128xf32> to vector<512x128xbf16>
    %c0_9 = arith.constant 0 : index
    %c0_10 = arith.constant 0 : index
    %c0_11 = arith.constant 0 : index
    %12 = vector.load %arg5[%c0_9, %c0_10, %c0_11] : memref<1x512x128xbf16, #tpu.memory_space<vmem>>, vector<1x512x128xbf16>
    %13 = vector.shape_cast %12 : vector<1x512x128xbf16> to vector<512x128xbf16>
    %14 = vector.shape_cast %11 : vector<512x128xbf16> to vector<1x512x128xbf16>
    tpu.vector_store %arg5[%c0_9, %c0_10, %c0_11], %14 {strides = array<i32>} : memref<1x512x128xbf16, #tpu.memory_space<vmem>>, vector<1x512x128xbf16>,
    return
  }
  func.func @transform_0(%arg0: i32, %arg1: i32) -> (i32, i32, i32) {
    %c0_i32 = arith.constant 0 : i32
    %c0_i32_0 = arith.constant 0 : i32
    return %arg0, %arg1, %c0_i32 : i32, i32, i32
  }
  func.func @transform_1(%arg0: i32, %arg1: i32) -> (i32, i32, i32) {
    %c0_i32 = arith.constant 0 : i32
    %c0_i32_0 = arith.constant 0 : i32
    %c0_i32_1 = arith.constant 0 : i32
    return %arg0, %c0_i32, %c0_i32_0 : i32, i32, i32
  }
  func.func @transform_2(%arg0: i32, %arg1: i32) -> (i32, i32, i32) {
    %c0_i32 = arith.constant 0 : i32
    %c0_i32_0 = arith.constant 0 : i32
    %c0_i32_1 = arith.constant 0 : i32
    %c0_i32_2 = arith.constant 0 : i32
    return %c0_i32, %c0_i32_0, %c0_i32_1 : i32, i32, i32
  }
  func.func @transform_3(%arg0: i32, %arg1: i32) -> (i32, i32, i32) {
    %c0_i32 = arith.constant 0 : i32
    %c0_i32_0 = arith.constant 0 : i32
    return %arg0, %arg1, %c0_i32 : i32, i32, i32
  }
}

module attributes {stable_mosaic.version = 11 : i64} {
  func.func @_bmm_kernel(%arg0: i32, %arg1: i32, %arg2: memref<1x128x512xbf16, #tpu.memory_space<vmem>>, %arg3: memref<1x512x128xbf16, #tpu.memory_space<vmem>>, %arg4: memref<1x1x128xf32, #tpu.memory_space<vmem>>, %arg5: memref<1x128x128xbf16, #tpu.memory_space<vmem>>) attributes {dimension_semantics = [#tpu.dimension_semantics<parallel>, #tpu.dimension_semantics<parallel>], iteration_bounds = array<i64: 1, 1>, scalar_prefetch = 0 : i64, scratch_operands = 0 : i64, tpu.core_type = #tpu.core_type<tc>, window_params = [{transform_indices = @transform_0, window_bounds = array<i64: 1, 128, 512>}, {transform_indices = @transform_1, window_bounds = array<i64: 1, 512, 128>}, {pipeline_mode = #tpu.pipeline_mode<synchronous>, transform_indices = @transform_2, window_bounds = array<i64: 1, 1, 128>}, {transform_indices = @transform_3, window_bounds = array<i64: 1, 128, 128>}]} {
    %c0 = arith.constant 0 : index
    %c0_0 = arith.constant 0 : index
    %c0_1 = arith.constant 0 : index
    %0 = vector.load %arg2[%c0, %c0_0, %c0_1] : memref<1x128x512xbf16, #tpu.memory_space<vmem>>, vector<1x128x512xbf16>
    %1 = vector.shape_cast %0 : vector<1x128x512xbf16> to vector<128x512xbf16>
    %c0_2 = arith.constant 0 : index
    %c0_3 = arith.constant 0 : index
    %c0_4 = arith.constant 0 : index
    %2 = vector.load %arg3[%c0_2, %c0_3, %c0_4] : memref<1x512x128xbf16, #tpu.memory_space<vmem>>, vector<1x512x128xbf16>
    %3 = vector.shape_cast %2 : vector<1x512x128xbf16> to vector<512x128xbf16>
    %cst = arith.constant dense<0.000000e+00> : vector<128x128xf32>
    %4 = tpu.matmul %1, %3, %cst {dimension_numbers = #tpu.dot_dimension_numbers<[1], [0], [0], [1], [0, 0, 1, 1], [], []>} : vector<128x512xbf16>, vector<512x128xbf16>, vector<128x128xf32> -> vector<128x128xf32>
    %c0_5 = arith.constant 0 : index
    %c0_6 = arith.constant 0 : index
    %c0_7 = arith.constant 0 : index
    %5 = vector.load %arg4[%c0_5, %c0_6, %c0_7] : memref<1x1x128xf32, #tpu.memory_space<vmem>>, vector<1x1x128xf32>
    %6 = vector.shape_cast %5 : vector<1x1x128xf32> to vector<1x128xf32>
    %7 = vector.broadcast %6 : vector<1x128xf32> to vector<128x128xf32>
    %8 = arith.addf %4, %7 : vector<128x128xf32>
    %cst_8 = arith.constant 0.000000e+00 : f32
    %9 = vector.broadcast %cst_8 : f32 to vector<128x128xf32>
    %10 = arith.maximumf %8, %9 : vector<128x128xf32>
    %11 = arith.truncf %10 : vector<128x128xf32> to vector<128x128xbf16>
    %c0_9 = arith.constant 0 : index
    %c0_10 = arith.constant 0 : index
    %c0_11 = arith.constant 0 : index
    %12 = vector.load %arg5[%c0_9, %c0_10, %c0_11] : memref<1x128x128xbf16, #tpu.memory_space<vmem>>, vector<1x128x128xbf16>
    %13 = vector.shape_cast %12 : vector<1x128x128xbf16> to vector<128x128xbf16>
    %14 = vector.shape_cast %11 : vector<128x128xbf16> to vector<1x128x128xbf16>
    tpu.vector_store %arg5[%c0_9, %c0_10, %c0_11], %14 {strides = array<i32>} : memref<1x128x128xbf16, #tpu.memory_space<vmem>>, vector<1x128x128xbf16>,
    return
  }
  func.func @transform_0(%arg0: i32, %arg1: i32) -> (i32, i32, i32) {
    %c0_i32 = arith.constant 0 : i32
    %c0_i32_0 = arith.constant 0 : i32
    return %arg0, %arg1, %c0_i32 : i32, i32, i32
  }
  func.func @transform_1(%arg0: i32, %arg1: i32) -> (i32, i32, i32) {
    %c0_i32 = arith.constant 0 : i32
    %c0_i32_0 = arith.constant 0 : i32
    %c0_i32_1 = arith.constant 0 : i32
    return %arg0, %c0_i32, %c0_i32_0 : i32, i32, i32
  }
  func.func @transform_2(%arg0: i32, %arg1: i32) -> (i32, i32, i32) {
    %c0_i32 = arith.constant 0 : i32
    %c0_i32_0 = arith.constant 0 : i32
    %c0_i32_1 = arith.constant 0 : i32
    %c0_i32_2 = arith.constant 0 : i32
    return %c0_i32, %c0_i32_0, %c0_i32_1 : i32, i32, i32
  }
  func.func @transform_3(%arg0: i32, %arg1: i32) -> (i32, i32, i32) {
    %c0_i32 = arith.constant 0 : i32
    %c0_i32_0 = arith.constant 0 : i32
    return %arg0, %arg1, %c0_i32 : i32, i32, i32
  }
}

module attributes {stable_mosaic.version = 11 : i64} {
  func.func @_bmm_kernel(%arg0: i32, %arg1: i32, %arg2: memref<1x32x1024xbf16, #tpu.memory_space<vmem>>, %arg3: memref<1x1024x128xbf16, #tpu.memory_space<vmem>>, %arg4: memref<1x1x128xf32, #tpu.memory_space<vmem>>, %arg5: memref<1x32x128xbf16, #tpu.memory_space<vmem>>) attributes {dimension_semantics = [#tpu.dimension_semantics<parallel>, #tpu.dimension_semantics<parallel>], iteration_bounds = array<i64: 1, 1>, scalar_prefetch = 0 : i64, scratch_operands = 0 : i64, tpu.core_type = #tpu.core_type<tc>, window_params = [{transform_indices = @transform_0, window_bounds = array<i64: 1, 32, 1024>}, {transform_indices = @transform_1, window_bounds = array<i64: 1, 1024, 128>}, {pipeline_mode = #tpu.pipeline_mode<synchronous>, transform_indices = @transform_2, window_bounds = array<i64: 1, 1, 128>}, {transform_indices = @transform_3, window_bounds = array<i64: 1, 32, 128>}]} {
    %c0 = arith.constant 0 : index
    %c0_0 = arith.constant 0 : index
    %c0_1 = arith.constant 0 : index
    %0 = vector.load %arg2[%c0, %c0_0, %c0_1] : memref<1x32x1024xbf16, #tpu.memory_space<vmem>>, vector<1x32x1024xbf16>
    %1 = vector.shape_cast %0 : vector<1x32x1024xbf16> to vector<32x1024xbf16>
    %c0_2 = arith.constant 0 : index
    %c0_3 = arith.constant 0 : index
    %c0_4 = arith.constant 0 : index
    %2 = vector.load %arg3[%c0_2, %c0_3, %c0_4] : memref<1x1024x128xbf16, #tpu.memory_space<vmem>>, vector<1x1024x128xbf16>
    %3 = vector.shape_cast %2 : vector<1x1024x128xbf16> to vector<1024x128xbf16>
    %cst = arith.constant dense<0.000000e+00> : vector<32x128xf32>
    %4 = tpu.matmul %1, %3, %cst {dimension_numbers = #tpu.dot_dimension_numbers<[1], [0], [0], [1], [0, 0, 1, 1], [], []>} : vector<32x1024xbf16>, vector<1024x128xbf16>, vector<32x128xf32> -> vector<32x128xf32>
    %c0_5 = arith.constant 0 : index
    %c0_6 = arith.constant 0 : index
    %c0_7 = arith.constant 0 : index
    %5 = vector.load %arg4[%c0_5, %c0_6, %c0_7] : memref<1x1x128xf32, #tpu.memory_space<vmem>>, vector<1x1x128xf32>
    %6 = vector.shape_cast %5 : vector<1x1x128xf32> to vector<1x128xf32>
    %7 = vector.broadcast %6 : vector<1x128xf32> to vector<32x128xf32>
    %8 = arith.addf %4, %7 : vector<32x128xf32>
    %cst_8 = arith.constant 0.000000e+00 : f32
    %9 = vector.broadcast %cst_8 : f32 to vector<32x128xf32>
    %10 = arith.maximumf %8, %9 : vector<32x128xf32>
    %11 = arith.truncf %10 : vector<32x128xf32> to vector<32x128xbf16>
    %c0_9 = arith.constant 0 : index
    %c0_10 = arith.constant 0 : index
    %c0_11 = arith.constant 0 : index
    %12 = vector.load %arg5[%c0_9, %c0_10, %c0_11] : memref<1x32x128xbf16, #tpu.memory_space<vmem>>, vector<1x32x128xbf16>
    %13 = vector.shape_cast %12 : vector<1x32x128xbf16> to vector<32x128xbf16>
    %14 = vector.shape_cast %11 : vector<32x128xbf16> to vector<1x32x128xbf16>
    tpu.vector_store %arg5[%c0_9, %c0_10, %c0_11], %14 {strides = array<i32>} : memref<1x32x128xbf16, #tpu.memory_space<vmem>>, vector<1x32x128xbf16>,
    return
  }
  func.func @transform_0(%arg0: i32, %arg1: i32) -> (i32, i32, i32) {
    %c0_i32 = arith.constant 0 : i32
    %c0_i32_0 = arith.constant 0 : i32
    return %arg0, %arg1, %c0_i32 : i32, i32, i32
  }
  func.func @transform_1(%arg0: i32, %arg1: i32) -> (i32, i32, i32) {
    %c0_i32 = arith.constant 0 : i32
    %c0_i32_0 = arith.constant 0 : i32
    %c0_i32_1 = arith.constant 0 : i32
    return %arg0, %c0_i32, %c0_i32_0 : i32, i32, i32
  }
  func.func @transform_2(%arg0: i32, %arg1: i32) -> (i32, i32, i32) {
    %c0_i32 = arith.constant 0 : i32
    %c0_i32_0 = arith.constant 0 : i32
    %c0_i32_1 = arith.constant 0 : i32
    %c0_i32_2 = arith.constant 0 : i32
    return %c0_i32, %c0_i32_0, %c0_i32_1 : i32, i32, i32
  }
  func.func @transform_3(%arg0: i32, %arg1: i32) -> (i32, i32, i32) {
    %c0_i32 = arith.constant 0 : i32
    %c0_i32_0 = arith.constant 0 : i32
    return %arg0, %arg1, %c0_i32 : i32, i32, i32
  }
}

module attributes {stable_mosaic.version = 11 : i64} {
  func.func @_enc_head_kernel(%arg0: memref<2x1024xbf16, #tpu.memory_space<vmem>>, %arg1: memref<1024x256xbf16, #tpu.memory_space<vmem>>, %arg2: memref<1x256xf32, #tpu.memory_space<vmem>>, %arg3: memref<256x10xbf16, #tpu.memory_space<vmem>>, %arg4: memref<1x10xf32, #tpu.memory_space<vmem>>, %arg5: memref<256x10xbf16, #tpu.memory_space<vmem>>, %arg6: memref<1x10xf32, #tpu.memory_space<vmem>>, %arg7: memref<2x10xf32, #tpu.memory_space<vmem>>, %arg8: memref<2x10xf32, #tpu.memory_space<vmem>>, %arg9: memref<2x10xf32, #tpu.memory_space<vmem>>, %arg10: memref<2x10xf32, #tpu.memory_space<vmem>>) attributes {dimension_semantics = [], scalar_prefetch = 0 : i64, scratch_operands = 0 : i64, tpu.core_type = #tpu.core_type<tc>} {
    %c0 = arith.constant 0 : index
    %c0_0 = arith.constant 0 : index
    %0 = vector.load %arg0[%c0, %c0_0] : memref<2x1024xbf16, #tpu.memory_space<vmem>>, vector<2x1024xbf16>
    %c0_1 = arith.constant 0 : index
    %c0_2 = arith.constant 0 : index
    %1 = vector.load %arg1[%c0_1, %c0_2] : memref<1024x256xbf16, #tpu.memory_space<vmem>>, vector<1024x256xbf16>
    %cst = arith.constant dense<0.000000e+00> : vector<2x256xf32>
    %2 = tpu.matmul %0, %1, %cst {dimension_numbers = #tpu.dot_dimension_numbers<[1], [0], [0], [1], [0, 0, 1, 1], [], []>} : vector<2x1024xbf16>, vector<1024x256xbf16>, vector<2x256xf32> -> vector<2x256xf32>
    %c0_3 = arith.constant 0 : index
    %c0_4 = arith.constant 0 : index
    %3 = vector.load %arg2[%c0_3, %c0_4] : memref<1x256xf32, #tpu.memory_space<vmem>>, vector<1x256xf32>
    %4 = vector.broadcast %3 : vector<1x256xf32> to vector<2x256xf32>
    %5 = arith.addf %2, %4 : vector<2x256xf32>
    %cst_5 = arith.constant 0.000000e+00 : f32
    %6 = vector.broadcast %cst_5 : f32 to vector<2x256xf32>
    %7 = arith.maximumf %5, %6 : vector<2x256xf32>
    %8 = arith.truncf %7 : vector<2x256xf32> to vector<2x256xbf16>
    %c0_6 = arith.constant 0 : index
    %c0_7 = arith.constant 0 : index
    %9 = vector.load %arg3[%c0_6, %c0_7] : memref<256x10xbf16, #tpu.memory_space<vmem>>, vector<256x10xbf16>
    %cst_8 = arith.constant dense<0.000000e+00> : vector<2x10xf32>
    %10 = tpu.matmul %8, %9, %cst_8 {dimension_numbers = #tpu.dot_dimension_numbers<[1], [0], [0], [1], [0, 0, 1, 1], [], []>} : vector<2x256xbf16>, vector<256x10xbf16>, vector<2x10xf32> -> vector<2x10xf32>
    %c0_9 = arith.constant 0 : index
    %c0_10 = arith.constant 0 : index
    %11 = vector.load %arg4[%c0_9, %c0_10] : memref<1x10xf32, #tpu.memory_space<vmem>>, vector<1x10xf32>
    %12 = vector.broadcast %11 : vector<1x10xf32> to vector<2x10xf32>
    %13 = arith.addf %10, %12 : vector<2x10xf32>
    %c0_11 = arith.constant 0 : index
    %c0_12 = arith.constant 0 : index
    %14 = vector.load %arg5[%c0_11, %c0_12] : memref<256x10xbf16, #tpu.memory_space<vmem>>, vector<256x10xbf16>
    %cst_13 = arith.constant dense<0.000000e+00> : vector<2x10xf32>
    %15 = tpu.matmul %8, %14, %cst_13 {dimension_numbers = #tpu.dot_dimension_numbers<[1], [0], [0], [1], [0, 0, 1, 1], [], []>} : vector<2x256xbf16>, vector<256x10xbf16>, vector<2x10xf32> -> vector<2x10xf32>
    %c0_14 = arith.constant 0 : index
    %c0_15 = arith.constant 0 : index
    %16 = vector.load %arg6[%c0_14, %c0_15] : memref<1x10xf32, #tpu.memory_space<vmem>>, vector<1x10xf32>
    %17 = vector.broadcast %16 : vector<1x10xf32> to vector<2x10xf32>
    %18 = arith.addf %15, %17 : vector<2x10xf32>
    %c0_16 = arith.constant 0 : index
    %c0_17 = arith.constant 0 : index
    %19 = vector.load %arg8[%c0_16, %c0_17] : memref<2x10xf32, #tpu.memory_space<vmem>>, vector<2x10xf32>
    tpu.vector_store %arg8[%c0_16, %c0_17], %13 {strides = array<i32>} : memref<2x10xf32, #tpu.memory_space<vmem>>, vector<2x10xf32>,
    %c0_18 = arith.constant 0 : index
    %c0_19 = arith.constant 0 : index
    %20 = vector.load %arg9[%c0_18, %c0_19] : memref<2x10xf32, #tpu.memory_space<vmem>>, vector<2x10xf32>
    tpu.vector_store %arg9[%c0_18, %c0_19], %18 {strides = array<i32>} : memref<2x10xf32, #tpu.memory_space<vmem>>, vector<2x10xf32>,
    %c0_20 = arith.constant 0 : index
    %c0_21 = arith.constant 0 : index
    %21 = vector.load %arg7[%c0_20, %c0_21] : memref<2x10xf32, #tpu.memory_space<vmem>>, vector<2x10xf32>
    %cst_22 = arith.constant 5.000000e-01 : f32
    %22 = vector.broadcast %cst_22 : f32 to vector<2x10xf32>
    %23 = arith.mulf %22, %18 : vector<2x10xf32>
    %24 = math.exp %23 : vector<2x10xf32>
    %25 = arith.mulf %21, %24 : vector<2x10xf32>
    %26 = arith.addf %25, %13 : vector<2x10xf32>
    %c0_23 = arith.constant 0 : index
    %c0_24 = arith.constant 0 : index
    %27 = vector.load %arg10[%c0_23, %c0_24] : memref<2x10xf32, #tpu.memory_space<vmem>>, vector<2x10xf32>
    tpu.vector_store %arg10[%c0_23, %c0_24], %26 {strides = array<i32>} : memref<2x10xf32, #tpu.memory_space<vmem>>, vector<2x10xf32>,
    return
  }
}

module attributes {stable_mosaic.version = 11 : i64} {
  func.func @_dec_head_kernel(%arg0: memref<2x10xbf16, #tpu.memory_space<vmem>>, %arg1: memref<10x256xbf16, #tpu.memory_space<vmem>>, %arg2: memref<1x256xf32, #tpu.memory_space<vmem>>, %arg3: memref<256x1024xbf16, #tpu.memory_space<vmem>>, %arg4: memref<1x1024xf32, #tpu.memory_space<vmem>>, %arg5: memref<2x1024xbf16, #tpu.memory_space<vmem>>) attributes {dimension_semantics = [], scalar_prefetch = 0 : i64, scratch_operands = 0 : i64, tpu.core_type = #tpu.core_type<tc>} {
    %c0 = arith.constant 0 : index
    %c0_0 = arith.constant 0 : index
    %0 = vector.load %arg0[%c0, %c0_0] : memref<2x10xbf16, #tpu.memory_space<vmem>>, vector<2x10xbf16>
    %c0_1 = arith.constant 0 : index
    %c0_2 = arith.constant 0 : index
    %1 = vector.load %arg1[%c0_1, %c0_2] : memref<10x256xbf16, #tpu.memory_space<vmem>>, vector<10x256xbf16>
    %cst = arith.constant dense<0.000000e+00> : vector<2x256xf32>
    %2 = tpu.matmul %0, %1, %cst {dimension_numbers = #tpu.dot_dimension_numbers<[1], [0], [0], [1], [0, 0, 1, 1], [], []>} : vector<2x10xbf16>, vector<10x256xbf16>, vector<2x256xf32> -> vector<2x256xf32>
    %c0_3 = arith.constant 0 : index
    %c0_4 = arith.constant 0 : index
    %3 = vector.load %arg2[%c0_3, %c0_4] : memref<1x256xf32, #tpu.memory_space<vmem>>, vector<1x256xf32>
    %4 = vector.broadcast %3 : vector<1x256xf32> to vector<2x256xf32>
    %5 = arith.addf %2, %4 : vector<2x256xf32>
    %cst_5 = arith.constant 0.000000e+00 : f32
    %6 = vector.broadcast %cst_5 : f32 to vector<2x256xf32>
    %7 = arith.maximumf %5, %6 : vector<2x256xf32>
    %8 = arith.truncf %7 : vector<2x256xf32> to vector<2x256xbf16>
    %c0_6 = arith.constant 0 : index
    %c0_7 = arith.constant 0 : index
    %9 = vector.load %arg3[%c0_6, %c0_7] : memref<256x1024xbf16, #tpu.memory_space<vmem>>, vector<256x1024xbf16>
    %cst_8 = arith.constant dense<0.000000e+00> : vector<2x1024xf32>
    %10 = tpu.matmul %8, %9, %cst_8 {dimension_numbers = #tpu.dot_dimension_numbers<[1], [0], [0], [1], [0, 0, 1, 1], [], []>} : vector<2x256xbf16>, vector<256x1024xbf16>, vector<2x1024xf32> -> vector<2x1024xf32>
    %c0_9 = arith.constant 0 : index
    %c0_10 = arith.constant 0 : index
    %11 = vector.load %arg4[%c0_9, %c0_10] : memref<1x1024xf32, #tpu.memory_space<vmem>>, vector<1x1024xf32>
    %12 = vector.broadcast %11 : vector<1x1024xf32> to vector<2x1024xf32>
    %13 = arith.addf %10, %12 : vector<2x1024xf32>
    %cst_11 = arith.constant 0.000000e+00 : f32
    %14 = vector.broadcast %cst_11 : f32 to vector<2x1024xf32>
    %15 = arith.maximumf %13, %14 : vector<2x1024xf32>
    %16 = arith.truncf %15 : vector<2x1024xf32> to vector<2x1024xbf16>
    %c0_12 = arith.constant 0 : index
    %c0_13 = arith.constant 0 : index
    %17 = vector.load %arg5[%c0_12, %c0_13] : memref<2x1024xbf16, #tpu.memory_space<vmem>>, vector<2x1024xbf16>
    tpu.vector_store %arg5[%c0_12, %c0_13], %16 {strides = array<i32>} : memref<2x1024xbf16, #tpu.memory_space<vmem>>, vector<2x1024xbf16>,
    return
  }
}

module attributes {stable_mosaic.version = 11 : i64} {
  func.func @_bmm_kernel(%arg0: i32, %arg1: i32, %arg2: memref<1x32x256xbf16, #tpu.memory_space<vmem>>, %arg3: memref<1x256x128xbf16, #tpu.memory_space<vmem>>, %arg4: memref<1x1x128xf32, #tpu.memory_space<vmem>>, %arg5: memref<1x32x128xbf16, #tpu.memory_space<vmem>>) attributes {dimension_semantics = [#tpu.dimension_semantics<parallel>, #tpu.dimension_semantics<parallel>], iteration_bounds = array<i64: 4, 1>, scalar_prefetch = 0 : i64, scratch_operands = 0 : i64, tpu.core_type = #tpu.core_type<tc>, window_params = [{transform_indices = @transform_0, window_bounds = array<i64: 1, 32, 256>}, {transform_indices = @transform_1, window_bounds = array<i64: 1, 256, 128>}, {pipeline_mode = #tpu.pipeline_mode<synchronous>, transform_indices = @transform_2, window_bounds = array<i64: 1, 1, 128>}, {transform_indices = @transform_3, window_bounds = array<i64: 1, 32, 128>}]} {
    %c0 = arith.constant 0 : index
    %c0_0 = arith.constant 0 : index
    %c0_1 = arith.constant 0 : index
    %0 = vector.load %arg2[%c0, %c0_0, %c0_1] : memref<1x32x256xbf16, #tpu.memory_space<vmem>>, vector<1x32x256xbf16>
    %1 = vector.shape_cast %0 : vector<1x32x256xbf16> to vector<32x256xbf16>
    %c0_2 = arith.constant 0 : index
    %c0_3 = arith.constant 0 : index
    %c0_4 = arith.constant 0 : index
    %2 = vector.load %arg3[%c0_2, %c0_3, %c0_4] : memref<1x256x128xbf16, #tpu.memory_space<vmem>>, vector<1x256x128xbf16>
    %3 = vector.shape_cast %2 : vector<1x256x128xbf16> to vector<256x128xbf16>
    %cst = arith.constant dense<0.000000e+00> : vector<32x128xf32>
    %4 = tpu.matmul %1, %3, %cst {dimension_numbers = #tpu.dot_dimension_numbers<[1], [0], [0], [1], [0, 0, 1, 1], [], []>} : vector<32x256xbf16>, vector<256x128xbf16>, vector<32x128xf32> -> vector<32x128xf32>
    %c0_5 = arith.constant 0 : index
    %c0_6 = arith.constant 0 : index
    %c0_7 = arith.constant 0 : index
    %5 = vector.load %arg4[%c0_5, %c0_6, %c0_7] : memref<1x1x128xf32, #tpu.memory_space<vmem>>, vector<1x1x128xf32>
    %6 = vector.shape_cast %5 : vector<1x1x128xf32> to vector<1x128xf32>
    %7 = vector.broadcast %6 : vector<1x128xf32> to vector<32x128xf32>
    %8 = arith.addf %4, %7 : vector<32x128xf32>
    %cst_8 = arith.constant 0.000000e+00 : f32
    %9 = vector.broadcast %cst_8 : f32 to vector<32x128xf32>
    %10 = arith.maximumf %8, %9 : vector<32x128xf32>
    %11 = arith.truncf %10 : vector<32x128xf32> to vector<32x128xbf16>
    %c0_9 = arith.constant 0 : index
    %c0_10 = arith.constant 0 : index
    %c0_11 = arith.constant 0 : index
    %12 = vector.load %arg5[%c0_9, %c0_10, %c0_11] : memref<1x32x128xbf16, #tpu.memory_space<vmem>>, vector<1x32x128xbf16>
    %13 = vector.shape_cast %12 : vector<1x32x128xbf16> to vector<32x128xbf16>
    %14 = vector.shape_cast %11 : vector<32x128xbf16> to vector<1x32x128xbf16>
    tpu.vector_store %arg5[%c0_9, %c0_10, %c0_11], %14 {strides = array<i32>} : memref<1x32x128xbf16, #tpu.memory_space<vmem>>, vector<1x32x128xbf16>,
    return
  }
  func.func @transform_0(%arg0: i32, %arg1: i32) -> (i32, i32, i32) {
    %c0_i32 = arith.constant 0 : i32
    %c0_i32_0 = arith.constant 0 : i32
    return %arg0, %arg1, %c0_i32 : i32, i32, i32
  }
  func.func @transform_1(%arg0: i32, %arg1: i32) -> (i32, i32, i32) {
    %c0_i32 = arith.constant 0 : i32
    %c0_i32_0 = arith.constant 0 : i32
    %c0_i32_1 = arith.constant 0 : i32
    return %arg0, %c0_i32, %c0_i32_0 : i32, i32, i32
  }
  func.func @transform_2(%arg0: i32, %arg1: i32) -> (i32, i32, i32) {
    %c0_i32 = arith.constant 0 : i32
    %c0_i32_0 = arith.constant 0 : i32
    %c0_i32_1 = arith.constant 0 : i32
    %c0_i32_2 = arith.constant 0 : i32
    return %c0_i32, %c0_i32_0, %c0_i32_1 : i32, i32, i32
  }
  func.func @transform_3(%arg0: i32, %arg1: i32) -> (i32, i32, i32) {
    %c0_i32 = arith.constant 0 : i32
    %c0_i32_0 = arith.constant 0 : i32
    return %arg0, %arg1, %c0_i32 : i32, i32, i32
  }
}

module attributes {stable_mosaic.version = 11 : i64} {
  func.func @_bmm_kernel(%arg0: i32, %arg1: i32, %arg2: memref<1x128x256xbf16, #tpu.memory_space<vmem>>, %arg3: memref<1x256x128xbf16, #tpu.memory_space<vmem>>, %arg4: memref<1x1x128xf32, #tpu.memory_space<vmem>>, %arg5: memref<1x128x128xbf16, #tpu.memory_space<vmem>>) attributes {dimension_semantics = [#tpu.dimension_semantics<parallel>, #tpu.dimension_semantics<parallel>], iteration_bounds = array<i64: 4, 1>, scalar_prefetch = 0 : i64, scratch_operands = 0 : i64, tpu.core_type = #tpu.core_type<tc>, window_params = [{transform_indices = @transform_0, window_bounds = array<i64: 1, 128, 256>}, {transform_indices = @transform_1, window_bounds = array<i64: 1, 256, 128>}, {pipeline_mode = #tpu.pipeline_mode<synchronous>, transform_indices = @transform_2, window_bounds = array<i64: 1, 1, 128>}, {transform_indices = @transform_3, window_bounds = array<i64: 1, 128, 128>}]} {
    %c0 = arith.constant 0 : index
    %c0_0 = arith.constant 0 : index
    %c0_1 = arith.constant 0 : index
    %0 = vector.load %arg2[%c0, %c0_0, %c0_1] : memref<1x128x256xbf16, #tpu.memory_space<vmem>>, vector<1x128x256xbf16>
    %1 = vector.shape_cast %0 : vector<1x128x256xbf16> to vector<128x256xbf16>
    %c0_2 = arith.constant 0 : index
    %c0_3 = arith.constant 0 : index
    %c0_4 = arith.constant 0 : index
    %2 = vector.load %arg3[%c0_2, %c0_3, %c0_4] : memref<1x256x128xbf16, #tpu.memory_space<vmem>>, vector<1x256x128xbf16>
    %3 = vector.shape_cast %2 : vector<1x256x128xbf16> to vector<256x128xbf16>
    %cst = arith.constant dense<0.000000e+00> : vector<128x128xf32>
    %4 = tpu.matmul %1, %3, %cst {dimension_numbers = #tpu.dot_dimension_numbers<[1], [0], [0], [1], [0, 0, 1, 1], [], []>} : vector<128x256xbf16>, vector<256x128xbf16>, vector<128x128xf32> -> vector<128x128xf32>
    %c0_5 = arith.constant 0 : index
    %c0_6 = arith.constant 0 : index
    %c0_7 = arith.constant 0 : index
    %5 = vector.load %arg4[%c0_5, %c0_6, %c0_7] : memref<1x1x128xf32, #tpu.memory_space<vmem>>, vector<1x1x128xf32>
    %6 = vector.shape_cast %5 : vector<1x1x128xf32> to vector<1x128xf32>
    %7 = vector.broadcast %6 : vector<1x128xf32> to vector<128x128xf32>
    %8 = arith.addf %4, %7 : vector<128x128xf32>
    %cst_8 = arith.constant 0.000000e+00 : f32
    %9 = vector.broadcast %cst_8 : f32 to vector<128x128xf32>
    %10 = arith.maximumf %8, %9 : vector<128x128xf32>
    %11 = arith.truncf %10 : vector<128x128xf32> to vector<128x128xbf16>
    %c0_9 = arith.constant 0 : index
    %c0_10 = arith.constant 0 : index
    %c0_11 = arith.constant 0 : index
    %12 = vector.load %arg5[%c0_9, %c0_10, %c0_11] : memref<1x128x128xbf16, #tpu.memory_space<vmem>>, vector<1x128x128xbf16>
    %13 = vector.shape_cast %12 : vector<1x128x128xbf16> to vector<128x128xbf16>
    %14 = vector.shape_cast %11 : vector<128x128xbf16> to vector<1x128x128xbf16>
    tpu.vector_store %arg5[%c0_9, %c0_10, %c0_11], %14 {strides = array<i32>} : memref<1x128x128xbf16, #tpu.memory_space<vmem>>, vector<1x128x128xbf16>,
    return
  }
  func.func @transform_0(%arg0: i32, %arg1: i32) -> (i32, i32, i32) {
    %c0_i32 = arith.constant 0 : i32
    %c0_i32_0 = arith.constant 0 : i32
    return %arg0, %arg1, %c0_i32 : i32, i32, i32
  }
  func.func @transform_1(%arg0: i32, %arg1: i32) -> (i32, i32, i32) {
    %c0_i32 = arith.constant 0 : i32
    %c0_i32_0 = arith.constant 0 : i32
    %c0_i32_1 = arith.constant 0 : i32
    return %arg0, %c0_i32, %c0_i32_0 : i32, i32, i32
  }
  func.func @transform_2(%arg0: i32, %arg1: i32) -> (i32, i32, i32) {
    %c0_i32 = arith.constant 0 : i32
    %c0_i32_0 = arith.constant 0 : i32
    %c0_i32_1 = arith.constant 0 : i32
    %c0_i32_2 = arith.constant 0 : i32
    return %c0_i32, %c0_i32_0, %c0_i32_1 : i32, i32, i32
  }
  func.func @transform_3(%arg0: i32, %arg1: i32) -> (i32, i32, i32) {
    %c0_i32 = arith.constant 0 : i32
    %c0_i32_0 = arith.constant 0 : i32
    return %arg0, %arg1, %c0_i32 : i32, i32, i32
  }
}

module attributes {stable_mosaic.version = 11 : i64} {
  func.func @_bmm_kernel(%arg0: i32, %arg1: i32, %arg2: memref<1x512x128xbf16, #tpu.memory_space<vmem>>, %arg3: memref<1x128x128xbf16, #tpu.memory_space<vmem>>, %arg4: memref<1x1x128xf32, #tpu.memory_space<vmem>>, %arg5: memref<1x512x128xbf16, #tpu.memory_space<vmem>>) attributes {dimension_semantics = [#tpu.dimension_semantics<parallel>, #tpu.dimension_semantics<parallel>], iteration_bounds = array<i64: 4, 1>, scalar_prefetch = 0 : i64, scratch_operands = 0 : i64, tpu.core_type = #tpu.core_type<tc>, window_params = [{transform_indices = @transform_0, window_bounds = array<i64: 1, 512, 128>}, {transform_indices = @transform_1, window_bounds = array<i64: 1, 128, 128>}, {pipeline_mode = #tpu.pipeline_mode<synchronous>, transform_indices = @transform_2, window_bounds = array<i64: 1, 1, 128>}, {transform_indices = @transform_3, window_bounds = array<i64: 1, 512, 128>}]} {
    %c0 = arith.constant 0 : index
    %c0_0 = arith.constant 0 : index
    %c0_1 = arith.constant 0 : index
    %0 = vector.load %arg2[%c0, %c0_0, %c0_1] : memref<1x512x128xbf16, #tpu.memory_space<vmem>>, vector<1x512x128xbf16>
    %1 = vector.shape_cast %0 : vector<1x512x128xbf16> to vector<512x128xbf16>
    %c0_2 = arith.constant 0 : index
    %c0_3 = arith.constant 0 : index
    %c0_4 = arith.constant 0 : index
    %2 = vector.load %arg3[%c0_2, %c0_3, %c0_4] : memref<1x128x128xbf16, #tpu.memory_space<vmem>>, vector<1x128x128xbf16>
    %3 = vector.shape_cast %2 : vector<1x128x128xbf16> to vector<128x128xbf16>
    %cst = arith.constant dense<0.000000e+00> : vector<512x128xf32>
    %4 = tpu.matmul %1, %3, %cst {dimension_numbers = #tpu.dot_dimension_numbers<[1], [0], [0], [1], [0, 0, 1, 1], [], []>} : vector<512x128xbf16>, vector<128x128xbf16>, vector<512x128xf32> -> vector<512x128xf32>
    %c0_5 = arith.constant 0 : index
    %c0_6 = arith.constant 0 : index
    %c0_7 = arith.constant 0 : index
    %5 = vector.load %arg4[%c0_5, %c0_6, %c0_7] : memref<1x1x128xf32, #tpu.memory_space<vmem>>, vector<1x1x128xf32>
    %6 = vector.shape_cast %5 : vector<1x1x128xf32> to vector<1x128xf32>
    %7 = vector.broadcast %6 : vector<1x128xf32> to vector<512x128xf32>
    %8 = arith.addf %4, %7 : vector<512x128xf32>
    %cst_8 = arith.constant 0.000000e+00 : f32
    %9 = vector.broadcast %cst_8 : f32 to vector<512x128xf32>
    %10 = arith.maximumf %8, %9 : vector<512x128xf32>
    %11 = arith.truncf %10 : vector<512x128xf32> to vector<512x128xbf16>
    %c0_9 = arith.constant 0 : index
    %c0_10 = arith.constant 0 : index
    %c0_11 = arith.constant 0 : index
    %12 = vector.load %arg5[%c0_9, %c0_10, %c0_11] : memref<1x512x128xbf16, #tpu.memory_space<vmem>>, vector<1x512x128xbf16>
    %13 = vector.shape_cast %12 : vector<1x512x128xbf16> to vector<512x128xbf16>
    %14 = vector.shape_cast %11 : vector<512x128xbf16> to vector<1x512x128xbf16>
    tpu.vector_store %arg5[%c0_9, %c0_10, %c0_11], %14 {strides = array<i32>} : memref<1x512x128xbf16, #tpu.memory_space<vmem>>, vector<1x512x128xbf16>,
    return
  }
  func.func @transform_0(%arg0: i32, %arg1: i32) -> (i32, i32, i32) {
    %c0_i32 = arith.constant 0 : i32
    %c0_i32_0 = arith.constant 0 : i32
    return %arg0, %arg1, %c0_i32 : i32, i32, i32
  }
  func.func @transform_1(%arg0: i32, %arg1: i32) -> (i32, i32, i32) {
    %c0_i32 = arith.constant 0 : i32
    %c0_i32_0 = arith.constant 0 : i32
    %c0_i32_1 = arith.constant 0 : i32
    return %arg0, %c0_i32, %c0_i32_0 : i32, i32, i32
  }
  func.func @transform_2(%arg0: i32, %arg1: i32) -> (i32, i32, i32) {
    %c0_i32 = arith.constant 0 : i32
    %c0_i32_0 = arith.constant 0 : i32
    %c0_i32_1 = arith.constant 0 : i32
    %c0_i32_2 = arith.constant 0 : i32
    return %c0_i32, %c0_i32_0, %c0_i32_1 : i32, i32, i32
  }
  func.func @transform_3(%arg0: i32, %arg1: i32) -> (i32, i32, i32) {
    %c0_i32 = arith.constant 0 : i32
    %c0_i32_0 = arith.constant 0 : i32
    return %arg0, %arg1, %c0_i32 : i32, i32, i32
  }
}

module attributes {stable_mosaic.version = 11 : i64} {
  func.func @_bmm_kernel(%arg0: i32, %arg1: i32, %arg2: memref<1x512x128xbf16, #tpu.memory_space<vmem>>, %arg3: memref<1x128x128xbf16, #tpu.memory_space<vmem>>, %arg4: memref<1x1x128xf32, #tpu.memory_space<vmem>>, %arg5: memref<1x512x128xf32, #tpu.memory_space<vmem>>) attributes {dimension_semantics = [#tpu.dimension_semantics<parallel>, #tpu.dimension_semantics<parallel>], iteration_bounds = array<i64: 4, 4>, scalar_prefetch = 0 : i64, scratch_operands = 0 : i64, tpu.core_type = #tpu.core_type<tc>, window_params = [{transform_indices = @transform_0, window_bounds = array<i64: 1, 512, 128>}, {transform_indices = @transform_1, window_bounds = array<i64: 1, 128, 128>}, {pipeline_mode = #tpu.pipeline_mode<synchronous>, transform_indices = @transform_2, window_bounds = array<i64: 1, 1, 128>}, {transform_indices = @transform_3, window_bounds = array<i64: 1, 512, 128>}]} {
    %c0 = arith.constant 0 : index
    %c0_0 = arith.constant 0 : index
    %c0_1 = arith.constant 0 : index
    %0 = vector.load %arg2[%c0, %c0_0, %c0_1] : memref<1x512x128xbf16, #tpu.memory_space<vmem>>, vector<1x512x128xbf16>
    %1 = vector.shape_cast %0 : vector<1x512x128xbf16> to vector<512x128xbf16>
    %c0_2 = arith.constant 0 : index
    %c0_3 = arith.constant 0 : index
    %c0_4 = arith.constant 0 : index
    %2 = vector.load %arg3[%c0_2, %c0_3, %c0_4] : memref<1x128x128xbf16, #tpu.memory_space<vmem>>, vector<1x128x128xbf16>
    %3 = vector.shape_cast %2 : vector<1x128x128xbf16> to vector<128x128xbf16>
    %cst = arith.constant dense<0.000000e+00> : vector<512x128xf32>
    %4 = tpu.matmul %1, %3, %cst {dimension_numbers = #tpu.dot_dimension_numbers<[1], [0], [0], [1], [0, 0, 1, 1], [], []>} : vector<512x128xbf16>, vector<128x128xbf16>, vector<512x128xf32> -> vector<512x128xf32>
    %c0_5 = arith.constant 0 : index
    %c0_6 = arith.constant 0 : index
    %c0_7 = arith.constant 0 : index
    %5 = vector.load %arg4[%c0_5, %c0_6, %c0_7] : memref<1x1x128xf32, #tpu.memory_space<vmem>>, vector<1x1x128xf32>
    %6 = vector.shape_cast %5 : vector<1x1x128xf32> to vector<1x128xf32>
    %7 = vector.broadcast %6 : vector<1x128xf32> to vector<512x128xf32>
    %8 = arith.addf %4, %7 : vector<512x128xf32>
    %c0_8 = arith.constant 0 : index
    %c0_9 = arith.constant 0 : index
    %c0_10 = arith.constant 0 : index
    %9 = vector.load %arg5[%c0_8, %c0_9, %c0_10] : memref<1x512x128xf32, #tpu.memory_space<vmem>>, vector<1x512x128xf32>
    %10 = vector.shape_cast %9 : vector<1x512x128xf32> to vector<512x128xf32>
    %11 = vector.shape_cast %8 : vector<512x128xf32> to vector<1x512x128xf32>
    tpu.vector_store %arg5[%c0_8, %c0_9, %c0_10], %11 {strides = array<i32>} : memref<1x512x128xf32, #tpu.memory_space<vmem>>, vector<1x512x128xf32>,
    return
  }
  func.func @transform_0(%arg0: i32, %arg1: i32) -> (i32, i32, i32) {
    %c0_i32 = arith.constant 0 : i32
    %c0_i32_0 = arith.constant 0 : i32
    return %arg0, %arg1, %c0_i32 : i32, i32, i32
  }
  func.func @transform_1(%arg0: i32, %arg1: i32) -> (i32, i32, i32) {
    %c0_i32 = arith.constant 0 : i32
    %c0_i32_0 = arith.constant 0 : i32
    %c0_i32_1 = arith.constant 0 : i32
    return %arg0, %c0_i32, %c0_i32_0 : i32, i32, i32
  }
  func.func @transform_2(%arg0: i32, %arg1: i32) -> (i32, i32, i32) {
    %c0_i32 = arith.constant 0 : i32
    %c0_i32_0 = arith.constant 0 : i32
    %c0_i32_1 = arith.constant 0 : i32
    %c0_i32_2 = arith.constant 0 : i32
    return %c0_i32, %c0_i32_0, %c0_i32_1 : i32, i32, i32
  }
  func.func @transform_3(%arg0: i32, %arg1: i32) -> (i32, i32, i32) {
    %c0_i32 = arith.constant 0 : i32
    %c0_i32_0 = arith.constant 0 : i32
    return %arg0, %arg1, %c0_i32 : i32, i32, i32
  }
}

</mosaic_0001>

<llo_original>
// kernel: ffvae_forward.10
$region0: #{ffvae_forward.10}
  #allocation0 [shape = 'u32[]', space=smem, size = 0x4, offset = 0x4, fixed_abs, tag = 'smem constant byte address 0x4 - core index']
  #allocation1 [shape = 'u32[144,128]{1,0:T(1,128)}', space=vmem, size = 0x12000, scoped, tag = 'internal scratch']
  %s0 = inlined_call_operand.vmem [shape: bf16[1,2048,48], index: 0, kind: input, shape index: {}]
  %s1 = inlined_call_operand.vmem [shape: bf16[1,48,128], index: 1, kind: input, shape index: {}]
  %s2 = inlined_call_operand.vmem [shape: f32[1,1,128], index: 2, kind: input, shape index: {}]
  %s3 = inlined_call_operand.vmem [shape: bf16[1,2048,128], index: 3, kind: output, shape index: {}]
  %s4 = sld [smem:[#allocation0]]
  $region45: #{ffvae_forward.10} parent=0
    _
  %s6 = ssub.s32 1, %s4
  %s7 = scalar_select 0, %s6, %s4
  loop: start=0, step=1, limit=6
  $region2: #{ffvae_forward.10} parent=0 // loop_pre_header
    _
  $region3: #{ffvae_forward.10} parent=0 // loop_header
    %s9 = sphi 0, %s13
    %p10 = scmp.ge.s32.totalorder %s9, 6
    %s16 = sphi 0, %s28
    %s17 = sphi 0, %s24
    %s18 = sphi 0, %s16
    %s19 = sphi 0, %s17
    %s20 = sphi 0, %s18
    %s21 = sphi 0, %s19
    %s33 = sphi 0, %s35
    %s36 = sphi 0, %s33
    %s37 = sphi 0, %s36
    %s53 = sphi 0, %s37
    %s59 = sphi 0, %s61
    %s62 = sphi 0, %s59
    %s63 = sphi 0, %s62
    %s79 = sphi 0, %s63
    %s83 = sphi 0, %s83
    %s85 = sphi 0, %s83
    %s86 = sphi 0, %s85
    %s100 = sphi 0, %s86
    %s108 = sphi 0, %s110
    %s111 = sphi 0, %s108
    %s112 = sphi 0, %s111
    %s128 = sphi 0, %s112
  $region4: #{ffvae_forward.10} parent=0 // loop_header_branch
    %12 = sbr.rel (%p10) target = $region8
  $region5: #{ffvae_forward.10} parent=0 // loop_body
    %s14 = ssub.s32 %s9, 1
    %s15 = ssub.s32 %s9, 2
    %s22 = sadd.s32 1, %s17
    %p23 = scmp.ge.s32.totalorder %s22, 4
    %s24 = scalar_select %p23, 0, %s22
    %s25 = sadd.s32 1, %s16
    %s26 = scalar_select %p23, %s25, %s16
    %p27 = scmp.ge.s32.totalorder %s26, 1
    %s28 = scalar_select %p27, 0, %s26
    %s29 = ssub.s32 %s16, %s28
    %s30 = ssub.s32 %s17, %s24
    %s31 = sor.u32 %s29, %s30
    %p32 = scmp.eq.s32.totalorder %s31, 0
    %s34 = sadd.s32 %s33, 1
    %s35 = scalar_select %p32, %s33, %s34
    %p38 = pneg %p32
    %p39 = scmp.eq.s32.totalorder %s9, 3
    %p40 = por %p38, %p39
    %p41 = scmp.ne.s32.totalorder %s33, %s36
    %p42 = scmp.eq.s32.totalorder %s9, 0
    %p43 = por %p41, %p42
    %p44 = scmp.ne.s32.totalorder %s33, %s36
    %p45 = scmp.eq.s32.totalorder %s14, 3
    %p46 = por %p44, %p45
    %p47 = scmp.ne.s32.totalorder %s36, %s37
    %p48 = scmp.eq.s32.totalorder %s14, 0
    %p49 = por %p47, %p48
    %p50 = scmp.ne.s32.totalorder %s36, %s37
    %p51 = scmp.eq.s32.totalorder %s15, 3
    %p52 = por %p50, %p51
    %p54 = scmp.ne.s32.totalorder %s37, %s53
    %p55 = scmp.eq.s32.totalorder %s15, 0
    %p56 = por %p54, %p55
    %s57 = ssub.s32 %s16, %s28
    %p58 = scmp.eq.s32.totalorder %s57, 0
    %s60 = sadd.s32 %s59, 1
    %s61 = scalar_select %p58, %s59, %s60
    %p64 = pneg %p58
    %p65 = scmp.eq.s32.totalorder %s9, 3
    %p66 = por %p64, %p65
    %p67 = scmp.ne.s32.totalorder %s59, %s62
    %p68 = scmp.eq.s32.totalorder %s9, 0
    %p69 = por %p67, %p68
    %p70 = scmp.ne.s32.totalorder %s59, %s62
    %p71 = scmp.eq.s32.totalorder %s14, 3
    %p72 = por %p70, %p71
    %p73 = scmp.ne.s32.totalorder %s62, %s63
    %p74 = scmp.eq.s32.totalorder %s14, 0
    %p75 = por %p73, %p74
    %p76 = scmp.ne.s32.totalorder %s62, %s63
    %p77 = scmp.eq.s32.totalorder %s15, 3
    %p78 = por %p76, %p77
    %p80 = scmp.ne.s32.totalorder %s63, %s79
    %p81 = scmp.eq.s32.totalorder %s15, 0
    %p82 = por %p80, %p81
    %s84 = sadd.s32 %s83, 1
    %p87 = scmp.eq.s32.totalorder %s9, 3
    %p88 = scmp.ne.s32.totalorder %s83, %s85
    %p89 = scmp.eq.s32.totalorder %s9, 0
    %p90 = por %p88, %p89
    %p91 = scmp.ne.s32.totalorder %s83, %s85
    %p92 = scmp.eq.s32.totalorder %s14, 3
    %p93 = por %p91, %p92
    %p94 = scmp.ne.s32.totalorder %s85, %s86
    %p95 = scmp.eq.s32.totalorder %s14, 0
    %p96 = por %p94, %p95
    %p97 = scmp.ne.s32.totalorder %s85, %s86
    %p98 = scmp.eq.s32.totalorder %s15, 3
    %p99 = por %p97, %p98
    %p101 = scmp.ne.s32.totalorder %s86, %s100
    %p102 = scmp.eq.s32.totalorder %s15, 0
    %p103 = por %p101, %p102
    %s104 = ssub.s32 %s16, %s28
    %s105 = ssub.s32 %s17, %s24
    %s106 = sor.u32 %s104, %s105
    %p107 = scmp.eq.s32.totalorder %s106, 0
    %s109 = sadd.s32 %s108, 1
    %s110 = scalar_select %p107, %s108, %s109
    %p113 = pneg %p107
    %p114 = scmp.eq.s32.totalorder %s9, 3
    %p115 = por %p113, %p114
    %p116 = scmp.ne.s32.totalorder %s108, %s111
    %p117 = scmp.eq.s32.totalorder %s9, 0
    %p118 = por %p116, %p117
    %p119 = scmp.ne.s32.totalorder %s108, %s111
    %p120 = scmp.eq.s32.totalorder %s14, 3
    %p121 = por %p119, %p120
    %p122 = scmp.ne.s32.totalorder %s111, %s112
    %p123 = scmp.eq.s32.totalorder %s14, 0
    %p124 = por %p122, %p123
    %p125 = scmp.ne.s32.totalorder %s111, %s112
    %p126 = scmp.eq.s32.totalorder %s15, 3
    %p127 = por %p125, %p126
    %p129 = scmp.ne.s32.totalorder %s112, %s128
    %p130 = scmp.eq.s32.totalorder %s15, 0
    %p131 = por %p129, %p130
    %p132 = scmp.le.s32.totalorder 1, %s9
    %p133 = scmp.lt.s32.totalorder %s9, 5
    %p134 = pnand %p132, %p133
    %p135 = pneg %p134
    // Predicated region
    $region9: #{ffvae_forward.10} parent=5 // pred_check
      _
    $region10: #{ffvae_forward.10} parent=5 // pred_check_branch
      %137 = sbr.rel (%p134) target = $region12
    $region11: #{ffvae_forward.10} parent=5 // pred_region
      %s138 = ssub.s32 %s9, 1
      // Predicated region
      $region13: #{ffvae_forward.10} parent=11 // pred_check
        %p139 = pneg %p75
      $region14: #{ffvae_forward.10} parent=11 // pred_check_branch
        %141 = sbr.rel (%p139) target = $region16
      $region15: #{ffvae_forward.10} parent=11 // pred_region
        %p142 = scmp.lt.s32.totalorder %s18, 0
        %s143 = scalar_select %p142, %s18, 0
        %s144 = smul.addr %s143, 6
        %s145 = smul.addr %s144, 4
        %s146 = scalar_lea.vmem %s1, %s145
      $region16: #{ffvae_forward.10} parent=11 // pred_fallthru
        _
      // Predicated region
      $region17: #{ffvae_forward.10} parent=11 // pred_check
        %p147 = pneg %p96
      $region18: #{ffvae_forward.10} parent=11 // pred_check_branch
        %149 = sbr.rel (%p147) target = $region20
      $region19: #{ffvae_forward.10} parent=11 // pred_region
        _
      $region20: #{ffvae_forward.10} parent=11 // pred_fallthru
        _
    $region12: #{ffvae_forward.10} parent=5 // pred_fallthru
      _
    %p150 = scmp.lt.s32.totalorder %s9, 4
    // Predicated region
    $region21: #{ffvae_forward.10} parent=5 // pred_check
      %p151 = pneg %p150
    $region22: #{ffvae_forward.10} parent=5 // pred_check_branch
      %153 = sbr.rel (%p151) target = $region24
    $region23: #{ffvae_forward.10} parent=5 // pred_region
      // Predicated region
      $region25: #{ffvae_forward.10} parent=23 // pred_check
        %p154 = pneg %p43
      $region26: #{ffvae_forward.10} parent=23 // pred_check_branch
        %156 = sbr.rel (%p154) target = $region28
      $region27: #{ffvae_forward.10} parent=23 // pred_region
        %s157 = smul.u32 64, %s17
        %p158 = scmp.lt.s32.totalorder %s16, 0
        %s159 = scalar_select %p158, %s16, 0
        %p160 = scmp.lt.s32.totalorder %s157, 255
        %s161 = scalar_select %p160, %s157, 255
        %s162 = smul.addr %s159, 256
        %s163 = sadd.s32 %s161, %s162
        %s164 = smul.addr %s163, 4
        %s165 = scalar_lea.vmem %s0, %s164
        %s166 = smul.u32 64, %s17
      $region28: #{ffvae_forward.10} parent=23 // pred_fallthru
        _
    $region24: #{ffvae_forward.10} parent=5 // pred_fallthru
      _
    %p167 = scmp.le.s32.totalorder 1, %s9
    %p168 = scmp.lt.s32.totalorder %s9, 5
    %p169 = pnand %p167, %p168
    %p170 = pneg %p169
    // Predicated region
    $region29: #{ffvae_forward.10} parent=5 // pred_check
      _
    $region30: #{ffvae_forward.10} parent=5 // pred_check_branch
      %172 = sbr.rel (%p169) target = $region32
    $region31: #{ffvae_forward.10} parent=5 // pred_region
      %s173 = ssub.s32 %s9, 1
      %s174 = smul.u32 64, %s19
      %p175 = scmp.lt.s32.totalorder %s18, 0
      %s176 = scalar_select %p175, %s18, 0
      %p177 = scmp.lt.s32.totalorder %s174, 255
      %s178 = scalar_select %p177, %s174, 255
      %s179 = smul.addr %s176, 256
      %s180 = sadd.s32 %s178, %s179
      %s181 = smul.addr %s180, 4
      %s182 = scalar_lea.vmem %s0, %s181
      %p183 = pneg %p49
      %p184 = pneg %p46
      %p185 = scmp.lt.s32.totalorder %s18, 0
      %s186 = scalar_select %p185, %s18, 0
      %s187 = smul.addr %s186, 6
      %s188 = smul.addr %s187, 4
      %s189 = scalar_lea.vmem %s1, %s188
      %p190 = pneg %p75
      %p191 = pneg %p72
      %p192 = pneg %p96
      %p193 = pneg %p93
      %p194 = pneg %p124
      %p195 = pneg %p121
      %s196 = smul.u32 64, %s19
      %p197 = scmp.lt.s32.totalorder %s18, 0
      %s198 = scalar_select %p197, %s18, 0
      %p199 = scmp.lt.s32.totalorder %s196, 255
      %s200 = scalar_select %p199, %s196, 255
      %s201 = smul.addr %s198, 256
      %s202 = sadd.s32 %s200, %s201
      %s203 = smul.addr %s202, 4
      %s204 = scalar_lea.vmem %s3, %s203
      %s205 = smul.u32 64, %s19
      %p206 = scmp.lt.s32.totalorder %s18, 0
      %s207 = scalar_select %p206, %s18, 0
      %p208 = scmp.lt.s32.totalorder %s205, 255
      %s209 = scalar_select %p208, %s205, 255
      %s210 = smul.addr %s207, 256
      %s211 = sadd.s32 %s209, %s210
      %s212 = smul.addr %s211, 4
      %s213 = scalar_lea.vmem %s0, %s212
      %s214 = smul.u32 64, %s19
      %p215 = scmp.lt.s32.totalorder %s18, 0
      %s216 = scalar_select %p215, %s18, 0
      %s217 = smul.addr %s216, 6
      %s218 = smul.addr %s217, 4
      %s219 = scalar_lea.vmem %s1, %s218
      %s220 = smul.u32 64, %s19
      %p221 = scmp.lt.s32.totalorder %s18, 0
      %s222 = scalar_select %p221, %s18, 0
      %p223 = scmp.lt.s32.totalorder %s220, 255
      %s224 = scalar_select %p223, %s220, 255
      %s225 = smul.addr %s222, 256
      %s226 = sadd.s32 %s224, %s225
      %s227 = smul.addr %s226, 4
      %s228 = scalar_lea.vmem %s3, %s227
      %s229 = smul.u32 64, %s19
      %v231 = vld [vmem:[%s213] sm:$0xf]
      %v232 = vld [vmem:[%s213 + $0x4] sm:$0xf]
      %v233 = vld [vmem:[%s213 + $0x8] sm:$0xf]
      %v234 = vld [vmem:[%s213 + $0xc] sm:$0xf]
      %v235 = vld [vmem:[%s213 + $0x10] sm:$0xf]
      %v236 = vld [vmem:[%s213 + $0x14] sm:$0xf]
      %v237 = vld [vmem:[%s213 + $0x18] sm:$0xf]
      %v238 = vld [vmem:[%s213 + $0x1c] sm:$0xf]
      %v239 = vld [vmem:[%s213 + $0x20] sm:$0xf]
      %v240 = vld [vmem:[%s213 + $0x24] sm:$0xf]
      %v241 = vld [vmem:[%s213 + $0x28] sm:$0xf]
      %v242 = vld [vmem:[%s213 + $0x2c] sm:$0xf]
      %v243 = vld [vmem:[%s213 + $0x30] sm:$0xf]
      %v244 = vld [vmem:[%s213 + $0x34] sm:$0xf]
      %v245 = vld [vmem:[%s213 + $0x38] sm:$0xf]
      %v246 = vld [vmem:[%s213 + $0x3c] sm:$0xf]
      %v247 = vld [vmem:[%s213 + $0x40] sm:$0xf]
      %v248 = vld [vmem:[%s213 + $0x44] sm:$0xf]
      %v249 = vld [vmem:[%s213 + $0x48] sm:$0xf]
      %v250 = vld [vmem:[%s213 + $0x4c] sm:$0xf]
      %v251 = vld [vmem:[%s213 + $0x50] sm:$0xf]
      %v252 = vld [vmem:[%s213 + $0x54] sm:$0xf]
      %v253 = vld [vmem:[%s213 + $0x58] sm:$0xf]
      %v254 = vld [vmem:[%s213 + $0x5c] sm:$0xf]
      %v255 = vld [vmem:[%s213 + $0x60] sm:$0xf]
      %v256 = vld [vmem:[%s213 + $0x64] sm:$0xf]
      %v257 = vld [vmem:[%s213 + $0x68] sm:$0xf]
      %v258 = vld [vmem:[%s213 + $0x6c] sm:$0xf]
      %v259 = vld [vmem:[%s213 + $0x70] sm:$0xf]
      %v260 = vld [vmem:[%s213 + $0x74] sm:$0xf]
      %v261 = vld [vmem:[%s213 + $0x78] sm:$0xf]
      %v262 = vld [vmem:[%s213 + $0x7c] sm:$0xf]
      %v263 = vld [vmem:[%s213 + $0x80] sm:$0xf]
      %v264 = vld [vmem:[%s213 + $0x84] sm:$0xf]
      %v265 = vld [vmem:[%s213 + $0x88] sm:$0xf]
      %v266 = vld [vmem:[%s213 + $0x8c] sm:$0xf]
      %v267 = vld [vmem:[%s213 + $0x90] sm:$0xf]
      %v268 = vld [vmem:[%s213 + $0x94] sm:$0xf]
      %v269 = vld [vmem:[%s213 + $0x98] sm:$0xf]
      %v270 = vld [vmem:[%s213 + $0x9c] sm:$0xf]
      %v271 = vld [vmem:[%s213 + $0xa0] sm:$0xf]
      %v272 = vld [vmem:[%s213 + $0xa4] sm:$0xf]
      %v273 = vld [vmem:[%s213 + $0xa8] sm:$0xf]
      %v274 = vld [vmem:[%s213 + $0xac] sm:$0xf]
      %v275 = vld [vmem:[%s213 + $0xb0] sm:$0xf]
      %v276 = vld [vmem:[%s213 + $0xb4] sm:$0xf]
      %v277 = vld [vmem:[%s213 + $0xb8] sm:$0xf]
      %v278 = vld [vmem:[%s213 + $0xbc] sm:$0xf]
      %v279 = vld [vmem:[%s213 + $0xc0] sm:$0xf]
      %v280 = vld [vmem:[%s213 + $0xc4] sm:$0xf]
      %v281 = vld [vmem:[%s213 + $0xc8] sm:$0xf]
      %v282 = vld [vmem:[%s213 + $0xcc] sm:$0xf]
      %v283 = vld [vmem:[%s213 + $0xd0] sm:$0xf]
      %v284 = vld [vmem:[%s213 + $0xd4] sm:$0xf]
      %v285 = vld [vmem:[%s213 + $0xd8] sm:$0xf]
      %v286 = vld [vmem:[%s213 + $0xdc] sm:$0xf]
      %v287 = vld [vmem:[%s213 + $0xe0] sm:$0xf]
      %v288 = vld [vmem:[%s213 + $0xe4] sm:$0xf]
      %v289 = vld [vmem:[%s213 + $0xe8] sm:$0xf]
      %v290 = vld [vmem:[%s213 + $0xec] sm:$0xf]
      %v291 = vld [vmem:[%s213 + $0xf0] sm:$0xf]
      %v292 = vld [vmem:[%s213 + $0xf4] sm:$0xf]
      %v293 = vld [vmem:[%s213 + $0xf8] sm:$0xf]
      %v294 = vld [vmem:[%s213 + $0xfc] sm:$0xf]
      %v295 = vld [vmem:[%s219] sm:$0xf]
      %v296 = vld [vmem:[%s219 + $0x4] sm:$0xf]
      %v297 = vld [vmem:[%s219 + $0x8] sm:$0xf]
      %v298 = vld [vmem:[%s219 + $0xc] sm:$0xf]
      %v299 = vld [vmem:[%s219 + $0x10] sm:$0xf]
      %v300 = vld [vmem:[%s219 + $0x14] sm:$0xf]
      %v301 = vld [vmem:[%s2] sm:$0x1]
      %v303 = vlaneseq
      %v304 = vshrl.u32 %v303, 7
      %v305 = vsub.s32 0, %v304
      %v306 = vrot.slane %v301, %v305
      %v372 = vunpack.c.l.b16 %v231
      %v373 = vunpack.c.l.b16 %v232
      %v374 = vunpack.c.l.b16 %v233
      %v375 = vunpack.c.l.b16 %v234
      %v376 = vunpack.c.l.b16 %v235
      %v377 = vunpack.c.l.b16 %v236
      %v378 = vunpack.c.l.b16 %v237
      %v379 = vunpack.c.l.b16 %v238
      %v380 = vunpack.c.l.b16 %v239
      %v381 = vunpack.c.l.b16 %v240
      %v382 = vunpack.c.l.b16 %v241
      %v383 = vunpack.c.l.b16 %v242
      %v384 = vunpack.c.l.b16 %v243
      %v385 = vunpack.c.l.b16 %v244
      %v386 = vunpack.c.l.b16 %v245
      %v387 = vunpack.c.l.b16 %v246
      %v388 = vunpack.c.l.b16 %v247
      %v389 = vunpack.c.l.b16 %v248
      %v390 = vunpack.c.l.b16 %v249
      %v391 = vunpack.c.l.b16 %v250
      %v392 = vunpack.c.l.b16 %v251
      %v393 = vunpack.c.l.b16 %v252
      %v394 = vunpack.c.l.b16 %v253
      %v395 = vunpack.c.l.b16 %v254
      %v396 = vunpack.c.l.b16 %v255
      %v397 = vunpack.c.l.b16 %v256
      %v398 = vunpack.c.l.b16 %v257
      %v399 = vunpack.c.l.b16 %v258
      %v400 = vunpack.c.l.b16 %v259
      %v401 = vunpack.c.l.b16 %v260
      %v402 = vunpack.c.l.b16 %v261
      %v403 = vunpack.c.l.b16 %v262
      %v404 = vunpack.c.l.b16 %v263
      %v405 = vunpack.c.l.b16 %v264
      %v406 = vunpack.c.l.b16 %v265
      %v407 = vunpack.c.l.b16 %v266
      %v408 = vunpack.c.l.b16 %v267
      %v409 = vunpack.c.l.b16 %v268
      %v410 = vunpack.c.l.b16 %v269
      %v411 = vunpack.c.l.b16 %v270
      %v412 = vunpack.c.l.b16 %v271
      %v413 = vunpack.c.l.b16 %v272
      %v414 = vunpack.c.l.b16 %v273
      %v415 = vunpack.c.l.b16 %v274
      %v416 = vunpack.c.l.b16 %v275
      %v417 = vunpack.c.l.b16 %v276
      %v418 = vunpack.c.l.b16 %v277
      %v419 = vunpack.c.l.b16 %v278
      %v420 = vunpack.c.l.b16 %v279
      %v421 = vunpack.c.l.b16 %v280
      %v422 = vunpack.c.l.b16 %v281
      %v423 = vunpack.c.l.b16 %v282
      %v424 = vunpack.c.l.b16 %v283
      %v425 = vunpack.c.l.b16 %v284
      %v426 = vunpack.c.l.b16 %v285
      %v427 = vunpack.c.l.b16 %v286
      %v428 = vunpack.c.l.b16 %v287
      %v429 = vunpack.c.l.b16 %v288
      %v430 = vunpack.c.l.b16 %v289
      %v431 = vunpack.c.l.b16 %v290
      %v432 = vunpack.c.l.b16 %v291
      %v433 = vunpack.c.l.b16 %v292
      %v434 = vunpack.c.l.b16 %v293
      %v435 = vunpack.c.l.b16 %v294
      %v436 = vpack.c.b16 %v373, %v372
      %v437 = vpack.c.b16 %v375, %v374
      %v438 = vpack.c.b16 %v377, %v376
      %v439 = vpack.c.b16 %v379, %v378
      %v440 = vpack.c.b16 %v381, %v380
      %v441 = vpack.c.b16 %v383, %v382
      %v442 = vpack.c.b16 %v385, %v384
      %v443 = vpack.c.b16 %v387, %v386
      %v444 = vpack.c.b16 %v389, %v388
      %v445 = vpack.c.b16 %v391, %v390
      %v446 = vpack.c.b16 %v393, %v392
      %v447 = vpack.c.b16 %v395, %v394
      %v448 = vpack.c.b16 %v397, %v396
      %v449 = vpack.c.b16 %v399, %v398
      %v450 = vpack.c.b16 %v401, %v400
      %v451 = vpack.c.b16 %v403, %v402
      %v452 = vpack.c.b16 %v405, %v404
      %v453 = vpack.c.b16 %v407, %v406
      %v454 = vpack.c.b16 %v409, %v408
      %v455 = vpack.c.b16 %v411, %v410
      %v456 = vpack.c.b16 %v413, %v412
      %v457 = vpack.c.b16 %v415, %v414
      %v458 = vpack.c.b16 %v417, %v416
      %v459 = vpack.c.b16 %v419, %v418
      %v460 = vpack.c.b16 %v421, %v420
      %v461 = vpack.c.b16 %v423, %v422
      %v462 = vpack.c.b16 %v425, %v424
      %v463 = vpack.c.b16 %v427, %v426
      %v464 = vpack.c.b16 %v429, %v428
      %v465 = vpack.c.b16 %v431, %v430
      %v466 = vpack.c.b16 %v433, %v432
      %v467 = vpack.c.b16 %v435, %v434
      %v474 = vunpack.c.l.b16 %v295
      %v475 = vunpack.c.l.b16 %v296
      %v476 = vunpack.c.l.b16 %v297
      %v477 = vunpack.c.l.b16 %v298
      %v478 = vunpack.c.l.b16 %v299
      %v479 = vunpack.c.l.b16 %v300
      %v480 = vpack.c.b16 %v475, %v474
      %v481 = vpack.c.b16 %v477, %v476
      %v482 = vpack.c.b16 %v479, %v478
      %vm486 = vcmask 392192
      %v488 = vsel %vm486, %v436, 0
      %v491 = vsel %vm486, %v437, 0
      %v494 = vsel %vm486, %v438, 0
      %v497 = vsel %vm486, %v439, 0
      %v500 = vsel %vm486, %v440, 0
      %v503 = vsel %vm486, %v441, 0
      %v506 = vsel %vm486, %v442, 0
      %v509 = vsel %vm486, %v443, 0
      %v512 = vsel %vm486, %v444, 0
      %v515 = vsel %vm486, %v445, 0
      %v518 = vsel %vm486, %v446, 0
      %v521 = vsel %vm486, %v447, 0
      %v524 = vsel %vm486, %v448, 0
      %v527 = vsel %vm486, %v449, 0
      %v530 = vsel %vm486, %v450, 0
      %v533 = vsel %vm486, %v451, 0
      %v536 = vsel %vm486, %v452, 0
      %v539 = vsel %vm486, %v453, 0
      %v542 = vsel %vm486, %v454, 0
      %v545 = vsel %vm486, %v455, 0
      %v548 = vsel %vm486, %v456, 0
      %v551 = vsel %vm486, %v457, 0
      %v554 = vsel %vm486, %v458, 0
      %v557 = vsel %vm486, %v459, 0
      %v560 = vsel %vm486, %v460, 0
      %v563 = vsel %vm486, %v461, 0
      %v566 = vsel %vm486, %v462, 0
      %v569 = vsel %vm486, %v463, 0
      %v572 = vsel %vm486, %v464, 0
      %v575 = vsel %vm486, %v465, 0
      %v578 = vsel %vm486, %v466, 0
      %v581 = vsel %vm486, %v467, 0
      %583 = vmatprep.subr.bf16.mxu0 0
      %584 = vmatpush1.bf16.msra.mxu0 %v480
      %585 = vmatprep.subr.bf16.mxu0 0
      %586 = vmatpush1.bf16.msra.mxu0 %v481
      %587 = vmatprep.subr.bf16.mxu0 0
      %588 = vmatpush1.bf16.msra.mxu0 %v482
      %589 = vmatprep.subr.bf16.mxu0 0
      %590 = vmatpush1.bf16.msra.mxu0 0
      %591 = vmatprep.subr.bf16.mxu0 0
      %592 = vmatpush1.bf16.msra.mxu0 0
      %593 = vmatprep.subr.bf16.mxu0 0
      %594 = vmatpush1.bf16.msra.mxu0 0
      %595 = vmatprep.subr.bf16.mxu0 0
      %596 = vmatpush1.bf16.msra.mxu0 0
      %597 = vmatprep.subr.bf16.mxu0 0
      %598 = vmatpush1.bf16.msra.mxu0 0
      %599 = vmatprep.subr.bf16.mxu0 0
      %600 = vmatpush1.bf16.msra.mxu0 0
      %601 = vmatprep.subr.bf16.mxu0 0
      %602 = vmatpush1.bf16.msra.mxu0 0
      %603 = vmatprep.subr.bf16.mxu0 0
      %604 = vmatpush1.bf16.msra.mxu0 0
      %605 = vmatprep.subr.bf16.mxu0 0
      %606 = vmatpush1.bf16.msra.mxu0 0
      %607 = vmatprep.subr.bf16.mxu0 0
      %608 = vmatpush1.bf16.msra.mxu0 0
      %609 = vmatprep.subr.bf16.mxu0 0
      %610 = vmatpush1.bf16.msra.mxu0 0
      %611 = vmatprep.subr.bf16.mxu0 0
      %612 = vmatpush1.bf16.msra.mxu0 0
      %613 = vmatprep.subr.bf16.mxu0 0
      %614 = vmatpush1.bf16.msra.mxu0 0
      %615 = vmatprep.mubr.bf16.mxu0 0
      %616 = vmatmul.mubr.bf16.gmra.mrb[0].mxu0 %v488
      %v617 = vpop.f32.mrb[0].mxu0
      %v618 = vadd.f32 %v306, %v617
      %v619 = vpop.f32.mrb[0].mxu0
      %v620 = vpop.f32.mrb[0].mxu0
      %v621 = vadd.f32 %v306, %v620
      %v622 = vpop.f32.mrb[0].mxu0
      %623 = vmatprep.mubr.bf16.mxu0 0
      %624 = vmatmul.mubr.bf16.gmra.mrb[0].mxu0 %v491
      %v625 = vpop.f32.mrb[0].mxu0
      %v626 = vadd.f32 %v306, %v625
      %v627 = vpop.f32.mrb[0].mxu0
      %v628 = vpop.f32.mrb[0].mxu0
      %v629 = vadd.f32 %v306, %v628
      %v630 = vpop.f32.mrb[0].mxu0
      %631 = vmatprep.mubr.bf16.mxu0 0
      %632 = vmatmul.mubr.bf16.gmra.mrb[0].mxu0 %v494
      %v633 = vpop.f32.mrb[0].mxu0
      %v634 = vadd.f32 %v306, %v633
      %v635 = vpop.f32.mrb[0].mxu0
      %v636 = vpop.f32.mrb[0].mxu0
      %v637 = vadd.f32 %v306, %v636
      %v638 = vpop.f32.mrb[0].mxu0
      %639 = vmatprep.mubr.bf16.mxu0 0
      %640 = vmatmul.mubr.bf16.gmra.mrb[0].mxu0 %v497
      %v641 = vpop.f32.mrb[0].mxu0
      %v642 = vadd.f32 %v306, %v641
      %v643 = vpop.f32.mrb[0].mxu0
      %v644 = vpop.f32.mrb[0].mxu0
      %v645 = vadd.f32 %v306, %v644
      %v646 = vpop.f32.mrb[0].mxu0
      %647 = vmatprep.mubr.bf16.mxu0 0
      %648 = vmatmul.mubr.bf16.gmra.mrb[0].mxu0 %v500
      %v649 = vpop.f32.mrb[0].mxu0
      %v650 = vadd.f32 %v306, %v649
      %v651 = vpop.f32.mrb[0].mxu0
      %v652 = vpop.f32.mrb[0].mxu0
      %v653 = vadd.f32 %v306, %v652
      %v654 = vpop.f32.mrb[0].mxu0
      %655 = vmatprep.mubr.bf16.mxu0 0
      %656 = vmatmul.mubr.bf16.gmra.mrb[0].mxu0 %v503
      %v657 = vpop.f32.mrb[0].mxu0
      %v658 = vadd.f32 %v306, %v657
      %v659 = vpop.f32.mrb[0].mxu0
      %v660 = vpop.f32.mrb[0].mxu0
      %v661 = vadd.f32 %v306, %v660
      %v662 = vpop.f32.mrb[0].mxu0
      %663 = vmatprep.mubr.bf16.mxu0 0
      %664 = vmatmul.mubr.bf16.gmra.mrb[0].mxu0 %v506
      %v665 = vpop.f32.mrb[0].mxu0
      %v666 = vadd.f32 %v306, %v665
      %v667 = vpop.f32.mrb[0].mxu0
      %v668 = vpop.f32.mrb[0].mxu0
      %v669 = vadd.f32 %v306, %v668
      %v670 = vpop.f32.mrb[0].mxu0
      %671 = vmatprep.mubr.bf16.mxu0 0
      %672 = vmatmul.mubr.bf16.gmra.mrb[0].mxu0 %v509
      %v673 = vpop.f32.mrb[0].mxu0
      %v674 = vadd.f32 %v306, %v673
      %v675 = vpop.f32.mrb[0].mxu0
      %v676 = vpop.f32.mrb[0].mxu0
      %v677 = vadd.f32 %v306, %v676
      %v678 = vpop.f32.mrb[0].mxu0
      %679 = vmatprep.mubr.bf16.mxu0 0
      %680 = vmatmul.mubr.bf16.gmra.mrb[0].mxu0 %v512
      %v681 = vpop.f32.mrb[0].mxu0
      %v682 = vadd.f32 %v306, %v681
      %v683 = vpop.f32.mrb[0].mxu0
      %v684 = vpop.f32.mrb[0].mxu0
      %v685 = vadd.f32 %v306, %v684
      %v686 = vpop.f32.mrb[0].mxu0
      %687 = vmatprep.mubr.bf16.mxu0 0
      %688 = vmatmul.mubr.bf16.gmra.mrb[0].mxu0 %v515
      %v689 = vpop.f32.mrb[0].mxu0
      %v690 = vadd.f32 %v306, %v689
      %v691 = vpop.f32.mrb[0].mxu0
      %v692 = vpop.f32.mrb[0].mxu0
      %v693 = vadd.f32 %v306, %v692
      %v694 = vpop.f32.mrb[0].mxu0
      %695 = vmatprep.mubr.bf16.mxu0 0
      %696 = vmatmul.mubr.bf16.gmra.mrb[0].mxu0 %v518
      %v697 = vpop.f32.mrb[0].mxu0
      %v698 = vadd.f32 %v306, %v697
      %v699 = vpop.f32.mrb[0].mxu0
      %v700 = vpop.f32.mrb[0].mxu0
      %v701 = vadd.f32 %v306, %v700
      %v702 = vpop.f32.mrb[0].mxu0
      %703 = vmatprep.mubr.bf16.mxu0 0
      %704 = vmatmul.mubr.bf16.gmra.mrb[0].mxu0 %v521
      %v705 = vpop.f32.mrb[0].mxu0
      %v706 = vadd.f32 %v306, %v705
      %v707 = vpop.f32.mrb[0].mxu0
      %v708 = vpop.f32.mrb[0].mxu0
      %v709 = vadd.f32 %v306, %v708
      %v710 = vpop.f32.mrb[0].mxu0
      %711 = vmatprep.mubr.bf16.mxu0 0
      %712 = vmatmul.mubr.bf16.gmra.mrb[0].mxu0 %v524
      %v713 = vpop.f32.mrb[0].mxu0
      %v714 = vadd.f32 %v306, %v713
      %v715 = vpop.f32.mrb[0].mxu0
      %v716 = vpop.f32.mrb[0].mxu0
      %v717 = vadd.f32 %v306, %v716
      %v718 = vpop.f32.mrb[0].mxu0
      %719 = vmatprep.mubr.bf16.mxu0 0
      %720 = vmatmul.mubr.bf16.gmra.mrb[0].mxu0 %v527
      %v721 = vpop.f32.mrb[0].mxu0
      %v722 = vadd.f32 %v306, %v721
      %v723 = vpop.f32.mrb[0].mxu0
      %v724 = vpop.f32.mrb[0].mxu0
      %v725 = vadd.f32 %v306, %v724
      %v726 = vpop.f32.mrb[0].mxu0
      %727 = vmatprep.mubr.bf16.mxu0 0
      %728 = vmatmul.mubr.bf16.gmra.mrb[0].mxu0 %v530
      %v729 = vpop.f32.mrb[0].mxu0
      %v730 = vadd.f32 %v306, %v729
      %v731 = vpop.f32.mrb[0].mxu0
      %v732 = vpop.f32.mrb[0].mxu0
      %v733 = vadd.f32 %v306, %v732
      %v734 = vpop.f32.mrb[0].mxu0
      %735 = vmatprep.mubr.bf16.mxu0 0
      %736 = vmatmul.mubr.bf16.gmra.mrb[0].mxu0 %v533
      %v737 = vpop.f32.mrb[0].mxu0
      %v738 = vadd.f32 %v306, %v737
      %v739 = vpop.f32.mrb[0].mxu0
      %v740 = vpop.f32.mrb[0].mxu0
      %v741 = vadd.f32 %v306, %v740
      %v742 = vpop.f32.mrb[0].mxu0
      %743 = vmatprep.mubr.bf16.mxu0 0
      %744 = vmatmul.mubr.bf16.gmra.mrb[0].mxu0 %v536
      %v745 = vpop.f32.mrb[0].mxu0
      %v746 = vadd.f32 %v306, %v745
      %v747 = vpop.f32.mrb[0].mxu0
      %v748 = vpop.f32.mrb[0].mxu0
      %v749 = vadd.f32 %v306, %v748
      %v750 = vpop.f32.mrb[0].mxu0
      %751 = vmatprep.mubr.bf16.mxu0 0
      %752 = vmatmul.mubr.bf16.gmra.mrb[0].mxu0 %v539
      %v753 = vpop.f32.mrb[0].mxu0
      %v754 = vadd.f32 %v306, %v753
      %v755 = vpop.f32.mrb[0].mxu0
      %v756 = vpop.f32.mrb[0].mxu0
      %v757 = vadd.f32 %v306, %v756
      %v758 = vpop.f32.mrb[0].mxu0
      %759 = vmatprep.mubr.bf16.mxu0 0
      %760 = vmatmul.mubr.bf16.gmra.mrb[0].mxu0 %v542
      %v761 = vpop.f32.mrb[0].mxu0
      %v762 = vadd.f32 %v306, %v761
      %v763 = vpop.f32.mrb[0].mxu0
      %v764 = vpop.f32.mrb[0].mxu0
      %v765 = vadd.f32 %v306, %v764
      %v766 = vpop.f32.mrb[0].mxu0
      %767 = vmatprep.mubr.bf16.mxu0 0
      %768 = vmatmul.mubr.bf16.gmra.mrb[0].mxu0 %v545
      %v769 = vpop.f32.mrb[0].mxu0
      %v770 = vadd.f32 %v306, %v769
      %v771 = vpop.f32.mrb[0].mxu0
      %v772 = vpop.f32.mrb[0].mxu0
      %v773 = vadd.f32 %v306, %v772
      %v774 = vpop.f32.mrb[0].mxu0
      %775 = vmatprep.mubr.bf16.mxu0 0
      %776 = vmatmul.mubr.bf16.gmra.mrb[0].mxu0 %v548
      %v777 = vpop.f32.mrb[0].mxu0
      %v778 = vadd.f32 %v306, %v777
      %v779 = vpop.f32.mrb[0].mxu0
      %v780 = vpop.f32.mrb[0].mxu0
      %v781 = vadd.f32 %v306, %v780
      %v782 = vpop.f32.mrb[0].mxu0
      %783 = vmatprep.mubr.bf16.mxu0 0
      %784 = vmatmul.mubr.bf16.gmra.mrb[0].mxu0 %v551
      %v785 = vpop.f32.mrb[0].mxu0
      %v786 = vadd.f32 %v306, %v785
      %v787 = vpop.f32.mrb[0].mxu0
      %v788 = vpop.f32.mrb[0].mxu0
      %v789 = vadd.f32 %v306, %v788
      %v790 = vpop.f32.mrb[0].mxu0
      %791 = vmatprep.mubr.bf16.mxu0 0
      %792 = vmatmul.mubr.bf16.gmra.mrb[0].mxu0 %v554
      %v793 = vpop.f32.mrb[0].mxu0
      %v794 = vadd.f32 %v306, %v793
      %v795 = vpop.f32.mrb[0].mxu0
      %v796 = vpop.f32.mrb[0].mxu0
      %v797 = vadd.f32 %v306, %v796
      %v798 = vpop.f32.mrb[0].mxu0
      %799 = vmatprep.mubr.bf16.mxu0 0
      %800 = vmatmul.mubr.bf16.gmra.mrb[0].mxu0 %v557
      %v801 = vpop.f32.mrb[0].mxu0
      %v802 = vadd.f32 %v306, %v801
      %v803 = vpop.f32.mrb[0].mxu0
      %v804 = vpop.f32.mrb[0].mxu0
      %v805 = vadd.f32 %v306, %v804
      %v806 = vpop.f32.mrb[0].mxu0
      %807 = vmatprep.mubr.bf16.mxu0 0
      %808 = vmatmul.mubr.bf16.gmra.mrb[0].mxu0 %v560
      %v809 = vpop.f32.mrb[0].mxu0
      %v810 = vadd.f32 %v306, %v809
      %v811 = vpop.f32.mrb[0].mxu0
      %v812 = vpop.f32.mrb[0].mxu0
      %v813 = vadd.f32 %v306, %v812
      %v814 = vpop.f32.mrb[0].mxu0
      %815 = vmatprep.mubr.bf16.mxu0 0
      %816 = vmatmul.mubr.bf16.gmra.mrb[0].mxu0 %v563
      %v817 = vpop.f32.mrb[0].mxu0
      %v818 = vadd.f32 %v306, %v817
      %v819 = vpop.f32.mrb[0].mxu0
      %v820 = vpop.f32.mrb[0].mxu0
      %v821 = vadd.f32 %v306, %v820
      %v822 = vpop.f32.mrb[0].mxu0
      %823 = vmatprep.mubr.bf16.mxu0 0
      %824 = vmatmul.mubr.bf16.gmra.mrb[0].mxu0 %v566
      %v825 = vpop.f32.mrb[0].mxu0
      %v826 = vadd.f32 %v306, %v825
      %v827 = vpop.f32.mrb[0].mxu0
      %v828 = vpop.f32.mrb[0].mxu0
      %v829 = vadd.f32 %v306, %v828
      %v830 = vpop.f32.mrb[0].mxu0
      %831 = vmatprep.mubr.bf16.mxu0 0
      %832 = vmatmul.mubr.bf16.gmra.mrb[0].mxu0 %v569
      %v833 = vpop.f32.mrb[0].mxu0
      %v834 = vadd.f32 %v306, %v833
      %v835 = vpop.f32.mrb[0].mxu0
      %v836 = vpop.f32.mrb[0].mxu0
      %v837 = vadd.f32 %v306, %v836
      %v838 = vpop.f32.mrb[0].mxu0
      %839 = vmatprep.mubr.bf16.mxu0 0
      %840 = vmatmul.mubr.bf16.gmra.mrb[0].mxu0 %v572
      %v841 = vpop.f32.mrb[0].mxu0
      %v842 = vadd.f32 %v306, %v841
      %v843 = vpop.f32.mrb[0].mxu0
      %v844 = vpop.f32.mrb[0].mxu0
      %v845 = vadd.f32 %v306, %v844
      %v846 = vpop.f32.mrb[0].mxu0
      %847 = vmatprep.mubr.bf16.mxu0 0
      %848 = vmatmul.mubr.bf16.gmra.mrb[0].mxu0 %v575
      %v849 = vpop.f32.mrb[0].mxu0
      %v850 = vadd.f32 %v306, %v849
      %v851 = vpop.f32.mrb[0].mxu0
      %v852 = vpop.f32.mrb[0].mxu0
      %v853 = vadd.f32 %v306, %v852
      %v854 = vpop.f32.mrb[0].mxu0
      %855 = vmatprep.mubr.bf16.mxu0 0
      %856 = vmatmul.mubr.bf16.gmra.mrb[0].mxu0 %v578
      %v857 = vpop.f32.mrb[0].mxu0
      %v858 = vadd.f32 %v306, %v857
      %v859 = vpop.f32.mrb[0].mxu0
      %v860 = vpop.f32.mrb[0].mxu0
      %v861 = vadd.f32 %v306, %v860
      %v862 = vpop.f32.mrb[0].mxu0
      %863 = vmatprep.mubr.bf16.mxu0 0
      %864 = vmatmul.mubr.bf16.gmra.mrb[0].mxu0 %v581
      %v865 = vpop.f32.mrb[0].mxu0
      %v866 = vadd.f32 %v306, %v865
      %v867 = vpop.f32.mrb[0].mxu0
      %v868 = vpop.f32.mrb[0].mxu0
      %v869 = vadd.f32 %v306, %v868
      %v870 = vpop.f32.mrb[0].mxu0
      %871 = vdwg.mxu0
      %v872 = vmax.f32 %v618, 0.0
      %v873 = vmax.f32 %v621, 0.0
      %v874 = vmax.f32 %v626, 0.0
      %v875 = vmax.f32 %v629, 0.0
      %v876 = vmax.f32 %v634, 0.0
      %v877 = vmax.f32 %v637, 0.0
      %v878 = vmax.f32 %v642, 0.0
      %v879 = vmax.f32 %v645, 0.0
      %v880 = vmax.f32 %v650, 0.0
      %v881 = vmax.f32 %v653, 0.0
      %v882 = vmax.f32 %v658, 0.0
      %v883 = vmax.f32 %v661, 0.0
      %v884 = vmax.f32 %v666, 0.0
      %v885 = vmax.f32 %v669, 0.0
      %v886 = vmax.f32 %v674, 0.0
      %v887 = vmax.f32 %v677, 0.0
      %v888 = vmax.f32 %v682, 0.0
      %v889 = vmax.f32 %v685, 0.0
      %v890 = vmax.f32 %v690, 0.0
      %v891 = vmax.f32 %v693, 0.0
      %v892 = vmax.f32 %v698, 0.0
      %v893 = vmax.f32 %v701, 0.0
      %v894 = vmax.f32 %v706, 0.0
      %v895 = vmax.f32 %v709, 0.0
      %v896 = vmax.f32 %v714, 0.0
      %v897 = vmax.f32 %v717, 0.0
      %v898 = vmax.f32 %v722, 0.0
      %v899 = vmax.f32 %v725, 0.0
      %v900 = vmax.f32 %v730, 0.0
      %v901 = vmax.f32 %v733, 0.0
      %v902 = vmax.f32 %v738, 0.0
      %v903 = vmax.f32 %v741, 0.0
      %v904 = vmax.f32 %v746, 0.0
      %v905 = vmax.f32 %v749, 0.0
      %v906 = vmax.f32 %v754, 0.0
      %v907 = vmax.f32 %v757, 0.0
      %v908 = vmax.f32 %v762, 0.0
      %v909 = vmax.f32 %v765, 0.0
      %v910 = vmax.f32 %v770, 0.0
      %v911 = vmax.f32 %v773, 0.0
      %v912 = vmax.f32 %v778, 0.0
      %v913 = vmax.f32 %v781, 0.0
      %v914 = vmax.f32 %v786, 0.0
      %v915 = vmax.f32 %v789, 0.0
      %v916 = vmax.f32 %v794, 0.0
      %v917 = vmax.f32 %v797, 0.0
      %v918 = vmax.f32 %v802, 0.0
      %v919 = vmax.f32 %v805, 0.0
      %v920 = vmax.f32 %v810, 0.0
      %v921 = vmax.f32 %v813, 0.0
      %v922 = vmax.f32 %v818, 0.0
      %v923 = vmax.f32 %v821, 0.0
      %v924 = vmax.f32 %v826, 0.0
      %v925 = vmax.f32 %v829, 0.0
      %v926 = vmax.f32 %v834, 0.0
      %v927 = vmax.f32 %v837, 0.0
      %v928 = vmax.f32 %v842, 0.0
      %v929 = vmax.f32 %v845, 0.0
      %v930 = vmax.f32 %v850, 0.0
      %v931 = vmax.f32 %v853, 0.0
      %v932 = vmax.f32 %v858, 0.0
      %v933 = vmax.f32 %v861, 0.0
      %v934 = vmax.f32 %v866, 0.0
      %v935 = vmax.f32 %v869, 0.0
      %v936 = vpack.c.bf16 %v873, %v872
      %v937 = vpack.c.bf16 %v875, %v874
      %v938 = vpack.c.bf16 %v877, %v876
      %v939 = vpack.c.bf16 %v879, %v878
      %v940 = vpack.c.bf16 %v881, %v880
      %v941 = vpack.c.bf16 %v883, %v882
      %v942 = vpack.c.bf16 %v885, %v884
      %v943 = vpack.c.bf16 %v887, %v886
      %v944 = vpack.c.bf16 %v889, %v888
      %v945 = vpack.c.bf16 %v891, %v890
      %v946 = vpack.c.bf16 %v893, %v892
      %v947 = vpack.c.bf16 %v895, %v894
      %v948 = vpack.c.bf16 %v897, %v896
      %v949 = vpack.c.bf16 %v899, %v898
      %v950 = vpack.c.bf16 %v901, %v900
      %v951 = vpack.c.bf16 %v903, %v902
      %v952 = vpack.c.bf16 %v905, %v904
      %v953 = vpack.c.bf16 %v907, %v906
      %v954 = vpack.c.bf16 %v909, %v908
      %v955 = vpack.c.bf16 %v911, %v910
      %v956 = vpack.c.bf16 %v913, %v912
      %v957 = vpack.c.bf16 %v915, %v914
      %v958 = vpack.c.bf16 %v917, %v916
      %v959 = vpack.c.bf16 %v919, %v918
      %v960 = vpack.c.bf16 %v921, %v920
      %v961 = vpack.c.bf16 %v923, %v922
      %v962 = vpack.c.bf16 %v925, %v924
      %v963 = vpack.c.bf16 %v927, %v926
      %v964 = vpack.c.bf16 %v929, %v928
      %v965 = vpack.c.bf16 %v931, %v930
      %v966 = vpack.c.bf16 %v933, %v932
      %v967 = vpack.c.bf16 %v935, %v934
      %v1000 = vunpack.c.l.b16 %v936
      %v1001 = vunpack.c.h.b16 %v936
      %v1002 = vunpack.c.l.b16 %v937
      %v1003 = vunpack.c.h.b16 %v937
      %v1004 = vunpack.c.l.b16 %v938
      %v1005 = vunpack.c.h.b16 %v938
      %v1006 = vunpack.c.l.b16 %v939
      %v1007 = vunpack.c.h.b16 %v939
      %v1008 = vunpack.c.l.b16 %v940
      %v1009 = vunpack.c.h.b16 %v940
      %v1010 = vunpack.c.l.b16 %v941
      %v1011 = vunpack.c.h.b16 %v941
      %v1012 = vunpack.c.l.b16 %v942
      %v1013 = vunpack.c.h.b16 %v942
      %v1014 = vunpack.c.l.b16 %v943
      %v1015 = vunpack.c.h.b16 %v943
      %v1016 = vunpack.c.l.b16 %v944
      %v1017 = vunpack.c.h.b16 %v944
      %v1018 = vunpack.c.l.b16 %v945
      %v1019 = vunpack.c.h.b16 %v945
      %v1020 = vunpack.c.l.b16 %v946
      %v1021 = vunpack.c.h.b16 %v946
      %v1022 = vunpack.c.l.b16 %v947
      %v1023 = vunpack.c.h.b16 %v947
      %v1024 = vunpack.c.l.b16 %v948
      %v1025 = vunpack.c.h.b16 %v948
      %v1026 = vunpack.c.l.b16 %v949
      %v1027 = vunpack.c.h.b16 %v949
      %v1028 = vunpack.c.l.b16 %v950
      %v1029 = vunpack.c.h.b16 %v950
      %v1030 = vunpack.c.l.b16 %v951
      %v1031 = vunpack.c.h.b16 %v951
      %v1032 = vunpack.c.l.b16 %v952
      %v1033 = vunpack.c.h.b16 %v952
      %v1034 = vunpack.c.l.b16 %v953
      %v1035 = vunpack.c.h.b16 %v953
      %v1036 = vunpack.c.l.b16 %v954
      %v1037 = vunpack.c.h.b16 %v954
      %v1038 = vunpack.c.l.b16 %v955
      %v1039 = vunpack.c.h.b16 %v955
      %v1040 = vunpack.c.l.b16 %v956
      %v1041 = vunpack.c.h.b16 %v956
      %v1042 = vunpack.c.l.b16 %v957
      %v1043 = vunpack.c.h.b16 %v957
      %v1044 = vunpack.c.l.b16 %v958
      %v1045 = vunpack.c.h.b16 %v958
      %v1046 = vunpack.c.l.b16 %v959
      %v1047 = vunpack.c.h.b16 %v959
      %v1048 = vunpack.c.l.b16 %v960
      %v1049 = vunpack.c.h.b16 %v960
      %v1050 = vunpack.c.l.b16 %v961
      %v1051 = vunpack.c.h.b16 %v961
      %v1052 = vunpack.c.l.b16 %v962
      %v1053 = vunpack.c.h.b16 %v962
      %v1054 = vunpack.c.l.b16 %v963
      %v1055 = vunpack.c.h.b16 %v963
      %v1056 = vunpack.c.l.b16 %v964
      %v1057 = vunpack.c.h.b16 %v964
      %v1058 = vunpack.c.l.b16 %v965
      %v1059 = vunpack.c.h.b16 %v965
      %v1060 = vunpack.c.l.b16 %v966
      %v1061 = vunpack.c.h.b16 %v966
      %v1062 = vunpack.c.l.b16 %v967
      %v1063 = vunpack.c.h.b16 %v967
      %v1064 = vpack.c.b16 %v1000, %v1000
      %v1065 = vpack.c.b16 %v1001, %v1001
      %v1066 = vpack.c.b16 %v1002, %v1002
      %v1067 = vpack.c.b16 %v1003, %v1003
      %v1068 = vpack.c.b16 %v1004, %v1004
      %v1069 = vpack.c.b16 %v1005, %v1005
      %v1070 = vpack.c.b16 %v1006, %v1006
      %v1071 = vpack.c.b16 %v1007, %v1007
      %v1072 = vpack.c.b16 %v1008, %v1008
      %v1073 = vpack.c.b16 %v1009, %v1009
      %v1074 = vpack.c.b16 %v1010, %v1010
      %v1075 = vpack.c.b16 %v1011, %v1011
      %v1076 = vpack.c.b16 %v1012, %v1012
      %v1077 = vpack.c.b16 %v1013, %v1013
      %v1078 = vpack.c.b16 %v1014, %v1014
      %v1079 = vpack.c.b16 %v1015, %v1015
      %v1080 = vpack.c.b16 %v1016, %v1016
      %v1081 = vpack.c.b16 %v1017, %v1017
      %v1082 = vpack.c.b16 %v1018, %v1018
      %v1083 = vpack.c.b16 %v1019, %v1019
      %v1084 = vpack.c.b16 %v1020, %v1020
      %v1085 = vpack.c.b16 %v1021, %v1021
      %v1086 = vpack.c.b16 %v1022, %v1022
      %v1087 = vpack.c.b16 %v1023, %v1023
      %v1088 = vpack.c.b16 %v1024, %v1024
      %v1089 = vpack.c.b16 %v1025, %v1025
      %v1090 = vpack.c.b16 %v1026, %v1026
      %v1091 = vpack.c.b16 %v1027, %v1027
      %v1092 = vpack.c.b16 %v1028, %v1028
      %v1093 = vpack.c.b16 %v1029, %v1029
      %v1094 = vpack.c.b16 %v1030, %v1030
      %v1095 = vpack.c.b16 %v1031, %v1031
      %v1096 = vpack.c.b16 %v1032, %v1032
      %v1097 = vpack.c.b16 %v1033, %v1033
      %v1098 = vpack.c.b16 %v1034, %v1034
      %v1099 = vpack.c.b16 %v1035, %v1035
      %v1100 = vpack.c.b16 %v1036, %v1036
      %v1101 = vpack.c.b16 %v1037, %v1037
      %v1102 = vpack.c.b16 %v1038, %v1038
      %v1103 = vpack.c.b16 %v1039, %v1039
      %v1104 = vpack.c.b16 %v1040, %v1040
      %v1105 = vpack.c.b16 %v1041, %v1041
      %v1106 = vpack.c.b16 %v1042, %v1042
      %v1107 = vpack.c.b16 %v1043, %v1043
      %v1108 = vpack.c.b16 %v1044, %v1044
      %v1109 = vpack.c.b16 %v1045, %v1045
      %v1110 = vpack.c.b16 %v1046, %v1046
      %v1111 = vpack.c.b16 %v1047, %v1047
      %v1112 = vpack.c.b16 %v1048, %v1048
      %v1113 = vpack.c.b16 %v1049, %v1049
      %v1114 = vpack.c.b16 %v1050, %v1050
      %v1115 = vpack.c.b16 %v1051, %v1051
      %v1116 = vpack.c.b16 %v1052, %v1052
      %v1117 = vpack.c.b16 %v1053, %v1053
      %v1118 = vpack.c.b16 %v1054, %v1054
      %v1119 = vpack.c.b16 %v1055, %v1055
      %v1120 = vpack.c.b16 %v1056, %v1056
      %v1121 = vpack.c.b16 %v1057, %v1057
      %v1122 = vpack.c.b16 %v1058, %v1058
      %v1123 = vpack.c.b16 %v1059, %v1059
      %v1124 = vpack.c.b16 %v1060, %v1060
      %v1125 = vpack.c.b16 %v1061, %v1061
      %v1126 = vpack.c.b16 %v1062, %v1062
      %v1127 = vpack.c.b16 %v1063, %v1063
      %1192 = vst [vmem:[%s228] sm:$0xf] %v1064
      %1193 = vst [vmem:[%s228 + $0x4] sm:$0xf] %v1065
      %1194 = vst [vmem:[%s228 + $0x8] sm:$0xf] %v1066
      %1195 = vst [vmem:[%s228 + $0xc] sm:$0xf] %v1067
      %1196 = vst [vmem:[%s228 + $0x10] sm:$0xf] %v1068
      %1197 = vst [vmem:[%s228 + $0x14] sm:$0xf] %v1069
      %1198 = vst [vmem:[%s228 + $0x18] sm:$0xf] %v1070
      %1199 = vst [vmem:[%s228 + $0x1c] sm:$0xf] %v1071
      %1200 = vst [vmem:[%s228 + $0x20] sm:$0xf] %v1072
      %1201 = vst [vmem:[%s228 + $0x24] sm:$0xf] %v1073
      %1202 = vst [vmem:[%s228 + $0x28] sm:$0xf] %v1074
      %1203 = vst [vmem:[%s228 + $0x2c] sm:$0xf] %v1075
      %1204 = vst [vmem:[%s228 + $0x30] sm:$0xf] %v1076
      %1205 = vst [vmem:[%s228 + $0x34] sm:$0xf] %v1077
      %1206 = vst [vmem:[%s228 + $0x38] sm:$0xf] %v1078
      %1207 = vst [vmem:[%s228 + $0x3c] sm:$0xf] %v1079
      %1208 = vst [vmem:[%s228 + $0x40] sm:$0xf] %v1080
      %1209 = vst [vmem:[%s228 + $0x44] sm:$0xf] %v1081
      %1210 = vst [vmem:[%s228 + $0x48] sm:$0xf] %v1082
      %1211 = vst [vmem:[%s228 + $0x4c] sm:$0xf] %v1083
      %1212 = vst [vmem:[%s228 + $0x50] sm:$0xf] %v1084
      %1213 = vst [vmem:[%s228 + $0x54] sm:$0xf] %v1085
      %1214 = vst [vmem:[%s228 + $0x58] sm:$0xf] %v1086
      %1215 = vst [vmem:[%s228 + $0x5c] sm:$0xf] %v1087
      %1216 = vst [vmem:[%s228 + $0x60] sm:$0xf] %v1088
      %1217 = vst [vmem:[%s228 + $0x64] sm:$0xf] %v1089
      %1218 = vst [vmem:[%s228 + $0x68] sm:$0xf] %v1090
      %1219 = vst [vmem:[%s228 + $0x6c] sm:$0xf] %v1091
      %1220 = vst [vmem:[%s228 + $0x70] sm:$0xf] %v1092
      %1221 = vst [vmem:[%s228 + $0x74] sm:$0xf] %v1093
      %1222 = vst [vmem:[%s228 + $0x78] sm:$0xf] %v1094
      %1223 = vst [vmem:[%s228 + $0x7c] sm:$0xf] %v1095
      %1224 = vst [vmem:[%s228 + $0x80] sm:$0xf] %v1096
      %1225 = vst [vmem:[%s228 + $0x84] sm:$0xf] %v1097
      %1226 = vst [vmem:[%s228 + $0x88] sm:$0xf] %v1098
      %1227 = vst [vmem:[%s228 + $0x8c] sm:$0xf] %v1099
      %1228 = vst [vmem:[%s228 + $0x90] sm:$0xf] %v1100
      %1229 = vst [vmem:[%s228 + $0x94] sm:$0xf] %v1101
      %1230 = vst [vmem:[%s228 + $0x98] sm:$0xf] %v1102
      %1231 = vst [vmem:[%s228 + $0x9c] sm:$0xf] %v1103
      %1232 = vst [vmem:[%s228 + $0xa0] sm:$0xf] %v1104
      %1233 = vst [vmem:[%s228 + $0xa4] sm:$0xf] %v1105
      %1234 = vst [vmem:[%s228 + $0xa8] sm:$0xf] %v1106
      %1235 = vst [vmem:[%s228 + $0xac] sm:$0xf] %v1107
      %1236 = vst [vmem:[%s228 + $0xb0] sm:$0xf] %v1108
      %1237 = vst [vmem:[%s228 + $0xb4] sm:$0xf] %v1109
      %1238 = vst [vmem:[%s228 + $0xb8] sm:$0xf] %v1110
      %1239 = vst [vmem:[%s228 + $0xbc] sm:$0xf] %v1111
      %1240 = vst [vmem:[%s228 + $0xc0] sm:$0xf] %v1112
      %1241 = vst [vmem:[%s228 + $0xc4] sm:$0xf] %v1113
      %1242 = vst [vmem:[%s228 + $0xc8] sm:$0xf] %v1114
      %1243 = vst [vmem:[%s228 + $0xcc] sm:$0xf] %v1115
      %1244 = vst [vmem:[%s228 + $0xd0] sm:$0xf] %v1116
      %1245 = vst [vmem:[%s228 + $0xd4] sm:$0xf] %v1117
      %1246 = vst [vmem:[%s228 + $0xd8] sm:$0xf] %v1118
      %1247 = vst [vmem:[%s228 + $0xdc] sm:$0xf] %v1119
      %1248 = vst [vmem:[%s228 + $0xe0] sm:$0xf] %v1120
      %1249 = vst [vmem:[%s228 + $0xe4] sm:$0xf] %v1121
      %1250 = vst [vmem:[%s228 + $0xe8] sm:$0xf] %v1122
      %1251 = vst [vmem:[%s228 + $0xec] sm:$0xf] %v1123
      %1252 = vst [vmem:[%s228 + $0xf0] sm:$0xf] %v1124
      %1253 = vst [vmem:[%s228 + $0xf4] sm:$0xf] %v1125
      %1254 = vst [vmem:[%s228 + $0xf8] sm:$0xf] %v1126
      %1255 = vst [vmem:[%s228 + $0xfc] sm:$0xf] %v1127
      %s1256 = smul.u32 64, %s19
      %p1257 = scmp.lt.s32.totalorder %s18, 0
      %s1258 = scalar_select %p1257, %s18, 0
      %p1259 = scmp.lt.s32.totalorder %s1256, 255
      %s1260 = scalar_select %p1259, %s1256, 255
      %s1261 = smul.addr %s1258, 256
      %s1262 = sadd.s32 %s1260, %s1261
      %s1263 = smul.addr %s1262, 4
      %s1264 = scalar_lea.vmem %s3, %s1263
      // Predicated region
      $region33: #{ffvae_forward.10} parent=31 // pred_check
        %p1265 = pneg %p121
      $region34: #{ffvae_forward.10} parent=31 // pred_check_branch
        %1267 = sbr.rel (%p1265) target = $region36
      $region35: #{ffvae_forward.10} parent=31 // pred_region
        %s1268 = smul.u32 64, %s19
      $region36: #{ffvae_forward.10} parent=31 // pred_fallthru
        _
    $region32: #{ffvae_forward.10} parent=5 // pred_fallthru
      _
    %p1269 = scmp.le.s32.totalorder 2, %s9
    // Predicated region
    $region37: #{ffvae_forward.10} parent=5 // pred_check
      %p1270 = pneg %p1269
    $region38: #{ffvae_forward.10} parent=5 // pred_check_branch
      %1272 = sbr.rel (%p1270) target = $region40
    $region39: #{ffvae_forward.10} parent=5 // pred_region
      %s1273 = ssub.s32 %s9, 2
      // Predicated region
      $region41: #{ffvae_forward.10} parent=39 // pred_check
        %p1274 = pneg %p127
      $region42: #{ffvae_forward.10} parent=39 // pred_check_branch
        %1276 = sbr.rel (%p1274) target = $region44
      $region43: #{ffvae_forward.10} parent=39 // pred_region
        %s1277 = smul.u32 64, %s21
        %p1278 = scmp.lt.s32.totalorder %s20, 0
        %s1279 = scalar_select %p1278, %s20, 0
        %p1280 = scmp.lt.s32.totalorder %s1277, 255
        %s1281 = scalar_select %p1280, %s1277, 255
        %s1282 = smul.addr %s1279, 256
        %s1283 = sadd.s32 %s1281, %s1282
        %s1284 = smul.addr %s1283, 4
        %s1285 = scalar_lea.vmem %s3, %s1284
      $region44: #{ffvae_forward.10} parent=39 // pred_fallthru
        _
    $region40: #{ffvae_forward.10} parent=5 // pred_fallthru
      _
  $region6: #{ffvae_forward.10} parent=0 // loop_footer
    %s13 = sadd.s32 1, %s9
  $region7: #{ffvae_forward.10} parent=0 // loop_footer_branch
    %8 = sbr.rel target = $region3
  $region8: #{ffvae_forward.10} parent=0 // loop_exit
    _

// kernel: ffvae_forward.11
$region0: #{ffvae_forward.11}
  #allocation0 [shape = 'u32[]', space=smem, size = 0x4, offset = 0x4, fixed_abs, tag = 'smem constant byte address 0x4 - core index']
  #allocation1 [shape = 'u32[144,128]{1,0:T(1,128)}', space=vmem, size = 0x12000, scoped, tag = 'internal scratch']
  %s0 = inlined_call_operand.vmem [shape: bf16[1,512,512], index: 0, kind: input, shape index: {}]
  %s1 = inlined_call_operand.vmem [shape: bf16[1,512,128], index: 1, kind: input, shape index: {}]
  %s2 = inlined_call_operand.vmem [shape: f32[1,1,128], index: 2, kind: input, shape index: {}]
  %s3 = inlined_call_operand.vmem [shape: bf16[1,512,128], index: 3, kind: output, shape index: {}]
  %s4 = sld [smem:[#allocation0]]
  $region22: #{ffvae_forward.11} parent=0
    _
  %s6 = ssub.s32 1, %s4
  %s7 = scalar_select 0, %s6, %s4
  // Predicated region
  $region2: #{ffvae_forward.11} parent=0 // pred_check
    _
  $region3: #{ffvae_forward.11} parent=0 // pred_check_branch
    %9 = sbr.rel (0) target = $region5
  $region4: #{ffvae_forward.11} parent=0 // pred_region
    _
  $region5: #{ffvae_forward.11} parent=0 // pred_fallthru
    _
  // Predicated region
  $region6: #{ffvae_forward.11} parent=0 // pred_check
    _
  $region7: #{ffvae_forward.11} parent=0 // pred_check_branch
    %11 = sbr.rel (0) target = $region9
  $region8: #{ffvae_forward.11} parent=0 // pred_region
    _
  $region9: #{ffvae_forward.11} parent=0 // pred_fallthru
    _
  // Predicated region
  $region10: #{ffvae_forward.11} parent=0 // pred_check
    _
  $region11: #{ffvae_forward.11} parent=0 // pred_check_branch
    %13 = sbr.rel (0) target = $region13
  $region12: #{ffvae_forward.11} parent=0 // pred_region
    _
  $region13: #{ffvae_forward.11} parent=0 // pred_fallthru
    _
  %v15 = vld [vmem:[%s0] sm:$0xff]
  %v16 = vld [vmem:[%s0 + $0x8] sm:$0xff]
  %v17 = vld [vmem:[%s0 + $0x10] sm:$0xff]
  %v18 = vld [vmem:[%s0 + $0x18] sm:$0xff]
  %v19 = vld [vmem:[%s0 + $0x20] sm:$0xff]
  %v20 = vld [vmem:[%s0 + $0x28] sm:$0xff]
  %v21 = vld [vmem:[%s0 + $0x30] sm:$0xff]
  %v22 = vld [vmem:[%s0 + $0x38] sm:$0xff]
  %v23 = vld [vmem:[%s0 + $0x40] sm:$0xff]
  %v24 = vld [vmem:[%s0 + $0x48] sm:$0xff]
  %v25 = vld [vmem:[%s0 + $0x50] sm:$0xff]
  %v26 = vld [vmem:[%s0 + $0x58] sm:$0xff]
  %v27 = vld [vmem:[%s0 + $0x60] sm:$0xff]
  %v28 = vld [vmem:[%s0 + $0x68] sm:$0xff]
  %v29 = vld [vmem:[%s0 + $0x70] sm:$0xff]
  %v30 = vld [vmem:[%s0 + $0x78] sm:$0xff]
  %v31 = vld [vmem:[%s0 + $0x80] sm:$0xff]
  %v32 = vld [vmem:[%s0 + $0x88] sm:$0xff]
  %v33 = vld [vmem:[%s0 + $0x90] sm:$0xff]
  %v34 = vld [vmem:[%s0 + $0x98] sm:$0xff]
  %v35 = vld [vmem:[%s0 + $0xa0] sm:$0xff]
  %v36 = vld [vmem:[%s0 + $0xa8] sm:$0xff]
  %v37 = vld [vmem:[%s0 + $0xb0] sm:$0xff]
  %v38 = vld [vmem:[%s0 + $0xb8] sm:$0xff]
  %v39 = vld [vmem:[%s0 + $0xc0] sm:$0xff]
  %v40 = vld [vmem:[%s0 + $0xc8] sm:$0xff]
  %v41 = vld [vmem:[%s0 + $0xd0] sm:$0xff]
  %v42 = vld [vmem:[%s0 + $0xd8] sm:$0xff]
  %v43 = vld [vmem:[%s0 + $0xe0] sm:$0xff]
  %v44 = vld [vmem:[%s0 + $0xe8] sm:$0xff]
  %v45 = vld [vmem:[%s0 + $0xf0] sm:$0xff]
  %v46 = vld [vmem:[%s0 + $0xf8] sm:$0xff]
  %v47 = vld [vmem:[%s0 + $0x100] sm:$0xff]
  %v48 = vld [vmem:[%s0 + $0x108] sm:$0xff]
  %v49 = vld [vmem:[%s0 + $0x110] sm:$0xff]
  %v50 = vld [vmem:[%s0 + $0x118] sm:$0xff]
  %v51 = vld [vmem:[%s0 + $0x120] sm:$0xff]
  %v52 = vld [vmem:[%s0 + $0x128] sm:$0xff]
  %v53 = vld [vmem:[%s0 + $0x130] sm:$0xff]
  %v54 = vld [vmem:[%s0 + $0x138] sm:$0xff]
  %v55 = vld [vmem:[%s0 + $0x140] sm:$0xff]
  %v56 = vld [vmem:[%s0 + $0x148] sm:$0xff]
  %v57 = vld [vmem:[%s0 + $0x150] sm:$0xff]
  %v58 = vld [vmem:[%s0 + $0x158] sm:$0xff]
  %v59 = vld [vmem:[%s0 + $0x160] sm:$0xff]
  %v60 = vld [vmem:[%s0 + $0x168] sm:$0xff]
  %v61 = vld [vmem:[%s0 + $0x170] sm:$0xff]
  %v62 = vld [vmem:[%s0 + $0x178] sm:$0xff]
  %v63 = vld [vmem:[%s0 + $0x180] sm:$0xff]
  %v64 = vld [vmem:[%s0 + $0x188] sm:$0xff]
  %v65 = vld [vmem:[%s0 + $0x190] sm:$0xff]
  %v66 = vld [vmem:[%s0 + $0x198] sm:$0xff]
  %v67 = vld [vmem:[%s0 + $0x1a0] sm:$0xff]
  %v68 = vld [vmem:[%s0 + $0x1a8] sm:$0xff]
  %v69 = vld [vmem:[%s0 + $0x1b0] sm:$0xff]
  %v70 = vld [vmem:[%s0 + $0x1b8] sm:$0xff]
  %v71 = vld [vmem:[%s0 + $0x1c0] sm:$0xff]
  %v72 = vld [vmem:[%s0 + $0x1c8] sm:$0xff]
  %v73 = vld [vmem:[%s0 + $0x1d0] sm:$0xff]
  %v74 = vld [vmem:[%s0 + $0x1d8] sm:$0xff]
  %v75 = vld [vmem:[%s0 + $0x1e0] sm:$0xff]
  %v76 = vld [vmem:[%s0 + $0x1e8] sm:$0xff]
  %v77 = vld [vmem:[%s0 + $0x1f0] sm:$0xff]
  %v78 = vld [vmem:[%s0 + $0x1f8] sm:$0xff]
  %v79 = vld [vmem:[%s0 + $0x200] sm:$0xff]
  %v80 = vld [vmem:[%s0 + $0x208] sm:$0xff]
  %v81 = vld [vmem:[%s0 + $0x210] sm:$0xff]
  %v82 = vld [vmem:[%s0 + $0x218] sm:$0xff]
  %v83 = vld [vmem:[%s0 + $0x220] sm:$0xff]
  %v84 = vld [vmem:[%s0 + $0x228] sm:$0xff]
  %v85 = vld [vmem:[%s0 + $0x230] sm:$0xff]
  %v86 = vld [vmem:[%s0 + $0x238] sm:$0xff]
  %v87 = vld [vmem:[%s0 + $0x240] sm:$0xff]
  %v88 = vld [vmem:[%s0 + $0x248] sm:$0xff]
  %v89 = vld [vmem:[%s0 + $0x250] sm:$0xff]
  %v90 = vld [vmem:[%s0 + $0x258] sm:$0xff]
  %v91 = vld [vmem:[%s0 + $0x260] sm:$0xff]
  %v92 = vld [vmem:[%s0 + $0x268] sm:$0xff]
  %v93 = vld [vmem:[%s0 + $0x270] sm:$0xff]
  %v94 = vld [vmem:[%s0 + $0x278] sm:$0xff]
  %v95 = vld [vmem:[%s0 + $0x280] sm:$0xff]
  %v96 = vld [vmem:[%s0 + $0x288] sm:$0xff]
  %v97 = vld [vmem:[%s0 + $0x290] sm:$0xff]
  %v98 = vld [vmem:[%s0 + $0x298] sm:$0xff]
  %v99 = vld [vmem:[%s0 + $0x2a0] sm:$0xff]
  %v100 = vld [vmem:[%s0 + $0x2a8] sm:$0xff]
  %v101 = vld [vmem:[%s0 + $0x2b0] sm:$0xff]
  %v102 = vld [vmem:[%s0 + $0x2b8] sm:$0xff]
  %v103 = vld [vmem:[%s0 + $0x2c0] sm:$0xff]
  %v104 = vld [vmem:[%s0 + $0x2c8] sm:$0xff]
  %v105 = vld [vmem:[%s0 + $0x2d0] sm:$0xff]
  %v106 = vld [vmem:[%s0 + $0x2d8] sm:$0xff]
  %v107 = vld [vmem:[%s0 + $0x2e0] sm:$0xff]
  %v108 = vld [vmem:[%s0 + $0x2e8] sm:$0xff]
  %v109 = vld [vmem:[%s0 + $0x2f0] sm:$0xff]
  %v110 = vld [vmem:[%s0 + $0x2f8] sm:$0xff]
  %v111 = vld [vmem:[%s0 + $0x300] sm:$0xff]
  %v112 = vld [vmem:[%s0 + $0x308] sm:$0xff]
  %v113 = vld [vmem:[%s0 + $0x310] sm:$0xff]
  %v114 = vld [vmem:[%s0 + $0x318] sm:$0xff]
  %v115 = vld [vmem:[%s0 + $0x320] sm:$0xff]
  %v116 = vld [vmem:[%s0 + $0x328] sm:$0xff]
  %v117 = vld [vmem:[%s0 + $0x330] sm:$0xff]
  %v118 = vld [vmem:[%s0 + $0x338] sm:$0xff]
  %v119 = vld [vmem:[%s0 + $0x340] sm:$0xff]
  %v120 = vld [vmem:[%s0 + $0x348] sm:$0xff]
  %v121 = vld [vmem:[%s0 + $0x350] sm:$0xff]
  %v122 = vld [vmem:[%s0 + $0x358] sm:$0xff]
  %v123 = vld [vmem:[%s0 + $0x360] sm:$0xff]
  %v124 = vld [vmem:[%s0 + $0x368] sm:$0xff]
  %v125 = vld [vmem:[%s0 + $0x370] sm:$0xff]
  %v126 = vld [vmem:[%s0 + $0x378] sm:$0xff]
  %v127 = vld [vmem:[%s0 + $0x380] sm:$0xff]
  %v128 = vld [vmem:[%s0 + $0x388] sm:$0xff]
  %v129 = vld [vmem:[%s0 + $0x390] sm:$0xff]
  %v130 = vld [vmem:[%s0 + $0x398] sm:$0xff]
  %v131 = vld [vmem:[%s0 + $0x3a0] sm:$0xff]
  %v132 = vld [vmem:[%s0 + $0x3a8] sm:$0xff]
  %v133 = vld [vmem:[%s0 + $0x3b0] sm:$0xff]
  %v134 = vld [vmem:[%s0 + $0x3b8] sm:$0xff]
  %v135 = vld [vmem:[%s0 + $0x3c0] sm:$0xff]
  %v136 = vld [vmem:[%s0 + $0x3c8] sm:$0xff]
  %v137 = vld [vmem:[%s0 + $0x3d0] sm:$0xff]
  %v138 = vld [vmem:[%s0 + $0x3d8] sm:$0xff]
  %v139 = vld [vmem:[%s0 + $0x3e0] sm:$0xff]
  %v140 = vld [vmem:[%s0 + $0x3e8] sm:$0xff]
  %v141 = vld [vmem:[%s0 + $0x3f0] sm:$0xff]
  %v142 = vld [vmem:[%s0 + $0x3f8] sm:$0xff]
  %v143 = vld [vmem:[%s1] sm:$0xf]
  %v144 = vld [vmem:[%s1 + $0x4] sm:$0xf]
  %v145 = vld [vmem:[%s1 + $0x8] sm:$0xf]
  %v146 = vld [vmem:[%s1 + $0xc] sm:$0xf]
  %v147 = vld [vmem:[%s1 + $0x10] sm:$0xf]
  %v148 = vld [vmem:[%s1 + $0x14] sm:$0xf]
  %v149 = vld [vmem:[%s1 + $0x18] sm:$0xf]
  %v150 = vld [vmem:[%s1 + $0x1c] sm:$0xf]
  %v151 = vld [vmem:[%s1 + $0x20] sm:$0xf]
  %v152 = vld [vmem:[%s1 + $0x24] sm:$0xf]
  %v153 = vld [vmem:[%s1 + $0x28] sm:$0xf]
  %v154 = vld [vmem:[%s1 + $0x2c] sm:$0xf]
  %v155 = vld [vmem:[%s1 + $0x30] sm:$0xf]
  %v156 = vld [vmem:[%s1 + $0x34] sm:$0xf]
  %v157 = vld [vmem:[%s1 + $0x38] sm:$0xf]
  %v158 = vld [vmem:[%s1 + $0x3c] sm:$0xf]
  %v159 = vld [vmem:[%s1 + $0x40] sm:$0xf]
  %v160 = vld [vmem:[%s1 + $0x44] sm:$0xf]
  %v161 = vld [vmem:[%s1 + $0x48] sm:$0xf]
  %v162 = vld [vmem:[%s1 + $0x4c] sm:$0xf]
  %v163 = vld [vmem:[%s1 + $0x50] sm:$0xf]
  %v164 = vld [vmem:[%s1 + $0x54] sm:$0xf]
  %v165 = vld [vmem:[%s1 + $0x58] sm:$0xf]
  %v166 = vld [vmem:[%s1 + $0x5c] sm:$0xf]
  %v167 = vld [vmem:[%s1 + $0x60] sm:$0xf]
  %v168 = vld [vmem:[%s1 + $0x64] sm:$0xf]
  %v169 = vld [vmem:[%s1 + $0x68] sm:$0xf]
  %v170 = vld [vmem:[%s1 + $0x6c] sm:$0xf]
  %v171 = vld [vmem:[%s1 + $0x70] sm:$0xf]
  %v172 = vld [vmem:[%s1 + $0x74] sm:$0xf]
  %v173 = vld [vmem:[%s1 + $0x78] sm:$0xf]
  %v174 = vld [vmem:[%s1 + $0x7c] sm:$0xf]
  %v175 = vld [vmem:[%s1 + $0x80] sm:$0xf]
  %v176 = vld [vmem:[%s1 + $0x84] sm:$0xf]
  %v177 = vld [vmem:[%s1 + $0x88] sm:$0xf]
  %v178 = vld [vmem:[%s1 + $0x8c] sm:$0xf]
  %v179 = vld [vmem:[%s1 + $0x90] sm:$0xf]
  %v180 = vld [vmem:[%s1 + $0x94] sm:$0xf]
  %v181 = vld [vmem:[%s1 + $0x98] sm:$0xf]
  %v182 = vld [vmem:[%s1 + $0x9c] sm:$0xf]
  %v183 = vld [vmem:[%s1 + $0xa0] sm:$0xf]
  %v184 = vld [vmem:[%s1 + $0xa4] sm:$0xf]
  %v185 = vld [vmem:[%s1 + $0xa8] sm:$0xf]
  %v186 = vld [vmem:[%s1 + $0xac] sm:$0xf]
  %v187 = vld [vmem:[%s1 + $0xb0] sm:$0xf]
  %v188 = vld [vmem:[%s1 + $0xb4] sm:$0xf]
  %v189 = vld [vmem:[%s1 + $0xb8] sm:$0xf]
  %v190 = vld [vmem:[%s1 + $0xbc] sm:$0xf]
  %v191 = vld [vmem:[%s1 + $0xc0] sm:$0xf]
  %v192 = vld [vmem:[%s1 + $0xc4] sm:$0xf]
  %v193 = vld [vmem:[%s1 + $0xc8] sm:$0xf]
  %v194 = vld [vmem:[%s1 + $0xcc] sm:$0xf]
  %v195 = vld [vmem:[%s1 + $0xd0] sm:$0xf]
  %v196 = vld [vmem:[%s1 + $0xd4] sm:$0xf]
  %v197 = vld [vmem:[%s1 + $0xd8] sm:$0xf]
  %v198 = vld [vmem:[%s1 + $0xdc] sm:$0xf]
  %v199 = vld [vmem:[%s1 + $0xe0] sm:$0xf]
  %v200 = vld [vmem:[%s1 + $0xe4] sm:$0xf]
  %v201 = vld [vmem:[%s1 + $0xe8] sm:$0xf]
  %v202 = vld [vmem:[%s1 + $0xec] sm:$0xf]
  %v203 = vld [vmem:[%s1 + $0xf0] sm:$0xf]
  %v204 = vld [vmem:[%s1 + $0xf4] sm:$0xf]
  %v205 = vld [vmem:[%s1 + $0xf8] sm:$0xf]
  %v206 = vld [vmem:[%s1 + $0xfc] sm:$0xf]
  %v207 = vld [vmem:[%s2] sm:$0x1]
  %v209 = vlaneseq
  %v210 = vshrl.u32 %v209, 7
  %v211 = vsub.s32 0, %v210
  %v212 = vrot.slane %v207, %v211
  %v342 = vunpack.c.l.b16 %v15
  %v343 = vunpack.c.h.b16 %v15
  %v344 = vunpack.c.l.b16 %v16
  %v345 = vunpack.c.h.b16 %v16
  %v346 = vunpack.c.l.b16 %v17
  %v347 = vunpack.c.h.b16 %v17
  %v348 = vunpack.c.l.b16 %v18
  %v349 = vunpack.c.h.b16 %v18
  %v350 = vunpack.c.l.b16 %v19
  %v351 = vunpack.c.h.b16 %v19
  %v352 = vunpack.c.l.b16 %v20
  %v353 = vunpack.c.h.b16 %v20
  %v354 = vunpack.c.l.b16 %v21
  %v355 = vunpack.c.h.b16 %v21
  %v356 = vunpack.c.l.b16 %v22
  %v357 = vunpack.c.h.b16 %v22
  %v358 = vunpack.c.l.b16 %v23
  %v359 = vunpack.c.h.b16 %v23
  %v360 = vunpack.c.l.b16 %v24
  %v361 = vunpack.c.h.b16 %v24
  %v362 = vunpack.c.l.b16 %v25
  %v363 = vunpack.c.h.b16 %v25
  %v364 = vunpack.c.l.b16 %v26
  %v365 = vunpack.c.h.b16 %v26
  %v366 = vunpack.c.l.b16 %v27
  %v367 = vunpack.c.h.b16 %v27
  %v368 = vunpack.c.l.b16 %v28
  %v369 = vunpack.c.h.b16 %v28
  %v370 = vunpack.c.l.b16 %v29
  %v371 = vunpack.c.h.b16 %v29
  %v372 = vunpack.c.l.b16 %v30
  %v373 = vunpack.c.h.b16 %v30
  %v374 = vunpack.c.l.b16 %v31
  %v375 = vunpack.c.h.b16 %v31
  %v376 = vunpack.c.l.b16 %v32
  %v377 = vunpack.c.h.b16 %v32
  %v378 = vunpack.c.l.b16 %v33
  %v379 = vunpack.c.h.b16 %v33
  %v380 = vunpack.c.l.b16 %v34
  %v381 = vunpack.c.h.b16 %v34
  %v382 = vunpack.c.l.b16 %v35
  %v383 = vunpack.c.h.b16 %v35
  %v384 = vunpack.c.l.b16 %v36
  %v385 = vunpack.c.h.b16 %v36
  %v386 = vunpack.c.l.b16 %v37
  %v387 = vunpack.c.h.b16 %v37
  %v388 = vunpack.c.l.b16 %v38
  %v389 = vunpack.c.h.b16 %v38
  %v390 = vunpack.c.l.b16 %v39
  %v391 = vunpack.c.h.b16 %v39
  %v392 = vunpack.c.l.b16 %v40
  %v393 = vunpack.c.h.b16 %v40
  %v394 = vunpack.c.l.b16 %v41
  %v395 = vunpack.c.h.b16 %v41
  %v396 = vunpack.c.l.b16 %v42
  %v397 = vunpack.c.h.b16 %v42
  %v398 = vunpack.c.l.b16 %v43
  %v399 = vunpack.c.h.b16 %v43
  %v400 = vunpack.c.l.b16 %v44
  %v401 = vunpack.c.h.b16 %v44
  %v402 = vunpack.c.l.b16 %v45
  %v403 = vunpack.c.h.b16 %v45
  %v404 = vunpack.c.l.b16 %v46
  %v405 = vunpack.c.h.b16 %v46
  %v406 = vunpack.c.l.b16 %v47
  %v407 = vunpack.c.h.b16 %v47
  %v408 = vunpack.c.l.b16 %v48
  %v409 = vunpack.c.h.b16 %v48
  %v410 = vunpack.c.l.b16 %v49
  %v411 = vunpack.c.h.b16 %v49
  %v412 = vunpack.c.l.b16 %v50
  %v413 = vunpack.c.h.b16 %v50
  %v414 = vunpack.c.l.b16 %v51
  %v415 = vunpack.c.h.b16 %v51
  %v416 = vunpack.c.l.b16 %v52
  %v417 = vunpack.c.h.b16 %v52
  %v418 = vunpack.c.l.b16 %v53
  %v419 = vunpack.c.h.b16 %v53
  %v420 = vunpack.c.l.b16 %v54
  %v421 = vunpack.c.h.b16 %v54
  %v422 = vunpack.c.l.b16 %v55
  %v423 = vunpack.c.h.b16 %v55
  %v424 = vunpack.c.l.b16 %v56
  %v425 = vunpack.c.h.b16 %v56
  %v426 = vunpack.c.l.b16 %v57
  %v427 = vunpack.c.h.b16 %v57
  %v428 = vunpack.c.l.b16 %v58
  %v429 = vunpack.c.h.b16 %v58
  %v430 = vunpack.c.l.b16 %v59
  %v431 = vunpack.c.h.b16 %v59
  %v432 = vunpack.c.l.b16 %v60
  %v433 = vunpack.c.h.b16 %v60
  %v434 = vunpack.c.l.b16 %v61
  %v435 = vunpack.c.h.b16 %v61
  %v436 = vunpack.c.l.b16 %v62
  %v437 = vunpack.c.h.b16 %v62
  %v438 = vunpack.c.l.b16 %v63
  %v439 = vunpack.c.h.b16 %v63
  %v440 = vunpack.c.l.b16 %v64
  %v441 = vunpack.c.h.b16 %v64
  %v442 = vunpack.c.l.b16 %v65
  %v443 = vunpack.c.h.b16 %v65
  %v444 = vunpack.c.l.b16 %v66
  %v445 = vunpack.c.h.b16 %v66
  %v446 = vunpack.c.l.b16 %v67
  %v447 = vunpack.c.h.b16 %v67
  %v448 = vunpack.c.l.b16 %v68
  %v449 = vunpack.c.h.b16 %v68
  %v450 = vunpack.c.l.b16 %v69
  %v451 = vunpack.c.h.b16 %v69
  %v452 = vunpack.c.l.b16 %v70
  %v453 = vunpack.c.h.b16 %v70
  %v454 = vunpack.c.l.b16 %v71
  %v455 = vunpack.c.h.b16 %v71
  %v456 = vunpack.c.l.b16 %v72
  %v457 = vunpack.c.h.b16 %v72
  %v458 = vunpack.c.l.b16 %v73
  %v459 = vunpack.c.h.b16 %v73
  %v460 = vunpack.c.l.b16 %v74
  %v461 = vunpack.c.h.b16 %v74
  %v462 = vunpack.c.l.b16 %v75
  %v463 = vunpack.c.h.b16 %v75
  %v464 = vunpack.c.l.b16 %v76
  %v465 = vunpack.c.h.b16 %v76
  %v466 = vunpack.c.l.b16 %v77
  %v467 = vunpack.c.h.b16 %v77
  %v468 = vunpack.c.l.b16 %v78
  %v469 = vunpack.c.h.b16 %v78
  %v470 = vunpack.c.l.b16 %v79
  %v471 = vunpack.c.h.b16 %v79
  %v472 = vunpack.c.l.b16 %v80
  %v473 = vunpack.c.h.b16 %v80
  %v474 = vunpack.c.l.b16 %v81
  %v475 = vunpack.c.h.b16 %v81
  %v476 = vunpack.c.l.b16 %v82
  %v477 = vunpack.c.h.b16 %v82
  %v478 = vunpack.c.l.b16 %v83
  %v479 = vunpack.c.h.b16 %v83
  %v480 = vunpack.c.l.b16 %v84
  %v481 = vunpack.c.h.b16 %v84
  %v482 = vunpack.c.l.b16 %v85
  %v483 = vunpack.c.h.b16 %v85
  %v484 = vunpack.c.l.b16 %v86
  %v485 = vunpack.c.h.b16 %v86
  %v486 = vunpack.c.l.b16 %v87
  %v487 = vunpack.c.h.b16 %v87
  %v488 = vunpack.c.l.b16 %v88
  %v489 = vunpack.c.h.b16 %v88
  %v490 = vunpack.c.l.b16 %v89
  %v491 = vunpack.c.h.b16 %v89
  %v492 = vunpack.c.l.b16 %v90
  %v493 = vunpack.c.h.b16 %v90
  %v494 = vunpack.c.l.b16 %v91
  %v495 = vunpack.c.h.b16 %v91
  %v496 = vunpack.c.l.b16 %v92
  %v497 = vunpack.c.h.b16 %v92
  %v498 = vunpack.c.l.b16 %v93
  %v499 = vunpack.c.h.b16 %v93
  %v500 = vunpack.c.l.b16 %v94
  %v501 = vunpack.c.h.b16 %v94
  %v502 = vunpack.c.l.b16 %v95
  %v503 = vunpack.c.h.b16 %v95
  %v504 = vunpack.c.l.b16 %v96
  %v505 = vunpack.c.h.b16 %v96
  %v506 = vunpack.c.l.b16 %v97
  %v507 = vunpack.c.h.b16 %v97
  %v508 = vunpack.c.l.b16 %v98
  %v509 = vunpack.c.h.b16 %v98
  %v510 = vunpack.c.l.b16 %v99
  %v511 = vunpack.c.h.b16 %v99
  %v512 = vunpack.c.l.b16 %v100
  %v513 = vunpack.c.h.b16 %v100
  %v514 = vunpack.c.l.b16 %v101
  %v515 = vunpack.c.h.b16 %v101
  %v516 = vunpack.c.l.b16 %v102
  %v517 = vunpack.c.h.b16 %v102
  %v518 = vunpack.c.l.b16 %v103
  %v519 = vunpack.c.h.b16 %v103
  %v520 = vunpack.c.l.b16 %v104
  %v521 = vunpack.c.h.b16 %v104
  %v522 = vunpack.c.l.b16 %v105
  %v523 = vunpack.c.h.b16 %v105
  %v524 = vunpack.c.l.b16 %v106
  %v525 = vunpack.c.h.b16 %v106
  %v526 = vunpack.c.l.b16 %v107
  %v527 = vunpack.c.h.b16 %v107
  %v528 = vunpack.c.l.b16 %v108
  %v529 = vunpack.c.h.b16 %v108
  %v530 = vunpack.c.l.b16 %v109
  %v531 = vunpack.c.h.b16 %v109
  %v532 = vunpack.c.l.b16 %v110
  %v533 = vunpack.c.h.b16 %v110
  %v534 = vunpack.c.l.b16 %v111
  %v535 = vunpack.c.h.b16 %v111
  %v536 = vunpack.c.l.b16 %v112
  %v537 = vunpack.c.h.b16 %v112
  %v538 = vunpack.c.l.b16 %v113
  %v539 = vunpack.c.h.b16 %v113
  %v540 = vunpack.c.l.b16 %v114
  %v541 = vunpack.c.h.b16 %v114
  %v542 = vunpack.c.l.b16 %v115
  %v543 = vunpack.c.h.b16 %v115
  %v544 = vunpack.c.l.b16 %v116
  %v545 = vunpack.c.h.b16 %v116
  %v546 = vunpack.c.l.b16 %v117
  %v547 = vunpack.c.h.b16 %v117
  %v548 = vunpack.c.l.b16 %v118
  %v549 = vunpack.c.h.b16 %v118
  %v550 = vunpack.c.l.b16 %v119
  %v551 = vunpack.c.h.b16 %v119
  %v552 = vunpack.c.l.b16 %v120
  %v553 = vunpack.c.h.b16 %v120
  %v554 = vunpack.c.l.b16 %v121
  %v555 = vunpack.c.h.b16 %v121
  %v556 = vunpack.c.l.b16 %v122
  %v557 = vunpack.c.h.b16 %v122
  %v558 = vunpack.c.l.b16 %v123
  %v559 = vunpack.c.h.b16 %v123
  %v560 = vunpack.c.l.b16 %v124
  %v561 = vunpack.c.h.b16 %v124
  %v562 = vunpack.c.l.b16 %v125
  %v563 = vunpack.c.h.b16 %v125
  %v564 = vunpack.c.l.b16 %v126
  %v565 = vunpack.c.h.b16 %v126
  %v566 = vunpack.c.l.b16 %v127
  %v567 = vunpack.c.h.b16 %v127
  %v568 = vunpack.c.l.b16 %v128
  %v569 = vunpack.c.h.b16 %v128
  %v570 = vunpack.c.l.b16 %v129
  %v571 = vunpack.c.h.b16 %v129
  %v572 = vunpack.c.l.b16 %v130
  %v573 = vunpack.c.h.b16 %v130
  %v574 = vunpack.c.l.b16 %v131
  %v575 = vunpack.c.h.b16 %v131
  %v576 = vunpack.c.l.b16 %v132
  %v577 = vunpack.c.h.b16 %v132
  %v578 = vunpack.c.l.b16 %v133
  %v579 = vunpack.c.h.b16 %v133
  %v580 = vunpack.c.l.b16 %v134
  %v581 = vunpack.c.h.b16 %v134
  %v582 = vunpack.c.l.b16 %v135
  %v583 = vunpack.c.h.b16 %v135
  %v584 = vunpack.c.l.b16 %v136
  %v585 = vunpack.c.h.b16 %v136
  %v586 = vunpack.c.l.b16 %v137
  %v587 = vunpack.c.h.b16 %v137
  %v588 = vunpack.c.l.b16 %v138
  %v589 = vunpack.c.h.b16 %v138
  %v590 = vunpack.c.l.b16 %v139
  %v591 = vunpack.c.h.b16 %v139
  %v592 = vunpack.c.l.b16 %v140
  %v593 = vunpack.c.h.b16 %v140
  %v594 = vunpack.c.l.b16 %v141
  %v595 = vunpack.c.h.b16 %v141
  %v596 = vunpack.c.l.b16 %v142
  %v597 = vunpack.c.h.b16 %v142
  %v598 = vpack.c.b16 %v346, %v342
  %v599 = vpack.c.b16 %v347, %v343
  %v600 = vpack.c.b16 %v348, %v344
  %v601 = vpack.c.b16 %v349, %v345
  %v602 = vpack.c.b16 %v354, %v350
  %v603 = vpack.c.b16 %v355, %v351
  %v604 = vpack.c.b16 %v356, %v352
  %v605 = vpack.c.b16 %v357, %v353
  %v606 = vpack.c.b16 %v362, %v358
  %v607 = vpack.c.b16 %v363, %v359
  %v608 = vpack.c.b16 %v364, %v360
  %v609 = vpack.c.b16 %v365, %v361
  %v610 = vpack.c.b16 %v370, %v366
  %v611 = vpack.c.b16 %v371, %v367
  %v612 = vpack.c.b16 %v372, %v368
  %v613 = vpack.c.b16 %v373, %v369
  %v614 = vpack.c.b16 %v378, %v374
  %v615 = vpack.c.b16 %v379, %v375
  %v616 = vpack.c.b16 %v380, %v376
  %v617 = vpack.c.b16 %v381, %v377
  %v618 = vpack.c.b16 %v386, %v382
  %v619 = vpack.c.b16 %v387, %v383
  %v620 = vpack.c.b16 %v388, %v384
  %v621 = vpack.c.b16 %v389, %v385
  %v622 = vpack.c.b16 %v394, %v390
  %v623 = vpack.c.b16 %v395, %v391
  %v624 = vpack.c.b16 %v396, %v392
  %v625 = vpack.c.b16 %v397, %v393
  %v626 = vpack.c.b16 %v402, %v398
  %v627 = vpack.c.b16 %v403, %v399
  %v628 = vpack.c.b16 %v404, %v400
  %v629 = vpack.c.b16 %v405, %v401
  %v630 = vpack.c.b16 %v410, %v406
  %v631 = vpack.c.b16 %v411, %v407
  %v632 = vpack.c.b16 %v412, %v408
  %v633 = vpack.c.b16 %v413, %v409
  %v634 = vpack.c.b16 %v418, %v414
  %v635 = vpack.c.b16 %v419, %v415
  %v636 = vpack.c.b16 %v420, %v416
  %v637 = vpack.c.b16 %v421, %v417
  %v638 = vpack.c.b16 %v426, %v422
  %v639 = vpack.c.b16 %v427, %v423
  %v640 = vpack.c.b16 %v428, %v424
  %v641 = vpack.c.b16 %v429, %v425
  %v642 = vpack.c.b16 %v434, %v430
  %v643 = vpack.c.b16 %v435, %v431
  %v644 = vpack.c.b16 %v436, %v432
  %v645 = vpack.c.b16 %v437, %v433
  %v646 = vpack.c.b16 %v442, %v438
  %v647 = vpack.c.b16 %v443, %v439
  %v648 = vpack.c.b16 %v444, %v440
  %v649 = vpack.c.b16 %v445, %v441
  %v650 = vpack.c.b16 %v450, %v446
  %v651 = vpack.c.b16 %v451, %v447
  %v652 = vpack.c.b16 %v452, %v448
  %v653 = vpack.c.b16 %v453, %v449
  %v654 = vpack.c.b16 %v458, %v454
  %v655 = vpack.c.b16 %v459, %v455
  %v656 = vpack.c.b16 %v460, %v456
  %v657 = vpack.c.b16 %v461, %v457
  %v658 = vpack.c.b16 %v466, %v462
  %v659 = vpack.c.b16 %v467, %v463
  %v660 = vpack.c.b16 %v468, %v464
  %v661 = vpack.c.b16 %v469, %v465
  %v662 = vpack.c.b16 %v474, %v470
  %v663 = vpack.c.b16 %v475, %v471
  %v664 = vpack.c.b16 %v476, %v472
  %v665 = vpack.c.b16 %v477, %v473
  %v666 = vpack.c.b16 %v482, %v478
  %v667 = vpack.c.b16 %v483, %v479
  %v668 = vpack.c.b16 %v484, %v480
  %v669 = vpack.c.b16 %v485, %v481
  %v670 = vpack.c.b16 %v490, %v486
  %v671 = vpack.c.b16 %v491, %v487
  %v672 = vpack.c.b16 %v492, %v488
  %v673 = vpack.c.b16 %v493, %v489
  %v674 = vpack.c.b16 %v498, %v494
  %v675 = vpack.c.b16 %v499, %v495
  %v676 = vpack.c.b16 %v500, %v496
  %v677 = vpack.c.b16 %v501, %v497
  %v678 = vpack.c.b16 %v506, %v502
  %v679 = vpack.c.b16 %v507, %v503
  %v680 = vpack.c.b16 %v508, %v504
  %v681 = vpack.c.b16 %v509, %v505
  %v682 = vpack.c.b16 %v514, %v510
  %v683 = vpack.c.b16 %v515, %v511
  %v684 = vpack.c.b16 %v516, %v512
  %v685 = vpack.c.b16 %v517, %v513
  %v686 = vpack.c.b16 %v522, %v518
  %v687 = vpack.c.b16 %v523, %v519
  %v688 = vpack.c.b16 %v524, %v520
  %v689 = vpack.c.b16 %v525, %v521
  %v690 = vpack.c.b16 %v530, %v526
  %v691 = vpack.c.b16 %v531, %v527
  %v692 = vpack.c.b16 %v532, %v528
  %v693 = vpack.c.b16 %v533, %v529
  %v694 = vpack.c.b16 %v538, %v534
  %v695 = vpack.c.b16 %v539, %v535
  %v696 = vpack.c.b16 %v540, %v536
  %v697 = vpack.c.b16 %v541, %v537
  %v698 = vpack.c.b16 %v546, %v542
  %v699 = vpack.c.b16 %v547, %v543
  %v700 = vpack.c.b16 %v548, %v544
  %v701 = vpack.c.b16 %v549, %v545
  %v702 = vpack.c.b16 %v554, %v550
  %v703 = vpack.c.b16 %v555, %v551
  %v704 = vpack.c.b16 %v556, %v552
  %v705 = vpack.c.b16 %v557, %v553
  %v706 = vpack.c.b16 %v562, %v558
  %v707 = vpack.c.b16 %v563, %v559
  %v708 = vpack.c.b16 %v564, %v560
  %v709 = vpack.c.b16 %v565, %v561
  %v710 = vpack.c.b16 %v570, %v566
  %v711 = vpack.c.b16 %v571, %v567
  %v712 = vpack.c.b16 %v572, %v568
  %v713 = vpack.c.b16 %v573, %v569
  %v714 = vpack.c.b16 %v578, %v574
  %v715 = vpack.c.b16 %v579, %v575
  %v716 = vpack.c.b16 %v580, %v576
  %v717 = vpack.c.b16 %v581, %v577
  %v718 = vpack.c.b16 %v586, %v582
  %v719 = vpack.c.b16 %v587, %v583
  %v720 = vpack.c.b16 %v588, %v584
  %v721 = vpack.c.b16 %v589, %v585
  %v722 = vpack.c.b16 %v594, %v590
  %v723 = vpack.c.b16 %v595, %v591
  %v724 = vpack.c.b16 %v596, %v592
  %v725 = vpack.c.b16 %v597, %v593
  %v918 = vunpack.c.l.b16 %v143
  %v919 = vunpack.c.l.b16 %v144
  %v920 = vunpack.c.l.b16 %v145
  %v921 = vunpack.c.l.b16 %v146
  %v922 = vunpack.c.l.b16 %v147
  %v923 = vunpack.c.l.b16 %v148
  %v924 = vunpack.c.l.b16 %v149
  %v925 = vunpack.c.l.b16 %v150
  %v926 = vunpack.c.l.b16 %v151
  %v927 = vunpack.c.l.b16 %v152
  %v928 = vunpack.c.l.b16 %v153
  %v929 = vunpack.c.l.b16 %v154
  %v930 = vunpack.c.l.b16 %v155
  %v931 = vunpack.c.l.b16 %v156
  %v932 = vunpack.c.l.b16 %v157
  %v933 = vunpack.c.l.b16 %v158
  %v934 = vunpack.c.l.b16 %v159
  %v935 = vunpack.c.l.b16 %v160
  %v936 = vunpack.c.l.b16 %v161
  %v937 = vunpack.c.l.b16 %v162
  %v938 = vunpack.c.l.b16 %v163
  %v939 = vunpack.c.l.b16 %v164
  %v940 = vunpack.c.l.b16 %v165
  %v941 = vunpack.c.l.b16 %v166
  %v942 = vunpack.c.l.b16 %v167
  %v943 = vunpack.c.l.b16 %v168
  %v944 = vunpack.c.l.b16 %v169
  %v945 = vunpack.c.l.b16 %v170
  %v946 = vunpack.c.l.b16 %v171
  %v947 = vunpack.c.l.b16 %v172
  %v948 = vunpack.c.l.b16 %v173
  %v949 = vunpack.c.l.b16 %v174
  %v950 = vunpack.c.l.b16 %v175
  %v951 = vunpack.c.l.b16 %v176
  %v952 = vunpack.c.l.b16 %v177
  %v953 = vunpack.c.l.b16 %v178
  %v954 = vunpack.c.l.b16 %v179
  %v955 = vunpack.c.l.b16 %v180
  %v956 = vunpack.c.l.b16 %v181
  %v957 = vunpack.c.l.b16 %v182
  %v958 = vunpack.c.l.b16 %v183
  %v959 = vunpack.c.l.b16 %v184
  %v960 = vunpack.c.l.b16 %v185
  %v961 = vunpack.c.l.b16 %v186
  %v962 = vunpack.c.l.b16 %v187
  %v963 = vunpack.c.l.b16 %v188
  %v964 = vunpack.c.l.b16 %v189
  %v965 = vunpack.c.l.b16 %v190
  %v966 = vunpack.c.l.b16 %v191
  %v967 = vunpack.c.l.b16 %v192
  %v968 = vunpack.c.l.b16 %v193
  %v969 = vunpack.c.l.b16 %v194
  %v970 = vunpack.c.l.b16 %v195
  %v971 = vunpack.c.l.b16 %v196
  %v972 = vunpack.c.l.b16 %v197
  %v973 = vunpack.c.l.b16 %v198
  %v974 = vunpack.c.l.b16 %v199
  %v975 = vunpack.c.l.b16 %v200
  %v976 = vunpack.c.l.b16 %v201
  %v977 = vunpack.c.l.b16 %v202
  %v978 = vunpack.c.l.b16 %v203
  %v979 = vunpack.c.l.b16 %v204
  %v980 = vunpack.c.l.b16 %v205
  %v981 = vunpack.c.l.b16 %v206
  %v982 = vpack.c.b16 %v919, %v918
  %v983 = vpack.c.b16 %v921, %v920
  %v984 = vpack.c.b16 %v923, %v922
  %v985 = vpack.c.b16 %v925, %v924
  %v986 = vpack.c.b16 %v927, %v926
  %v987 = vpack.c.b16 %v929, %v928
  %v988 = vpack.c.b16 %v931, %v930
  %v989 = vpack.c.b16 %v933, %v932
  %v990 = vpack.c.b16 %v935, %v934
  %v991 = vpack.c.b16 %v937, %v936
  %v992 = vpack.c.b16 %v939, %v938
  %v993 = vpack.c.b16 %v941, %v940
  %v994 = vpack.c.b16 %v943, %v942
  %v995 = vpack.c.b16 %v945, %v944
  %v996 = vpack.c.b16 %v947, %v946
  %v997 = vpack.c.b16 %v949, %v948
  %v998 = vpack.c.b16 %v951, %v950
  %v999 = vpack.c.b16 %v953, %v952
  %v1000 = vpack.c.b16 %v955, %v954
  %v1001 = vpack.c.b16 %v957, %v956
  %v1002 = vpack.c.b16 %v959, %v958
  %v1003 = vpack.c.b16 %v961, %v960
  %v1004 = vpack.c.b16 %v963, %v962
  %v1005 = vpack.c.b16 %v965, %v964
  %v1006 = vpack.c.b16 %v967, %v966
  %v1007 = vpack.c.b16 %v969, %v968
  %v1008 = vpack.c.b16 %v971, %v970
  %v1009 = vpack.c.b16 %v973, %v972
  %v1010 = vpack.c.b16 %v975, %v974
  %v1011 = vpack.c.b16 %v977, %v976
  %v1012 = vpack.c.b16 %v979, %v978
  %v1013 = vpack.c.b16 %v981, %v980
  %1046 = vmatprep.subr.bf16.mxu0 0
  %1047 = vmatpush1.bf16.msra.mxu0 %v982
  %1048 = vmatprep.subr.bf16.mxu0 0
  %1049 = vmatpush1.bf16.msra.mxu0 %v983
  %1050 = vmatprep.subr.bf16.mxu0 0
  %1051 = vmatpush1.bf16.msra.mxu0 %v984
  %1052 = vmatprep.subr.bf16.mxu0 0
  %1053 = vmatpush1.bf16.msra.mxu0 %v985
  %1054 = vmatprep.subr.bf16.mxu0 0
  %1055 = vmatpush1.bf16.msra.mxu0 %v986
  %1056 = vmatprep.subr.bf16.mxu0 0
  %1057 = vmatpush1.bf16.msra.mxu0 %v987
  %1058 = vmatprep.subr.bf16.mxu0 0
  %1059 = vmatpush1.bf16.msra.mxu0 %v988
  %1060 = vmatprep.subr.bf16.mxu0 0
  %1061 = vmatpush1.bf16.msra.mxu0 %v989
  %1062 = vmatprep.subr.bf16.mxu0 0
  %1063 = vmatpush1.bf16.msra.mxu0 %v990
  %1064 = vmatprep.subr.bf16.mxu0 0
  %1065 = vmatpush1.bf16.msra.mxu0 %v991
  %1066 = vmatprep.subr.bf16.mxu0 0
  %1067 = vmatpush1.bf16.msra.mxu0 %v992
  %1068 = vmatprep.subr.bf16.mxu0 0
  %1069 = vmatpush1.bf16.msra.mxu0 %v993
  %1070 = vmatprep.subr.bf16.mxu0 0
  %1071 = vmatpush1.bf16.msra.mxu0 %v994
  %1072 = vmatprep.subr.bf16.mxu0 0
  %1073 = vmatpush1.bf16.msra.mxu0 %v995
  %1074 = vmatprep.subr.bf16.mxu0 0
  %1075 = vmatpush1.bf16.msra.mxu0 %v996
  %1076 = vmatprep.subr.bf16.mxu0 0
  %1077 = vmatpush1.bf16.msra.mxu0 %v997
  %1078 = vmatprep.mubr.bf16.mxu0 %v599
  %1079 = vmatmul.mubr.bf16.gmra.mrb[0].mxu0 %v598
  %v1080 = vpop.f32.mrb[0].mxu0
  %v1081 = vadd.f32 %v212, %v1080
  %v1082 = vpop.f32.mrb[0].mxu0
  %v1083 = vpop.f32.mrb[0].mxu0
  %v1084 = vadd.f32 %v212, %v1083
  %v1085 = vpop.f32.mrb[0].mxu0
  %1086 = vmatprep.mubr.bf16.mxu0 %v603
  %1087 = vmatmul.mubr.bf16.gmra.mrb[0].mxu0 %v602
  %v1088 = vpop.f32.mrb[0].mxu0
  %v1089 = vadd.f32 %v212, %v1088
  %v1090 = vpop.f32.mrb[0].mxu0
  %v1091 = vpop.f32.mrb[0].mxu0
  %v1092 = vadd.f32 %v212, %v1091
  %v1093 = vpop.f32.mrb[0].mxu0
  %1094 = vmatprep.mubr.bf16.mxu0 %v607
  %1095 = vmatmul.mubr.bf16.gmra.mrb[0].mxu0 %v606
  %v1096 = vpop.f32.mrb[0].mxu0
  %v1097 = vadd.f32 %v212, %v1096
  %v1098 = vpop.f32.mrb[0].mxu0
  %v1099 = vpop.f32.mrb[0].mxu0
  %v1100 = vadd.f32 %v212, %v1099
  %v1101 = vpop.f32.mrb[0].mxu0
  %1102 = vmatprep.mubr.bf16.mxu0 %v611
  %1103 = vmatmul.mubr.bf16.gmra.mrb[0].mxu0 %v610
  %v1104 = vpop.f32.mrb[0].mxu0
  %v1105 = vadd.f32 %v212, %v1104
  %v1106 = vpop.f32.mrb[0].mxu0
  %v1107 = vpop.f32.mrb[0].mxu0
  %v1108 = vadd.f32 %v212, %v1107
  %v1109 = vpop.f32.mrb[0].mxu0
  %1110 = vmatprep.mubr.bf16.mxu0 %v615
  %1111 = vmatmul.mubr.bf16.gmra.mrb[0].mxu0 %v614
  %v1112 = vpop.f32.mrb[0].mxu0
  %v1113 = vadd.f32 %v212, %v1112
  %v1114 = vpop.f32.mrb[0].mxu0
  %v1115 = vpop.f32.mrb[0].mxu0
  %v1116 = vadd.f32 %v212, %v1115
  %v1117 = vpop.f32.mrb[0].mxu0
  %1118 = vmatprep.mubr.bf16.mxu0 %v619
  %1119 = vmatmul.mubr.bf16.gmra.mrb[0].mxu0 %v618
  %v1120 = vpop.f32.mrb[0].mxu0
  %v1121 = vadd.f32 %v212, %v1120
  %v1122 = vpop.f32.mrb[0].mxu0
  %v1123 = vpop.f32.mrb[0].mxu0
  %v1124 = vadd.f32 %v212, %v1123
  %v1125 = vpop.f32.mrb[0].mxu0
  %1126 = vmatprep.mubr.bf16.mxu0 %v623
  %1127 = vmatmul.mubr.bf16.gmra.mrb[0].mxu0 %v622
  %v1128 = vpop.f32.mrb[0].mxu0
  %v1129 = vadd.f32 %v212, %v1128
  %v1130 = vpop.f32.mrb[0].mxu0
  %v1131 = vpop.f32.mrb[0].mxu0
  %v1132 = vadd.f32 %v212, %v1131
  %v1133 = vpop.f32.mrb[0].mxu0
  %1134 = vmatprep.mubr.bf16.mxu0 %v627
  %1135 = vmatmul.mubr.bf16.gmra.mrb[0].mxu0 %v626
  %v1136 = vpop.f32.mrb[0].mxu0
  %v1137 = vadd.f32 %v212, %v1136
  %v1138 = vpop.f32.mrb[0].mxu0
  %v1139 = vpop.f32.mrb[0].mxu0
  %v1140 = vadd.f32 %v212, %v1139
  %v1141 = vpop.f32.mrb[0].mxu0
  %1142 = vmatprep.mubr.bf16.mxu0 %v631
  %1143 = vmatmul.mubr.bf16.gmra.mrb[0].mxu0 %v630
  %v1144 = vpop.f32.mrb[0].mxu0
  %v1145 = vadd.f32 %v212, %v1144
  %v1146 = vpop.f32.mrb[0].mxu0
  %v1147 = vpop.f32.mrb[0].mxu0
  %v1148 = vadd.f32 %v212, %v1147
  %v1149 = vpop.f32.mrb[0].mxu0
  %1150 = vmatprep.mubr.bf16.mxu0 %v635
  %1151 = vmatmul.mubr.bf16.gmra.mrb[0].mxu0 %v634
  %v1152 = vpop.f32.mrb[0].mxu0
  %v1153 = vadd.f32 %v212, %v1152
  %v1154 = vpop.f32.mrb[0].mxu0
  %v1155 = vpop.f32.mrb[0].mxu0
  %v1156 = vadd.f32 %v212, %v1155
  %v1157 = vpop.f32.mrb[0].mxu0
  %1158 = vmatprep.mubr.bf16.mxu0 %v639
  %1159 = vmatmul.mubr.bf16.gmra.mrb[0].mxu0 %v638
  %v1160 = vpop.f32.mrb[0].mxu0
  %v1161 = vadd.f32 %v212, %v1160
  %v1162 = vpop.f32.mrb[0].mxu0
  %v1163 = vpop.f32.mrb[0].mxu0
  %v1164 = vadd.f32 %v212, %v1163
  %v1165 = vpop.f32.mrb[0].mxu0
  %1166 = vmatprep.mubr.bf16.mxu0 %v643
  %1167 = vmatmul.mubr.bf16.gmra.mrb[0].mxu0 %v642
  %v1168 = vpop.f32.mrb[0].mxu0
  %v1169 = vadd.f32 %v212, %v1168
  %v1170 = vpop.f32.mrb[0].mxu0
  %v1171 = vpop.f32.mrb[0].mxu0
  %v1172 = vadd.f32 %v212, %v1171
  %v1173 = vpop.f32.mrb[0].mxu0
  %1174 = vmatprep.mubr.bf16.mxu0 %v647
  %1175 = vmatmul.mubr.bf16.gmra.mrb[0].mxu0 %v646
  %v1176 = vpop.f32.mrb[0].mxu0
  %v1177 = vadd.f32 %v212, %v1176
  %v1178 = vpop.f32.mrb[0].mxu0
  %v1179 = vpop.f32.mrb[0].mxu0
  %v1180 = vadd.f32 %v212, %v1179
  %v1181 = vpop.f32.mrb[0].mxu0
  %1182 = vmatprep.mubr.bf16.mxu0 %v651
  %1183 = vmatmul.mubr.bf16.gmra.mrb[0].mxu0 %v650
  %v1184 = vpop.f32.mrb[0].mxu0
  %v1185 = vadd.f32 %v212, %v1184
  %v1186 = vpop.f32.mrb[0].mxu0
  %v1187 = vpop.f32.mrb[0].mxu0
  %v1188 = vadd.f32 %v212, %v1187
  %v1189 = vpop.f32.mrb[0].mxu0
  %1190 = vmatprep.mubr.bf16.mxu0 %v655
  %1191 = vmatmul.mubr.bf16.gmra.mrb[0].mxu0 %v654
  %v1192 = vpop.f32.mrb[0].mxu0
  %v1193 = vadd.f32 %v212, %v1192
  %v1194 = vpop.f32.mrb[0].mxu0
  %v1195 = vpop.f32.mrb[0].mxu0
  %v1196 = vadd.f32 %v212, %v1195
  %v1197 = vpop.f32.mrb[0].mxu0
  %1198 = vmatprep.mubr.bf16.mxu0 %v659
  %1199 = vmatmul.mubr.bf16.gmra.mrb[0].mxu0 %v658
  %v1200 = vpop.f32.mrb[0].mxu0
  %v1201 = vadd.f32 %v212, %v1200
  %v1202 = vpop.f32.mrb[0].mxu0
  %v1203 = vpop.f32.mrb[0].mxu0
  %v1204 = vadd.f32 %v212, %v1203
  %v1205 = vpop.f32.mrb[0].mxu0
  %1206 = vmatprep.mubr.bf16.mxu0 %v663
  %1207 = vmatmul.mubr.bf16.gmra.mrb[0].mxu0 %v662
  %v1208 = vpop.f32.mrb[0].mxu0
  %v1209 = vadd.f32 %v212, %v1208
  %v1210 = vpop.f32.mrb[0].mxu0
  %v1211 = vpop.f32.mrb[0].mxu0
  %v1212 = vadd.f32 %v212, %v1211
  %v1213 = vpop.f32.mrb[0].mxu0
  %1214 = vmatprep.mubr.bf16.mxu0 %v667
  %1215 = vmatmul.mubr.bf16.gmra.mrb[0].mxu0 %v666
  %v1216 = vpop.f32.mrb[0].mxu0
  %v1217 = vadd.f32 %v212, %v1216
  %v1218 = vpop.f32.mrb[0].mxu0
  %v1219 = vpop.f32.mrb[0].mxu0
  %v1220 = vadd.f32 %v212, %v1219
  %v1221 = vpop.f32.mrb[0].mxu0
  %1222 = vmatprep.mubr.bf16.mxu0 %v671
  %1223 = vmatmul.mubr.bf16.gmra.mrb[0].mxu0 %v670
  %v1224 = vpop.f32.mrb[0].mxu0
  %v1225 = vadd.f32 %v212, %v1224
  %v1226 = vpop.f32.mrb[0].mxu0
  %v1227 = vpop.f32.mrb[0].mxu0
  %v1228 = vadd.f32 %v212, %v1227
  %v1229 = vpop.f32.mrb[0].mxu0
  %1230 = vmatprep.mubr.bf16.mxu0 %v675
  %1231 = vmatmul.mubr.bf16.gmra.mrb[0].mxu0 %v674
  %v1232 = vpop.f32.mrb[0].mxu0
  %v1233 = vadd.f32 %v212, %v1232
  %v1234 = vpop.f32.mrb[0].mxu0
  %v1235 = vpop.f32.mrb[0].mxu0
  %v1236 = vadd.f32 %v212, %v1235
  %v1237 = vpop.f32.mrb[0].mxu0
  %1238 = vmatprep.mubr.bf16.mxu0 %v679
  %1239 = vmatmul.mubr.bf16.gmra.mrb[0].mxu0 %v678
  %v1240 = vpop.f32.mrb[0].mxu0
  %v1241 = vadd.f32 %v212, %v1240
  %v1242 = vpop.f32.mrb[0].mxu0
  %v1243 = vpop.f32.mrb[0].mxu0
  %v1244 = vadd.f32 %v212, %v1243
  %v1245 = vpop.f32.mrb[0].mxu0
  %1246 = vmatprep.mubr.bf16.mxu0 %v683
  %1247 = vmatmul.mubr.bf16.gmra.mrb[0].mxu0 %v682
  %v1248 = vpop.f32.mrb[0].mxu0
  %v1249 = vadd.f32 %v212, %v1248
  %v1250 = vpop.f32.mrb[0].mxu0
  %v1251 = vpop.f32.mrb[0].mxu0
  %v1252 = vadd.f32 %v212, %v1251
  %v1253 = vpop.f32.mrb[0].mxu0
  %1254 = vmatprep.mubr.bf16.mxu0 %v687
  %1255 = vmatmul.mubr.bf16.gmra.mrb[0].mxu0 %v686
  %v1256 = vpop.f32.mrb[0].mxu0
  %v1257 = vadd.f32 %v212, %v1256
  %v1258 = vpop.f32.mrb[0].mxu0
  %v1259 = vpop.f32.mrb[0].mxu0
  %v1260 = vadd.f32 %v212, %v1259
  %v1261 = vpop.f32.mrb[0].mxu0
  %1262 = vmatprep.mubr.bf16.mxu0 %v691
  %1263 = vmatmul.mubr.bf16.gmra.mrb[0].mxu0 %v690
  %v1264 = vpop.f32.mrb[0].mxu0
  %v1265 = vadd.f32 %v212, %v1264
  %v1266 = vpop.f32.mrb[0].mxu0
  %v1267 = vpop.f32.mrb[0].mxu0
  %v1268 = vadd.f32 %v212, %v1267
  %v1269 = vpop.f32.mrb[0].mxu0
  %1270 = vmatprep.mubr.bf16.mxu0 %v695
  %1271 = vmatmul.mubr.bf16.gmra.mrb[0].mxu0 %v694
  %v1272 = vpop.f32.mrb[0].mxu0
  %v1273 = vadd.f32 %v212, %v1272
  %v1274 = vpop.f32.mrb[0].mxu0
  %v1275 = vpop.f32.mrb[0].mxu0
  %v1276 = vadd.f32 %v212, %v1275
  %v1277 = vpop.f32.mrb[0].mxu0
  %1278 = vmatprep.mubr.bf16.mxu0 %v699
  %1279 = vmatmul.mubr.bf16.gmra.mrb[0].mxu0 %v698
  %v1280 = vpop.f32.mrb[0].mxu0
  %v1281 = vadd.f32 %v212, %v1280
  %v1282 = vpop.f32.mrb[0].mxu0
  %v1283 = vpop.f32.mrb[0].mxu0
  %v1284 = vadd.f32 %v212, %v1283
  %v1285 = vpop.f32.mrb[0].mxu0
  %1286 = vmatprep.mubr.bf16.mxu0 %v703
  %1287 = vmatmul.mubr.bf16.gmra.mrb[0].mxu0 %v702
  %v1288 = vpop.f32.mrb[0].mxu0
  %v1289 = vadd.f32 %v212, %v1288
  %v1290 = vpop.f32.mrb[0].mxu0
  %v1291 = vpop.f32.mrb[0].mxu0
  %v1292 = vadd.f32 %v212, %v1291
  %v1293 = vpop.f32.mrb[0].mxu0
  %1294 = vmatprep.mubr.bf16.mxu0 %v707
  %1295 = vmatmul.mubr.bf16.gmra.mrb[0].mxu0 %v706
  %v1296 = vpop.f32.mrb[0].mxu0
  %v1297 = vadd.f32 %v212, %v1296
  %v1298 = vpop.f32.mrb[0].mxu0
  %v1299 = vpop.f32.mrb[0].mxu0
  %v1300 = vadd.f32 %v212, %v1299
  %v1301 = vpop.f32.mrb[0].mxu0
  %1302 = vmatprep.mubr.bf16.mxu0 %v711
  %1303 = vmatmul.mubr.bf16.gmra.mrb[0].mxu0 %v710
  %v1304 = vpop.f32.mrb[0].mxu0
  %v1305 = vadd.f32 %v212, %v1304
  %v1306 = vpop.f32.mrb[0].mxu0
  %v1307 = vpop.f32.mrb[0].mxu0
  %v1308 = vadd.f32 %v212, %v1307
  %v1309 = vpop.f32.mrb[0].mxu0
  %1310 = vmatprep.mubr.bf16.mxu0 %v715
  %1311 = vmatmul.mubr.bf16.gmra.mrb[0].mxu0 %v714
  %v1312 = vpop.f32.mrb[0].mxu0
  %v1313 = vadd.f32 %v212, %v1312
  %v1314 = vpop.f32.mrb[0].mxu0
  %v1315 = vpop.f32.mrb[0].mxu0
  %v1316 = vadd.f32 %v212, %v1315
  %v1317 = vpop.f32.mrb[0].mxu0
  %1318 = vmatprep.mubr.bf16.mxu0 %v719
  %1319 = vmatmul.mubr.bf16.gmra.mrb[0].mxu0 %v718
  %v1320 = vpop.f32.mrb[0].mxu0
  %v1321 = vadd.f32 %v212, %v1320
  %v1322 = vpop.f32.mrb[0].mxu0
  %v1323 = vpop.f32.mrb[0].mxu0
  %v1324 = vadd.f32 %v212, %v1323
  %v1325 = vpop.f32.mrb[0].mxu0
  %1326 = vmatprep.mubr.bf16.mxu0 %v723
  %1327 = vmatmul.mubr.bf16.gmra.mrb[0].mxu0 %v722
  %v1328 = vpop.f32.mrb[0].mxu0
  %v1329 = vadd.f32 %v212, %v1328
  %v1330 = vpop.f32.mrb[0].mxu0
  %v1331 = vpop.f32.mrb[0].mxu0
  %v1332 = vadd.f32 %v212, %v1331
  %v1333 = vpop.f32.mrb[0].mxu0
  %1334 = vdwg.mxu0
  %1335 = vmatprep.subr.bf16.mxu0 0
  %1336 = vmatpush1.bf16.msra.mxu0 %v998
  %1337 = vmatprep.subr.bf16.mxu0 0
  %1338 = vmatpush1.bf16.msra.mxu0 %v999
  %1339 = vmatprep.subr.bf16.mxu0 0
  %1340 = vmatpush1.bf16.msra.mxu0 %v1000
  %1341 = vmatprep.subr.bf16.mxu0 0
  %1342 = vmatpush1.bf16.msra.mxu0 %v1001
  %1343 = vmatprep.subr.bf16.mxu0 0
  %1344 = vmatpush1.bf16.msra.mxu0 %v1002
  %1345 = vmatprep.subr.bf16.mxu0 0
  %1346 = vmatpush1.bf16.msra.mxu0 %v1003
  %1347 = vmatprep.subr.bf16.mxu0 0
  %1348 = vmatpush1.bf16.msra.mxu0 %v1004
  %1349 = vmatprep.subr.bf16.mxu0 0
  %1350 = vmatpush1.bf16.msra.mxu0 %v1005
  %1351 = vmatprep.subr.bf16.mxu0 0
  %1352 = vmatpush1.bf16.msra.mxu0 %v1006
  %1353 = vmatprep.subr.bf16.mxu0 0
  %1354 = vmatpush1.bf16.msra.mxu0 %v1007
  %1355 = vmatprep.subr.bf16.mxu0 0
  %1356 = vmatpush1.bf16.msra.mxu0 %v1008
  %1357 = vmatprep.subr.bf16.mxu0 0
  %1358 = vmatpush1.bf16.msra.mxu0 %v1009
  %1359 = vmatprep.subr.bf16.mxu0 0
  %1360 = vmatpush1.bf16.msra.mxu0 %v1010
  %1361 = vmatprep.subr.bf16.mxu0 0
  %1362 = vmatpush1.bf16.msra.mxu0 %v1011
  %1363 = vmatprep.subr.bf16.mxu0 0
  %1364 = vmatpush1.bf16.msra.mxu0 %v1012
  %1365 = vmatprep.subr.bf16.mxu0 0
  %1366 = vmatpush1.bf16.msra.mxu0 %v1013
  %1367 = vmatprep.mubr.bf16.mxu0 %v601
  %1368 = vmatmul.mubr.bf16.gmra.mrb[0].mxu0 %v600
  %v1369 = vpop.f32.mrb[0].mxu0
  %v1370 = vadd.f32 %v1081, %v1369
  %v1371 = vpop.f32.mrb[0].mxu0
  %v1372 = vpop.f32.mrb[0].mxu0
  %v1373 = vadd.f32 %v1084, %v1372
  %v1374 = vpop.f32.mrb[0].mxu0
  %1375 = vmatprep.mubr.bf16.mxu0 %v605
  %1376 = vmatmul.mubr.bf16.gmra.mrb[0].mxu0 %v604
  %v1377 = vpop.f32.mrb[0].mxu0
  %v1378 = vadd.f32 %v1089, %v1377
  %v1379 = vpop.f32.mrb[0].mxu0
  %v1380 = vpop.f32.mrb[0].mxu0
  %v1381 = vadd.f32 %v1092, %v1380
  %v1382 = vpop.f32.mrb[0].mxu0
  %1383 = vmatprep.mubr.bf16.mxu0 %v609
  %1384 = vmatmul.mubr.bf16.gmra.mrb[0].mxu0 %v608
  %v1385 = vpop.f32.mrb[0].mxu0
  %v1386 = vadd.f32 %v1097, %v1385
  %v1387 = vpop.f32.mrb[0].mxu0
  %v1388 = vpop.f32.mrb[0].mxu0
  %v1389 = vadd.f32 %v1100, %v1388
  %v1390 = vpop.f32.mrb[0].mxu0
  %1391 = vmatprep.mubr.bf16.mxu0 %v613
  %1392 = vmatmul.mubr.bf16.gmra.mrb[0].mxu0 %v612
  %v1393 = vpop.f32.mrb[0].mxu0
  %v1394 = vadd.f32 %v1105, %v1393
  %v1395 = vpop.f32.mrb[0].mxu0
  %v1396 = vpop.f32.mrb[0].mxu0
  %v1397 = vadd.f32 %v1108, %v1396
  %v1398 = vpop.f32.mrb[0].mxu0
  %1399 = vmatprep.mubr.bf16.mxu0 %v617
  %1400 = vmatmul.mubr.bf16.gmra.mrb[0].mxu0 %v616
  %v1401 = vpop.f32.mrb[0].mxu0
  %v1402 = vadd.f32 %v1113, %v1401
  %v1403 = vpop.f32.mrb[0].mxu0
  %v1404 = vpop.f32.mrb[0].mxu0
  %v1405 = vadd.f32 %v1116, %v1404
  %v1406 = vpop.f32.mrb[0].mxu0
  %1407 = vmatprep.mubr.bf16.mxu0 %v621
  %1408 = vmatmul.mubr.bf16.gmra.mrb[0].mxu0 %v620
  %v1409 = vpop.f32.mrb[0].mxu0
  %v1410 = vadd.f32 %v1121, %v1409
  %v1411 = vpop.f32.mrb[0].mxu0
  %v1412 = vpop.f32.mrb[0].mxu0
  %v1413 = vadd.f32 %v1124, %v1412
  %v1414 = vpop.f32.mrb[0].mxu0
  %1415 = vmatprep.mubr.bf16.mxu0 %v625
  %1416 = vmatmul.mubr.bf16.gmra.mrb[0].mxu0 %v624
  %v1417 = vpop.f32.mrb[0].mxu0
  %v1418 = vadd.f32 %v1129, %v1417
  %v1419 = vpop.f32.mrb[0].mxu0
  %v1420 = vpop.f32.mrb[0].mxu0
  %v1421 = vadd.f32 %v1132, %v1420
  %v1422 = vpop.f32.mrb[0].mxu0
  %1423 = vmatprep.mubr.bf16.mxu0 %v629
  %1424 = vmatmul.mubr.bf16.gmra.mrb[0].mxu0 %v628
  %v1425 = vpop.f32.mrb[0].mxu0
  %v1426 = vadd.f32 %v1137, %v1425
  %v1427 = vpop.f32.mrb[0].mxu0
  %v1428 = vpop.f32.mrb[0].mxu0
  %v1429 = vadd.f32 %v1140, %v1428
  %v1430 = vpop.f32.mrb[0].mxu0
  %1431 = vmatprep.mubr.bf16.mxu0 %v633
  %1432 = vmatmul.mubr.bf16.gmra.mrb[0].mxu0 %v632
  %v1433 = vpop.f32.mrb[0].mxu0
  %v1434 = vadd.f32 %v1145, %v1433
  %v1435 = vpop.f32.mrb[0].mxu0
  %v1436 = vpop.f32.mrb[0].mxu0
  %v1437 = vadd.f32 %v1148, %v1436
  %v1438 = vpop.f32.mrb[0].mxu0
  %1439 = vmatprep.mubr.bf16.mxu0 %v637
  %1440 = vmatmul.mubr.bf16.gmra.mrb[0].mxu0 %v636
  %v1441 = vpop.f32.mrb[0].mxu0
  %v1442 = vadd.f32 %v1153, %v1441
  %v1443 = vpop.f32.mrb[0].mxu0
  %v1444 = vpop.f32.mrb[0].mxu0
  %v1445 = vadd.f32 %v1156, %v1444
  %v1446 = vpop.f32.mrb[0].mxu0
  %1447 = vmatprep.mubr.bf16.mxu0 %v641
  %1448 = vmatmul.mubr.bf16.gmra.mrb[0].mxu0 %v640
  %v1449 = vpop.f32.mrb[0].mxu0
  %v1450 = vadd.f32 %v1161, %v1449
  %v1451 = vpop.f32.mrb[0].mxu0
  %v1452 = vpop.f32.mrb[0].mxu0
  %v1453 = vadd.f32 %v1164, %v1452
  %v1454 = vpop.f32.mrb[0].mxu0
  %1455 = vmatprep.mubr.bf16.mxu0 %v645
  %1456 = vmatmul.mubr.bf16.gmra.mrb[0].mxu0 %v644
  %v1457 = vpop.f32.mrb[0].mxu0
  %v1458 = vadd.f32 %v1169, %v1457
  %v1459 = vpop.f32.mrb[0].mxu0
  %v1460 = vpop.f32.mrb[0].mxu0
  %v1461 = vadd.f32 %v1172, %v1460
  %v1462 = vpop.f32.mrb[0].mxu0
  %1463 = vmatprep.mubr.bf16.mxu0 %v649
  %1464 = vmatmul.mubr.bf16.gmra.mrb[0].mxu0 %v648
  %v1465 = vpop.f32.mrb[0].mxu0
  %v1466 = vadd.f32 %v1177, %v1465
  %v1467 = vpop.f32.mrb[0].mxu0
  %v1468 = vpop.f32.mrb[0].mxu0
  %v1469 = vadd.f32 %v1180, %v1468
  %v1470 = vpop.f32.mrb[0].mxu0
  %1471 = vmatprep.mubr.bf16.mxu0 %v653
  %1472 = vmatmul.mubr.bf16.gmra.mrb[0].mxu0 %v652
  %v1473 = vpop.f32.mrb[0].mxu0
  %v1474 = vadd.f32 %v1185, %v1473
  %v1475 = vpop.f32.mrb[0].mxu0
  %v1476 = vpop.f32.mrb[0].mxu0
  %v1477 = vadd.f32 %v1188, %v1476
  %v1478 = vpop.f32.mrb[0].mxu0
  %1479 = vmatprep.mubr.bf16.mxu0 %v657
  %1480 = vmatmul.mubr.bf16.gmra.mrb[0].mxu0 %v656
  %v1481 = vpop.f32.mrb[0].mxu0
  %v1482 = vadd.f32 %v1193, %v1481
  %v1483 = vpop.f32.mrb[0].mxu0
  %v1484 = vpop.f32.mrb[0].mxu0
  %v1485 = vadd.f32 %v1196, %v1484
  %v1486 = vpop.f32.mrb[0].mxu0
  %1487 = vmatprep.mubr.bf16.mxu0 %v661
  %1488 = vmatmul.mubr.bf16.gmra.mrb[0].mxu0 %v660
  %v1489 = vpop.f32.mrb[0].mxu0
  %v1490 = vadd.f32 %v1201, %v1489
  %v1491 = vpop.f32.mrb[0].mxu0
  %v1492 = vpop.f32.mrb[0].mxu0
  %v1493 = vadd.f32 %v1204, %v1492
  %v1494 = vpop.f32.mrb[0].mxu0
  %1495 = vmatprep.mubr.bf16.mxu0 %v665
  %1496 = vmatmul.mubr.bf16.gmra.mrb[0].mxu0 %v664
  %v1497 = vpop.f32.mrb[0].mxu0
  %v1498 = vadd.f32 %v1209, %v1497
  %v1499 = vpop.f32.mrb[0].mxu0
  %v1500 = vpop.f32.mrb[0].mxu0
  %v1501 = vadd.f32 %v1212, %v1500
  %v1502 = vpop.f32.mrb[0].mxu0
  %1503 = vmatprep.mubr.bf16.mxu0 %v669
  %1504 = vmatmul.mubr.bf16.gmra.mrb[0].mxu0 %v668
  %v1505 = vpop.f32.mrb[0].mxu0
  %v1506 = vadd.f32 %v1217, %v1505
  %v1507 = vpop.f32.mrb[0].mxu0
  %v1508 = vpop.f32.mrb[0].mxu0
  %v1509 = vadd.f32 %v1220, %v1508
  %v1510 = vpop.f32.mrb[0].mxu0
  %1511 = vmatprep.mubr.bf16.mxu0 %v673
  %1512 = vmatmul.mubr.bf16.gmra.mrb[0].mxu0 %v672
  %v1513 = vpop.f32.mrb[0].mxu0
  %v1514 = vadd.f32 %v1225, %v1513
  %v1515 = vpop.f32.mrb[0].mxu0
  %v1516 = vpop.f32.mrb[0].mxu0
  %v1517 = vadd.f32 %v1228, %v1516
  %v1518 = vpop.f32.mrb[0].mxu0
  %1519 = vmatprep.mubr.bf16.mxu0 %v677
  %1520 = vmatmul.mubr.bf16.gmra.mrb[0].mxu0 %v676
  %v1521 = vpop.f32.mrb[0].mxu0
  %v1522 = vadd.f32 %v1233, %v1521
  %v1523 = vpop.f32.mrb[0].mxu0
  %v1524 = vpop.f32.mrb[0].mxu0
  %v1525 = vadd.f32 %v1236, %v1524
  %v1526 = vpop.f32.mrb[0].mxu0
  %1527 = vmatprep.mubr.bf16.mxu0 %v681
  %1528 = vmatmul.mubr.bf16.gmra.mrb[0].mxu0 %v680
  %v1529 = vpop.f32.mrb[0].mxu0
  %v1530 = vadd.f32 %v1241, %v1529
  %v1531 = vpop.f32.mrb[0].mxu0
  %v1532 = vpop.f32.mrb[0].mxu0
  %v1533 = vadd.f32 %v1244, %v1532
  %v1534 = vpop.f32.mrb[0].mxu0
  %1535 = vmatprep.mubr.bf16.mxu0 %v685
  %1536 = vmatmul.mubr.bf16.gmra.mrb[0].mxu0 %v684
  %v1537 = vpop.f32.mrb[0].mxu0
  %v1538 = vadd.f32 %v1249, %v1537
  %v1539 = vpop.f32.mrb[0].mxu0
  %v1540 = vpop.f32.mrb[0].mxu0
  %v1541 = vadd.f32 %v1252, %v1540
  %v1542 = vpop.f32.mrb[0].mxu0
  %1543 = vmatprep.mubr.bf16.mxu0 %v689
  %1544 = vmatmul.mubr.bf16.gmra.mrb[0].mxu0 %v688
  %v1545 = vpop.f32.mrb[0].mxu0
  %v1546 = vadd.f32 %v1257, %v1545
  %v1547 = vpop.f32.mrb[0].mxu0
  %v1548 = vpop.f32.mrb[0].mxu0
  %v1549 = vadd.f32 %v1260, %v1548
  %v1550 = vpop.f32.mrb[0].mxu0
  %1551 = vmatprep.mubr.bf16.mxu0 %v693
  %1552 = vmatmul.mubr.bf16.gmra.mrb[0].mxu0 %v692
  %v1553 = vpop.f32.mrb[0].mxu0
  %v1554 = vadd.f32 %v1265, %v1553
  %v1555 = vpop.f32.mrb[0].mxu0
  %v1556 = vpop.f32.mrb[0].mxu0
  %v1557 = vadd.f32 %v1268, %v1556
  %v1558 = vpop.f32.mrb[0].mxu0
  %1559 = vmatprep.mubr.bf16.mxu0 %v697
  %1560 = vmatmul.mubr.bf16.gmra.mrb[0].mxu0 %v696
  %v1561 = vpop.f32.mrb[0].mxu0
  %v1562 = vadd.f32 %v1273, %v1561
  %v1563 = vpop.f32.mrb[0].mxu0
  %v1564 = vpop.f32.mrb[0].mxu0
  %v1565 = vadd.f32 %v1276, %v1564
  %v1566 = vpop.f32.mrb[0].mxu0
  %1567 = vmatprep.mubr.bf16.mxu0 %v701
  %1568 = vmatmul.mubr.bf16.gmra.mrb[0].mxu0 %v700
  %v1569 = vpop.f32.mrb[0].mxu0
  %v1570 = vadd.f32 %v1281, %v1569
  %v1571 = vpop.f32.mrb[0].mxu0
  %v1572 = vpop.f32.mrb[0].mxu0
  %v1573 = vadd.f32 %v1284, %v1572
  %v1574 = vpop.f32.mrb[0].mxu0
  %1575 = vmatprep.mubr.bf16.mxu0 %v705
  %1576 = vmatmul.mubr.bf16.gmra.mrb[0].mxu0 %v704
  %v1577 = vpop.f32.mrb[0].mxu0
  %v1578 = vadd.f32 %v1289, %v1577
  %v1579 = vpop.f32.mrb[0].mxu0
  %v1580 = vpop.f32.mrb[0].mxu0
  %v1581 = vadd.f32 %v1292, %v1580
  %v1582 = vpop.f32.mrb[0].mxu0
  %1583 = vmatprep.mubr.bf16.mxu0 %v709
  %1584 = vmatmul.mubr.bf16.gmra.mrb[0].mxu0 %v708
  %v1585 = vpop.f32.mrb[0].mxu0
  %v1586 = vadd.f32 %v1297, %v1585
  %v1587 = vpop.f32.mrb[0].mxu0
  %v1588 = vpop.f32.mrb[0].mxu0
  %v1589 = vadd.f32 %v1300, %v1588
  %v1590 = vpop.f32.mrb[0].mxu0
  %1591 = vmatprep.mubr.bf16.mxu0 %v713
  %1592 = vmatmul.mubr.bf16.gmra.mrb[0].mxu0 %v712
  %v1593 = vpop.f32.mrb[0].mxu0
  %v1594 = vadd.f32 %v1305, %v1593
  %v1595 = vpop.f32.mrb[0].mxu0
  %v1596 = vpop.f32.mrb[0].mxu0
  %v1597 = vadd.f32 %v1308, %v1596
  %v1598 = vpop.f32.mrb[0].mxu0
  %1599 = vmatprep.mubr.bf16.mxu0 %v717
  %1600 = vmatmul.mubr.bf16.gmra.mrb[0].mxu0 %v716
  %v1601 = vpop.f32.mrb[0].mxu0
  %v1602 = vadd.f32 %v1313, %v1601
  %v1603 = vpop.f32.mrb[0].mxu0
  %v1604 = vpop.f32.mrb[0].mxu0
  %v1605 = vadd.f32 %v1316, %v1604
  %v1606 = vpop.f32.mrb[0].mxu0
  %1607 = vmatprep.mubr.bf16.mxu0 %v721
  %1608 = vmatmul.mubr.bf16.gmra.mrb[0].mxu0 %v720
  %v1609 = vpop.f32.mrb[0].mxu0
  %v1610 = vadd.f32 %v1321, %v1609
  %v1611 = vpop.f32.mrb[0].mxu0
  %v1612 = vpop.f32.mrb[0].mxu0
  %v1613 = vadd.f32 %v1324, %v1612
  %v1614 = vpop.f32.mrb[0].mxu0
  %1615 = vmatprep.mubr.bf16.mxu0 %v725
  %1616 = vmatmul.mubr.bf16.gmra.mrb[0].mxu0 %v724
  %v1617 = vpop.f32.mrb[0].mxu0
  %v1618 = vadd.f32 %v1329, %v1617
  %v1619 = vpop.f32.mrb[0].mxu0
  %v1620 = vpop.f32.mrb[0].mxu0
  %v1621 = vadd.f32 %v1332, %v1620
  %v1622 = vpop.f32.mrb[0].mxu0
  %1623 = vdwg.mxu0
  %v1624 = vmax.f32 %v1370, 0.0
  %v1625 = vmax.f32 %v1373, 0.0
  %v1626 = vmax.f32 %v1378, 0.0
  %v1627 = vmax.f32 %v1381, 0.0
  %v1628 = vmax.f32 %v1386, 0.0
  %v1629 = vmax.f32 %v1389, 0.0
  %v1630 = vmax.f32 %v1394, 0.0
  %v1631 = vmax.f32 %v1397, 0.0
  %v1632 = vmax.f32 %v1402, 0.0
  %v1633 = vmax.f32 %v1405, 0.0
  %v1634 = vmax.f32 %v1410, 0.0
  %v1635 = vmax.f32 %v1413, 0.0
  %v1636 = vmax.f32 %v1418, 0.0
  %v1637 = vmax.f32 %v1421, 0.0
  %v1638 = vmax.f32 %v1426, 0.0
  %v1639 = vmax.f32 %v1429, 0.0
  %v1640 = vmax.f32 %v1434, 0.0
  %v1641 = vmax.f32 %v1437, 0.0
  %v1642 = vmax.f32 %v1442, 0.0
  %v1643 = vmax.f32 %v1445, 0.0
  %v1644 = vmax.f32 %v1450, 0.0
  %v1645 = vmax.f32 %v1453, 0.0
  %v1646 = vmax.f32 %v1458, 0.0
  %v1647 = vmax.f32 %v1461, 0.0
  %v1648 = vmax.f32 %v1466, 0.0
  %v1649 = vmax.f32 %v1469, 0.0
  %v1650 = vmax.f32 %v1474, 0.0
  %v1651 = vmax.f32 %v1477, 0.0
  %v1652 = vmax.f32 %v1482, 0.0
  %v1653 = vmax.f32 %v1485, 0.0
  %v1654 = vmax.f32 %v1490, 0.0
  %v1655 = vmax.f32 %v1493, 0.0
  %v1656 = vmax.f32 %v1498, 0.0
  %v1657 = vmax.f32 %v1501, 0.0
  %v1658 = vmax.f32 %v1506, 0.0
  %v1659 = vmax.f32 %v1509, 0.0
  %v1660 = vmax.f32 %v1514, 0.0
  %v1661 = vmax.f32 %v1517, 0.0
  %v1662 = vmax.f32 %v1522, 0.0
  %v1663 = vmax.f32 %v1525, 0.0
  %v1664 = vmax.f32 %v1530, 0.0
  %v1665 = vmax.f32 %v1533, 0.0
  %v1666 = vmax.f32 %v1538, 0.0
  %v1667 = vmax.f32 %v1541, 0.0
  %v1668 = vmax.f32 %v1546, 0.0
  %v1669 = vmax.f32 %v1549, 0.0
  %v1670 = vmax.f32 %v1554, 0.0
  %v1671 = vmax.f32 %v1557, 0.0
  %v1672 = vmax.f32 %v1562, 0.0
  %v1673 = vmax.f32 %v1565, 0.0
  %v1674 = vmax.f32 %v1570, 0.0
  %v1675 = vmax.f32 %v1573, 0.0
  %v1676 = vmax.f32 %v1578, 0.0
  %v1677 = vmax.f32 %v1581, 0.0
  %v1678 = vmax.f32 %v1586, 0.0
  %v1679 = vmax.f32 %v1589, 0.0
  %v1680 = vmax.f32 %v1594, 0.0
  %v1681 = vmax.f32 %v1597, 0.0
  %v1682 = vmax.f32 %v1602, 0.0
  %v1683 = vmax.f32 %v1605, 0.0
  %v1684 = vmax.f32 %v1610, 0.0
  %v1685 = vmax.f32 %v1613, 0.0
  %v1686 = vmax.f32 %v1618, 0.0
  %v1687 = vmax.f32 %v1621, 0.0
  %v1688 = vpack.c.bf16 %v1625, %v1624
  %v1689 = vpack.c.bf16 %v1627, %v1626
  %v1690 = vpack.c.bf16 %v1629, %v1628
  %v1691 = vpack.c.bf16 %v1631, %v1630
  %v1692 = vpack.c.bf16 %v1633, %v1632
  %v1693 = vpack.c.bf16 %v1635, %v1634
  %v1694 = vpack.c.bf16 %v1637, %v1636
  %v1695 = vpack.c.bf16 %v1639, %v1638
  %v1696 = vpack.c.bf16 %v1641, %v1640
  %v1697 = vpack.c.bf16 %v1643, %v1642
  %v1698 = vpack.c.bf16 %v1645, %v1644
  %v1699 = vpack.c.bf16 %v1647, %v1646
  %v1700 = vpack.c.bf16 %v1649, %v1648
  %v1701 = vpack.c.bf16 %v1651, %v1650
  %v1702 = vpack.c.bf16 %v1653, %v1652
  %v1703 = vpack.c.bf16 %v1655, %v1654
  %v1704 = vpack.c.bf16 %v1657, %v1656
  %v1705 = vpack.c.bf16 %v1659, %v1658
  %v1706 = vpack.c.bf16 %v1661, %v1660
  %v1707 = vpack.c.bf16 %v1663, %v1662
  %v1708 = vpack.c.bf16 %v1665, %v1664
  %v1709 = vpack.c.bf16 %v1667, %v1666
  %v1710 = vpack.c.bf16 %v1669, %v1668
  %v1711 = vpack.c.bf16 %v1671, %v1670
  %v1712 = vpack.c.bf16 %v1673, %v1672
  %v1713 = vpack.c.bf16 %v1675, %v1674
  %v1714 = vpack.c.bf16 %v1677, %v1676
  %v1715 = vpack.c.bf16 %v1679, %v1678
  %v1716 = vpack.c.bf16 %v1681, %v1680
  %v1717 = vpack.c.bf16 %v1683, %v1682
  %v1718 = vpack.c.bf16 %v1685, %v1684
  %v1719 = vpack.c.bf16 %v1687, %v1686
  %v1752 = vunpack.c.l.b16 %v1688
  %v1753 = vunpack.c.h.b16 %v1688
  %v1754 = vunpack.c.l.b16 %v1689
  %v1755 = vunpack.c.h.b16 %v1689
  %v1756 = vunpack.c.l.b16 %v1690
  %v1757 = vunpack.c.h.b16 %v1690
  %v1758 = vunpack.c.l.b16 %v1691
  %v1759 = vunpack.c.h.b16 %v1691
  %v1760 = vunpack.c.l.b16 %v1692
  %v1761 = vunpack.c.h.b16 %v1692
  %v1762 = vunpack.c.l.b16 %v1693
  %v1763 = vunpack.c.h.b16 %v1693
  %v1764 = vunpack.c.l.b16 %v1694
  %v1765 = vunpack.c.h.b16 %v1694
  %v1766 = vunpack.c.l.b16 %v1695
  %v1767 = vunpack.c.h.b16 %v1695
  %v1768 = vunpack.c.l.b16 %v1696
  %v1769 = vunpack.c.h.b16 %v1696
  %v1770 = vunpack.c.l.b16 %v1697
  %v1771 = vunpack.c.h.b16 %v1697
  %v1772 = vunpack.c.l.b16 %v1698
  %v1773 = vunpack.c.h.b16 %v1698
  %v1774 = vunpack.c.l.b16 %v1699
  %v1775 = vunpack.c.h.b16 %v1699
  %v1776 = vunpack.c.l.b16 %v1700
  %v1777 = vunpack.c.h.b16 %v1700
  %v1778 = vunpack.c.l.b16 %v1701
  %v1779 = vunpack.c.h.b16 %v1701
  %v1780 = vunpack.c.l.b16 %v1702
  %v1781 = vunpack.c.h.b16 %v1702
  %v1782 = vunpack.c.l.b16 %v1703
  %v1783 = vunpack.c.h.b16 %v1703
  %v1784 = vunpack.c.l.b16 %v1704
  %v1785 = vunpack.c.h.b16 %v1704
  %v1786 = vunpack.c.l.b16 %v1705
  %v1787 = vunpack.c.h.b16 %v1705
  %v1788 = vunpack.c.l.b16 %v1706
  %v1789 = vunpack.c.h.b16 %v1706
  %v1790 = vunpack.c.l.b16 %v1707
  %v1791 = vunpack.c.h.b16 %v1707
  %v1792 = vunpack.c.l.b16 %v1708
  %v1793 = vunpack.c.h.b16 %v1708
  %v1794 = vunpack.c.l.b16 %v1709
  %v1795 = vunpack.c.h.b16 %v1709
  %v1796 = vunpack.c.l.b16 %v1710
  %v1797 = vunpack.c.h.b16 %v1710
  %v1798 = vunpack.c.l.b16 %v1711
  %v1799 = vunpack.c.h.b16 %v1711
  %v1800 = vunpack.c.l.b16 %v1712
  %v1801 = vunpack.c.h.b16 %v1712
  %v1802 = vunpack.c.l.b16 %v1713
  %v1803 = vunpack.c.h.b16 %v1713
  %v1804 = vunpack.c.l.b16 %v1714
  %v1805 = vunpack.c.h.b16 %v1714
  %v1806 = vunpack.c.l.b16 %v1715
  %v1807 = vunpack.c.h.b16 %v1715
  %v1808 = vunpack.c.l.b16 %v1716
  %v1809 = vunpack.c.h.b16 %v1716
  %v1810 = vunpack.c.l.b16 %v1717
  %v1811 = vunpack.c.h.b16 %v1717
  %v1812 = vunpack.c.l.b16 %v1718
  %v1813 = vunpack.c.h.b16 %v1718
  %v1814 = vunpack.c.l.b16 %v1719
  %v1815 = vunpack.c.h.b16 %v1719
  %v1816 = vpack.c.b16 %v1752, %v1752
  %v1817 = vpack.c.b16 %v1753, %v1753
  %v1818 = vpack.c.b16 %v1754, %v1754
  %v1819 = vpack.c.b16 %v1755, %v1755
  %v1820 = vpack.c.b16 %v1756, %v1756
  %v1821 = vpack.c.b16 %v1757, %v1757
  %v1822 = vpack.c.b16 %v1758, %v1758
  %v1823 = vpack.c.b16 %v1759, %v1759
  %v1824 = vpack.c.b16 %v1760, %v1760
  %v1825 = vpack.c.b16 %v1761, %v1761
  %v1826 = vpack.c.b16 %v1762, %v1762
  %v1827 = vpack.c.b16 %v1763, %v1763
  %v1828 = vpack.c.b16 %v1764, %v1764
  %v1829 = vpack.c.b16 %v1765, %v1765
  %v1830 = vpack.c.b16 %v1766, %v1766
  %v1831 = vpack.c.b16 %v1767, %v1767
  %v1832 = vpack.c.b16 %v1768, %v1768
  %v1833 = vpack.c.b16 %v1769, %v1769
  %v1834 = vpack.c.b16 %v1770, %v1770
  %v1835 = vpack.c.b16 %v1771, %v1771
  %v1836 = vpack.c.b16 %v1772, %v1772
  %v1837 = vpack.c.b16 %v1773, %v1773
  %v1838 = vpack.c.b16 %v1774, %v1774
  %v1839 = vpack.c.b16 %v1775, %v1775
  %v1840 = vpack.c.b16 %v1776, %v1776
  %v1841 = vpack.c.b16 %v1777, %v1777
  %v1842 = vpack.c.b16 %v1778, %v1778
  %v1843 = vpack.c.b16 %v1779, %v1779
  %v1844 = vpack.c.b16 %v1780, %v1780
  %v1845 = vpack.c.b16 %v1781, %v1781
  %v1846 = vpack.c.b16 %v1782, %v1782
  %v1847 = vpack.c.b16 %v1783, %v1783
  %v1848 = vpack.c.b16 %v1784, %v1784
  %v1849 = vpack.c.b16 %v1785, %v1785
  %v1850 = vpack.c.b16 %v1786, %v1786
  %v1851 = vpack.c.b16 %v1787, %v1787
  %v1852 = vpack.c.b16 %v1788, %v1788
  %v1853 = vpack.c.b16 %v1789, %v1789
  %v1854 = vpack.c.b16 %v1790, %v1790
  %v1855 = vpack.c.b16 %v1791, %v1791
  %v1856 = vpack.c.b16 %v1792, %v1792
  %v1857 = vpack.c.b16 %v1793, %v1793
  %v1858 = vpack.c.b16 %v1794, %v1794
  %v1859 = vpack.c.b16 %v1795, %v1795
  %v1860 = vpack.c.b16 %v1796, %v1796
  %v1861 = vpack.c.b16 %v1797, %v1797
  %v1862 = vpack.c.b16 %v1798, %v1798
  %v1863 = vpack.c.b16 %v1799, %v1799
  %v1864 = vpack.c.b16 %v1800, %v1800
  %v1865 = vpack.c.b16 %v1801, %v1801
  %v1866 = vpack.c.b16 %v1802, %v1802
  %v1867 = vpack.c.b16 %v1803, %v1803
  %v1868 = vpack.c.b16 %v1804, %v1804
  %v1869 = vpack.c.b16 %v1805, %v1805
  %v1870 = vpack.c.b16 %v1806, %v1806
  %v1871 = vpack.c.b16 %v1807, %v1807
  %v1872 = vpack.c.b16 %v1808, %v1808
  %v1873 = vpack.c.b16 %v1809, %v1809
  %v1874 = vpack.c.b16 %v1810, %v1810
  %v1875 = vpack.c.b16 %v1811, %v1811
  %v1876 = vpack.c.b16 %v1812, %v1812
  %v1877 = vpack.c.b16 %v1813, %v1813
  %v1878 = vpack.c.b16 %v1814, %v1814
  %v1879 = vpack.c.b16 %v1815, %v1815
  %1944 = vst [vmem:[%s3] sm:$0xf] %v1816
  %1945 = vst [vmem:[%s3 + $0x4] sm:$0xf] %v1817
  %1946 = vst [vmem:[%s3 + $0x8] sm:$0xf] %v1818
  %1947 = vst [vmem:[%s3 + $0xc] sm:$0xf] %v1819
  %1948 = vst [vmem:[%s3 + $0x10] sm:$0xf] %v1820
  %1949 = vst [vmem:[%s3 + $0x14] sm:$0xf] %v1821
  %1950 = vst [vmem:[%s3 + $0x18] sm:$0xf] %v1822
  %1951 = vst [vmem:[%s3 + $0x1c] sm:$0xf] %v1823
  %1952 = vst [vmem:[%s3 + $0x20] sm:$0xf] %v1824
  %1953 = vst [vmem:[%s3 + $0x24] sm:$0xf] %v1825
  %1954 = vst [vmem:[%s3 + $0x28] sm:$0xf] %v1826
  %1955 = vst [vmem:[%s3 + $0x2c] sm:$0xf] %v1827
  %1956 = vst [vmem:[%s3 + $0x30] sm:$0xf] %v1828
  %1957 = vst [vmem:[%s3 + $0x34] sm:$0xf] %v1829
  %1958 = vst [vmem:[%s3 + $0x38] sm:$0xf] %v1830
  %1959 = vst [vmem:[%s3 + $0x3c] sm:$0xf] %v1831
  %1960 = vst [vmem:[%s3 + $0x40] sm:$0xf] %v1832
  %1961 = vst [vmem:[%s3 + $0x44] sm:$0xf] %v1833
  %1962 = vst [vmem:[%s3 + $0x48] sm:$0xf] %v1834
  %1963 = vst [vmem:[%s3 + $0x4c] sm:$0xf] %v1835
  %1964 = vst [vmem:[%s3 + $0x50] sm:$0xf] %v1836
  %1965 = vst [vmem:[%s3 + $0x54] sm:$0xf] %v1837
  %1966 = vst [vmem:[%s3 + $0x58] sm:$0xf] %v1838
  %1967 = vst [vmem:[%s3 + $0x5c] sm:$0xf] %v1839
  %1968 = vst [vmem:[%s3 + $0x60] sm:$0xf] %v1840
  %1969 = vst [vmem:[%s3 + $0x64] sm:$0xf] %v1841
  %1970 = vst [vmem:[%s3 + $0x68] sm:$0xf] %v1842
  %1971 = vst [vmem:[%s3 + $0x6c] sm:$0xf] %v1843
  %1972 = vst [vmem:[%s3 + $0x70] sm:$0xf] %v1844
  %1973 = vst [vmem:[%s3 + $0x74] sm:$0xf] %v1845
  %1974 = vst [vmem:[%s3 + $0x78] sm:$0xf] %v1846
  %1975 = vst [vmem:[%s3 + $0x7c] sm:$0xf] %v1847
  %1976 = vst [vmem:[%s3 + $0x80] sm:$0xf] %v1848
  %1977 = vst [vmem:[%s3 + $0x84] sm:$0xf] %v1849
  %1978 = vst [vmem:[%s3 + $0x88] sm:$0xf] %v1850
  %1979 = vst [vmem:[%s3 + $0x8c] sm:$0xf] %v1851
  %1980 = vst [vmem:[%s3 + $0x90] sm:$0xf] %v1852
  %1981 = vst [vmem:[%s3 + $0x94] sm:$0xf] %v1853
  %1982 = vst [vmem:[%s3 + $0x98] sm:$0xf] %v1854
  %1983 = vst [vmem:[%s3 + $0x9c] sm:$0xf] %v1855
  %1984 = vst [vmem:[%s3 + $0xa0] sm:$0xf] %v1856
  %1985 = vst [vmem:[%s3 + $0xa4] sm:$0xf] %v1857
  %1986 = vst [vmem:[%s3 + $0xa8] sm:$0xf] %v1858
  %1987 = vst [vmem:[%s3 + $0xac] sm:$0xf] %v1859
  %1988 = vst [vmem:[%s3 + $0xb0] sm:$0xf] %v1860
  %1989 = vst [vmem:[%s3 + $0xb4] sm:$0xf] %v1861
  %1990 = vst [vmem:[%s3 + $0xb8] sm:$0xf] %v1862
  %1991 = vst [vmem:[%s3 + $0xbc] sm:$0xf] %v1863
  %1992 = vst [vmem:[%s3 + $0xc0] sm:$0xf] %v1864
  %1993 = vst [vmem:[%s3 + $0xc4] sm:$0xf] %v1865
  %1994 = vst [vmem:[%s3 + $0xc8] sm:$0xf] %v1866
  %1995 = vst [vmem:[%s3 + $0xcc] sm:$0xf] %v1867
  %1996 = vst [vmem:[%s3 + $0xd0] sm:$0xf] %v1868
  %1997 = vst [vmem:[%s3 + $0xd4] sm:$0xf] %v1869
  %1998 = vst [vmem:[%s3 + $0xd8] sm:$0xf] %v1870
  %1999 = vst [vmem:[%s3 + $0xdc] sm:$0xf] %v1871
  %2000 = vst [vmem:[%s3 + $0xe0] sm:$0xf] %v1872
  %2001 = vst [vmem:[%s3 + $0xe4] sm:$0xf] %v1873
  %2002 = vst [vmem:[%s3 + $0xe8] sm:$0xf] %v1874
  %2003 = vst [vmem:[%s3 + $0xec] sm:$0xf] %v1875
  %2004 = vst [vmem:[%s3 + $0xf0] sm:$0xf] %v1876
  %2005 = vst [vmem:[%s3 + $0xf4] sm:$0xf] %v1877
  %2006 = vst [vmem:[%s3 + $0xf8] sm:$0xf] %v1878
  %2007 = vst [vmem:[%s3 + $0xfc] sm:$0xf] %v1879
  // Predicated region
  $region14: #{ffvae_forward.11} parent=0 // pred_check
    _
  $region15: #{ffvae_forward.11} parent=0 // pred_check_branch
    %2009 = sbr.rel (0) target = $region17
  $region16: #{ffvae_forward.11} parent=0 // pred_region
    _
  $region17: #{ffvae_forward.11} parent=0 // pred_fallthru
    _
  // Predicated region
  $region18: #{ffvae_forward.11} parent=0 // pred_check
    _
  $region19: #{ffvae_forward.11} parent=0 // pred_check_branch
    %2011 = sbr.rel (0) target = $region21
  $region20: #{ffvae_forward.11} parent=0 // pred_region
    _
  $region21: #{ffvae_forward.11} parent=0 // pred_fallthru
    _

// kernel: ffvae_forward.12
$region0: #{ffvae_forward.12}
  #allocation0 [shape = 'u32[]', space=smem, size = 0x4, offset = 0x4, fixed_abs, tag = 'smem constant byte address 0x4 - core index']
  #allocation1 [shape = 'u32[144,128]{1,0:T(1,128)}', space=vmem, size = 0x12000, scoped, tag = 'internal scratch']
  %s0 = inlined_call_operand.vmem [shape: bf16[1,128,512], index: 0, kind: input, shape index: {}]
  %s1 = inlined_call_operand.vmem [shape: bf16[1,512,128], index: 1, kind: input, shape index: {}]
  %s2 = inlined_call_operand.vmem [shape: f32[1,1,128], index: 2, kind: input, shape index: {}]
  %s3 = inlined_call_operand.vmem [shape: bf16[1,128,128], index: 3, kind: output, shape index: {}]
  %s4 = sld [smem:[#allocation0]]
  $region22: #{ffvae_forward.12} parent=0
    _
  %s6 = ssub.s32 1, %s4
  %s7 = scalar_select 0, %s6, %s4
  // Predicated region
  $region2: #{ffvae_forward.12} parent=0 // pred_check
    _
  $region3: #{ffvae_forward.12} parent=0 // pred_check_branch
    %9 = sbr.rel (0) target = $region5
  $region4: #{ffvae_forward.12} parent=0 // pred_region
    _
  $region5: #{ffvae_forward.12} parent=0 // pred_fallthru
    _
  // Predicated region
  $region6: #{ffvae_forward.12} parent=0 // pred_check
    _
  $region7: #{ffvae_forward.12} parent=0 // pred_check_branch
    %11 = sbr.rel (0) target = $region9
  $region8: #{ffvae_forward.12} parent=0 // pred_region
    _
  $region9: #{ffvae_forward.12} parent=0 // pred_fallthru
    _
  // Predicated region
  $region10: #{ffvae_forward.12} parent=0 // pred_check
    _
  $region11: #{ffvae_forward.12} parent=0 // pred_check_branch
    %13 = sbr.rel (0) target = $region13
  $region12: #{ffvae_forward.12} parent=0 // pred_region
    _
  $region13: #{ffvae_forward.12} parent=0 // pred_fallthru
    _
  %v15 = vld [vmem:[%s0] sm:$0xff]
  %v16 = vld [vmem:[%s0 + $0x8] sm:$0xff]
  %v17 = vld [vmem:[%s0 + $0x10] sm:$0xff]
  %v18 = vld [vmem:[%s0 + $0x18] sm:$0xff]
  %v19 = vld [vmem:[%s0 + $0x20] sm:$0xff]
  %v20 = vld [vmem:[%s0 + $0x28] sm:$0xff]
  %v21 = vld [vmem:[%s0 + $0x30] sm:$0xff]
  %v22 = vld [vmem:[%s0 + $0x38] sm:$0xff]
  %v23 = vld [vmem:[%s0 + $0x40] sm:$0xff]
  %v24 = vld [vmem:[%s0 + $0x48] sm:$0xff]
  %v25 = vld [vmem:[%s0 + $0x50] sm:$0xff]
  %v26 = vld [vmem:[%s0 + $0x58] sm:$0xff]
  %v27 = vld [vmem:[%s0 + $0x60] sm:$0xff]
  %v28 = vld [vmem:[%s0 + $0x68] sm:$0xff]
  %v29 = vld [vmem:[%s0 + $0x70] sm:$0xff]
  %v30 = vld [vmem:[%s0 + $0x78] sm:$0xff]
  %v31 = vld [vmem:[%s0 + $0x80] sm:$0xff]
  %v32 = vld [vmem:[%s0 + $0x88] sm:$0xff]
  %v33 = vld [vmem:[%s0 + $0x90] sm:$0xff]
  %v34 = vld [vmem:[%s0 + $0x98] sm:$0xff]
  %v35 = vld [vmem:[%s0 + $0xa0] sm:$0xff]
  %v36 = vld [vmem:[%s0 + $0xa8] sm:$0xff]
  %v37 = vld [vmem:[%s0 + $0xb0] sm:$0xff]
  %v38 = vld [vmem:[%s0 + $0xb8] sm:$0xff]
  %v39 = vld [vmem:[%s0 + $0xc0] sm:$0xff]
  %v40 = vld [vmem:[%s0 + $0xc8] sm:$0xff]
  %v41 = vld [vmem:[%s0 + $0xd0] sm:$0xff]
  %v42 = vld [vmem:[%s0 + $0xd8] sm:$0xff]
  %v43 = vld [vmem:[%s0 + $0xe0] sm:$0xff]
  %v44 = vld [vmem:[%s0 + $0xe8] sm:$0xff]
  %v45 = vld [vmem:[%s0 + $0xf0] sm:$0xff]
  %v46 = vld [vmem:[%s0 + $0xf8] sm:$0xff]
  %v47 = vld [vmem:[%s1] sm:$0xf]
  %v48 = vld [vmem:[%s1 + $0x4] sm:$0xf]
  %v49 = vld [vmem:[%s1 + $0x8] sm:$0xf]
  %v50 = vld [vmem:[%s1 + $0xc] sm:$0xf]
  %v51 = vld [vmem:[%s1 + $0x10] sm:$0xf]
  %v52 = vld [vmem:[%s1 + $0x14] sm:$0xf]
  %v53 = vld [vmem:[%s1 + $0x18] sm:$0xf]
  %v54 = vld [vmem:[%s1 + $0x1c] sm:$0xf]
  %v55 = vld [vmem:[%s1 + $0x20] sm:$0xf]
  %v56 = vld [vmem:[%s1 + $0x24] sm:$0xf]
  %v57 = vld [vmem:[%s1 + $0x28] sm:$0xf]
  %v58 = vld [vmem:[%s1 + $0x2c] sm:$0xf]
  %v59 = vld [vmem:[%s1 + $0x30] sm:$0xf]
  %v60 = vld [vmem:[%s1 + $0x34] sm:$0xf]
  %v61 = vld [vmem:[%s1 + $0x38] sm:$0xf]
  %v62 = vld [vmem:[%s1 + $0x3c] sm:$0xf]
  %v63 = vld [vmem:[%s1 + $0x40] sm:$0xf]
  %v64 = vld [vmem:[%s1 + $0x44] sm:$0xf]
  %v65 = vld [vmem:[%s1 + $0x48] sm:$0xf]
  %v66 = vld [vmem:[%s1 + $0x4c] sm:$0xf]
  %v67 = vld [vmem:[%s1 + $0x50] sm:$0xf]
  %v68 = vld [vmem:[%s1 + $0x54] sm:$0xf]
  %v69 = vld [vmem:[%s1 + $0x58] sm:$0xf]
  %v70 = vld [vmem:[%s1 + $0x5c] sm:$0xf]
  %v71 = vld [vmem:[%s1 + $0x60] sm:$0xf]
  %v72 = vld [vmem:[%s1 + $0x64] sm:$0xf]
  %v73 = vld [vmem:[%s1 + $0x68] sm:$0xf]
  %v74 = vld [vmem:[%s1 + $0x6c] sm:$0xf]
  %v75 = vld [vmem:[%s1 + $0x70] sm:$0xf]
  %v76 = vld [vmem:[%s1 + $0x74] sm:$0xf]
  %v77 = vld [vmem:[%s1 + $0x78] sm:$0xf]
  %v78 = vld [vmem:[%s1 + $0x7c] sm:$0xf]
  %v79 = vld [vmem:[%s1 + $0x80] sm:$0xf]
  %v80 = vld [vmem:[%s1 + $0x84] sm:$0xf]
  %v81 = vld [vmem:[%s1 + $0x88] sm:$0xf]
  %v82 = vld [vmem:[%s1 + $0x8c] sm:$0xf]
  %v83 = vld [vmem:[%s1 + $0x90] sm:$0xf]
  %v84 = vld [vmem:[%s1 + $0x94] sm:$0xf]
  %v85 = vld [vmem:[%s1 + $0x98] sm:$0xf]
  %v86 = vld [vmem:[%s1 + $0x9c] sm:$0xf]
  %v87 = vld [vmem:[%s1 + $0xa0] sm:$0xf]
  %v88 = vld [vmem:[%s1 + $0xa4] sm:$0xf]
  %v89 = vld [vmem:[%s1 + $0xa8] sm:$0xf]
  %v90 = vld [vmem:[%s1 + $0xac] sm:$0xf]
  %v91 = vld [vmem:[%s1 + $0xb0] sm:$0xf]
  %v92 = vld [vmem:[%s1 + $0xb4] sm:$0xf]
  %v93 = vld [vmem:[%s1 + $0xb8] sm:$0xf]
  %v94 = vld [vmem:[%s1 + $0xbc] sm:$0xf]
  %v95 = vld [vmem:[%s1 + $0xc0] sm:$0xf]
  %v96 = vld [vmem:[%s1 + $0xc4] sm:$0xf]
  %v97 = vld [vmem:[%s1 + $0xc8] sm:$0xf]
  %v98 = vld [vmem:[%s1 + $0xcc] sm:$0xf]
  %v99 = vld [vmem:[%s1 + $0xd0] sm:$0xf]
  %v100 = vld [vmem:[%s1 + $0xd4] sm:$0xf]
  %v101 = vld [vmem:[%s1 + $0xd8] sm:$0xf]
  %v102 = vld [vmem:[%s1 + $0xdc] sm:$0xf]
  %v103 = vld [vmem:[%s1 + $0xe0] sm:$0xf]
  %v104 = vld [vmem:[%s1 + $0xe4] sm:$0xf]
  %v105 = vld [vmem:[%s1 + $0xe8] sm:$0xf]
  %v106 = vld [vmem:[%s1 + $0xec] sm:$0xf]
  %v107 = vld [vmem:[%s1 + $0xf0] sm:$0xf]
  %v108 = vld [vmem:[%s1 + $0xf4] sm:$0xf]
  %v109 = vld [vmem:[%s1 + $0xf8] sm:$0xf]
  %v110 = vld [vmem:[%s1 + $0xfc] sm:$0xf]
  %v111 = vld [vmem:[%s2] sm:$0x1]
  %v113 = vlaneseq
  %v114 = vshrl.u32 %v113, 7
  %v115 = vsub.s32 0, %v114
  %v116 = vrot.slane %v111, %v115
  %v150 = vunpack.c.l.b16 %v15
  %v151 = vunpack.c.h.b16 %v15
  %v152 = vunpack.c.l.b16 %v16
  %v153 = vunpack.c.h.b16 %v16
  %v154 = vunpack.c.l.b16 %v17
  %v155 = vunpack.c.h.b16 %v17
  %v156 = vunpack.c.l.b16 %v18
  %v157 = vunpack.c.h.b16 %v18
  %v158 = vunpack.c.l.b16 %v19
  %v159 = vunpack.c.h.b16 %v19
  %v160 = vunpack.c.l.b16 %v20
  %v161 = vunpack.c.h.b16 %v20
  %v162 = vunpack.c.l.b16 %v21
  %v163 = vunpack.c.h.b16 %v21
  %v164 = vunpack.c.l.b16 %v22
  %v165 = vunpack.c.h.b16 %v22
  %v166 = vunpack.c.l.b16 %v23
  %v167 = vunpack.c.h.b16 %v23
  %v168 = vunpack.c.l.b16 %v24
  %v169 = vunpack.c.h.b16 %v24
  %v170 = vunpack.c.l.b16 %v25
  %v171 = vunpack.c.h.b16 %v25
  %v172 = vunpack.c.l.b16 %v26
  %v173 = vunpack.c.h.b16 %v26
  %v174 = vunpack.c.l.b16 %v27
  %v175 = vunpack.c.h.b16 %v27
  %v176 = vunpack.c.l.b16 %v28
  %v177 = vunpack.c.h.b16 %v28
  %v178 = vunpack.c.l.b16 %v29
  %v179 = vunpack.c.h.b16 %v29
  %v180 = vunpack.c.l.b16 %v30
  %v181 = vunpack.c.h.b16 %v30
  %v182 = vunpack.c.l.b16 %v31
  %v183 = vunpack.c.h.b16 %v31
  %v184 = vunpack.c.l.b16 %v32
  %v185 = vunpack.c.h.b16 %v32
  %v186 = vunpack.c.l.b16 %v33
  %v187 = vunpack.c.h.b16 %v33
  %v188 = vunpack.c.l.b16 %v34
  %v189 = vunpack.c.h.b16 %v34
  %v190 = vunpack.c.l.b16 %v35
  %v191 = vunpack.c.h.b16 %v35
  %v192 = vunpack.c.l.b16 %v36
  %v193 = vunpack.c.h.b16 %v36
  %v194 = vunpack.c.l.b16 %v37
  %v195 = vunpack.c.h.b16 %v37
  %v196 = vunpack.c.l.b16 %v38
  %v197 = vunpack.c.h.b16 %v38
  %v198 = vunpack.c.l.b16 %v39
  %v199 = vunpack.c.h.b16 %v39
  %v200 = vunpack.c.l.b16 %v40
  %v201 = vunpack.c.h.b16 %v40
  %v202 = vunpack.c.l.b16 %v41
  %v203 = vunpack.c.h.b16 %v41
  %v204 = vunpack.c.l.b16 %v42
  %v205 = vunpack.c.h.b16 %v42
  %v206 = vunpack.c.l.b16 %v43
  %v207 = vunpack.c.h.b16 %v43
  %v208 = vunpack.c.l.b16 %v44
  %v209 = vunpack.c.h.b16 %v44
  %v210 = vunpack.c.l.b16 %v45
  %v211 = vunpack.c.h.b16 %v45
  %v212 = vunpack.c.l.b16 %v46
  %v213 = vunpack.c.h.b16 %v46
  %v214 = vpack.c.b16 %v154, %v150
  %v215 = vpack.c.b16 %v155, %v151
  %v216 = vpack.c.b16 %v156, %v152
  %v217 = vpack.c.b16 %v157, %v153
  %v218 = vpack.c.b16 %v162, %v158
  %v219 = vpack.c.b16 %v163, %v159
  %v220 = vpack.c.b16 %v164, %v160
  %v221 = vpack.c.b16 %v165, %v161
  %v222 = vpack.c.b16 %v170, %v166
  %v223 = vpack.c.b16 %v171, %v167
  %v224 = vpack.c.b16 %v172, %v168
  %v225 = vpack.c.b16 %v173, %v169
  %v226 = vpack.c.b16 %v178, %v174
  %v227 = vpack.c.b16 %v179, %v175
  %v228 = vpack.c.b16 %v180, %v176
  %v229 = vpack.c.b16 %v181, %v177
  %v230 = vpack.c.b16 %v186, %v182
  %v231 = vpack.c.b16 %v187, %v183
  %v232 = vpack.c.b16 %v188, %v184
  %v233 = vpack.c.b16 %v189, %v185
  %v234 = vpack.c.b16 %v194, %v190
  %v235 = vpack.c.b16 %v195, %v191
  %v236 = vpack.c.b16 %v196, %v192
  %v237 = vpack.c.b16 %v197, %v193
  %v238 = vpack.c.b16 %v202, %v198
  %v239 = vpack.c.b16 %v203, %v199
  %v240 = vpack.c.b16 %v204, %v200
  %v241 = vpack.c.b16 %v205, %v201
  %v242 = vpack.c.b16 %v210, %v206
  %v243 = vpack.c.b16 %v211, %v207
  %v244 = vpack.c.b16 %v212, %v208
  %v245 = vpack.c.b16 %v213, %v209
  %v342 = vunpack.c.l.b16 %v47
  %v343 = vunpack.c.l.b16 %v48
  %v344 = vunpack.c.l.b16 %v49
  %v345 = vunpack.c.l.b16 %v50
  %v346 = vunpack.c.l.b16 %v51
  %v347 = vunpack.c.l.b16 %v52
  %v348 = vunpack.c.l.b16 %v53
  %v349 = vunpack.c.l.b16 %v54
  %v350 = vunpack.c.l.b16 %v55
  %v351 = vunpack.c.l.b16 %v56
  %v352 = vunpack.c.l.b16 %v57
  %v353 = vunpack.c.l.b16 %v58
  %v354 = vunpack.c.l.b16 %v59
  %v355 = vunpack.c.l.b16 %v60
  %v356 = vunpack.c.l.b16 %v61
  %v357 = vunpack.c.l.b16 %v62
  %v358 = vunpack.c.l.b16 %v63
  %v359 = vunpack.c.l.b16 %v64
  %v360 = vunpack.c.l.b16 %v65
  %v361 = vunpack.c.l.b16 %v66
  %v362 = vunpack.c.l.b16 %v67
  %v363 = vunpack.c.l.b16 %v68
  %v364 = vunpack.c.l.b16 %v69
  %v365 = vunpack.c.l.b16 %v70
  %v366 = vunpack.c.l.b16 %v71
  %v367 = vunpack.c.l.b16 %v72
  %v368 = vunpack.c.l.b16 %v73
  %v369 = vunpack.c.l.b16 %v74
  %v370 = vunpack.c.l.b16 %v75
  %v371 = vunpack.c.l.b16 %v76
  %v372 = vunpack.c.l.b16 %v77
  %v373 = vunpack.c.l.b16 %v78
  %v374 = vunpack.c.l.b16 %v79
  %v375 = vunpack.c.l.b16 %v80
  %v376 = vunpack.c.l.b16 %v81
  %v377 = vunpack.c.l.b16 %v82
  %v378 = vunpack.c.l.b16 %v83
  %v379 = vunpack.c.l.b16 %v84
  %v380 = vunpack.c.l.b16 %v85
  %v381 = vunpack.c.l.b16 %v86
  %v382 = vunpack.c.l.b16 %v87
  %v383 = vunpack.c.l.b16 %v88
  %v384 = vunpack.c.l.b16 %v89
  %v385 = vunpack.c.l.b16 %v90
  %v386 = vunpack.c.l.b16 %v91
  %v387 = vunpack.c.l.b16 %v92
  %v388 = vunpack.c.l.b16 %v93
  %v389 = vunpack.c.l.b16 %v94
  %v390 = vunpack.c.l.b16 %v95
  %v391 = vunpack.c.l.b16 %v96
  %v392 = vunpack.c.l.b16 %v97
  %v393 = vunpack.c.l.b16 %v98
  %v394 = vunpack.c.l.b16 %v99
  %v395 = vunpack.c.l.b16 %v100
  %v396 = vunpack.c.l.b16 %v101
  %v397 = vunpack.c.l.b16 %v102
  %v398 = vunpack.c.l.b16 %v103
  %v399 = vunpack.c.l.b16 %v104
  %v400 = vunpack.c.l.b16 %v105
  %v401 = vunpack.c.l.b16 %v106
  %v402 = vunpack.c.l.b16 %v107
  %v403 = vunpack.c.l.b16 %v108
  %v404 = vunpack.c.l.b16 %v109
  %v405 = vunpack.c.l.b16 %v110
  %v406 = vpack.c.b16 %v343, %v342
  %v407 = vpack.c.b16 %v345, %v344
  %v408 = vpack.c.b16 %v347, %v346
  %v409 = vpack.c.b16 %v349, %v348
  %v410 = vpack.c.b16 %v351, %v350
  %v411 = vpack.c.b16 %v353, %v352
  %v412 = vpack.c.b16 %v355, %v354
  %v413 = vpack.c.b16 %v357, %v356
  %v414 = vpack.c.b16 %v359, %v358
  %v415 = vpack.c.b16 %v361, %v360
  %v416 = vpack.c.b16 %v363, %v362
  %v417 = vpack.c.b16 %v365, %v364
  %v418 = vpack.c.b16 %v367, %v366
  %v419 = vpack.c.b16 %v369, %v368
  %v420 = vpack.c.b16 %v371, %v370
  %v421 = vpack.c.b16 %v373, %v372
  %v422 = vpack.c.b16 %v375, %v374
  %v423 = vpack.c.b16 %v377, %v376
  %v424 = vpack.c.b16 %v379, %v378
  %v425 = vpack.c.b16 %v381, %v380
  %v426 = vpack.c.b16 %v383, %v382
  %v427 = vpack.c.b16 %v385, %v384
  %v428 = vpack.c.b16 %v387, %v386
  %v429 = vpack.c.b16 %v389, %v388
  %v430 = vpack.c.b16 %v391, %v390
  %v431 = vpack.c.b16 %v393, %v392
  %v432 = vpack.c.b16 %v395, %v394
  %v433 = vpack.c.b16 %v397, %v396
  %v434 = vpack.c.b16 %v399, %v398
  %v435 = vpack.c.b16 %v401, %v400
  %v436 = vpack.c.b16 %v403, %v402
  %v437 = vpack.c.b16 %v405, %v404
  %470 = vmatprep.subr.bf16.mxu0 0
  %471 = vmatpush1.bf16.msra.mxu0 %v406
  %472 = vmatprep.subr.bf16.mxu0 0
  %473 = vmatpush1.bf16.msra.mxu0 %v407
  %474 = vmatprep.subr.bf16.mxu0 0
  %475 = vmatpush1.bf16.msra.mxu0 %v408
  %476 = vmatprep.subr.bf16.mxu0 0
  %477 = vmatpush1.bf16.msra.mxu0 %v409
  %478 = vmatprep.subr.bf16.mxu0 0
  %479 = vmatpush1.bf16.msra.mxu0 %v410
  %480 = vmatprep.subr.bf16.mxu0 0
  %481 = vmatpush1.bf16.msra.mxu0 %v411
  %482 = vmatprep.subr.bf16.mxu0 0
  %483 = vmatpush1.bf16.msra.mxu0 %v412
  %484 = vmatprep.subr.bf16.mxu0 0
  %485 = vmatpush1.bf16.msra.mxu0 %v413
  %486 = vmatprep.subr.bf16.mxu0 0
  %487 = vmatpush1.bf16.msra.mxu0 %v414
  %488 = vmatprep.subr.bf16.mxu0 0
  %489 = vmatpush1.bf16.msra.mxu0 %v415
  %490 = vmatprep.subr.bf16.mxu0 0
  %491 = vmatpush1.bf16.msra.mxu0 %v416
  %492 = vmatprep.subr.bf16.mxu0 0
  %493 = vmatpush1.bf16.msra.mxu0 %v417
  %494 = vmatprep.subr.bf16.mxu0 0
  %495 = vmatpush1.bf16.msra.mxu0 %v418
  %496 = vmatprep.subr.bf16.mxu0 0
  %497 = vmatpush1.bf16.msra.mxu0 %v419
  %498 = vmatprep.subr.bf16.mxu0 0
  %499 = vmatpush1.bf16.msra.mxu0 %v420
  %500 = vmatprep.subr.bf16.mxu0 0
  %501 = vmatpush1.bf16.msra.mxu0 %v421
  %502 = vmatprep.mubr.bf16.mxu0 %v215
  %503 = vmatmul.mubr.bf16.gmra.mrb[0].mxu0 %v214
  %v504 = vpop.f32.mrb[0].mxu0
  %v505 = vadd.f32 %v116, %v504
  %v506 = vpop.f32.mrb[0].mxu0
  %v507 = vpop.f32.mrb[0].mxu0
  %v508 = vadd.f32 %v116, %v507
  %v509 = vpop.f32.mrb[0].mxu0
  %510 = vmatprep.mubr.bf16.mxu0 %v219
  %511 = vmatmul.mubr.bf16.gmra.mrb[0].mxu0 %v218
  %v512 = vpop.f32.mrb[0].mxu0
  %v513 = vadd.f32 %v116, %v512
  %v514 = vpop.f32.mrb[0].mxu0
  %v515 = vpop.f32.mrb[0].mxu0
  %v516 = vadd.f32 %v116, %v515
  %v517 = vpop.f32.mrb[0].mxu0
  %518 = vmatprep.mubr.bf16.mxu0 %v223
  %519 = vmatmul.mubr.bf16.gmra.mrb[0].mxu0 %v222
  %v520 = vpop.f32.mrb[0].mxu0
  %v521 = vadd.f32 %v116, %v520
  %v522 = vpop.f32.mrb[0].mxu0
  %v523 = vpop.f32.mrb[0].mxu0
  %v524 = vadd.f32 %v116, %v523
  %v525 = vpop.f32.mrb[0].mxu0
  %526 = vmatprep.mubr.bf16.mxu0 %v227
  %527 = vmatmul.mubr.bf16.gmra.mrb[0].mxu0 %v226
  %v528 = vpop.f32.mrb[0].mxu0
  %v529 = vadd.f32 %v116, %v528
  %v530 = vpop.f32.mrb[0].mxu0
  %v531 = vpop.f32.mrb[0].mxu0
  %v532 = vadd.f32 %v116, %v531
  %v533 = vpop.f32.mrb[0].mxu0
  %534 = vmatprep.mubr.bf16.mxu0 %v231
  %535 = vmatmul.mubr.bf16.gmra.mrb[0].mxu0 %v230
  %v536 = vpop.f32.mrb[0].mxu0
  %v537 = vadd.f32 %v116, %v536
  %v538 = vpop.f32.mrb[0].mxu0
  %v539 = vpop.f32.mrb[0].mxu0
  %v540 = vadd.f32 %v116, %v539
  %v541 = vpop.f32.mrb[0].mxu0
  %542 = vmatprep.mubr.bf16.mxu0 %v235
  %543 = vmatmul.mubr.bf16.gmra.mrb[0].mxu0 %v234
  %v544 = vpop.f32.mrb[0].mxu0
  %v545 = vadd.f32 %v116, %v544
  %v546 = vpop.f32.mrb[0].mxu0
  %v547 = vpop.f32.mrb[0].mxu0
  %v548 = vadd.f32 %v116, %v547
  %v549 = vpop.f32.mrb[0].mxu0
  %550 = vmatprep.mubr.bf16.mxu0 %v239
  %551 = vmatmul.mubr.bf16.gmra.mrb[0].mxu0 %v238
  %v552 = vpop.f32.mrb[0].mxu0
  %v553 = vadd.f32 %v116, %v552
  %v554 = vpop.f32.mrb[0].mxu0
  %v555 = vpop.f32.mrb[0].mxu0
  %v556 = vadd.f32 %v116, %v555
  %v557 = vpop.f32.mrb[0].mxu0
  %558 = vmatprep.mubr.bf16.mxu0 %v243
  %559 = vmatmul.mubr.bf16.gmra.mrb[0].mxu0 %v242
  %v560 = vpop.f32.mrb[0].mxu0
  %v561 = vadd.f32 %v116, %v560
  %v562 = vpop.f32.mrb[0].mxu0
  %v563 = vpop.f32.mrb[0].mxu0
  %v564 = vadd.f32 %v116, %v563
  %v565 = vpop.f32.mrb[0].mxu0
  %566 = vdwg.mxu0
  %567 = vmatprep.subr.bf16.mxu0 0
  %568 = vmatpush1.bf16.msra.mxu0 %v422
  %569 = vmatprep.subr.bf16.mxu0 0
  %570 = vmatpush1.bf16.msra.mxu0 %v423
  %571 = vmatprep.subr.bf16.mxu0 0
  %572 = vmatpush1.bf16.msra.mxu0 %v424
  %573 = vmatprep.subr.bf16.mxu0 0
  %574 = vmatpush1.bf16.msra.mxu0 %v425
  %575 = vmatprep.subr.bf16.mxu0 0
  %576 = vmatpush1.bf16.msra.mxu0 %v426
  %577 = vmatprep.subr.bf16.mxu0 0
  %578 = vmatpush1.bf16.msra.mxu0 %v427
  %579 = vmatprep.subr.bf16.mxu0 0
  %580 = vmatpush1.bf16.msra.mxu0 %v428
  %581 = vmatprep.subr.bf16.mxu0 0
  %582 = vmatpush1.bf16.msra.mxu0 %v429
  %583 = vmatprep.subr.bf16.mxu0 0
  %584 = vmatpush1.bf16.msra.mxu0 %v430
  %585 = vmatprep.subr.bf16.mxu0 0
  %586 = vmatpush1.bf16.msra.mxu0 %v431
  %587 = vmatprep.subr.bf16.mxu0 0
  %588 = vmatpush1.bf16.msra.mxu0 %v432
  %589 = vmatprep.subr.bf16.mxu0 0
  %590 = vmatpush1.bf16.msra.mxu0 %v433
  %591 = vmatprep.subr.bf16.mxu0 0
  %592 = vmatpush1.bf16.msra.mxu0 %v434
  %593 = vmatprep.subr.bf16.mxu0 0
  %594 = vmatpush1.bf16.msra.mxu0 %v435
  %595 = vmatprep.subr.bf16.mxu0 0
  %596 = vmatpush1.bf16.msra.mxu0 %v436
  %597 = vmatprep.subr.bf16.mxu0 0
  %598 = vmatpush1.bf16.msra.mxu0 %v437
  %599 = vmatprep.mubr.bf16.mxu0 %v217
  %600 = vmatmul.mubr.bf16.gmra.mrb[0].mxu0 %v216
  %v601 = vpop.f32.mrb[0].mxu0
  %v602 = vadd.f32 %v505, %v601
  %v603 = vpop.f32.mrb[0].mxu0
  %v604 = vpop.f32.mrb[0].mxu0
  %v605 = vadd.f32 %v508, %v604
  %v606 = vpop.f32.mrb[0].mxu0
  %607 = vmatprep.mubr.bf16.mxu0 %v221
  %608 = vmatmul.mubr.bf16.gmra.mrb[0].mxu0 %v220
  %v609 = vpop.f32.mrb[0].mxu0
  %v610 = vadd.f32 %v513, %v609
  %v611 = vpop.f32.mrb[0].mxu0
  %v612 = vpop.f32.mrb[0].mxu0
  %v613 = vadd.f32 %v516, %v612
  %v614 = vpop.f32.mrb[0].mxu0
  %615 = vmatprep.mubr.bf16.mxu0 %v225
  %616 = vmatmul.mubr.bf16.gmra.mrb[0].mxu0 %v224
  %v617 = vpop.f32.mrb[0].mxu0
  %v618 = vadd.f32 %v521, %v617
  %v619 = vpop.f32.mrb[0].mxu0
  %v620 = vpop.f32.mrb[0].mxu0
  %v621 = vadd.f32 %v524, %v620
  %v622 = vpop.f32.mrb[0].mxu0
  %623 = vmatprep.mubr.bf16.mxu0 %v229
  %624 = vmatmul.mubr.bf16.gmra.mrb[0].mxu0 %v228
  %v625 = vpop.f32.mrb[0].mxu0
  %v626 = vadd.f32 %v529, %v625
  %v627 = vpop.f32.mrb[0].mxu0
  %v628 = vpop.f32.mrb[0].mxu0
  %v629 = vadd.f32 %v532, %v628
  %v630 = vpop.f32.mrb[0].mxu0
  %631 = vmatprep.mubr.bf16.mxu0 %v233
  %632 = vmatmul.mubr.bf16.gmra.mrb[0].mxu0 %v232
  %v633 = vpop.f32.mrb[0].mxu0
  %v634 = vadd.f32 %v537, %v633
  %v635 = vpop.f32.mrb[0].mxu0
  %v636 = vpop.f32.mrb[0].mxu0
  %v637 = vadd.f32 %v540, %v636
  %v638 = vpop.f32.mrb[0].mxu0
  %639 = vmatprep.mubr.bf16.mxu0 %v237
  %640 = vmatmul.mubr.bf16.gmra.mrb[0].mxu0 %v236
  %v641 = vpop.f32.mrb[0].mxu0
  %v642 = vadd.f32 %v545, %v641
  %v643 = vpop.f32.mrb[0].mxu0
  %v644 = vpop.f32.mrb[0].mxu0
  %v645 = vadd.f32 %v548, %v644
  %v646 = vpop.f32.mrb[0].mxu0
  %647 = vmatprep.mubr.bf16.mxu0 %v241
  %648 = vmatmul.mubr.bf16.gmra.mrb[0].mxu0 %v240
  %v649 = vpop.f32.mrb[0].mxu0
  %v650 = vadd.f32 %v553, %v649
  %v651 = vpop.f32.mrb[0].mxu0
  %v652 = vpop.f32.mrb[0].mxu0
  %v653 = vadd.f32 %v556, %v652
  %v654 = vpop.f32.mrb[0].mxu0
  %655 = vmatprep.mubr.bf16.mxu0 %v245
  %656 = vmatmul.mubr.bf16.gmra.mrb[0].mxu0 %v244
  %v657 = vpop.f32.mrb[0].mxu0
  %v658 = vadd.f32 %v561, %v657
  %v659 = vpop.f32.mrb[0].mxu0
  %v660 = vpop.f32.mrb[0].mxu0
  %v661 = vadd.f32 %v564, %v660
  %v662 = vpop.f32.mrb[0].mxu0
  %663 = vdwg.mxu0
  %v664 = vmax.f32 %v602, 0.0
  %v665 = vmax.f32 %v605, 0.0
  %v666 = vmax.f32 %v610, 0.0
  %v667 = vmax.f32 %v613, 0.0
  %v668 = vmax.f32 %v618, 0.0
  %v669 = vmax.f32 %v621, 0.0
  %v670 = vmax.f32 %v626, 0.0
  %v671 = vmax.f32 %v629, 0.0
  %v672 = vmax.f32 %v634, 0.0
  %v673 = vmax.f32 %v637, 0.0
  %v674 = vmax.f32 %v642, 0.0
  %v675 = vmax.f32 %v645, 0.0
  %v676 = vmax.f32 %v650, 0.0
  %v677 = vmax.f32 %v653, 0.0
  %v678 = vmax.f32 %v658, 0.0
  %v679 = vmax.f32 %v661, 0.0
  %v680 = vpack.c.bf16 %v665, %v664
  %v681 = vpack.c.bf16 %v667, %v666
  %v682 = vpack.c.bf16 %v669, %v668
  %v683 = vpack.c.bf16 %v671, %v670
  %v684 = vpack.c.bf16 %v673, %v672
  %v685 = vpack.c.bf16 %v675, %v674
  %v686 = vpack.c.bf16 %v677, %v676
  %v687 = vpack.c.bf16 %v679, %v678
  %v696 = vunpack.c.l.b16 %v680
  %v697 = vunpack.c.h.b16 %v680
  %v698 = vunpack.c.l.b16 %v681
  %v699 = vunpack.c.h.b16 %v681
  %v700 = vunpack.c.l.b16 %v682
  %v701 = vunpack.c.h.b16 %v682
  %v702 = vunpack.c.l.b16 %v683
  %v703 = vunpack.c.h.b16 %v683
  %v704 = vunpack.c.l.b16 %v684
  %v705 = vunpack.c.h.b16 %v684
  %v706 = vunpack.c.l.b16 %v685
  %v707 = vunpack.c.h.b16 %v685
  %v708 = vunpack.c.l.b16 %v686
  %v709 = vunpack.c.h.b16 %v686
  %v710 = vunpack.c.l.b16 %v687
  %v711 = vunpack.c.h.b16 %v687
  %v712 = vpack.c.b16 %v696, %v696
  %v713 = vpack.c.b16 %v697, %v697
  %v714 = vpack.c.b16 %v698, %v698
  %v715 = vpack.c.b16 %v699, %v699
  %v716 = vpack.c.b16 %v700, %v700
  %v717 = vpack.c.b16 %v701, %v701
  %v718 = vpack.c.b16 %v702, %v702
  %v719 = vpack.c.b16 %v703, %v703
  %v720 = vpack.c.b16 %v704, %v704
  %v721 = vpack.c.b16 %v705, %v705
  %v722 = vpack.c.b16 %v706, %v706
  %v723 = vpack.c.b16 %v707, %v707
  %v724 = vpack.c.b16 %v708, %v708
  %v725 = vpack.c.b16 %v709, %v709
  %v726 = vpack.c.b16 %v710, %v710
  %v727 = vpack.c.b16 %v711, %v711
  %744 = vst [vmem:[%s3] sm:$0xf] %v712
  %745 = vst [vmem:[%s3 + $0x4] sm:$0xf] %v713
  %746 = vst [vmem:[%s3 + $0x8] sm:$0xf] %v714
  %747 = vst [vmem:[%s3 + $0xc] sm:$0xf] %v715
  %748 = vst [vmem:[%s3 + $0x10] sm:$0xf] %v716
  %749 = vst [vmem:[%s3 + $0x14] sm:$0xf] %v717
  %750 = vst [vmem:[%s3 + $0x18] sm:$0xf] %v718
  %751 = vst [vmem:[%s3 + $0x1c] sm:$0xf] %v719
  %752 = vst [vmem:[%s3 + $0x20] sm:$0xf] %v720
  %753 = vst [vmem:[%s3 + $0x24] sm:$0xf] %v721
  %754 = vst [vmem:[%s3 + $0x28] sm:$0xf] %v722
  %755 = vst [vmem:[%s3 + $0x2c] sm:$0xf] %v723
  %756 = vst [vmem:[%s3 + $0x30] sm:$0xf] %v724
  %757 = vst [vmem:[%s3 + $0x34] sm:$0xf] %v725
  %758 = vst [vmem:[%s3 + $0x38] sm:$0xf] %v726
  %759 = vst [vmem:[%s3 + $0x3c] sm:$0xf] %v727
  // Predicated region
  $region14: #{ffvae_forward.12} parent=0 // pred_check
    _
  $region15: #{ffvae_forward.12} parent=0 // pred_check_branch
    %761 = sbr.rel (0) target = $region17
  $region16: #{ffvae_forward.12} parent=0 // pred_region
    _
  $region17: #{ffvae_forward.12} parent=0 // pred_fallthru
    _
  // Predicated region
  $region18: #{ffvae_forward.12} parent=0 // pred_check
    _
  $region19: #{ffvae_forward.12} parent=0 // pred_check_branch
    %763 = sbr.rel (0) target = $region21
  $region20: #{ffvae_forward.12} parent=0 // pred_region
    _
  $region21: #{ffvae_forward.12} parent=0 // pred_fallthru
    _

// kernel: squeeze.11
$region0: #{squeeze.11}
  %s0 = inlined_call_operand.vmem [shape: bf16[1,32,64], index: 0, kind: input, shape index: {}]
  %s1 = inlined_call_operand.vmem [shape: bf16[2,1024], index: 1, kind: output, shape index: {}]
  $region1: #{squeeze.11} parent=0
    #allocation0 [shape = 'u8[32768]{0}', space=vmem, size = 0x8000, scoped, tag = 'scoped mem for output reshape']
    #allocation1 [shape = 'u8[16384]{0}', space=vmem, size = 0x4000, scoped, tag = 'scoped mem for input reshape']
    %s3 = smul.u32 4, 2
    %s4 = sshllo.u32 0, %s3
    %s5 = smul.addr 4, 3
    %s6 = scalar_lea.vmem %s0, %s5
    %s7 = sshrl.u32 %s4, 1
    %s8 = sor.u32 %s4, %s7
    %s9 = sand.u32 %s8, 85
    %s10 = sshrl.u32 %s9, 1
    %s11 = sor.u32 %s9, %s10
    %s12 = sand.u32 51, %s11
    %s13 = sshrl.u32 %s12, 2
    %s14 = sor.u32 %s12, %s13
    %s15 = sand.u32 15, %s14
    %v16 = vld [vmem:[%s6] sm:%s15]
    %v17 = vunpack.c.l.bf16 %v16
    %v18 = vunpack.c.h.bf16 %v16
    %s19 = scalar_lea.vmem [#allocation1], 24
    %20 = vst [vmem:[%s19] sm:%s4] %v17
    %s21 = smul.addr 4, 2
    %s22 = scalar_lea.vmem %s0, %s21
    %s23 = sshrl.u32 %s4, 1
    %s24 = sor.u32 %s4, %s23
    %s25 = sand.u32 %s24, 85
    %s26 = sshrl.u32 %s25, 1
    %s27 = sor.u32 %s25, %s26
    %s28 = sand.u32 51, %s27
    %s29 = sshrl.u32 %s28, 2
    %s30 = sor.u32 %s28, %s29
    %s31 = sand.u32 15, %s30
    %v32 = vld [vmem:[%s22] sm:%s31]
    %v33 = vunpack.c.l.bf16 %v32
    %v34 = vunpack.c.h.bf16 %v32
    %s35 = scalar_lea.vmem [#allocation1], 16
    %36 = vst [vmem:[%s35] sm:%s4] %v33
    %s37 = scalar_lea.vmem %s0, 4
    %s38 = sshrl.u32 %s4, 1
    %s39 = sor.u32 %s4, %s38
    %s40 = sand.u32 %s39, 85
    %s41 = sshrl.u32 %s40, 1
    %s42 = sor.u32 %s40, %s41
    %s43 = sand.u32 51, %s42
    %s44 = sshrl.u32 %s43, 2
    %s45 = sor.u32 %s43, %s44
    %s46 = sand.u32 15, %s45
    %v47 = vld [vmem:[%s37] sm:%s46]
    %v48 = vunpack.c.l.bf16 %v47
    %v49 = vunpack.c.h.bf16 %v47
    %s50 = scalar_lea.vmem [#allocation1], 8
    %51 = vst [vmem:[%s50] sm:%s4] %v48
    %s52 = sshrl.u32 %s4, 1
    %s53 = sor.u32 %s4, %s52
    %s54 = sand.u32 %s53, 85
    %s55 = sshrl.u32 %s54, 1
    %s56 = sor.u32 %s54, %s55
    %s57 = sand.u32 51, %s56
    %s58 = sshrl.u32 %s57, 2
    %s59 = sor.u32 %s57, %s58
    %s60 = sand.u32 15, %s59
    %v61 = vld [vmem:[%s0] sm:%s60]
    %v62 = vunpack.c.l.bf16 %v61
    %v63 = vunpack.c.h.bf16 %v61
    %64 = vst [vmem:[#allocation1] sm:%s4] %v62
    %v65 = vld [vmem:[#allocation1] ss:$2 sm:$0xff]
    %vm66 = vcmask 523264
    %67 = vst.msk [vmem:[#allocation0] ss:$8 sm:$0xf] %vm66, %v65
    %68 = vst.msk [vmem:[#allocation0] ss:$8 sm:$0xf0] %vm66, %v65
    %s69 = scalar_lea.vmem [#allocation1], 16
    %v70 = vld [vmem:[%s69] ss:$2 sm:$0xff]
    %vm71 = vcmask 523264
    %s72 = scalar_lea.vmem [#allocation0], 1
    %73 = vst.msk [vmem:[%s72] ss:$8 sm:$0xf] %vm71, %v70
    %s74 = scalar_lea.vmem [#allocation0], 1
    %75 = vst.msk [vmem:[%s74] ss:$8 sm:$0xf0] %vm71, %v70
    %s76 = scalar_lea.vmem [#allocation1], 1
    %s77 = smov 3
    %v78 = vld [vmem:[%s76] ss:$16 sm:%s77]
    %s79 = scalar_lea.vmem [#allocation1], 4294967267
    %s80 = smov 12
    %v81 = vld [vmem:[%s79] ss:$16 sm:%s80]
    %vm82 = vcmask 1043458
    %v83 = vsel %vm82, %v81, %v78
    %s84 = scalar_lea.vmem [#allocation1], 4294967237
    %s85 = smov 48
    %v86 = vld [vmem:[%s84] ss:$16 sm:%s85]
    %vm87 = vcmask 1045508
    %v88 = vsel %vm87, %v86, %v83
    %s89 = scalar_lea.vmem [#allocation1], 4294967207
    %s90 = smov 192
    %v91 = vld [vmem:[%s89] ss:$16 sm:%s90]
    %vm92 = vcmask 1047558
    %v93 = vsel %vm92, %v91, %v88
    %94 = vrot.lane.b32.xlu0 %v93, 64
    %v95 = vpop.permute.xlu0 %94
    %vm96 = vcmask 1048064
    %97 = vst.msk [vmem:[#allocation0] sm:$0x3] %vm96, %v95
    %s98 = scalar_lea.vmem [#allocation0], 6
    %99 = vst.msk [vmem:[%s98] sm:$0xc] %vm96, %v95
    %s100 = scalar_lea.vmem [#allocation0], 12
    %101 = vst.msk [vmem:[%s100] sm:$0x30] %vm96, %v95
    %s102 = scalar_lea.vmem [#allocation0], 18
    %103 = vst.msk [vmem:[%s102] sm:$0xc0] %vm96, %v95
    %s104 = scalar_lea.vmem [#allocation1], 9
    %s105 = smov 3
    %v106 = vld [vmem:[%s104] ss:$16 sm:%s105]
    %s107 = scalar_lea.vmem [#allocation1], 4294967275
    %s108 = smov 12
    %v109 = vld [vmem:[%s107] ss:$16 sm:%s108]
    %vm110 = vcmask 1043458
    %v111 = vsel %vm110, %v109, %v106
    %s112 = scalar_lea.vmem [#allocation1], 4294967245
    %s113 = smov 48
    %v114 = vld [vmem:[%s112] ss:$16 sm:%s113]
    %vm115 = vcmask 1045508
    %v116 = vsel %vm115, %v114, %v111
    %s117 = scalar_lea.vmem [#allocation1], 4294967215
    %s118 = smov 192
    %v119 = vld [vmem:[%s117] ss:$16 sm:%s118]
    %vm120 = vcmask 1047558
    %v121 = vsel %vm120, %v119, %v116
    %122 = vrot.lane.b32.xlu0 %v121, 64
    %v123 = vpop.permute.xlu0 %122
    %vm124 = vcmask 1048064
    %s125 = scalar_lea.vmem [#allocation0], 32
    %126 = vst.msk [vmem:[%s125] sm:$0x3] %vm124, %v123
    %s127 = scalar_lea.vmem [#allocation0], 38
    %128 = vst.msk [vmem:[%s127] sm:$0xc] %vm124, %v123
    %s129 = scalar_lea.vmem [#allocation0], 44
    %130 = vst.msk [vmem:[%s129] sm:$0x30] %vm124, %v123
    %s131 = scalar_lea.vmem [#allocation0], 50
    %132 = vst.msk [vmem:[%s131] sm:$0xc0] %vm124, %v123
    %s134 = smul.u32 1, 2
    %s135 = sshllo.u32 0, %s134
    %s136 = sshrl.u32 %s134, 1
    %v137 = vld [vmem:[#allocation0] sm:%s135]
    %v138 = vpack.c.bf16 0.0, %v137
    %s139 = sshllo.u32 0, %s136
    %140 = vst [vmem:[%s1] sm:%s139] %v138
    %s141 = scalar_lea.vmem [#allocation0], 8
    %v142 = vld [vmem:[%s141] sm:%s135]
    %v143 = vpack.c.bf16 0.0, %v142
    %s144 = sshllo.u32 0, %s136
    %s145 = scalar_lea.vmem %s1, 1
    %146 = vst [vmem:[%s145] sm:%s144] %v143
    %s147 = scalar_lea.vmem [#allocation0], 16
    %v148 = vld [vmem:[%s147] sm:%s135]
    %v149 = vpack.c.bf16 0.0, %v148
    %s150 = sshllo.u32 0, %s136
    %s151 = smul.addr 1, 2
    %s152 = scalar_lea.vmem %s1, %s151
    %153 = vst [vmem:[%s152] sm:%s150] %v149
    %s154 = scalar_lea.vmem [#allocation0], 24
    %v155 = vld [vmem:[%s154] sm:%s135]
    %v156 = vpack.c.bf16 0.0, %v155
    %s157 = sshllo.u32 0, %s136
    %s158 = smul.addr 1, 3
    %s159 = scalar_lea.vmem %s1, %s158
    %160 = vst [vmem:[%s159] sm:%s157] %v156
    %s161 = scalar_lea.vmem [#allocation0], 32
    %v162 = vld [vmem:[%s161] sm:%s135]
    %v163 = vpack.c.bf16 0.0, %v162
    %s164 = sshllo.u32 0, %s136
    %s165 = smul.addr 1, 4
    %s166 = scalar_lea.vmem %s1, %s165
    %167 = vst [vmem:[%s166] sm:%s164] %v163
    %s168 = scalar_lea.vmem [#allocation0], 40
    %v169 = vld [vmem:[%s168] sm:%s135]
    %v170 = vpack.c.bf16 0.0, %v169
    %s171 = sshllo.u32 0, %s136
    %s172 = smul.addr 1, 5
    %s173 = scalar_lea.vmem %s1, %s172
    %174 = vst [vmem:[%s173] sm:%s171] %v170
    %s175 = scalar_lea.vmem [#allocation0], 48
    %v176 = vld [vmem:[%s175] sm:%s135]
    %v177 = vpack.c.bf16 0.0, %v176
    %s178 = sshllo.u32 0, %s136
    %s179 = smul.addr 1, 6
    %s180 = scalar_lea.vmem %s1, %s179
    %181 = vst [vmem:[%s180] sm:%s178] %v177
    %s182 = scalar_lea.vmem [#allocation0], 56
    %v183 = vld [vmem:[%s182] sm:%s135]
    %v184 = vpack.c.bf16 0.0, %v183
    %s185 = sshllo.u32 0, %s136
    %s186 = smul.addr 1, 7
    %s187 = scalar_lea.vmem %s1, %s186
    %188 = vst [vmem:[%s187] sm:%s185] %v184

// kernel: ffvae_forward.13
$region0: #{ffvae_forward.13}
  #allocation0 [shape = 'u32[]', space=smem, size = 0x4, offset = 0x4, fixed_abs, tag = 'smem constant byte address 0x4 - core index']
  #allocation1 [shape = 'u32[144,128]{1,0:T(1,128)}', space=vmem, size = 0x12000, scoped, tag = 'internal scratch']
  %s0 = inlined_call_operand.vmem [shape: bf16[1,32,1024], index: 0, kind: input, shape index: {}]
  %s1 = inlined_call_operand.vmem [shape: bf16[1,1024,128], index: 1, kind: input, shape index: {}]
  %s2 = inlined_call_operand.vmem [shape: f32[1,1,128], index: 2, kind: input, shape index: {}]
  %s3 = inlined_call_operand.vmem [shape: bf16[1,32,128], index: 3, kind: output, shape index: {}]
  %s4 = sld [smem:[#allocation0]]
  $region22: #{ffvae_forward.13} parent=0
    _
  %s6 = ssub.s32 1, %s4
  %s7 = scalar_select 0, %s6, %s4
  // Predicated region
  $region2: #{ffvae_forward.13} parent=0 // pred_check
    _
  $region3: #{ffvae_forward.13} parent=0 // pred_check_branch
    %9 = sbr.rel (0) target = $region5
  $region4: #{ffvae_forward.13} parent=0 // pred_region
    _
  $region5: #{ffvae_forward.13} parent=0 // pred_fallthru
    _
  // Predicated region
  $region6: #{ffvae_forward.13} parent=0 // pred_check
    _
  $region7: #{ffvae_forward.13} parent=0 // pred_check_branch
    %11 = sbr.rel (0) target = $region9
  $region8: #{ffvae_forward.13} parent=0 // pred_region
    _
  $region9: #{ffvae_forward.13} parent=0 // pred_fallthru
    _
  // Predicated region
  $region10: #{ffvae_forward.13} parent=0 // pred_check
    _
  $region11: #{ffvae_forward.13} parent=0 // pred_check_branch
    %13 = sbr.rel (0) target = $region13
  $region12: #{ffvae_forward.13} parent=0 // pred_region
    _
  $region13: #{ffvae_forward.13} parent=0 // pred_fallthru
    _
  %v15 = vld [vmem:[%s0] sm:$0xff]
  %v16 = vld [vmem:[%s0 + $0x8] sm:$0xff]
  %v17 = vld [vmem:[%s0 + $0x10] sm:$0xff]
  %v18 = vld [vmem:[%s0 + $0x18] sm:$0xff]
  %v19 = vld [vmem:[%s0 + $0x20] sm:$0xff]
  %v20 = vld [vmem:[%s0 + $0x28] sm:$0xff]
  %v21 = vld [vmem:[%s0 + $0x30] sm:$0xff]
  %v22 = vld [vmem:[%s0 + $0x38] sm:$0xff]
  %v23 = vld [vmem:[%s0 + $0x40] sm:$0xff]
  %v24 = vld [vmem:[%s0 + $0x48] sm:$0xff]
  %v25 = vld [vmem:[%s0 + $0x50] sm:$0xff]
  %v26 = vld [vmem:[%s0 + $0x58] sm:$0xff]
  %v27 = vld [vmem:[%s0 + $0x60] sm:$0xff]
  %v28 = vld [vmem:[%s0 + $0x68] sm:$0xff]
  %v29 = vld [vmem:[%s0 + $0x70] sm:$0xff]
  %v30 = vld [vmem:[%s0 + $0x78] sm:$0xff]
  %v31 = vld [vmem:[%s1] sm:$0xf]
  %v32 = vld [vmem:[%s1 + $0x4] sm:$0xf]
  %v33 = vld [vmem:[%s1 + $0x8] sm:$0xf]
  %v34 = vld [vmem:[%s1 + $0xc] sm:$0xf]
  %v35 = vld [vmem:[%s1 + $0x10] sm:$0xf]
  %v36 = vld [vmem:[%s1 + $0x14] sm:$0xf]
  %v37 = vld [vmem:[%s1 + $0x18] sm:$0xf]
  %v38 = vld [vmem:[%s1 + $0x1c] sm:$0xf]
  %v39 = vld [vmem:[%s1 + $0x20] sm:$0xf]
  %v40 = vld [vmem:[%s1 + $0x24] sm:$0xf]
  %v41 = vld [vmem:[%s1 + $0x28] sm:$0xf]
  %v42 = vld [vmem:[%s1 + $0x2c] sm:$0xf]
  %v43 = vld [vmem:[%s1 + $0x30] sm:$0xf]
  %v44 = vld [vmem:[%s1 + $0x34] sm:$0xf]
  %v45 = vld [vmem:[%s1 + $0x38] sm:$0xf]
  %v46 = vld [vmem:[%s1 + $0x3c] sm:$0xf]
  %v47 = vld [vmem:[%s1 + $0x40] sm:$0xf]
  %v48 = vld [vmem:[%s1 + $0x44] sm:$0xf]
  %v49 = vld [vmem:[%s1 + $0x48] sm:$0xf]
  %v50 = vld [vmem:[%s1 + $0x4c] sm:$0xf]
  %v51 = vld [vmem:[%s1 + $0x50] sm:$0xf]
  %v52 = vld [vmem:[%s1 + $0x54] sm:$0xf]
  %v53 = vld [vmem:[%s1 + $0x58] sm:$0xf]
  %v54 = vld [vmem:[%s1 + $0x5c] sm:$0xf]
  %v55 = vld [vmem:[%s1 + $0x60] sm:$0xf]
  %v56 = vld [vmem:[%s1 + $0x64] sm:$0xf]
  %v57 = vld [vmem:[%s1 + $0x68] sm:$0xf]
  %v58 = vld [vmem:[%s1 + $0x6c] sm:$0xf]
  %v59 = vld [vmem:[%s1 + $0x70] sm:$0xf]
  %v60 = vld [vmem:[%s1 + $0x74] sm:$0xf]
  %v61 = vld [vmem:[%s1 + $0x78] sm:$0xf]
  %v62 = vld [vmem:[%s1 + $0x7c] sm:$0xf]
  %v63 = vld [vmem:[%s1 + $0x80] sm:$0xf]
  %v64 = vld [vmem:[%s1 + $0x84] sm:$0xf]
  %v65 = vld [vmem:[%s1 + $0x88] sm:$0xf]
  %v66 = vld [vmem:[%s1 + $0x8c] sm:$0xf]
  %v67 = vld [vmem:[%s1 + $0x90] sm:$0xf]
  %v68 = vld [vmem:[%s1 + $0x94] sm:$0xf]
  %v69 = vld [vmem:[%s1 + $0x98] sm:$0xf]
  %v70 = vld [vmem:[%s1 + $0x9c] sm:$0xf]
  %v71 = vld [vmem:[%s1 + $0xa0] sm:$0xf]
  %v72 = vld [vmem:[%s1 + $0xa4] sm:$0xf]
  %v73 = vld [vmem:[%s1 + $0xa8] sm:$0xf]
  %v74 = vld [vmem:[%s1 + $0xac] sm:$0xf]
  %v75 = vld [vmem:[%s1 + $0xb0] sm:$0xf]
  %v76 = vld [vmem:[%s1 + $0xb4] sm:$0xf]
  %v77 = vld [vmem:[%s1 + $0xb8] sm:$0xf]
  %v78 = vld [vmem:[%s1 + $0xbc] sm:$0xf]
  %v79 = vld [vmem:[%s1 + $0xc0] sm:$0xf]
  %v80 = vld [vmem:[%s1 + $0xc4] sm:$0xf]
  %v81 = vld [vmem:[%s1 + $0xc8] sm:$0xf]
  %v82 = vld [vmem:[%s1 + $0xcc] sm:$0xf]
  %v83 = vld [vmem:[%s1 + $0xd0] sm:$0xf]
  %v84 = vld [vmem:[%s1 + $0xd4] sm:$0xf]
  %v85 = vld [vmem:[%s1 + $0xd8] sm:$0xf]
  %v86 = vld [vmem:[%s1 + $0xdc] sm:$0xf]
  %v87 = vld [vmem:[%s1 + $0xe0] sm:$0xf]
  %v88 = vld [vmem:[%s1 + $0xe4] sm:$0xf]
  %v89 = vld [vmem:[%s1 + $0xe8] sm:$0xf]
  %v90 = vld [vmem:[%s1 + $0xec] sm:$0xf]
  %v91 = vld [vmem:[%s1 + $0xf0] sm:$0xf]
  %v92 = vld [vmem:[%s1 + $0xf4] sm:$0xf]
  %v93 = vld [vmem:[%s1 + $0xf8] sm:$0xf]
  %v94 = vld [vmem:[%s1 + $0xfc] sm:$0xf]
  %v95 = vld [vmem:[%s1 + $0x100] sm:$0xf]
  %v96 = vld [vmem:[%s1 + $0x104] sm:$0xf]
  %v97 = vld [vmem:[%s1 + $0x108] sm:$0xf]
  %v98 = vld [vmem:[%s1 + $0x10c] sm:$0xf]
  %v99 = vld [vmem:[%s1 + $0x110] sm:$0xf]
  %v100 = vld [vmem:[%s1 + $0x114] sm:$0xf]
  %v101 = vld [vmem:[%s1 + $0x118] sm:$0xf]
  %v102 = vld [vmem:[%s1 + $0x11c] sm:$0xf]
  %v103 = vld [vmem:[%s1 + $0x120] sm:$0xf]
  %v104 = vld [vmem:[%s1 + $0x124] sm:$0xf]
  %v105 = vld [vmem:[%s1 + $0x128] sm:$0xf]
  %v106 = vld [vmem:[%s1 + $0x12c] sm:$0xf]
  %v107 = vld [vmem:[%s1 + $0x130] sm:$0xf]
  %v108 = vld [vmem:[%s1 + $0x134] sm:$0xf]
  %v109 = vld [vmem:[%s1 + $0x138] sm:$0xf]
  %v110 = vld [vmem:[%s1 + $0x13c] sm:$0xf]
  %v111 = vld [vmem:[%s1 + $0x140] sm:$0xf]
  %v112 = vld [vmem:[%s1 + $0x144] sm:$0xf]
  %v113 = vld [vmem:[%s1 + $0x148] sm:$0xf]
  %v114 = vld [vmem:[%s1 + $0x14c] sm:$0xf]
  %v115 = vld [vmem:[%s1 + $0x150] sm:$0xf]
  %v116 = vld [vmem:[%s1 + $0x154] sm:$0xf]
  %v117 = vld [vmem:[%s1 + $0x158] sm:$0xf]
  %v118 = vld [vmem:[%s1 + $0x15c] sm:$0xf]
  %v119 = vld [vmem:[%s1 + $0x160] sm:$0xf]
  %v120 = vld [vmem:[%s1 + $0x164] sm:$0xf]
  %v121 = vld [vmem:[%s1 + $0x168] sm:$0xf]
  %v122 = vld [vmem:[%s1 + $0x16c] sm:$0xf]
  %v123 = vld [vmem:[%s1 + $0x170] sm:$0xf]
  %v124 = vld [vmem:[%s1 + $0x174] sm:$0xf]
  %v125 = vld [vmem:[%s1 + $0x178] sm:$0xf]
  %v126 = vld [vmem:[%s1 + $0x17c] sm:$0xf]
  %v127 = vld [vmem:[%s1 + $0x180] sm:$0xf]
  %v128 = vld [vmem:[%s1 + $0x184] sm:$0xf]
  %v129 = vld [vmem:[%s1 + $0x188] sm:$0xf]
  %v130 = vld [vmem:[%s1 + $0x18c] sm:$0xf]
  %v131 = vld [vmem:[%s1 + $0x190] sm:$0xf]
  %v132 = vld [vmem:[%s1 + $0x194] sm:$0xf]
  %v133 = vld [vmem:[%s1 + $0x198] sm:$0xf]
  %v134 = vld [vmem:[%s1 + $0x19c] sm:$0xf]
  %v135 = vld [vmem:[%s1 + $0x1a0] sm:$0xf]
  %v136 = vld [vmem:[%s1 + $0x1a4] sm:$0xf]
  %v137 = vld [vmem:[%s1 + $0x1a8] sm:$0xf]
  %v138 = vld [vmem:[%s1 + $0x1ac] sm:$0xf]
  %v139 = vld [vmem:[%s1 + $0x1b0] sm:$0xf]
  %v140 = vld [vmem:[%s1 + $0x1b4] sm:$0xf]
  %v141 = vld [vmem:[%s1 + $0x1b8] sm:$0xf]
  %v142 = vld [vmem:[%s1 + $0x1bc] sm:$0xf]
  %v143 = vld [vmem:[%s1 + $0x1c0] sm:$0xf]
  %v144 = vld [vmem:[%s1 + $0x1c4] sm:$0xf]
  %v145 = vld [vmem:[%s1 + $0x1c8] sm:$0xf]
  %v146 = vld [vmem:[%s1 + $0x1cc] sm:$0xf]
  %v147 = vld [vmem:[%s1 + $0x1d0] sm:$0xf]
  %v148 = vld [vmem:[%s1 + $0x1d4] sm:$0xf]
  %v149 = vld [vmem:[%s1 + $0x1d8] sm:$0xf]
  %v150 = vld [vmem:[%s1 + $0x1dc] sm:$0xf]
  %v151 = vld [vmem:[%s1 + $0x1e0] sm:$0xf]
  %v152 = vld [vmem:[%s1 + $0x1e4] sm:$0xf]
  %v153 = vld [vmem:[%s1 + $0x1e8] sm:$0xf]
  %v154 = vld [vmem:[%s1 + $0x1ec] sm:$0xf]
  %v155 = vld [vmem:[%s1 + $0x1f0] sm:$0xf]
  %v156 = vld [vmem:[%s1 + $0x1f4] sm:$0xf]
  %v157 = vld [vmem:[%s1 + $0x1f8] sm:$0xf]
  %v158 = vld [vmem:[%s1 + $0x1fc] sm:$0xf]
  %v159 = vld [vmem:[%s2] sm:$0x1]
  %v161 = vlaneseq
  %v162 = vshrl.u32 %v161, 7
  %v163 = vsub.s32 0, %v162
  %v164 = vrot.slane %v159, %v163
  %v182 = vunpack.c.l.b16 %v15
  %v183 = vunpack.c.h.b16 %v15
  %v184 = vunpack.c.l.b16 %v16
  %v185 = vunpack.c.h.b16 %v16
  %v186 = vunpack.c.l.b16 %v17
  %v187 = vunpack.c.h.b16 %v17
  %v188 = vunpack.c.l.b16 %v18
  %v189 = vunpack.c.h.b16 %v18
  %v190 = vunpack.c.l.b16 %v19
  %v191 = vunpack.c.h.b16 %v19
  %v192 = vunpack.c.l.b16 %v20
  %v193 = vunpack.c.h.b16 %v20
  %v194 = vunpack.c.l.b16 %v21
  %v195 = vunpack.c.h.b16 %v21
  %v196 = vunpack.c.l.b16 %v22
  %v197 = vunpack.c.h.b16 %v22
  %v198 = vunpack.c.l.b16 %v23
  %v199 = vunpack.c.h.b16 %v23
  %v200 = vunpack.c.l.b16 %v24
  %v201 = vunpack.c.h.b16 %v24
  %v202 = vunpack.c.l.b16 %v25
  %v203 = vunpack.c.h.b16 %v25
  %v204 = vunpack.c.l.b16 %v26
  %v205 = vunpack.c.h.b16 %v26
  %v206 = vunpack.c.l.b16 %v27
  %v207 = vunpack.c.h.b16 %v27
  %v208 = vunpack.c.l.b16 %v28
  %v209 = vunpack.c.h.b16 %v28
  %v210 = vunpack.c.l.b16 %v29
  %v211 = vunpack.c.h.b16 %v29
  %v212 = vunpack.c.l.b16 %v30
  %v213 = vunpack.c.h.b16 %v30
  %v214 = vpack.c.b16 %v190, %v182
  %v215 = vpack.c.b16 %v191, %v183
  %v216 = vpack.c.b16 %v192, %v184
  %v217 = vpack.c.b16 %v193, %v185
  %v218 = vpack.c.b16 %v194, %v186
  %v219 = vpack.c.b16 %v195, %v187
  %v220 = vpack.c.b16 %v196, %v188
  %v221 = vpack.c.b16 %v197, %v189
  %v222 = vpack.c.b16 %v206, %v198
  %v223 = vpack.c.b16 %v207, %v199
  %v224 = vpack.c.b16 %v208, %v200
  %v225 = vpack.c.b16 %v209, %v201
  %v226 = vpack.c.b16 %v210, %v202
  %v227 = vpack.c.b16 %v211, %v203
  %v228 = vpack.c.b16 %v212, %v204
  %v229 = vpack.c.b16 %v213, %v205
  %v374 = vunpack.c.l.b16 %v31
  %v375 = vunpack.c.l.b16 %v32
  %v376 = vunpack.c.l.b16 %v33
  %v377 = vunpack.c.l.b16 %v34
  %v378 = vunpack.c.l.b16 %v35
  %v379 = vunpack.c.l.b16 %v36
  %v380 = vunpack.c.l.b16 %v37
  %v381 = vunpack.c.l.b16 %v38
  %v382 = vunpack.c.l.b16 %v39
  %v383 = vunpack.c.l.b16 %v40
  %v384 = vunpack.c.l.b16 %v41
  %v385 = vunpack.c.l.b16 %v42
  %v386 = vunpack.c.l.b16 %v43
  %v387 = vunpack.c.l.b16 %v44
  %v388 = vunpack.c.l.b16 %v45
  %v389 = vunpack.c.l.b16 %v46
  %v390 = vunpack.c.l.b16 %v47
  %v391 = vunpack.c.l.b16 %v48
  %v392 = vunpack.c.l.b16 %v49
  %v393 = vunpack.c.l.b16 %v50
  %v394 = vunpack.c.l.b16 %v51
  %v395 = vunpack.c.l.b16 %v52
  %v396 = vunpack.c.l.b16 %v53
  %v397 = vunpack.c.l.b16 %v54
  %v398 = vunpack.c.l.b16 %v55
  %v399 = vunpack.c.l.b16 %v56
  %v400 = vunpack.c.l.b16 %v57
  %v401 = vunpack.c.l.b16 %v58
  %v402 = vunpack.c.l.b16 %v59
  %v403 = vunpack.c.l.b16 %v60
  %v404 = vunpack.c.l.b16 %v61
  %v405 = vunpack.c.l.b16 %v62
  %v406 = vunpack.c.l.b16 %v63
  %v407 = vunpack.c.l.b16 %v64
  %v408 = vunpack.c.l.b16 %v65
  %v409 = vunpack.c.l.b16 %v66
  %v410 = vunpack.c.l.b16 %v67
  %v411 = vunpack.c.l.b16 %v68
  %v412 = vunpack.c.l.b16 %v69
  %v413 = vunpack.c.l.b16 %v70
  %v414 = vunpack.c.l.b16 %v71
  %v415 = vunpack.c.l.b16 %v72
  %v416 = vunpack.c.l.b16 %v73
  %v417 = vunpack.c.l.b16 %v74
  %v418 = vunpack.c.l.b16 %v75
  %v419 = vunpack.c.l.b16 %v76
  %v420 = vunpack.c.l.b16 %v77
  %v421 = vunpack.c.l.b16 %v78
  %v422 = vunpack.c.l.b16 %v79
  %v423 = vunpack.c.l.b16 %v80
  %v424 = vunpack.c.l.b16 %v81
  %v425 = vunpack.c.l.b16 %v82
  %v426 = vunpack.c.l.b16 %v83
  %v427 = vunpack.c.l.b16 %v84
  %v428 = vunpack.c.l.b16 %v85
  %v429 = vunpack.c.l.b16 %v86
  %v430 = vunpack.c.l.b16 %v87
  %v431 = vunpack.c.l.b16 %v88
  %v432 = vunpack.c.l.b16 %v89
  %v433 = vunpack.c.l.b16 %v90
  %v434 = vunpack.c.l.b16 %v91
  %v435 = vunpack.c.l.b16 %v92
  %v436 = vunpack.c.l.b16 %v93
  %v437 = vunpack.c.l.b16 %v94
  %v438 = vunpack.c.l.b16 %v95
  %v439 = vunpack.c.l.b16 %v96
  %v440 = vunpack.c.l.b16 %v97
  %v441 = vunpack.c.l.b16 %v98
  %v442 = vunpack.c.l.b16 %v99
  %v443 = vunpack.c.l.b16 %v100
  %v444 = vunpack.c.l.b16 %v101
  %v445 = vunpack.c.l.b16 %v102
  %v446 = vunpack.c.l.b16 %v103
  %v447 = vunpack.c.l.b16 %v104
  %v448 = vunpack.c.l.b16 %v105
  %v449 = vunpack.c.l.b16 %v106
  %v450 = vunpack.c.l.b16 %v107
  %v451 = vunpack.c.l.b16 %v108
  %v452 = vunpack.c.l.b16 %v109
  %v453 = vunpack.c.l.b16 %v110
  %v454 = vunpack.c.l.b16 %v111
  %v455 = vunpack.c.l.b16 %v112
  %v456 = vunpack.c.l.b16 %v113
  %v457 = vunpack.c.l.b16 %v114
  %v458 = vunpack.c.l.b16 %v115
  %v459 = vunpack.c.l.b16 %v116
  %v460 = vunpack.c.l.b16 %v117
  %v461 = vunpack.c.l.b16 %v118
  %v462 = vunpack.c.l.b16 %v119
  %v463 = vunpack.c.l.b16 %v120
  %v464 = vunpack.c.l.b16 %v121
  %v465 = vunpack.c.l.b16 %v122
  %v466 = vunpack.c.l.b16 %v123
  %v467 = vunpack.c.l.b16 %v124
  %v468 = vunpack.c.l.b16 %v125
  %v469 = vunpack.c.l.b16 %v126
  %v470 = vunpack.c.l.b16 %v127
  %v471 = vunpack.c.l.b16 %v128
  %v472 = vunpack.c.l.b16 %v129
  %v473 = vunpack.c.l.b16 %v130
  %v474 = vunpack.c.l.b16 %v131
  %v475 = vunpack.c.l.b16 %v132
  %v476 = vunpack.c.l.b16 %v133
  %v477 = vunpack.c.l.b16 %v134
  %v478 = vunpack.c.l.b16 %v135
  %v479 = vunpack.c.l.b16 %v136
  %v480 = vunpack.c.l.b16 %v137
  %v481 = vunpack.c.l.b16 %v138
  %v482 = vunpack.c.l.b16 %v139
  %v483 = vunpack.c.l.b16 %v140
  %v484 = vunpack.c.l.b16 %v141
  %v485 = vunpack.c.l.b16 %v142
  %v486 = vunpack.c.l.b16 %v143
  %v487 = vunpack.c.l.b16 %v144
  %v488 = vunpack.c.l.b16 %v145
  %v489 = vunpack.c.l.b16 %v146
  %v490 = vunpack.c.l.b16 %v147
  %v491 = vunpack.c.l.b16 %v148
  %v492 = vunpack.c.l.b16 %v149
  %v493 = vunpack.c.l.b16 %v150
  %v494 = vunpack.c.l.b16 %v151
  %v495 = vunpack.c.l.b16 %v152
  %v496 = vunpack.c.l.b16 %v153
  %v497 = vunpack.c.l.b16 %v154
  %v498 = vunpack.c.l.b16 %v155
  %v499 = vunpack.c.l.b16 %v156
  %v500 = vunpack.c.l.b16 %v157
  %v501 = vunpack.c.l.b16 %v158
  %v502 = vpack.c.b16 %v375, %v374
  %v503 = vpack.c.b16 %v377, %v376
  %v504 = vpack.c.b16 %v379, %v378
  %v505 = vpack.c.b16 %v381, %v380
  %v506 = vpack.c.b16 %v383, %v382
  %v507 = vpack.c.b16 %v385, %v384
  %v508 = vpack.c.b16 %v387, %v386
  %v509 = vpack.c.b16 %v389, %v388
  %v510 = vpack.c.b16 %v391, %v390
  %v511 = vpack.c.b16 %v393, %v392
  %v512 = vpack.c.b16 %v395, %v394
  %v513 = vpack.c.b16 %v397, %v396
  %v514 = vpack.c.b16 %v399, %v398
  %v515 = vpack.c.b16 %v401, %v400
  %v516 = vpack.c.b16 %v403, %v402
  %v517 = vpack.c.b16 %v405, %v404
  %v518 = vpack.c.b16 %v407, %v406
  %v519 = vpack.c.b16 %v409, %v408
  %v520 = vpack.c.b16 %v411, %v410
  %v521 = vpack.c.b16 %v413, %v412
  %v522 = vpack.c.b16 %v415, %v414
  %v523 = vpack.c.b16 %v417, %v416
  %v524 = vpack.c.b16 %v419, %v418
  %v525 = vpack.c.b16 %v421, %v420
  %v526 = vpack.c.b16 %v423, %v422
  %v527 = vpack.c.b16 %v425, %v424
  %v528 = vpack.c.b16 %v427, %v426
  %v529 = vpack.c.b16 %v429, %v428
  %v530 = vpack.c.b16 %v431, %v430
  %v531 = vpack.c.b16 %v433, %v432
  %v532 = vpack.c.b16 %v435, %v434
  %v533 = vpack.c.b16 %v437, %v436
  %v534 = vpack.c.b16 %v439, %v438
  %v535 = vpack.c.b16 %v441, %v440
  %v536 = vpack.c.b16 %v443, %v442
  %v537 = vpack.c.b16 %v445, %v444
  %v538 = vpack.c.b16 %v447, %v446
  %v539 = vpack.c.b16 %v449, %v448
  %v540 = vpack.c.b16 %v451, %v450
  %v541 = vpack.c.b16 %v453, %v452
  %v542 = vpack.c.b16 %v455, %v454
  %v543 = vpack.c.b16 %v457, %v456
  %v544 = vpack.c.b16 %v459, %v458
  %v545 = vpack.c.b16 %v461, %v460
  %v546 = vpack.c.b16 %v463, %v462
  %v547 = vpack.c.b16 %v465, %v464
  %v548 = vpack.c.b16 %v467, %v466
  %v549 = vpack.c.b16 %v469, %v468
  %v550 = vpack.c.b16 %v471, %v470
  %v551 = vpack.c.b16 %v473, %v472
  %v552 = vpack.c.b16 %v475, %v474
  %v553 = vpack.c.b16 %v477, %v476
  %v554 = vpack.c.b16 %v479, %v478
  %v555 = vpack.c.b16 %v481, %v480
  %v556 = vpack.c.b16 %v483, %v482
  %v557 = vpack.c.b16 %v485, %v484
  %v558 = vpack.c.b16 %v487, %v486
  %v559 = vpack.c.b16 %v489, %v488
  %v560 = vpack.c.b16 %v491, %v490
  %v561 = vpack.c.b16 %v493, %v492
  %v562 = vpack.c.b16 %v495, %v494
  %v563 = vpack.c.b16 %v497, %v496
  %v564 = vpack.c.b16 %v499, %v498
  %v565 = vpack.c.b16 %v501, %v500
  %630 = vmatprep.subr.bf16.mxu0 0
  %631 = vmatpush1.bf16.msra.mxu0 %v502
  %632 = vmatprep.subr.bf16.mxu0 0
  %633 = vmatpush1.bf16.msra.mxu0 %v503
  %634 = vmatprep.subr.bf16.mxu0 0
  %635 = vmatpush1.bf16.msra.mxu0 %v504
  %636 = vmatprep.subr.bf16.mxu0 0
  %637 = vmatpush1.bf16.msra.mxu0 %v505
  %638 = vmatprep.subr.bf16.mxu0 0
  %639 = vmatpush1.bf16.msra.mxu0 %v506
  %640 = vmatprep.subr.bf16.mxu0 0
  %641 = vmatpush1.bf16.msra.mxu0 %v507
  %642 = vmatprep.subr.bf16.mxu0 0
  %643 = vmatpush1.bf16.msra.mxu0 %v508
  %644 = vmatprep.subr.bf16.mxu0 0
  %645 = vmatpush1.bf16.msra.mxu0 %v509
  %646 = vmatprep.subr.bf16.mxu0 0
  %647 = vmatpush1.bf16.msra.mxu0 %v510
  %648 = vmatprep.subr.bf16.mxu0 0
  %649 = vmatpush1.bf16.msra.mxu0 %v511
  %650 = vmatprep.subr.bf16.mxu0 0
  %651 = vmatpush1.bf16.msra.mxu0 %v512
  %652 = vmatprep.subr.bf16.mxu0 0
  %653 = vmatpush1.bf16.msra.mxu0 %v513
  %654 = vmatprep.subr.bf16.mxu0 0
  %655 = vmatpush1.bf16.msra.mxu0 %v514
  %656 = vmatprep.subr.bf16.mxu0 0
  %657 = vmatpush1.bf16.msra.mxu0 %v515
  %658 = vmatprep.subr.bf16.mxu0 0
  %659 = vmatpush1.bf16.msra.mxu0 %v516
  %660 = vmatprep.subr.bf16.mxu0 0
  %661 = vmatpush1.bf16.msra.mxu0 %v517
  %662 = vmatprep.mubr.bf16.mxu0 %v215
  %663 = vmatmul.mubr.bf16.gmra.mrb[0].mxu0 %v214
  %v664 = vpop.f32.mrb[0].mxu0
  %v665 = vadd.f32 %v164, %v664
  %v666 = vpop.f32.mrb[0].mxu0
  %v667 = vpop.f32.mrb[0].mxu0
  %v668 = vadd.f32 %v164, %v667
  %v669 = vpop.f32.mrb[0].mxu0
  %670 = vmatprep.mubr.bf16.mxu0 %v223
  %671 = vmatmul.mubr.bf16.gmra.mrb[0].mxu0 %v222
  %v672 = vpop.f32.mrb[0].mxu0
  %v673 = vadd.f32 %v164, %v672
  %v674 = vpop.f32.mrb[0].mxu0
  %v675 = vpop.f32.mrb[0].mxu0
  %v676 = vadd.f32 %v164, %v675
  %v677 = vpop.f32.mrb[0].mxu0
  %678 = vdwg.mxu0
  %679 = vmatprep.subr.bf16.mxu0 0
  %680 = vmatpush1.bf16.msra.mxu0 %v518
  %681 = vmatprep.subr.bf16.mxu0 0
  %682 = vmatpush1.bf16.msra.mxu0 %v519
  %683 = vmatprep.subr.bf16.mxu0 0
  %684 = vmatpush1.bf16.msra.mxu0 %v520
  %685 = vmatprep.subr.bf16.mxu0 0
  %686 = vmatpush1.bf16.msra.mxu0 %v521
  %687 = vmatprep.subr.bf16.mxu0 0
  %688 = vmatpush1.bf16.msra.mxu0 %v522
  %689 = vmatprep.subr.bf16.mxu0 0
  %690 = vmatpush1.bf16.msra.mxu0 %v523
  %691 = vmatprep.subr.bf16.mxu0 0
  %692 = vmatpush1.bf16.msra.mxu0 %v524
  %693 = vmatprep.subr.bf16.mxu0 0
  %694 = vmatpush1.bf16.msra.mxu0 %v525
  %695 = vmatprep.subr.bf16.mxu0 0
  %696 = vmatpush1.bf16.msra.mxu0 %v526
  %697 = vmatprep.subr.bf16.mxu0 0
  %698 = vmatpush1.bf16.msra.mxu0 %v527
  %699 = vmatprep.subr.bf16.mxu0 0
  %700 = vmatpush1.bf16.msra.mxu0 %v528
  %701 = vmatprep.subr.bf16.mxu0 0
  %702 = vmatpush1.bf16.msra.mxu0 %v529
  %703 = vmatprep.subr.bf16.mxu0 0
  %704 = vmatpush1.bf16.msra.mxu0 %v530
  %705 = vmatprep.subr.bf16.mxu0 0
  %706 = vmatpush1.bf16.msra.mxu0 %v531
  %707 = vmatprep.subr.bf16.mxu0 0
  %708 = vmatpush1.bf16.msra.mxu0 %v532
  %709 = vmatprep.subr.bf16.mxu0 0
  %710 = vmatpush1.bf16.msra.mxu0 %v533
  %711 = vmatprep.mubr.bf16.mxu0 %v217
  %712 = vmatmul.mubr.bf16.gmra.mrb[0].mxu0 %v216
  %v713 = vpop.f32.mrb[0].mxu0
  %v714 = vadd.f32 %v665, %v713
  %v715 = vpop.f32.mrb[0].mxu0
  %v716 = vpop.f32.mrb[0].mxu0
  %v717 = vadd.f32 %v668, %v716
  %v718 = vpop.f32.mrb[0].mxu0
  %719 = vmatprep.mubr.bf16.mxu0 %v225
  %720 = vmatmul.mubr.bf16.gmra.mrb[0].mxu0 %v224
  %v721 = vpop.f32.mrb[0].mxu0
  %v722 = vadd.f32 %v673, %v721
  %v723 = vpop.f32.mrb[0].mxu0
  %v724 = vpop.f32.mrb[0].mxu0
  %v725 = vadd.f32 %v676, %v724
  %v726 = vpop.f32.mrb[0].mxu0
  %727 = vdwg.mxu0
  %728 = vmatprep.subr.bf16.mxu0 0
  %729 = vmatpush1.bf16.msra.mxu0 %v534
  %730 = vmatprep.subr.bf16.mxu0 0
  %731 = vmatpush1.bf16.msra.mxu0 %v535
  %732 = vmatprep.subr.bf16.mxu0 0
  %733 = vmatpush1.bf16.msra.mxu0 %v536
  %734 = vmatprep.subr.bf16.mxu0 0
  %735 = vmatpush1.bf16.msra.mxu0 %v537
  %736 = vmatprep.subr.bf16.mxu0 0
  %737 = vmatpush1.bf16.msra.mxu0 %v538
  %738 = vmatprep.subr.bf16.mxu0 0
  %739 = vmatpush1.bf16.msra.mxu0 %v539
  %740 = vmatprep.subr.bf16.mxu0 0
  %741 = vmatpush1.bf16.msra.mxu0 %v540
  %742 = vmatprep.subr.bf16.mxu0 0
  %743 = vmatpush1.bf16.msra.mxu0 %v541
  %744 = vmatprep.subr.bf16.mxu0 0
  %745 = vmatpush1.bf16.msra.mxu0 %v542
  %746 = vmatprep.subr.bf16.mxu0 0
  %747 = vmatpush1.bf16.msra.mxu0 %v543
  %748 = vmatprep.subr.bf16.mxu0 0
  %749 = vmatpush1.bf16.msra.mxu0 %v544
  %750 = vmatprep.subr.bf16.mxu0 0
  %751 = vmatpush1.bf16.msra.mxu0 %v545
  %752 = vmatprep.subr.bf16.mxu0 0
  %753 = vmatpush1.bf16.msra.mxu0 %v546
  %754 = vmatprep.subr.bf16.mxu0 0
  %755 = vmatpush1.bf16.msra.mxu0 %v547
  %756 = vmatprep.subr.bf16.mxu0 0
  %757 = vmatpush1.bf16.msra.mxu0 %v548
  %758 = vmatprep.subr.bf16.mxu0 0
  %759 = vmatpush1.bf16.msra.mxu0 %v549
  %760 = vmatprep.mubr.bf16.mxu0 %v219
  %761 = vmatmul.mubr.bf16.gmra.mrb[0].mxu0 %v218
  %v762 = vpop.f32.mrb[0].mxu0
  %v763 = vadd.f32 %v714, %v762
  %v764 = vpop.f32.mrb[0].mxu0
  %v765 = vpop.f32.mrb[0].mxu0
  %v766 = vadd.f32 %v717, %v765
  %v767 = vpop.f32.mrb[0].mxu0
  %768 = vmatprep.mubr.bf16.mxu0 %v227
  %769 = vmatmul.mubr.bf16.gmra.mrb[0].mxu0 %v226
  %v770 = vpop.f32.mrb[0].mxu0
  %v771 = vadd.f32 %v722, %v770
  %v772 = vpop.f32.mrb[0].mxu0
  %v773 = vpop.f32.mrb[0].mxu0
  %v774 = vadd.f32 %v725, %v773
  %v775 = vpop.f32.mrb[0].mxu0
  %776 = vdwg.mxu0
  %777 = vmatprep.subr.bf16.mxu0 0
  %778 = vmatpush1.bf16.msra.mxu0 %v550
  %779 = vmatprep.subr.bf16.mxu0 0
  %780 = vmatpush1.bf16.msra.mxu0 %v551
  %781 = vmatprep.subr.bf16.mxu0 0
  %782 = vmatpush1.bf16.msra.mxu0 %v552
  %783 = vmatprep.subr.bf16.mxu0 0
  %784 = vmatpush1.bf16.msra.mxu0 %v553
  %785 = vmatprep.subr.bf16.mxu0 0
  %786 = vmatpush1.bf16.msra.mxu0 %v554
  %787 = vmatprep.subr.bf16.mxu0 0
  %788 = vmatpush1.bf16.msra.mxu0 %v555
  %789 = vmatprep.subr.bf16.mxu0 0
  %790 = vmatpush1.bf16.msra.mxu0 %v556
  %791 = vmatprep.subr.bf16.mxu0 0
  %792 = vmatpush1.bf16.msra.mxu0 %v557
  %793 = vmatprep.subr.bf16.mxu0 0
  %794 = vmatpush1.bf16.msra.mxu0 %v558
  %795 = vmatprep.subr.bf16.mxu0 0
  %796 = vmatpush1.bf16.msra.mxu0 %v559
  %797 = vmatprep.subr.bf16.mxu0 0
  %798 = vmatpush1.bf16.msra.mxu0 %v560
  %799 = vmatprep.subr.bf16.mxu0 0
  %800 = vmatpush1.bf16.msra.mxu0 %v561
  %801 = vmatprep.subr.bf16.mxu0 0
  %802 = vmatpush1.bf16.msra.mxu0 %v562
  %803 = vmatprep.subr.bf16.mxu0 0
  %804 = vmatpush1.bf16.msra.mxu0 %v563
  %805 = vmatprep.subr.bf16.mxu0 0
  %806 = vmatpush1.bf16.msra.mxu0 %v564
  %807 = vmatprep.subr.bf16.mxu0 0
  %808 = vmatpush1.bf16.msra.mxu0 %v565
  %809 = vmatprep.mubr.bf16.mxu0 %v221
  %810 = vmatmul.mubr.bf16.gmra.mrb[0].mxu0 %v220
  %v811 = vpop.f32.mrb[0].mxu0
  %v812 = vadd.f32 %v763, %v811
  %v813 = vpop.f32.mrb[0].mxu0
  %v814 = vpop.f32.mrb[0].mxu0
  %v815 = vadd.f32 %v766, %v814
  %v816 = vpop.f32.mrb[0].mxu0
  %817 = vmatprep.mubr.bf16.mxu0 %v229
  %818 = vmatmul.mubr.bf16.gmra.mrb[0].mxu0 %v228
  %v819 = vpop.f32.mrb[0].mxu0
  %v820 = vadd.f32 %v771, %v819
  %v821 = vpop.f32.mrb[0].mxu0
  %v822 = vpop.f32.mrb[0].mxu0
  %v823 = vadd.f32 %v774, %v822
  %v824 = vpop.f32.mrb[0].mxu0
  %825 = vdwg.mxu0
  %v826 = vmax.f32 %v812, 0.0
  %v827 = vmax.f32 %v815, 0.0
  %v828 = vmax.f32 %v820, 0.0
  %v829 = vmax.f32 %v823, 0.0
  %v830 = vpack.c.bf16 %v827, %v826
  %v831 = vpack.c.bf16 %v829, %v828
  %v834 = vunpack.c.l.b16 %v830
  %v835 = vunpack.c.h.b16 %v830
  %v836 = vunpack.c.l.b16 %v831
  %v837 = vunpack.c.h.b16 %v831
  %v838 = vpack.c.b16 %v834, %v834
  %v839 = vpack.c.b16 %v835, %v835
  %v840 = vpack.c.b16 %v836, %v836
  %v841 = vpack.c.b16 %v837, %v837
  %846 = vst [vmem:[%s3] sm:$0xf] %v838
  %847 = vst [vmem:[%s3 + $0x4] sm:$0xf] %v839
  %848 = vst [vmem:[%s3 + $0x8] sm:$0xf] %v840
  %849 = vst [vmem:[%s3 + $0xc] sm:$0xf] %v841
  // Predicated region
  $region14: #{ffvae_forward.13} parent=0 // pred_check
    _
  $region15: #{ffvae_forward.13} parent=0 // pred_check_branch
    %851 = sbr.rel (0) target = $region17
  $region16: #{ffvae_forward.13} parent=0 // pred_region
    _
  $region17: #{ffvae_forward.13} parent=0 // pred_fallthru
    _
  // Predicated region
  $region18: #{ffvae_forward.13} parent=0 // pred_check
    _
  $region19: #{ffvae_forward.13} parent=0 // pred_check_branch
    %853 = sbr.rel (0) target = $region21
  $region20: #{ffvae_forward.13} parent=0 // pred_region
    _
  $region21: #{ffvae_forward.13} parent=0 // pred_fallthru
    _

// kernel: ffvae_forward.14
$region0: #{ffvae_forward.14}
  #allocation0 [shape = 'u32[]', space=smem, size = 0x4, offset = 0x4, fixed_abs, tag = 'smem constant byte address 0x4 - core index']
  #allocation1 [shape = 'u32[144,128]{1,0:T(1,128)}', space=vmem, size = 0x12000, scoped, tag = 'internal scratch']
  %s0 = inlined_call_operand.vmem [shape: bf16[2,1024], index: 0, kind: input, shape index: {}]
  %s1 = inlined_call_operand.vmem [shape: bf16[1024,256], index: 1, kind: input, shape index: {}]
  %s2 = inlined_call_operand.vmem [shape: f32[1,256], index: 2, kind: input, shape index: {}]
  %s3 = inlined_call_operand.vmem [shape: bf16[256,10], index: 3, kind: input, shape index: {}]
  %s4 = inlined_call_operand.vmem [shape: f32[1,10], index: 4, kind: input, shape index: {}]
  %s5 = inlined_call_operand.vmem [shape: bf16[256,10], index: 5, kind: input, shape index: {}]
  %s6 = inlined_call_operand.vmem [shape: f32[1,10], index: 6, kind: input, shape index: {}]
  %s7 = inlined_call_operand.vmem [shape: f32[2,10], index: 7, kind: input, shape index: {}]
  %s8 = inlined_call_operand.vmem [shape: f32[2,10], index: 8, kind: output, shape index: {0}]
  %s9 = inlined_call_operand.hbm [shape: f32[2,10], index: 9, kind: output, shape index: {1}]
  %s10 = inlined_call_operand.vmem [shape: f32[2,10], index: 10, kind: output, shape index: {2}]
  %11 = xla_tuple %s8, %s9, %s10
  %s12 = sld [smem:[#allocation0]]
  $region58: #{ffvae_forward.14} parent=0
    _
  %s14 = ssub.s32 1, %s12
  %s15 = scalar_select 0, %s14, %s12
  $region1: #{ffvae_forward.14} parent=0
    #allocation2 [shape = 'u8[1024]{0}', space=vmem, size = 0x400, scoped, tag = 'output window, operand 1, single buffered']
    #allocation3 [shape = 's32[1]{0}', space=sflag, size = 0x4, scoped, tag = 'scoped memory for ffvae_forward.14']
    %16 = vsyncpa [#allocation3], 0
    // Predicated region
    $region2: #{ffvae_forward.14} parent=1 // pred_check
      _
    $region3: #{ffvae_forward.14} parent=1 // pred_check_branch
      %18 = sbr.rel (0) target = $region5
    $region4: #{ffvae_forward.14} parent=1 // pred_region
      _
    $region5: #{ffvae_forward.14} parent=1 // pred_fallthru
      _
    // Predicated region
    $region6: #{ffvae_forward.14} parent=1 // pred_check
      _
    $region7: #{ffvae_forward.14} parent=1 // pred_check_branch
      %20 = sbr.rel (0) target = $region9
    $region8: #{ffvae_forward.14} parent=1 // pred_region
      _
    $region9: #{ffvae_forward.14} parent=1 // pred_fallthru
      _
    // Predicated region
    $region10: #{ffvae_forward.14} parent=1 // pred_check
      _
    $region11: #{ffvae_forward.14} parent=1 // pred_check_branch
      %22 = sbr.rel (0) target = $region13
    $region12: #{ffvae_forward.14} parent=1 // pred_region
      _
    $region13: #{ffvae_forward.14} parent=1 // pred_fallthru
      _
    // Predicated region
    $region14: #{ffvae_forward.14} parent=1 // pred_check
      _
    $region15: #{ffvae_forward.14} parent=1 // pred_check_branch
      %24 = sbr.rel (0) target = $region17
    $region16: #{ffvae_forward.14} parent=1 // pred_region
      _
    $region17: #{ffvae_forward.14} parent=1 // pred_fallthru
      _
    // Predicated region
    $region18: #{ffvae_forward.14} parent=1 // pred_check
      _
    $region19: #{ffvae_forward.14} parent=1 // pred_check_branch
      %26 = sbr.rel (0) target = $region21
    $region20: #{ffvae_forward.14} parent=1 // pred_region
      _
    $region21: #{ffvae_forward.14} parent=1 // pred_fallthru
      _
    // Predicated region
    $region22: #{ffvae_forward.14} parent=1 // pred_check
      _
    $region23: #{ffvae_forward.14} parent=1 // pred_check_branch
      %28 = sbr.rel (0) target = $region25
    $region24: #{ffvae_forward.14} parent=1 // pred_region
      _
    $region25: #{ffvae_forward.14} parent=1 // pred_fallthru
      _
    // Predicated region
    $region26: #{ffvae_forward.14} parent=1 // pred_check
      _
    $region27: #{ffvae_forward.14} parent=1 // pred_check_branch
      %30 = sbr.rel (0) target = $region29
    $region28: #{ffvae_forward.14} parent=1 // pred_region
      _
    $region29: #{ffvae_forward.14} parent=1 // pred_fallthru
      _
    // Predicated region
    $region30: #{ffvae_forward.14} parent=1 // pred_check
      _
    $region31: #{ffvae_forward.14} parent=1 // pred_check_branch
      %32 = sbr.rel (0) target = $region33
    $region32: #{ffvae_forward.14} parent=1 // pred_region
      _
    $region33: #{ffvae_forward.14} parent=1 // pred_fallthru
      _
    %v34 = vld [vmem:[%s0] sm:$0xff]
    %v35 = vld [vmem:[%s1] sm:$0xff]
    %v36 = vld [vmem:[%s1 + $0x8] sm:$0xff]
    %v37 = vld [vmem:[%s1 + $0x10] sm:$0xff]
    %v38 = vld [vmem:[%s1 + $0x18] sm:$0xff]
    %v39 = vld [vmem:[%s1 + $0x20] sm:$0xff]
    %v40 = vld [vmem:[%s1 + $0x28] sm:$0xff]
    %v41 = vld [vmem:[%s1 + $0x30] sm:$0xff]
    %v42 = vld [vmem:[%s1 + $0x38] sm:$0xff]
    %v43 = vld [vmem:[%s1 + $0x40] sm:$0xff]
    %v44 = vld [vmem:[%s1 + $0x48] sm:$0xff]
    %v45 = vld [vmem:[%s1 + $0x50] sm:$0xff]
    %v46 = vld [vmem:[%s1 + $0x58] sm:$0xff]
    %v47 = vld [vmem:[%s1 + $0x60] sm:$0xff]
    %v48 = vld [vmem:[%s1 + $0x68] sm:$0xff]
    %v49 = vld [vmem:[%s1 + $0x70] sm:$0xff]
    %v50 = vld [vmem:[%s1 + $0x78] sm:$0xff]
    %v51 = vld [vmem:[%s1 + $0x80] sm:$0xff]
    %v52 = vld [vmem:[%s1 + $0x88] sm:$0xff]
    %v53 = vld [vmem:[%s1 + $0x90] sm:$0xff]
    %v54 = vld [vmem:[%s1 + $0x98] sm:$0xff]
    %v55 = vld [vmem:[%s1 + $0xa0] sm:$0xff]
    %v56 = vld [vmem:[%s1 + $0xa8] sm:$0xff]
    %v57 = vld [vmem:[%s1 + $0xb0] sm:$0xff]
    %v58 = vld [vmem:[%s1 + $0xb8] sm:$0xff]
    %v59 = vld [vmem:[%s1 + $0xc0] sm:$0xff]
    %v60 = vld [vmem:[%s1 + $0xc8] sm:$0xff]
    %v61 = vld [vmem:[%s1 + $0xd0] sm:$0xff]
    %v62 = vld [vmem:[%s1 + $0xd8] sm:$0xff]
    %v63 = vld [vmem:[%s1 + $0xe0] sm:$0xff]
    %v64 = vld [vmem:[%s1 + $0xe8] sm:$0xff]
    %v65 = vld [vmem:[%s1 + $0xf0] sm:$0xff]
    %v66 = vld [vmem:[%s1 + $0xf8] sm:$0xff]
    %v67 = vld [vmem:[%s1 + $0x100] sm:$0xff]
    %v68 = vld [vmem:[%s1 + $0x108] sm:$0xff]
    %v69 = vld [vmem:[%s1 + $0x110] sm:$0xff]
    %v70 = vld [vmem:[%s1 + $0x118] sm:$0xff]
    %v71 = vld [vmem:[%s1 + $0x120] sm:$0xff]
    %v72 = vld [vmem:[%s1 + $0x128] sm:$0xff]
    %v73 = vld [vmem:[%s1 + $0x130] sm:$0xff]
    %v74 = vld [vmem:[%s1 + $0x138] sm:$0xff]
    %v75 = vld [vmem:[%s1 + $0x140] sm:$0xff]
    %v76 = vld [vmem:[%s1 + $0x148] sm:$0xff]
    %v77 = vld [vmem:[%s1 + $0x150] sm:$0xff]
    %v78 = vld [vmem:[%s1 + $0x158] sm:$0xff]
    %v79 = vld [vmem:[%s1 + $0x160] sm:$0xff]
    %v80 = vld [vmem:[%s1 + $0x168] sm:$0xff]
    %v81 = vld [vmem:[%s1 + $0x170] sm:$0xff]
    %v82 = vld [vmem:[%s1 + $0x178] sm:$0xff]
    %v83 = vld [vmem:[%s1 + $0x180] sm:$0xff]
    %v84 = vld [vmem:[%s1 + $0x188] sm:$0xff]
    %v85 = vld [vmem:[%s1 + $0x190] sm:$0xff]
    %v86 = vld [vmem:[%s1 + $0x198] sm:$0xff]
    %v87 = vld [vmem:[%s1 + $0x1a0] sm:$0xff]
    %v88 = vld [vmem:[%s1 + $0x1a8] sm:$0xff]
    %v89 = vld [vmem:[%s1 + $0x1b0] sm:$0xff]
    %v90 = vld [vmem:[%s1 + $0x1b8] sm:$0xff]
    %v91 = vld [vmem:[%s1 + $0x1c0] sm:$0xff]
    %v92 = vld [vmem:[%s1 + $0x1c8] sm:$0xff]
    %v93 = vld [vmem:[%s1 + $0x1d0] sm:$0xff]
    %v94 = vld [vmem:[%s1 + $0x1d8] sm:$0xff]
    %v95 = vld [vmem:[%s1 + $0x1e0] sm:$0xff]
    %v96 = vld [vmem:[%s1 + $0x1e8] sm:$0xff]
    %v97 = vld [vmem:[%s1 + $0x1f0] sm:$0xff]
    %v98 = vld [vmem:[%s1 + $0x1f8] sm:$0xff]
    %v99 = vld [vmem:[%s1 + $0x200] sm:$0xff]
    %v100 = vld [vmem:[%s1 + $0x208] sm:$0xff]
    %v101 = vld [vmem:[%s1 + $0x210] sm:$0xff]
    %v102 = vld [vmem:[%s1 + $0x218] sm:$0xff]
    %v103 = vld [vmem:[%s1 + $0x220] sm:$0xff]
    %v104 = vld [vmem:[%s1 + $0x228] sm:$0xff]
    %v105 = vld [vmem:[%s1 + $0x230] sm:$0xff]
    %v106 = vld [vmem:[%s1 + $0x238] sm:$0xff]
    %v107 = vld [vmem:[%s1 + $0x240] sm:$0xff]
    %v108 = vld [vmem:[%s1 + $0x248] sm:$0xff]
    %v109 = vld [vmem:[%s1 + $0x250] sm:$0xff]
    %v110 = vld [vmem:[%s1 + $0x258] sm:$0xff]
    %v111 = vld [vmem:[%s1 + $0x260] sm:$0xff]
    %v112 = vld [vmem:[%s1 + $0x268] sm:$0xff]
    %v113 = vld [vmem:[%s1 + $0x270] sm:$0xff]
    %v114 = vld [vmem:[%s1 + $0x278] sm:$0xff]
    %v115 = vld [vmem:[%s1 + $0x280] sm:$0xff]
    %v116 = vld [vmem:[%s1 + $0x288] sm:$0xff]
    %v117 = vld [vmem:[%s1 + $0x290] sm:$0xff]
    %v118 = vld [vmem:[%s1 + $0x298] sm:$0xff]
    %v119 = vld [vmem:[%s1 + $0x2a0] sm:$0xff]
    %v120 = vld [vmem:[%s1 + $0x2a8] sm:$0xff]
    %v121 = vld [vmem:[%s1 + $0x2b0] sm:$0xff]
    %v122 = vld [vmem:[%s1 + $0x2b8] sm:$0xff]
    %v123 = vld [vmem:[%s1 + $0x2c0] sm:$0xff]
    %v124 = vld [vmem:[%s1 + $0x2c8] sm:$0xff]
    %v125 = vld [vmem:[%s1 + $0x2d0] sm:$0xff]
    %v126 = vld [vmem:[%s1 + $0x2d8] sm:$0xff]
    %v127 = vld [vmem:[%s1 + $0x2e0] sm:$0xff]
    %v128 = vld [vmem:[%s1 + $0x2e8] sm:$0xff]
    %v129 = vld [vmem:[%s1 + $0x2f0] sm:$0xff]
    %v130 = vld [vmem:[%s1 + $0x2f8] sm:$0xff]
    %v131 = vld [vmem:[%s1 + $0x300] sm:$0xff]
    %v132 = vld [vmem:[%s1 + $0x308] sm:$0xff]
    %v133 = vld [vmem:[%s1 + $0x310] sm:$0xff]
    %v134 = vld [vmem:[%s1 + $0x318] sm:$0xff]
    %v135 = vld [vmem:[%s1 + $0x320] sm:$0xff]
    %v136 = vld [vmem:[%s1 + $0x328] sm:$0xff]
    %v137 = vld [vmem:[%s1 + $0x330] sm:$0xff]
    %v138 = vld [vmem:[%s1 + $0x338] sm:$0xff]
    %v139 = vld [vmem:[%s1 + $0x340] sm:$0xff]
    %v140 = vld [vmem:[%s1 + $0x348] sm:$0xff]
    %v141 = vld [vmem:[%s1 + $0x350] sm:$0xff]
    %v142 = vld [vmem:[%s1 + $0x358] sm:$0xff]
    %v143 = vld [vmem:[%s1 + $0x360] sm:$0xff]
    %v144 = vld [vmem:[%s1 + $0x368] sm:$0xff]
    %v145 = vld [vmem:[%s1 + $0x370] sm:$0xff]
    %v146 = vld [vmem:[%s1 + $0x378] sm:$0xff]
    %v147 = vld [vmem:[%s1 + $0x380] sm:$0xff]
    %v148 = vld [vmem:[%s1 + $0x388] sm:$0xff]
    %v149 = vld [vmem:[%s1 + $0x390] sm:$0xff]
    %v150 = vld [vmem:[%s1 + $0x398] sm:$0xff]
    %v151 = vld [vmem:[%s1 + $0x3a0] sm:$0xff]
    %v152 = vld [vmem:[%s1 + $0x3a8] sm:$0xff]
    %v153 = vld [vmem:[%s1 + $0x3b0] sm:$0xff]
    %v154 = vld [vmem:[%s1 + $0x3b8] sm:$0xff]
    %v155 = vld [vmem:[%s1 + $0x3c0] sm:$0xff]
    %v156 = vld [vmem:[%s1 + $0x3c8] sm:$0xff]
    %v157 = vld [vmem:[%s1 + $0x3d0] sm:$0xff]
    %v158 = vld [vmem:[%s1 + $0x3d8] sm:$0xff]
    %v159 = vld [vmem:[%s1 + $0x3e0] sm:$0xff]
    %v160 = vld [vmem:[%s1 + $0x3e8] sm:$0xff]
    %v161 = vld [vmem:[%s1 + $0x3f0] sm:$0xff]
    %v162 = vld [vmem:[%s1 + $0x3f8] sm:$0xff]
    %v163 = vld [vmem:[%s2] sm:$0x3]
    %v165 = vlaneseq
    %v166 = vshrl.u32 %v165, 7
    %v167 = vsub.s32 0, %v166
    %v168 = vrot.slane %v163, %v167
    %v169 = vlaneseq
    %v170 = vshrl.u32 %v169, 7
    %v171 = vsub.s32 1, %v170
    %v172 = vrot.slane %v163, %v171
    %v176 = vcombine.high %v34, %v34
    %v178 = vunpack.c.l.s4 1966171168
    %v179 = vunpack.c.0.s8 %v178
    %v180 = vlaneseq
    %v181 = vshrl.u32 %v180, 7
    %v182 = vsub.s32 %v179, %v181
    %v183 = vrot.slane %v34, %v182
    %v185 = vunpack.c.l.s4 1966171168
    %v186 = vunpack.c.0.s8 %v185
    %v187 = vlaneseq
    %v188 = vshrl.u32 %v187, 7
    %v189 = vsub.s32 %v186, %v188
    %v190 = vrot.slane %v176, %v189
    %v191 = vcombine.high %v183, %v183
    %v192 = vcombine.high %v190, %v190
    %v194 = vunpack.c.l.s4 1966171168
    %v195 = vunpack.c.0.s8 %v194
    %v196 = vlaneseq
    %v197 = vshrl.u32 %v196, 7
    %v198 = vsub.s32 %v195, %v197
    %v199 = vrot.slane %v183, %v198
    %v201 = vunpack.c.l.s4 1966171168
    %v202 = vunpack.c.0.s8 %v201
    %v203 = vlaneseq
    %v204 = vshrl.u32 %v203, 7
    %v205 = vsub.s32 %v202, %v204
    %v206 = vrot.slane %v190, %v205
    %v208 = vunpack.c.l.s4 1966171168
    %v209 = vunpack.c.0.s8 %v208
    %v210 = vlaneseq
    %v211 = vshrl.u32 %v210, 7
    %v212 = vsub.s32 %v209, %v211
    %v213 = vrot.slane %v191, %v212
    %v215 = vunpack.c.l.s4 1966171168
    %v216 = vunpack.c.0.s8 %v215
    %v217 = vlaneseq
    %v218 = vshrl.u32 %v217, 7
    %v219 = vsub.s32 %v216, %v218
    %v220 = vrot.slane %v192, %v219
    %v221 = vcombine.high %v199, %v199
    %v222 = vcombine.high %v206, %v206
    %v223 = vcombine.high %v213, %v213
    %v224 = vcombine.high %v220, %v220
    %v361 = vunpack.c.l.b16 %v35
    %v362 = vunpack.c.h.b16 %v35
    %v363 = vunpack.c.l.b16 %v36
    %v364 = vunpack.c.h.b16 %v36
    %v365 = vunpack.c.l.b16 %v37
    %v366 = vunpack.c.h.b16 %v37
    %v367 = vunpack.c.l.b16 %v38
    %v368 = vunpack.c.h.b16 %v38
    %v369 = vunpack.c.l.b16 %v39
    %v370 = vunpack.c.h.b16 %v39
    %v371 = vunpack.c.l.b16 %v40
    %v372 = vunpack.c.h.b16 %v40
    %v373 = vunpack.c.l.b16 %v41
    %v374 = vunpack.c.h.b16 %v41
    %v375 = vunpack.c.l.b16 %v42
    %v376 = vunpack.c.h.b16 %v42
    %v377 = vunpack.c.l.b16 %v43
    %v378 = vunpack.c.h.b16 %v43
    %v379 = vunpack.c.l.b16 %v44
    %v380 = vunpack.c.h.b16 %v44
    %v381 = vunpack.c.l.b16 %v45
    %v382 = vunpack.c.h.b16 %v45
    %v383 = vunpack.c.l.b16 %v46
    %v384 = vunpack.c.h.b16 %v46
    %v385 = vunpack.c.l.b16 %v47
    %v386 = vunpack.c.h.b16 %v47
    %v387 = vunpack.c.l.b16 %v48
    %v388 = vunpack.c.h.b16 %v48
    %v389 = vunpack.c.l.b16 %v49
    %v390 = vunpack.c.h.b16 %v49
    %v391 = vunpack.c.l.b16 %v50
    %v392 = vunpack.c.h.b16 %v50
    %v393 = vunpack.c.l.b16 %v51
    %v394 = vunpack.c.h.b16 %v51
    %v395 = vunpack.c.l.b16 %v52
    %v396 = vunpack.c.h.b16 %v52
    %v397 = vunpack.c.l.b16 %v53
    %v398 = vunpack.c.h.b16 %v53
    %v399 = vunpack.c.l.b16 %v54
    %v400 = vunpack.c.h.b16 %v54
    %v401 = vunpack.c.l.b16 %v55
    %v402 = vunpack.c.h.b16 %v55
    %v403 = vunpack.c.l.b16 %v56
    %v404 = vunpack.c.h.b16 %v56
    %v405 = vunpack.c.l.b16 %v57
    %v406 = vunpack.c.h.b16 %v57
    %v407 = vunpack.c.l.b16 %v58
    %v408 = vunpack.c.h.b16 %v58
    %v409 = vunpack.c.l.b16 %v59
    %v410 = vunpack.c.h.b16 %v59
    %v411 = vunpack.c.l.b16 %v60
    %v412 = vunpack.c.h.b16 %v60
    %v413 = vunpack.c.l.b16 %v61
    %v414 = vunpack.c.h.b16 %v61
    %v415 = vunpack.c.l.b16 %v62
    %v416 = vunpack.c.h.b16 %v62
    %v417 = vunpack.c.l.b16 %v63
    %v418 = vunpack.c.h.b16 %v63
    %v419 = vunpack.c.l.b16 %v64
    %v420 = vunpack.c.h.b16 %v64
    %v421 = vunpack.c.l.b16 %v65
    %v422 = vunpack.c.h.b16 %v65
    %v423 = vunpack.c.l.b16 %v66
    %v424 = vunpack.c.h.b16 %v66
    %v425 = vunpack.c.l.b16 %v67
    %v426 = vunpack.c.h.b16 %v67
    %v427 = vunpack.c.l.b16 %v68
    %v428 = vunpack.c.h.b16 %v68
    %v429 = vunpack.c.l.b16 %v69
    %v430 = vunpack.c.h.b16 %v69
    %v431 = vunpack.c.l.b16 %v70
    %v432 = vunpack.c.h.b16 %v70
    %v433 = vunpack.c.l.b16 %v71
    %v434 = vunpack.c.h.b16 %v71
    %v435 = vunpack.c.l.b16 %v72
    %v436 = vunpack.c.h.b16 %v72
    %v437 = vunpack.c.l.b16 %v73
    %v438 = vunpack.c.h.b16 %v73
    %v439 = vunpack.c.l.b16 %v74
    %v440 = vunpack.c.h.b16 %v74
    %v441 = vunpack.c.l.b16 %v75
    %v442 = vunpack.c.h.b16 %v75
    %v443 = vunpack.c.l.b16 %v76
    %v444 = vunpack.c.h.b16 %v76
    %v445 = vunpack.c.l.b16 %v77
    %v446 = vunpack.c.h.b16 %v77
    %v447 = vunpack.c.l.b16 %v78
    %v448 = vunpack.c.h.b16 %v78
    %v449 = vunpack.c.l.b16 %v79
    %v450 = vunpack.c.h.b16 %v79
    %v451 = vunpack.c.l.b16 %v80
    %v452 = vunpack.c.h.b16 %v80
    %v453 = vunpack.c.l.b16 %v81
    %v454 = vunpack.c.h.b16 %v81
    %v455 = vunpack.c.l.b16 %v82
    %v456 = vunpack.c.h.b16 %v82
    %v457 = vunpack.c.l.b16 %v83
    %v458 = vunpack.c.h.b16 %v83
    %v459 = vunpack.c.l.b16 %v84
    %v460 = vunpack.c.h.b16 %v84
    %v461 = vunpack.c.l.b16 %v85
    %v462 = vunpack.c.h.b16 %v85
    %v463 = vunpack.c.l.b16 %v86
    %v464 = vunpack.c.h.b16 %v86
    %v465 = vunpack.c.l.b16 %v87
    %v466 = vunpack.c.h.b16 %v87
    %v467 = vunpack.c.l.b16 %v88
    %v468 = vunpack.c.h.b16 %v88
    %v469 = vunpack.c.l.b16 %v89
    %v470 = vunpack.c.h.b16 %v89
    %v471 = vunpack.c.l.b16 %v90
    %v472 = vunpack.c.h.b16 %v90
    %v473 = vunpack.c.l.b16 %v91
    %v474 = vunpack.c.h.b16 %v91
    %v475 = vunpack.c.l.b16 %v92
    %v476 = vunpack.c.h.b16 %v92
    %v477 = vunpack.c.l.b16 %v93
    %v478 = vunpack.c.h.b16 %v93
    %v479 = vunpack.c.l.b16 %v94
    %v480 = vunpack.c.h.b16 %v94
    %v481 = vunpack.c.l.b16 %v95
    %v482 = vunpack.c.h.b16 %v95
    %v483 = vunpack.c.l.b16 %v96
    %v484 = vunpack.c.h.b16 %v96
    %v485 = vunpack.c.l.b16 %v97
    %v486 = vunpack.c.h.b16 %v97
    %v487 = vunpack.c.l.b16 %v98
    %v488 = vunpack.c.h.b16 %v98
    %v489 = vunpack.c.l.b16 %v99
    %v490 = vunpack.c.h.b16 %v99
    %v491 = vunpack.c.l.b16 %v100
    %v492 = vunpack.c.h.b16 %v100
    %v493 = vunpack.c.l.b16 %v101
    %v494 = vunpack.c.h.b16 %v101
    %v495 = vunpack.c.l.b16 %v102
    %v496 = vunpack.c.h.b16 %v102
    %v497 = vunpack.c.l.b16 %v103
    %v498 = vunpack.c.h.b16 %v103
    %v499 = vunpack.c.l.b16 %v104
    %v500 = vunpack.c.h.b16 %v104
    %v501 = vunpack.c.l.b16 %v105
    %v502 = vunpack.c.h.b16 %v105
    %v503 = vunpack.c.l.b16 %v106
    %v504 = vunpack.c.h.b16 %v106
    %v505 = vunpack.c.l.b16 %v107
    %v506 = vunpack.c.h.b16 %v107
    %v507 = vunpack.c.l.b16 %v108
    %v508 = vunpack.c.h.b16 %v108
    %v509 = vunpack.c.l.b16 %v109
    %v510 = vunpack.c.h.b16 %v109
    %v511 = vunpack.c.l.b16 %v110
    %v512 = vunpack.c.h.b16 %v110
    %v513 = vunpack.c.l.b16 %v111
    %v514 = vunpack.c.h.b16 %v111
    %v515 = vunpack.c.l.b16 %v112
    %v516 = vunpack.c.h.b16 %v112
    %v517 = vunpack.c.l.b16 %v113
    %v518 = vunpack.c.h.b16 %v113
    %v519 = vunpack.c.l.b16 %v114
    %v520 = vunpack.c.h.b16 %v114
    %v521 = vunpack.c.l.b16 %v115
    %v522 = vunpack.c.h.b16 %v115
    %v523 = vunpack.c.l.b16 %v116
    %v524 = vunpack.c.h.b16 %v116
    %v525 = vunpack.c.l.b16 %v117
    %v526 = vunpack.c.h.b16 %v117
    %v527 = vunpack.c.l.b16 %v118
    %v528 = vunpack.c.h.b16 %v118
    %v529 = vunpack.c.l.b16 %v119
    %v530 = vunpack.c.h.b16 %v119
    %v531 = vunpack.c.l.b16 %v120
    %v532 = vunpack.c.h.b16 %v120
    %v533 = vunpack.c.l.b16 %v121
    %v534 = vunpack.c.h.b16 %v121
    %v535 = vunpack.c.l.b16 %v122
    %v536 = vunpack.c.h.b16 %v122
    %v537 = vunpack.c.l.b16 %v123
    %v538 = vunpack.c.h.b16 %v123
    %v539 = vunpack.c.l.b16 %v124
    %v540 = vunpack.c.h.b16 %v124
    %v541 = vunpack.c.l.b16 %v125
    %v542 = vunpack.c.h.b16 %v125
    %v543 = vunpack.c.l.b16 %v126
    %v544 = vunpack.c.h.b16 %v126
    %v545 = vunpack.c.l.b16 %v127
    %v546 = vunpack.c.h.b16 %v127
    %v547 = vunpack.c.l.b16 %v128
    %v548 = vunpack.c.h.b16 %v128
    %v549 = vunpack.c.l.b16 %v129
    %v550 = vunpack.c.h.b16 %v129
    %v551 = vunpack.c.l.b16 %v130
    %v552 = vunpack.c.h.b16 %v130
    %v553 = vunpack.c.l.b16 %v131
    %v554 = vunpack.c.h.b16 %v131
    %v555 = vunpack.c.l.b16 %v132
    %v556 = vunpack.c.h.b16 %v132
    %v557 = vunpack.c.l.b16 %v133
    %v558 = vunpack.c.h.b16 %v133
    %v559 = vunpack.c.l.b16 %v134
    %v560 = vunpack.c.h.b16 %v134
    %v561 = vunpack.c.l.b16 %v135
    %v562 = vunpack.c.h.b16 %v135
    %v563 = vunpack.c.l.b16 %v136
    %v564 = vunpack.c.h.b16 %v136
    %v565 = vunpack.c.l.b16 %v137
    %v566 = vunpack.c.h.b16 %v137
    %v567 = vunpack.c.l.b16 %v138
    %v568 = vunpack.c.h.b16 %v138
    %v569 = vunpack.c.l.b16 %v139
    %v570 = vunpack.c.h.b16 %v139
    %v571 = vunpack.c.l.b16 %v140
    %v572 = vunpack.c.h.b16 %v140
    %v573 = vunpack.c.l.b16 %v141
    %v574 = vunpack.c.h.b16 %v141
    %v575 = vunpack.c.l.b16 %v142
    %v576 = vunpack.c.h.b16 %v142
    %v577 = vunpack.c.l.b16 %v143
    %v578 = vunpack.c.h.b16 %v143
    %v579 = vunpack.c.l.b16 %v144
    %v580 = vunpack.c.h.b16 %v144
    %v581 = vunpack.c.l.b16 %v145
    %v582 = vunpack.c.h.b16 %v145
    %v583 = vunpack.c.l.b16 %v146
    %v584 = vunpack.c.h.b16 %v146
    %v585 = vunpack.c.l.b16 %v147
    %v586 = vunpack.c.h.b16 %v147
    %v587 = vunpack.c.l.b16 %v148
    %v588 = vunpack.c.h.b16 %v148
    %v589 = vunpack.c.l.b16 %v149
    %v590 = vunpack.c.h.b16 %v149
    %v591 = vunpack.c.l.b16 %v150
    %v592 = vunpack.c.h.b16 %v150
    %v593 = vunpack.c.l.b16 %v151
    %v594 = vunpack.c.h.b16 %v151
    %v595 = vunpack.c.l.b16 %v152
    %v596 = vunpack.c.h.b16 %v152
    %v597 = vunpack.c.l.b16 %v153
    %v598 = vunpack.c.h.b16 %v153
    %v599 = vunpack.c.l.b16 %v154
    %v600 = vunpack.c.h.b16 %v154
    %v601 = vunpack.c.l.b16 %v155
    %v602 = vunpack.c.h.b16 %v155
    %v603 = vunpack.c.l.b16 %v156
    %v604 = vunpack.c.h.b16 %v156
    %v605 = vunpack.c.l.b16 %v157
    %v606 = vunpack.c.h.b16 %v157
    %v607 = vunpack.c.l.b16 %v158
    %v608 = vunpack.c.h.b16 %v158
    %v609 = vunpack.c.l.b16 %v159
    %v610 = vunpack.c.h.b16 %v159
    %v611 = vunpack.c.l.b16 %v160
    %v612 = vunpack.c.h.b16 %v160
    %v613 = vunpack.c.l.b16 %v161
    %v614 = vunpack.c.h.b16 %v161
    %v615 = vunpack.c.l.b16 %v162
    %v616 = vunpack.c.h.b16 %v162
    %v617 = vpack.c.b16 %v363, %v361
    %v618 = vpack.c.b16 %v364, %v362
    %v619 = vpack.c.b16 %v367, %v365
    %v620 = vpack.c.b16 %v368, %v366
    %v621 = vpack.c.b16 %v371, %v369
    %v622 = vpack.c.b16 %v372, %v370
    %v623 = vpack.c.b16 %v375, %v373
    %v624 = vpack.c.b16 %v376, %v374
    %v625 = vpack.c.b16 %v379, %v377
    %v626 = vpack.c.b16 %v380, %v378
    %v627 = vpack.c.b16 %v383, %v381
    %v628 = vpack.c.b16 %v384, %v382
    %v629 = vpack.c.b16 %v387, %v385
    %v630 = vpack.c.b16 %v388, %v386
    %v631 = vpack.c.b16 %v391, %v389
    %v632 = vpack.c.b16 %v392, %v390
    %v633 = vpack.c.b16 %v395, %v393
    %v634 = vpack.c.b16 %v396, %v394
    %v635 = vpack.c.b16 %v399, %v397
    %v636 = vpack.c.b16 %v400, %v398
    %v637 = vpack.c.b16 %v403, %v401
    %v638 = vpack.c.b16 %v404, %v402
    %v639 = vpack.c.b16 %v407, %v405
    %v640 = vpack.c.b16 %v408, %v406
    %v641 = vpack.c.b16 %v411, %v409
    %v642 = vpack.c.b16 %v412, %v410
    %v643 = vpack.c.b16 %v415, %v413
    %v644 = vpack.c.b16 %v416, %v414
    %v645 = vpack.c.b16 %v419, %v417
    %v646 = vpack.c.b16 %v420, %v418
    %v647 = vpack.c.b16 %v423, %v421
    %v648 = vpack.c.b16 %v424, %v422
    %v649 = vpack.c.b16 %v427, %v425
    %v650 = vpack.c.b16 %v428, %v426
    %v651 = vpack.c.b16 %v431, %v429
    %v652 = vpack.c.b16 %v432, %v430
    %v653 = vpack.c.b16 %v435, %v433
    %v654 = vpack.c.b16 %v436, %v434
    %v655 = vpack.c.b16 %v439, %v437
    %v656 = vpack.c.b16 %v440, %v438
    %v657 = vpack.c.b16 %v443, %v441
    %v658 = vpack.c.b16 %v444, %v442
    %v659 = vpack.c.b16 %v447, %v445
    %v660 = vpack.c.b16 %v448, %v446
    %v661 = vpack.c.b16 %v451, %v449
    %v662 = vpack.c.b16 %v452, %v450
    %v663 = vpack.c.b16 %v455, %v453
    %v664 = vpack.c.b16 %v456, %v454
    %v665 = vpack.c.b16 %v459, %v457
    %v666 = vpack.c.b16 %v460, %v458
    %v667 = vpack.c.b16 %v463, %v461
    %v668 = vpack.c.b16 %v464, %v462
    %v669 = vpack.c.b16 %v467, %v465
    %v670 = vpack.c.b16 %v468, %v466
    %v671 = vpack.c.b16 %v471, %v469
    %v672 = vpack.c.b16 %v472, %v470
    %v673 = vpack.c.b16 %v475, %v473
    %v674 = vpack.c.b16 %v476, %v474
    %v675 = vpack.c.b16 %v479, %v477
    %v676 = vpack.c.b16 %v480, %v478
    %v677 = vpack.c.b16 %v483, %v481
    %v678 = vpack.c.b16 %v484, %v482
    %v679 = vpack.c.b16 %v487, %v485
    %v680 = vpack.c.b16 %v488, %v486
    %v681 = vpack.c.b16 %v491, %v489
    %v682 = vpack.c.b16 %v492, %v490
    %v683 = vpack.c.b16 %v495, %v493
    %v684 = vpack.c.b16 %v496, %v494
    %v685 = vpack.c.b16 %v499, %v497
    %v686 = vpack.c.b16 %v500, %v498
    %v687 = vpack.c.b16 %v503, %v501
    %v688 = vpack.c.b16 %v504, %v502
    %v689 = vpack.c.b16 %v507, %v505
    %v690 = vpack.c.b16 %v508, %v506
    %v691 = vpack.c.b16 %v511, %v509
    %v692 = vpack.c.b16 %v512, %v510
    %v693 = vpack.c.b16 %v515, %v513
    %v694 = vpack.c.b16 %v516, %v514
    %v695 = vpack.c.b16 %v519, %v517
    %v696 = vpack.c.b16 %v520, %v518
    %v697 = vpack.c.b16 %v523, %v521
    %v698 = vpack.c.b16 %v524, %v522
    %v699 = vpack.c.b16 %v527, %v525
    %v700 = vpack.c.b16 %v528, %v526
    %v701 = vpack.c.b16 %v531, %v529
    %v702 = vpack.c.b16 %v532, %v530
    %v703 = vpack.c.b16 %v535, %v533
    %v704 = vpack.c.b16 %v536, %v534
    %v705 = vpack.c.b16 %v539, %v537
    %v706 = vpack.c.b16 %v540, %v538
    %v707 = vpack.c.b16 %v543, %v541
    %v708 = vpack.c.b16 %v544, %v542
    %v709 = vpack.c.b16 %v547, %v545
    %v710 = vpack.c.b16 %v548, %v546
    %v711 = vpack.c.b16 %v551, %v549
    %v712 = vpack.c.b16 %v552, %v550
    %v713 = vpack.c.b16 %v555, %v553
    %v714 = vpack.c.b16 %v556, %v554
    %v715 = vpack.c.b16 %v559, %v557
    %v716 = vpack.c.b16 %v560, %v558
    %v717 = vpack.c.b16 %v563, %v561
    %v718 = vpack.c.b16 %v564, %v562
    %v719 = vpack.c.b16 %v567, %v565
    %v720 = vpack.c.b16 %v568, %v566
    %v721 = vpack.c.b16 %v571, %v569
    %v722 = vpack.c.b16 %v572, %v570
    %v723 = vpack.c.b16 %v575, %v573
    %v724 = vpack.c.b16 %v576, %v574
    %v725 = vpack.c.b16 %v579, %v577
    %v726 = vpack.c.b16 %v580, %v578
    %v727 = vpack.c.b16 %v583, %v581
    %v728 = vpack.c.b16 %v584, %v582
    %v729 = vpack.c.b16 %v587, %v585
    %v730 = vpack.c.b16 %v588, %v586
    %v731 = vpack.c.b16 %v591, %v589
    %v732 = vpack.c.b16 %v592, %v590
    %v733 = vpack.c.b16 %v595, %v593
    %v734 = vpack.c.b16 %v596, %v594
    %v735 = vpack.c.b16 %v599, %v597
    %v736 = vpack.c.b16 %v600, %v598
    %v737 = vpack.c.b16 %v603, %v601
    %v738 = vpack.c.b16 %v604, %v602
    %v739 = vpack.c.b16 %v607, %v605
    %v740 = vpack.c.b16 %v608, %v606
    %v741 = vpack.c.b16 %v611, %v609
    %v742 = vpack.c.b16 %v612, %v610
    %v743 = vpack.c.b16 %v615, %v613
    %v744 = vpack.c.b16 %v616, %v614
    %873 = vmatprep.subr.bf16.mxu0 %v618
    %874 = vmatpush1.bf16.msra.mxu0 %v617
    %875 = vmatprep.subr.bf16.mxu0 %v620
    %876 = vmatpush1.bf16.msra.mxu0 %v619
    %877 = vmatprep.subr.bf16.mxu0 %v622
    %878 = vmatpush1.bf16.msra.mxu0 %v621
    %879 = vmatprep.subr.bf16.mxu0 %v624
    %880 = vmatpush1.bf16.msra.mxu0 %v623
    %881 = vmatprep.subr.bf16.mxu0 %v626
    %882 = vmatpush1.bf16.msra.mxu0 %v625
    %883 = vmatprep.subr.bf16.mxu0 %v628
    %884 = vmatpush1.bf16.msra.mxu0 %v627
    %885 = vmatprep.subr.bf16.mxu0 %v630
    %886 = vmatpush1.bf16.msra.mxu0 %v629
    %887 = vmatprep.subr.bf16.mxu0 %v632
    %888 = vmatpush1.bf16.msra.mxu0 %v631
    %889 = vmatprep.subr.bf16.mxu0 %v634
    %890 = vmatpush1.bf16.msra.mxu0 %v633
    %891 = vmatprep.subr.bf16.mxu0 %v636
    %892 = vmatpush1.bf16.msra.mxu0 %v635
    %893 = vmatprep.subr.bf16.mxu0 %v638
    %894 = vmatpush1.bf16.msra.mxu0 %v637
    %895 = vmatprep.subr.bf16.mxu0 %v640
    %896 = vmatpush1.bf16.msra.mxu0 %v639
    %897 = vmatprep.subr.bf16.mxu0 %v642
    %898 = vmatpush1.bf16.msra.mxu0 %v641
    %899 = vmatprep.subr.bf16.mxu0 %v644
    %900 = vmatpush1.bf16.msra.mxu0 %v643
    %901 = vmatprep.subr.bf16.mxu0 %v646
    %902 = vmatpush1.bf16.msra.mxu0 %v645
    %903 = vmatprep.subr.bf16.mxu0 %v648
    %904 = vmatpush1.bf16.msra.mxu0 %v647
    %905 = vmatprep.mubr.bf16.mxu0 %v213
    %906 = vmatmul.mubr.bf16.gmra.mrb[0].mxu0 %v199
    %v907 = vpop.f32.mrb[0].mxu0
    %v908 = vadd.f32 %v168, %v907
    %v909 = vpop.f32.mrb[0].mxu0
    %v910 = vadd.f32 %v172, %v909
    %v911 = vpop.f32.mrb[0].mxu0
    %v912 = vpop.f32.mrb[0].mxu0
    %913 = vdwg.mxu0
    %914 = vmatprep.subr.bf16.mxu0 %v650
    %915 = vmatpush1.bf16.msra.mxu0 %v649
    %916 = vmatprep.subr.bf16.mxu0 %v652
    %917 = vmatpush1.bf16.msra.mxu0 %v651
    %918 = vmatprep.subr.bf16.mxu0 %v654
    %919 = vmatpush1.bf16.msra.mxu0 %v653
    %920 = vmatprep.subr.bf16.mxu0 %v656
    %921 = vmatpush1.bf16.msra.mxu0 %v655
    %922 = vmatprep.subr.bf16.mxu0 %v658
    %923 = vmatpush1.bf16.msra.mxu0 %v657
    %924 = vmatprep.subr.bf16.mxu0 %v660
    %925 = vmatpush1.bf16.msra.mxu0 %v659
    %926 = vmatprep.subr.bf16.mxu0 %v662
    %927 = vmatpush1.bf16.msra.mxu0 %v661
    %928 = vmatprep.subr.bf16.mxu0 %v664
    %929 = vmatpush1.bf16.msra.mxu0 %v663
    %930 = vmatprep.subr.bf16.mxu0 %v666
    %931 = vmatpush1.bf16.msra.mxu0 %v665
    %932 = vmatprep.subr.bf16.mxu0 %v668
    %933 = vmatpush1.bf16.msra.mxu0 %v667
    %934 = vmatprep.subr.bf16.mxu0 %v670
    %935 = vmatpush1.bf16.msra.mxu0 %v669
    %936 = vmatprep.subr.bf16.mxu0 %v672
    %937 = vmatpush1.bf16.msra.mxu0 %v671
    %938 = vmatprep.subr.bf16.mxu0 %v674
    %939 = vmatpush1.bf16.msra.mxu0 %v673
    %940 = vmatprep.subr.bf16.mxu0 %v676
    %941 = vmatpush1.bf16.msra.mxu0 %v675
    %942 = vmatprep.subr.bf16.mxu0 %v678
    %943 = vmatpush1.bf16.msra.mxu0 %v677
    %944 = vmatprep.subr.bf16.mxu0 %v680
    %945 = vmatpush1.bf16.msra.mxu0 %v679
    %946 = vmatprep.mubr.bf16.mxu0 %v223
    %947 = vmatmul.mubr.bf16.gmra.mrb[0].mxu0 %v221
    %v948 = vpop.f32.mrb[0].mxu0
    %v949 = vadd.f32 %v908, %v948
    %v950 = vpop.f32.mrb[0].mxu0
    %v951 = vadd.f32 %v910, %v950
    %v952 = vpop.f32.mrb[0].mxu0
    %v953 = vpop.f32.mrb[0].mxu0
    %954 = vdwg.mxu0
    %955 = vmatprep.subr.bf16.mxu0 %v682
    %956 = vmatpush1.bf16.msra.mxu0 %v681
    %957 = vmatprep.subr.bf16.mxu0 %v684
    %958 = vmatpush1.bf16.msra.mxu0 %v683
    %959 = vmatprep.subr.bf16.mxu0 %v686
    %960 = vmatpush1.bf16.msra.mxu0 %v685
    %961 = vmatprep.subr.bf16.mxu0 %v688
    %962 = vmatpush1.bf16.msra.mxu0 %v687
    %963 = vmatprep.subr.bf16.mxu0 %v690
    %964 = vmatpush1.bf16.msra.mxu0 %v689
    %965 = vmatprep.subr.bf16.mxu0 %v692
    %966 = vmatpush1.bf16.msra.mxu0 %v691
    %967 = vmatprep.subr.bf16.mxu0 %v694
    %968 = vmatpush1.bf16.msra.mxu0 %v693
    %969 = vmatprep.subr.bf16.mxu0 %v696
    %970 = vmatpush1.bf16.msra.mxu0 %v695
    %971 = vmatprep.subr.bf16.mxu0 %v698
    %972 = vmatpush1.bf16.msra.mxu0 %v697
    %973 = vmatprep.subr.bf16.mxu0 %v700
    %974 = vmatpush1.bf16.msra.mxu0 %v699
    %975 = vmatprep.subr.bf16.mxu0 %v702
    %976 = vmatpush1.bf16.msra.mxu0 %v701
    %977 = vmatprep.subr.bf16.mxu0 %v704
    %978 = vmatpush1.bf16.msra.mxu0 %v703
    %979 = vmatprep.subr.bf16.mxu0 %v706
    %980 = vmatpush1.bf16.msra.mxu0 %v705
    %981 = vmatprep.subr.bf16.mxu0 %v708
    %982 = vmatpush1.bf16.msra.mxu0 %v707
    %983 = vmatprep.subr.bf16.mxu0 %v710
    %984 = vmatpush1.bf16.msra.mxu0 %v709
    %985 = vmatprep.subr.bf16.mxu0 %v712
    %986 = vmatpush1.bf16.msra.mxu0 %v711
    %987 = vmatprep.mubr.bf16.mxu0 %v220
    %988 = vmatmul.mubr.bf16.gmra.mrb[0].mxu0 %v206
    %v989 = vpop.f32.mrb[0].mxu0
    %v990 = vadd.f32 %v949, %v989
    %v991 = vpop.f32.mrb[0].mxu0
    %v992 = vadd.f32 %v951, %v991
    %v993 = vpop.f32.mrb[0].mxu0
    %v994 = vpop.f32.mrb[0].mxu0
    %995 = vdwg.mxu0
    %996 = vmatprep.subr.bf16.mxu0 %v714
    %997 = vmatpush1.bf16.msra.mxu0 %v713
    %998 = vmatprep.subr.bf16.mxu0 %v716
    %999 = vmatpush1.bf16.msra.mxu0 %v715
    %1000 = vmatprep.subr.bf16.mxu0 %v718
    %1001 = vmatpush1.bf16.msra.mxu0 %v717
    %1002 = vmatprep.subr.bf16.mxu0 %v720
    %1003 = vmatpush1.bf16.msra.mxu0 %v719
    %1004 = vmatprep.subr.bf16.mxu0 %v722
    %1005 = vmatpush1.bf16.msra.mxu0 %v721
    %1006 = vmatprep.subr.bf16.mxu0 %v724
    %1007 = vmatpush1.bf16.msra.mxu0 %v723
    %1008 = vmatprep.subr.bf16.mxu0 %v726
    %1009 = vmatpush1.bf16.msra.mxu0 %v725
    %1010 = vmatprep.subr.bf16.mxu0 %v728
    %1011 = vmatpush1.bf16.msra.mxu0 %v727
    %1012 = vmatprep.subr.bf16.mxu0 %v730
    %1013 = vmatpush1.bf16.msra.mxu0 %v729
    %1014 = vmatprep.subr.bf16.mxu0 %v732
    %1015 = vmatpush1.bf16.msra.mxu0 %v731
    %1016 = vmatprep.subr.bf16.mxu0 %v734
    %1017 = vmatpush1.bf16.msra.mxu0 %v733
    %1018 = vmatprep.subr.bf16.mxu0 %v736
    %1019 = vmatpush1.bf16.msra.mxu0 %v735
    %1020 = vmatprep.subr.bf16.mxu0 %v738
    %1021 = vmatpush1.bf16.msra.mxu0 %v737
    %1022 = vmatprep.subr.bf16.mxu0 %v740
    %1023 = vmatpush1.bf16.msra.mxu0 %v739
    %1024 = vmatprep.subr.bf16.mxu0 %v742
    %1025 = vmatpush1.bf16.msra.mxu0 %v741
    %1026 = vmatprep.subr.bf16.mxu0 %v744
    %1027 = vmatpush1.bf16.msra.mxu0 %v743
    %1028 = vmatprep.mubr.bf16.mxu0 %v224
    %1029 = vmatmul.mubr.bf16.gmra.mrb[0].mxu0 %v222
    %v1030 = vpop.f32.mrb[0].mxu0
    %v1031 = vadd.f32 %v990, %v1030
    %v1032 = vpop.f32.mrb[0].mxu0
    %v1033 = vadd.f32 %v992, %v1032
    %v1034 = vpop.f32.mrb[0].mxu0
    %v1035 = vpop.f32.mrb[0].mxu0
    %1036 = vdwg.mxu0
    %v1037 = vmax.f32 %v1031, 0.0
    %v1038 = vmax.f32 %v1033, 0.0
    %v1039 = vpack.c.bf16 %v1037, %v1037
    %v1040 = vpack.c.bf16 %v1038, %v1038
    %v1041 = vld [vmem:[%s3] sm:$0xf]
    %v1042 = vld [vmem:[%s3 + $0x4] sm:$0xf]
    %v1043 = vld [vmem:[%s3 + $0x8] sm:$0xf]
    %v1044 = vld [vmem:[%s3 + $0xc] sm:$0xf]
    %v1045 = vld [vmem:[%s3 + $0x10] sm:$0xf]
    %v1046 = vld [vmem:[%s3 + $0x14] sm:$0xf]
    %v1047 = vld [vmem:[%s3 + $0x18] sm:$0xf]
    %v1048 = vld [vmem:[%s3 + $0x1c] sm:$0xf]
    %v1049 = vld [vmem:[%s3 + $0x20] sm:$0xf]
    %v1050 = vld [vmem:[%s3 + $0x24] sm:$0xf]
    %v1051 = vld [vmem:[%s3 + $0x28] sm:$0xf]
    %v1052 = vld [vmem:[%s3 + $0x2c] sm:$0xf]
    %v1053 = vld [vmem:[%s3 + $0x30] sm:$0xf]
    %v1054 = vld [vmem:[%s3 + $0x34] sm:$0xf]
    %v1055 = vld [vmem:[%s3 + $0x38] sm:$0xf]
    %v1056 = vld [vmem:[%s3 + $0x3c] sm:$0xf]
    %v1057 = vld [vmem:[%s3 + $0x40] sm:$0xf]
    %v1058 = vld [vmem:[%s3 + $0x44] sm:$0xf]
    %v1059 = vld [vmem:[%s3 + $0x48] sm:$0xf]
    %v1060 = vld [vmem:[%s3 + $0x4c] sm:$0xf]
    %v1061 = vld [vmem:[%s3 + $0x50] sm:$0xf]
    %v1062 = vld [vmem:[%s3 + $0x54] sm:$0xf]
    %v1063 = vld [vmem:[%s3 + $0x58] sm:$0xf]
    %v1064 = vld [vmem:[%s3 + $0x5c] sm:$0xf]
    %v1065 = vld [vmem:[%s3 + $0x60] sm:$0xf]
    %v1066 = vld [vmem:[%s3 + $0x64] sm:$0xf]
    %v1067 = vld [vmem:[%s3 + $0x68] sm:$0xf]
    %v1068 = vld [vmem:[%s3 + $0x6c] sm:$0xf]
    %v1069 = vld [vmem:[%s3 + $0x70] sm:$0xf]
    %v1070 = vld [vmem:[%s3 + $0x74] sm:$0xf]
    %v1071 = vld [vmem:[%s3 + $0x78] sm:$0xf]
    %v1072 = vld [vmem:[%s3 + $0x7c] sm:$0xf]
    %v1073 = vld [vmem:[%s4] sm:$0x1]
    %v1075 = vlaneseq
    %v1076 = vshrl.u32 %v1075, 7
    %v1077 = vsub.s32 0, %v1076
    %v1078 = vrot.slane %v1073, %v1077
    %v1112 = vunpack.c.l.b16 %v1041
    %v1113 = vunpack.c.l.b16 %v1042
    %v1114 = vunpack.c.l.b16 %v1043
    %v1115 = vunpack.c.l.b16 %v1044
    %v1116 = vunpack.c.l.b16 %v1045
    %v1117 = vunpack.c.l.b16 %v1046
    %v1118 = vunpack.c.l.b16 %v1047
    %v1119 = vunpack.c.l.b16 %v1048
    %v1120 = vunpack.c.l.b16 %v1049
    %v1121 = vunpack.c.l.b16 %v1050
    %v1122 = vunpack.c.l.b16 %v1051
    %v1123 = vunpack.c.l.b16 %v1052
    %v1124 = vunpack.c.l.b16 %v1053
    %v1125 = vunpack.c.l.b16 %v1054
    %v1126 = vunpack.c.l.b16 %v1055
    %v1127 = vunpack.c.l.b16 %v1056
    %v1128 = vunpack.c.l.b16 %v1057
    %v1129 = vunpack.c.l.b16 %v1058
    %v1130 = vunpack.c.l.b16 %v1059
    %v1131 = vunpack.c.l.b16 %v1060
    %v1132 = vunpack.c.l.b16 %v1061
    %v1133 = vunpack.c.l.b16 %v1062
    %v1134 = vunpack.c.l.b16 %v1063
    %v1135 = vunpack.c.l.b16 %v1064
    %v1136 = vunpack.c.l.b16 %v1065
    %v1137 = vunpack.c.l.b16 %v1066
    %v1138 = vunpack.c.l.b16 %v1067
    %v1139 = vunpack.c.l.b16 %v1068
    %v1140 = vunpack.c.l.b16 %v1069
    %v1141 = vunpack.c.l.b16 %v1070
    %v1142 = vunpack.c.l.b16 %v1071
    %v1143 = vunpack.c.l.b16 %v1072
    %v1144 = vpack.c.b16 %v1113, %v1112
    %v1145 = vpack.c.b16 %v1115, %v1114
    %v1146 = vpack.c.b16 %v1117, %v1116
    %v1147 = vpack.c.b16 %v1119, %v1118
    %v1148 = vpack.c.b16 %v1121, %v1120
    %v1149 = vpack.c.b16 %v1123, %v1122
    %v1150 = vpack.c.b16 %v1125, %v1124
    %v1151 = vpack.c.b16 %v1127, %v1126
    %v1152 = vpack.c.b16 %v1129, %v1128
    %v1153 = vpack.c.b16 %v1131, %v1130
    %v1154 = vpack.c.b16 %v1133, %v1132
    %v1155 = vpack.c.b16 %v1135, %v1134
    %v1156 = vpack.c.b16 %v1137, %v1136
    %v1157 = vpack.c.b16 %v1139, %v1138
    %v1158 = vpack.c.b16 %v1141, %v1140
    %v1159 = vpack.c.b16 %v1143, %v1142
    %1176 = vmatprep.subr.bf16.mxu0 0
    %1177 = vmatpush1.bf16.msra.mxu0 %v1144
    %1178 = vmatprep.subr.bf16.mxu0 0
    %1179 = vmatpush1.bf16.msra.mxu0 %v1145
    %1180 = vmatprep.subr.bf16.mxu0 0
    %1181 = vmatpush1.bf16.msra.mxu0 %v1146
    %1182 = vmatprep.subr.bf16.mxu0 0
    %1183 = vmatpush1.bf16.msra.mxu0 %v1147
    %1184 = vmatprep.subr.bf16.mxu0 0
    %1185 = vmatpush1.bf16.msra.mxu0 %v1148
    %1186 = vmatprep.subr.bf16.mxu0 0
    %1187 = vmatpush1.bf16.msra.mxu0 %v1149
    %1188 = vmatprep.subr.bf16.mxu0 0
    %1189 = vmatpush1.bf16.msra.mxu0 %v1150
    %1190 = vmatprep.subr.bf16.mxu0 0
    %1191 = vmatpush1.bf16.msra.mxu0 %v1151
    %1192 = vmatprep.subr.bf16.mxu0 0
    %1193 = vmatpush1.bf16.msra.mxu0 %v1152
    %1194 = vmatprep.subr.bf16.mxu0 0
    %1195 = vmatpush1.bf16.msra.mxu0 %v1153
    %1196 = vmatprep.subr.bf16.mxu0 0
    %1197 = vmatpush1.bf16.msra.mxu0 %v1154
    %1198 = vmatprep.subr.bf16.mxu0 0
    %1199 = vmatpush1.bf16.msra.mxu0 %v1155
    %1200 = vmatprep.subr.bf16.mxu0 0
    %1201 = vmatpush1.bf16.msra.mxu0 %v1156
    %1202 = vmatprep.subr.bf16.mxu0 0
    %1203 = vmatpush1.bf16.msra.mxu0 %v1157
    %1204 = vmatprep.subr.bf16.mxu0 0
    %1205 = vmatpush1.bf16.msra.mxu0 %v1158
    %1206 = vmatprep.subr.bf16.mxu0 0
    %1207 = vmatpush1.bf16.msra.mxu0 %v1159
    %1208 = vmatprep.mubr.bf16.mxu0 %v1040
    %1209 = vmatmul.mubr.bf16.gmra.mrb[0].mxu0 %v1039
    %v1210 = vpop.f32.mrb[0].mxu0
    %v1211 = vadd.f32 %v1078, %v1210
    %v1212 = vpop.f32.mrb[0].mxu0
    %v1213 = vpop.f32.mrb[0].mxu0
    %v1214 = vpop.f32.mrb[0].mxu0
    %1215 = vdwg.mxu0
    %v1216 = vld [vmem:[%s5] sm:$0xf]
    %v1217 = vld [vmem:[%s5 + $0x4] sm:$0xf]
    %v1218 = vld [vmem:[%s5 + $0x8] sm:$0xf]
    %v1219 = vld [vmem:[%s5 + $0xc] sm:$0xf]
    %v1220 = vld [vmem:[%s5 + $0x10] sm:$0xf]
    %v1221 = vld [vmem:[%s5 + $0x14] sm:$0xf]
    %v1222 = vld [vmem:[%s5 + $0x18] sm:$0xf]
    %v1223 = vld [vmem:[%s5 + $0x1c] sm:$0xf]
    %v1224 = vld [vmem:[%s5 + $0x20] sm:$0xf]
    %v1225 = vld [vmem:[%s5 + $0x24] sm:$0xf]
    %v1226 = vld [vmem:[%s5 + $0x28] sm:$0xf]
    %v1227 = vld [vmem:[%s5 + $0x2c] sm:$0xf]
    %v1228 = vld [vmem:[%s5 + $0x30] sm:$0xf]
    %v1229 = vld [vmem:[%s5 + $0x34] sm:$0xf]
    %v1230 = vld [vmem:[%s5 + $0x38] sm:$0xf]
    %v1231 = vld [vmem:[%s5 + $0x3c] sm:$0xf]
    %v1232 = vld [vmem:[%s5 + $0x40] sm:$0xf]
    %v1233 = vld [vmem:[%s5 + $0x44] sm:$0xf]
    %v1234 = vld [vmem:[%s5 + $0x48] sm:$0xf]
    %v1235 = vld [vmem:[%s5 + $0x4c] sm:$0xf]
    %v1236 = vld [vmem:[%s5 + $0x50] sm:$0xf]
    %v1237 = vld [vmem:[%s5 + $0x54] sm:$0xf]
    %v1238 = vld [vmem:[%s5 + $0x58] sm:$0xf]
    %v1239 = vld [vmem:[%s5 + $0x5c] sm:$0xf]
    %v1240 = vld [vmem:[%s5 + $0x60] sm:$0xf]
    %v1241 = vld [vmem:[%s5 + $0x64] sm:$0xf]
    %v1242 = vld [vmem:[%s5 + $0x68] sm:$0xf]
    %v1243 = vld [vmem:[%s5 + $0x6c] sm:$0xf]
    %v1244 = vld [vmem:[%s5 + $0x70] sm:$0xf]
    %v1245 = vld [vmem:[%s5 + $0x74] sm:$0xf]
    %v1246 = vld [vmem:[%s5 + $0x78] sm:$0xf]
    %v1247 = vld [vmem:[%s5 + $0x7c] sm:$0xf]
    %v1248 = vld [vmem:[%s6] sm:$0x1]
    %v1250 = vlaneseq
    %v1251 = vshrl.u32 %v1250, 7
    %v1252 = vsub.s32 0, %v1251
    %v1253 = vrot.slane %v1248, %v1252
    %v1287 = vunpack.c.l.b16 %v1216
    %v1288 = vunpack.c.l.b16 %v1217
    %v1289 = vunpack.c.l.b16 %v1218
    %v1290 = vunpack.c.l.b16 %v1219
    %v1291 = vunpack.c.l.b16 %v1220
    %v1292 = vunpack.c.l.b16 %v1221
    %v1293 = vunpack.c.l.b16 %v1222
    %v1294 = vunpack.c.l.b16 %v1223
    %v1295 = vunpack.c.l.b16 %v1224
    %v1296 = vunpack.c.l.b16 %v1225
    %v1297 = vunpack.c.l.b16 %v1226
    %v1298 = vunpack.c.l.b16 %v1227
    %v1299 = vunpack.c.l.b16 %v1228
    %v1300 = vunpack.c.l.b16 %v1229
    %v1301 = vunpack.c.l.b16 %v1230
    %v1302 = vunpack.c.l.b16 %v1231
    %v1303 = vunpack.c.l.b16 %v1232
    %v1304 = vunpack.c.l.b16 %v1233
    %v1305 = vunpack.c.l.b16 %v1234
    %v1306 = vunpack.c.l.b16 %v1235
    %v1307 = vunpack.c.l.b16 %v1236
    %v1308 = vunpack.c.l.b16 %v1237
    %v1309 = vunpack.c.l.b16 %v1238
    %v1310 = vunpack.c.l.b16 %v1239
    %v1311 = vunpack.c.l.b16 %v1240
    %v1312 = vunpack.c.l.b16 %v1241
    %v1313 = vunpack.c.l.b16 %v1242
    %v1314 = vunpack.c.l.b16 %v1243
    %v1315 = vunpack.c.l.b16 %v1244
    %v1316 = vunpack.c.l.b16 %v1245
    %v1317 = vunpack.c.l.b16 %v1246
    %v1318 = vunpack.c.l.b16 %v1247
    %v1319 = vpack.c.b16 %v1288, %v1287
    %v1320 = vpack.c.b16 %v1290, %v1289
    %v1321 = vpack.c.b16 %v1292, %v1291
    %v1322 = vpack.c.b16 %v1294, %v1293
    %v1323 = vpack.c.b16 %v1296, %v1295
    %v1324 = vpack.c.b16 %v1298, %v1297
    %v1325 = vpack.c.b16 %v1300, %v1299
    %v1326 = vpack.c.b16 %v1302, %v1301
    %v1327 = vpack.c.b16 %v1304, %v1303
    %v1328 = vpack.c.b16 %v1306, %v1305
    %v1329 = vpack.c.b16 %v1308, %v1307
    %v1330 = vpack.c.b16 %v1310, %v1309
    %v1331 = vpack.c.b16 %v1312, %v1311
    %v1332 = vpack.c.b16 %v1314, %v1313
    %v1333 = vpack.c.b16 %v1316, %v1315
    %v1334 = vpack.c.b16 %v1318, %v1317
    %1351 = vmatprep.subr.bf16.mxu0 0
    %1352 = vmatpush1.bf16.msra.mxu0 %v1319
    %1353 = vmatprep.subr.bf16.mxu0 0
    %1354 = vmatpush1.bf16.msra.mxu0 %v1320
    %1355 = vmatprep.subr.bf16.mxu0 0
    %1356 = vmatpush1.bf16.msra.mxu0 %v1321
    %1357 = vmatprep.subr.bf16.mxu0 0
    %1358 = vmatpush1.bf16.msra.mxu0 %v1322
    %1359 = vmatprep.subr.bf16.mxu0 0
    %1360 = vmatpush1.bf16.msra.mxu0 %v1323
    %1361 = vmatprep.subr.bf16.mxu0 0
    %1362 = vmatpush1.bf16.msra.mxu0 %v1324
    %1363 = vmatprep.subr.bf16.mxu0 0
    %1364 = vmatpush1.bf16.msra.mxu0 %v1325
    %1365 = vmatprep.subr.bf16.mxu0 0
    %1366 = vmatpush1.bf16.msra.mxu0 %v1326
    %1367 = vmatprep.subr.bf16.mxu0 0
    %1368 = vmatpush1.bf16.msra.mxu0 %v1327
    %1369 = vmatprep.subr.bf16.mxu0 0
    %1370 = vmatpush1.bf16.msra.mxu0 %v1328
    %1371 = vmatprep.subr.bf16.mxu0 0
    %1372 = vmatpush1.bf16.msra.mxu0 %v1329
    %1373 = vmatprep.subr.bf16.mxu0 0
    %1374 = vmatpush1.bf16.msra.mxu0 %v1330
    %1375 = vmatprep.subr.bf16.mxu0 0
    %1376 = vmatpush1.bf16.msra.mxu0 %v1331
    %1377 = vmatprep.subr.bf16.mxu0 0
    %1378 = vmatpush1.bf16.msra.mxu0 %v1332
    %1379 = vmatprep.subr.bf16.mxu0 0
    %1380 = vmatpush1.bf16.msra.mxu0 %v1333
    %1381 = vmatprep.subr.bf16.mxu0 0
    %1382 = vmatpush1.bf16.msra.mxu0 %v1334
    %1383 = vmatprep.mubr.bf16.mxu0 %v1040
    %1384 = vmatmul.mubr.bf16.gmra.mrb[0].mxu0 %v1039
    %v1385 = vpop.f32.mrb[0].mxu0
    %v1386 = vadd.f32 %v1253, %v1385
    %v1387 = vpop.f32.mrb[0].mxu0
    %v1388 = vpop.f32.mrb[0].mxu0
    %v1389 = vpop.f32.mrb[0].mxu0
    %1390 = vdwg.mxu0
    %vm1391 = vcmask 74752
    %1392 = vst.msk [vmem:[%s8] sm:$0x3] %vm1391, %v1211
    %1393 = vst.msk [vmem:[#allocation2] sm:$0x3] %vm1391, %v1386
    %v1394 = vld [vmem:[%s7] sm:$0x3]
    %v1395 = vmul.f32 %v1386, 0.5
    %v1396 = vmul.f32 %v1395, 1.442695
    %v1397 = vpow.pop %v1396
    %v1398 = vmul.f32 %v1394, %v1397
    %v1399 = vadd.f32 %v1398, %v1211
    %1400 = vst.msk [vmem:[%s10] sm:$0x3] %vm1391, %v1399
    // Predicated region
    $region34: #{ffvae_forward.14} parent=1 // pred_check
      _
    $region35: #{ffvae_forward.14} parent=1 // pred_check_branch
      %1402 = sbr.rel (0) target = $region37
    $region36: #{ffvae_forward.14} parent=1 // pred_region
      _
    $region37: #{ffvae_forward.14} parent=1 // pred_fallthru
      _
    // Predicated region
    $region38: #{ffvae_forward.14} parent=1 // pred_check
      _
    $region39: #{ffvae_forward.14} parent=1 // pred_check_branch
      %1404 = sbr.rel (0) target = $region41
    $region40: #{ffvae_forward.14} parent=1 // pred_region
      %s1406 = ssub.s32 32, 32
      %1407 = vsyncadd [#allocation3], %s1406
      %s1409 = sshll.u32 [#allocation2], 4
      %s1410 = int_to_ptr.vmem [resolvable:$true] %s1409
      %1412 = dma.vmem_to_hbm [thread:$0]  %s1410, 32, %s9, [#allocation3]
    $region41: #{ffvae_forward.14} parent=1 // pred_fallthru
      _
    // Predicated region
    $region42: #{ffvae_forward.14} parent=1 // pred_check
      _
    $region43: #{ffvae_forward.14} parent=1 // pred_check_branch
      %1414 = sbr.rel (0) target = $region45
    $region44: #{ffvae_forward.14} parent=1 // pred_region
      _
    $region45: #{ffvae_forward.14} parent=1 // pred_fallthru
      _
    // Predicated region
    $region46: #{ffvae_forward.14} parent=1 // pred_check
      _
    $region47: #{ffvae_forward.14} parent=1 // pred_check_branch
      %1416 = sbr.rel (0) target = $region49
    $region48: #{ffvae_forward.14} parent=1 // pred_region
      _
    $region49: #{ffvae_forward.14} parent=1 // pred_fallthru
      _
    // Predicated region
    $region50: #{ffvae_forward.14} parent=1 // pred_check
      _
    $region51: #{ffvae_forward.14} parent=1 // pred_check_branch
      %1418 = sbr.rel (0) target = $region53
    $region52: #{ffvae_forward.14} parent=1 // pred_region
      %1419 = dma.done [#allocation3], 32
    $region53: #{ffvae_forward.14} parent=1 // pred_fallthru
      _
    // Predicated region
    $region54: #{ffvae_forward.14} parent=1 // pred_check
      _
    $region55: #{ffvae_forward.14} parent=1 // pred_check_branch
      %1421 = sbr.rel (0) target = $region57
    $region56: #{ffvae_forward.14} parent=1 // pred_region
      _
    $region57: #{ffvae_forward.14} parent=1 // pred_fallthru
      _
    %1422 = vsyncpa [#allocation3], 1

// kernel: tile.8
$region0: #{tile.8}
  #allocation0 [shape = 's32[1]{0}', space=sflag, size = 0x4, scoped, tag = 'scoped memory for tile.8']
  %s0 = inlined_call_operand.vmem [shape: f32[64], index: 0, kind: input, shape index: {}]
  %s1 = inlined_call_operand.vmem [shape: f32[16,64], index: 1, kind: output, shape index: {}]
  // Predicated region
  $region2: #{tile.8} parent=0 // pred_check
    _
  $region3: #{tile.8} parent=0 // pred_check_branch
    %3 = sbr.rel (0) target = $region5
  $region4: #{tile.8} parent=0 // pred_region
    _
  $region5: #{tile.8} parent=0 // pred_fallthru
    _
  %v4 = vld [vmem:[%s0] ss:$0 sm:$0xff]
  %5 = vst [vmem:[%s1] sm:$0xff] %v4
  %s6 = scalar_lea.vmem %s1, 8
  %7 = vst [vmem:[%s6] sm:$0xff] %v4

// kernel: tile.9
$region0: #{tile.9}
  %s0 = inlined_call_operand.vmem [shape: f32[16,64], index: 0, kind: input, shape index: {}]
  %s1 = inlined_call_operand.vmem [shape: f32[1,1024], index: 1, kind: output, shape index: {}]
  $region1: #{tile.9} parent=0
    #allocation0 [shape = 'u8[32768]{0}', space=vmem, size = 0x8000, scoped, tag = 'scoped mem for output reshape']
    %v2 = vld [vmem:[%s0] ss:$2 sm:$0xff]
    %vm3 = vcmask 523264
    %4 = vst.msk [vmem:[#allocation0] ss:$8 sm:$0xf] %vm3, %v2
    %5 = vst.msk [vmem:[#allocation0] ss:$8 sm:$0xf0] %vm3, %v2
    %s6 = scalar_lea.vmem %s0, 1
    %v7 = vld [vmem:[%s6] ss:$2 sm:$0xff]
    %8 = vrot.lane.b32.xlu0 %v7, 64
    %v9 = vpop.permute.xlu0 %8
    %vm10 = vcmask 1048064
    %11 = vst.msk [vmem:[#allocation0] ss:$8 sm:$0xf] %vm10, %v9
    %12 = vst.msk [vmem:[#allocation0] ss:$8 sm:$0xf0] %vm10, %v9
    %s14 = sshllo.u32 0, 1
    %v16 = vld [vmem:[#allocation0] sm:%s14]
    %s17 = sshllo.u32 0, 1
    %18 = vst [vmem:[%s1] sm:%s17] %v16
    %s19 = scalar_lea.vmem [#allocation0], 8
    %v20 = vld [vmem:[%s19] sm:%s14]
    %s21 = sshllo.u32 0, 1
    %s22 = scalar_lea.vmem %s1, 1
    %23 = vst [vmem:[%s22] sm:%s21] %v20
    %s24 = scalar_lea.vmem [#allocation0], 16
    %v25 = vld [vmem:[%s24] sm:%s14]
    %s26 = sshllo.u32 0, 1
    %s27 = smul.addr 1, 2
    %s28 = scalar_lea.vmem %s1, %s27
    %29 = vst [vmem:[%s28] sm:%s26] %v25
    %s30 = scalar_lea.vmem [#allocation0], 24
    %v31 = vld [vmem:[%s30] sm:%s14]
    %s32 = sshllo.u32 0, 1
    %s33 = smul.addr 1, 3
    %s34 = scalar_lea.vmem %s1, %s33
    %35 = vst [vmem:[%s34] sm:%s32] %v31
    %s36 = scalar_lea.vmem [#allocation0], 32
    %v37 = vld [vmem:[%s36] sm:%s14]
    %s38 = sshllo.u32 0, 1
    %s39 = smul.addr 1, 4
    %s40 = scalar_lea.vmem %s1, %s39
    %41 = vst [vmem:[%s40] sm:%s38] %v37
    %s42 = scalar_lea.vmem [#allocation0], 40
    %v43 = vld [vmem:[%s42] sm:%s14]
    %s44 = sshllo.u32 0, 1
    %s45 = smul.addr 1, 5
    %s46 = scalar_lea.vmem %s1, %s45
    %47 = vst [vmem:[%s46] sm:%s44] %v43
    %s48 = scalar_lea.vmem [#allocation0], 48
    %v49 = vld [vmem:[%s48] sm:%s14]
    %s50 = sshllo.u32 0, 1
    %s51 = smul.addr 1, 6
    %s52 = scalar_lea.vmem %s1, %s51
    %53 = vst [vmem:[%s52] sm:%s50] %v49
    %s54 = scalar_lea.vmem [#allocation0], 56
    %v55 = vld [vmem:[%s54] sm:%s14]
    %s56 = sshllo.u32 0, 1
    %s57 = smul.addr 1, 7
    %s58 = scalar_lea.vmem %s1, %s57
    %59 = vst [vmem:[%s58] sm:%s56] %v55

// kernel: ffvae_forward.15
$region0: #{ffvae_forward.15}
  #allocation0 [shape = 'u32[]', space=smem, size = 0x4, offset = 0x4, fixed_abs, tag = 'smem constant byte address 0x4 - core index']
  #allocation1 [shape = 'u32[144,128]{1,0:T(1,128)}', space=vmem, size = 0x12000, scoped, tag = 'internal scratch']
  %s0 = inlined_call_operand.vmem [shape: bf16[2,10], index: 0, kind: input, shape index: {}]
  %s1 = inlined_call_operand.vmem [shape: bf16[10,256], index: 1, kind: input, shape index: {}]
  %s2 = inlined_call_operand.vmem [shape: f32[1,256], index: 2, kind: input, shape index: {}]
  %s3 = inlined_call_operand.vmem [shape: bf16[256,1024], index: 3, kind: input, shape index: {}]
  %s4 = inlined_call_operand.vmem [shape: f32[1,1024], index: 4, kind: input, shape index: {}]
  %s5 = inlined_call_operand.vmem [shape: bf16[2,1024], index: 5, kind: output, shape index: {}]
  %s6 = sld [smem:[#allocation0]]
  $region30: #{ffvae_forward.15} parent=0
    _
  %s8 = ssub.s32 1, %s6
  %s9 = scalar_select 0, %s8, %s6
  // Predicated region
  $region2: #{ffvae_forward.15} parent=0 // pred_check
    _
  $region3: #{ffvae_forward.15} parent=0 // pred_check_branch
    %11 = sbr.rel (0) target = $region5
  $region4: #{ffvae_forward.15} parent=0 // pred_region
    _
  $region5: #{ffvae_forward.15} parent=0 // pred_fallthru
    _
  // Predicated region
  $region6: #{ffvae_forward.15} parent=0 // pred_check
    _
  $region7: #{ffvae_forward.15} parent=0 // pred_check_branch
    %13 = sbr.rel (0) target = $region9
  $region8: #{ffvae_forward.15} parent=0 // pred_region
    _
  $region9: #{ffvae_forward.15} parent=0 // pred_fallthru
    _
  // Predicated region
  $region10: #{ffvae_forward.15} parent=0 // pred_check
    _
  $region11: #{ffvae_forward.15} parent=0 // pred_check_branch
    %15 = sbr.rel (0) target = $region13
  $region12: #{ffvae_forward.15} parent=0 // pred_region
    _
  $region13: #{ffvae_forward.15} parent=0 // pred_fallthru
    _
  // Predicated region
  $region14: #{ffvae_forward.15} parent=0 // pred_check
    _
  $region15: #{ffvae_forward.15} parent=0 // pred_check_branch
    %17 = sbr.rel (0) target = $region17
  $region16: #{ffvae_forward.15} parent=0 // pred_region
    _
  $region17: #{ffvae_forward.15} parent=0 // pred_fallthru
    _
  // Predicated region
  $region18: #{ffvae_forward.15} parent=0 // pred_check
    _
  $region19: #{ffvae_forward.15} parent=0 // pred_check_branch
    %19 = sbr.rel (0) target = $region21
  $region20: #{ffvae_forward.15} parent=0 // pred_region
    _
  $region21: #{ffvae_forward.15} parent=0 // pred_fallthru
    _
  %v21 = vld [vmem:[%s0] sm:$0x1]
  %v22 = vld [vmem:[%s1] sm:$0xff]
  %v23 = vld [vmem:[%s1 + $0x8] sm:$0x11]
  %v24 = vld [vmem:[%s2] sm:$0x3]
  %v26 = vlaneseq
  %v27 = vshrl.u32 %v26, 7
  %v28 = vsub.s32 0, %v27
  %v29 = vrot.slane %v24, %v28
  %v30 = vlaneseq
  %v31 = vshrl.u32 %v30, 7
  %v32 = vsub.s32 1, %v31
  %v33 = vrot.slane %v24, %v32
  %v38 = vunpack.c.l.b16 %v22
  %v39 = vunpack.c.h.b16 %v22
  %v40 = vunpack.c.l.b16 %v23
  %v41 = vunpack.c.h.b16 %v23
  %v42 = vpack.c.b16 %v40, %v38
  %v43 = vpack.c.b16 %v41, %v39
  %vm44 = vcmask 80896
  %v46 = vsel %vm44, %v21, 0
  %vm48 = vcmask 1044480
  %v50 = vsel %vm48, %v42, 0
  %v53 = vsel %vm48, %v43, 0
  %55 = vmatprep.subr.bf16.mxu0 %v53
  %56 = vmatpush1.bf16.msra.mxu0 %v50
  %57 = vmatprep.subr.bf16.mxu0 0
  %58 = vmatpush1.bf16.msra.mxu0 0
  %59 = vmatprep.subr.bf16.mxu0 0
  %60 = vmatpush1.bf16.msra.mxu0 0
  %61 = vmatprep.subr.bf16.mxu0 0
  %62 = vmatpush1.bf16.msra.mxu0 0
  %63 = vmatprep.subr.bf16.mxu0 0
  %64 = vmatpush1.bf16.msra.mxu0 0
  %65 = vmatprep.subr.bf16.mxu0 0
  %66 = vmatpush1.bf16.msra.mxu0 0
  %67 = vmatprep.subr.bf16.mxu0 0
  %68 = vmatpush1.bf16.msra.mxu0 0
  %69 = vmatprep.subr.bf16.mxu0 0
  %70 = vmatpush1.bf16.msra.mxu0 0
  %71 = vmatprep.subr.bf16.mxu0 0
  %72 = vmatpush1.bf16.msra.mxu0 0
  %73 = vmatprep.subr.bf16.mxu0 0
  %74 = vmatpush1.bf16.msra.mxu0 0
  %75 = vmatprep.subr.bf16.mxu0 0
  %76 = vmatpush1.bf16.msra.mxu0 0
  %77 = vmatprep.subr.bf16.mxu0 0
  %78 = vmatpush1.bf16.msra.mxu0 0
  %79 = vmatprep.subr.bf16.mxu0 0
  %80 = vmatpush1.bf16.msra.mxu0 0
  %81 = vmatprep.subr.bf16.mxu0 0
  %82 = vmatpush1.bf16.msra.mxu0 0
  %83 = vmatprep.subr.bf16.mxu0 0
  %84 = vmatpush1.bf16.msra.mxu0 0
  %85 = vmatprep.subr.bf16.mxu0 0
  %86 = vmatpush1.bf16.msra.mxu0 0
  %87 = vmatprep.mubr.bf16.mxu0 0
  %88 = vmatmul.mubr.bf16.gmra.mrb[0].mxu0 %v46
  %v89 = vpop.f32.mrb[0].mxu0
  %v90 = vadd.f32 %v29, %v89
  %v91 = vpop.f32.mrb[0].mxu0
  %v92 = vadd.f32 %v33, %v91
  %v93 = vpop.f32.mrb[0].mxu0
  %v94 = vpop.f32.mrb[0].mxu0
  %95 = vdwg.mxu0
  %v96 = vmax.f32 %v90, 0.0
  %v97 = vmax.f32 %v92, 0.0
  %v98 = vpack.c.bf16 %v96, %v96
  %v99 = vpack.c.bf16 %v97, %v97
  %v100 = vld [vmem:[%s3] sm:$0xff]
  %v101 = vld [vmem:[%s3 + $0x8] sm:$0xff]
  %v102 = vld [vmem:[%s3 + $0x10] sm:$0xff]
  %v103 = vld [vmem:[%s3 + $0x18] sm:$0xff]
  %v104 = vld [vmem:[%s3 + $0x20] sm:$0xff]
  %v105 = vld [vmem:[%s3 + $0x28] sm:$0xff]
  %v106 = vld [vmem:[%s3 + $0x30] sm:$0xff]
  %v107 = vld [vmem:[%s3 + $0x38] sm:$0xff]
  %v108 = vld [vmem:[%s3 + $0x40] sm:$0xff]
  %v109 = vld [vmem:[%s3 + $0x48] sm:$0xff]
  %v110 = vld [vmem:[%s3 + $0x50] sm:$0xff]
  %v111 = vld [vmem:[%s3 + $0x58] sm:$0xff]
  %v112 = vld [vmem:[%s3 + $0x60] sm:$0xff]
  %v113 = vld [vmem:[%s3 + $0x68] sm:$0xff]
  %v114 = vld [vmem:[%s3 + $0x70] sm:$0xff]
  %v115 = vld [vmem:[%s3 + $0x78] sm:$0xff]
  %v116 = vld [vmem:[%s3 + $0x80] sm:$0xff]
  %v117 = vld [vmem:[%s3 + $0x88] sm:$0xff]
  %v118 = vld [vmem:[%s3 + $0x90] sm:$0xff]
  %v119 = vld [vmem:[%s3 + $0x98] sm:$0xff]
  %v120 = vld [vmem:[%s3 + $0xa0] sm:$0xff]
  %v121 = vld [vmem:[%s3 + $0xa8] sm:$0xff]
  %v122 = vld [vmem:[%s3 + $0xb0] sm:$0xff]
  %v123 = vld [vmem:[%s3 + $0xb8] sm:$0xff]
  %v124 = vld [vmem:[%s3 + $0xc0] sm:$0xff]
  %v125 = vld [vmem:[%s3 + $0xc8] sm:$0xff]
  %v126 = vld [vmem:[%s3 + $0xd0] sm:$0xff]
  %v127 = vld [vmem:[%s3 + $0xd8] sm:$0xff]
  %v128 = vld [vmem:[%s3 + $0xe0] sm:$0xff]
  %v129 = vld [vmem:[%s3 + $0xe8] sm:$0xff]
  %v130 = vld [vmem:[%s3 + $0xf0] sm:$0xff]
  %v131 = vld [vmem:[%s3 + $0xf8] sm:$0xff]
  %v132 = vld [vmem:[%s3 + $0x100] sm:$0xff]
  %v133 = vld [vmem:[%s3 + $0x108] sm:$0xff]
  %v134 = vld [vmem:[%s3 + $0x110] sm:$0xff]
  %v135 = vld [vmem:[%s3 + $0x118] sm:$0xff]
  %v136 = vld [vmem:[%s3 + $0x120] sm:$0xff]
  %v137 = vld [vmem:[%s3 + $0x128] sm:$0xff]
  %v138 = vld [vmem:[%s3 + $0x130] sm:$0xff]
  %v139 = vld [vmem:[%s3 + $0x138] sm:$0xff]
  %v140 = vld [vmem:[%s3 + $0x140] sm:$0xff]
  %v141 = vld [vmem:[%s3 + $0x148] sm:$0xff]
  %v142 = vld [vmem:[%s3 + $0x150] sm:$0xff]
  %v143 = vld [vmem:[%s3 + $0x158] sm:$0xff]
  %v144 = vld [vmem:[%s3 + $0x160] sm:$0xff]
  %v145 = vld [vmem:[%s3 + $0x168] sm:$0xff]
  %v146 = vld [vmem:[%s3 + $0x170] sm:$0xff]
  %v147 = vld [vmem:[%s3 + $0x178] sm:$0xff]
  %v148 = vld [vmem:[%s3 + $0x180] sm:$0xff]
  %v149 = vld [vmem:[%s3 + $0x188] sm:$0xff]
  %v150 = vld [vmem:[%s3 + $0x190] sm:$0xff]
  %v151 = vld [vmem:[%s3 + $0x198] sm:$0xff]
  %v152 = vld [vmem:[%s3 + $0x1a0] sm:$0xff]
  %v153 = vld [vmem:[%s3 + $0x1a8] sm:$0xff]
  %v154 = vld [vmem:[%s3 + $0x1b0] sm:$0xff]
  %v155 = vld [vmem:[%s3 + $0x1b8] sm:$0xff]
  %v156 = vld [vmem:[%s3 + $0x1c0] sm:$0xff]
  %v157 = vld [vmem:[%s3 + $0x1c8] sm:$0xff]
  %v158 = vld [vmem:[%s3 + $0x1d0] sm:$0xff]
  %v159 = vld [vmem:[%s3 + $0x1d8] sm:$0xff]
  %v160 = vld [vmem:[%s3 + $0x1e0] sm:$0xff]
  %v161 = vld [vmem:[%s3 + $0x1e8] sm:$0xff]
  %v162 = vld [vmem:[%s3 + $0x1f0] sm:$0xff]
  %v163 = vld [vmem:[%s3 + $0x1f8] sm:$0xff]
  %v164 = vld [vmem:[%s3 + $0x200] sm:$0xff]
  %v165 = vld [vmem:[%s3 + $0x208] sm:$0xff]
  %v166 = vld [vmem:[%s3 + $0x210] sm:$0xff]
  %v167 = vld [vmem:[%s3 + $0x218] sm:$0xff]
  %v168 = vld [vmem:[%s3 + $0x220] sm:$0xff]
  %v169 = vld [vmem:[%s3 + $0x228] sm:$0xff]
  %v170 = vld [vmem:[%s3 + $0x230] sm:$0xff]
  %v171 = vld [vmem:[%s3 + $0x238] sm:$0xff]
  %v172 = vld [vmem:[%s3 + $0x240] sm:$0xff]
  %v173 = vld [vmem:[%s3 + $0x248] sm:$0xff]
  %v174 = vld [vmem:[%s3 + $0x250] sm:$0xff]
  %v175 = vld [vmem:[%s3 + $0x258] sm:$0xff]
  %v176 = vld [vmem:[%s3 + $0x260] sm:$0xff]
  %v177 = vld [vmem:[%s3 + $0x268] sm:$0xff]
  %v178 = vld [vmem:[%s3 + $0x270] sm:$0xff]
  %v179 = vld [vmem:[%s3 + $0x278] sm:$0xff]
  %v180 = vld [vmem:[%s3 + $0x280] sm:$0xff]
  %v181 = vld [vmem:[%s3 + $0x288] sm:$0xff]
  %v182 = vld [vmem:[%s3 + $0x290] sm:$0xff]
  %v183 = vld [vmem:[%s3 + $0x298] sm:$0xff]
  %v184 = vld [vmem:[%s3 + $0x2a0] sm:$0xff]
  %v185 = vld [vmem:[%s3 + $0x2a8] sm:$0xff]
  %v186 = vld [vmem:[%s3 + $0x2b0] sm:$0xff]
  %v187 = vld [vmem:[%s3 + $0x2b8] sm:$0xff]
  %v188 = vld [vmem:[%s3 + $0x2c0] sm:$0xff]
  %v189 = vld [vmem:[%s3 + $0x2c8] sm:$0xff]
  %v190 = vld [vmem:[%s3 + $0x2d0] sm:$0xff]
  %v191 = vld [vmem:[%s3 + $0x2d8] sm:$0xff]
  %v192 = vld [vmem:[%s3 + $0x2e0] sm:$0xff]
  %v193 = vld [vmem:[%s3 + $0x2e8] sm:$0xff]
  %v194 = vld [vmem:[%s3 + $0x2f0] sm:$0xff]
  %v195 = vld [vmem:[%s3 + $0x2f8] sm:$0xff]
  %v196 = vld [vmem:[%s3 + $0x300] sm:$0xff]
  %v197 = vld [vmem:[%s3 + $0x308] sm:$0xff]
  %v198 = vld [vmem:[%s3 + $0x310] sm:$0xff]
  %v199 = vld [vmem:[%s3 + $0x318] sm:$0xff]
  %v200 = vld [vmem:[%s3 + $0x320] sm:$0xff]
  %v201 = vld [vmem:[%s3 + $0x328] sm:$0xff]
  %v202 = vld [vmem:[%s3 + $0x330] sm:$0xff]
  %v203 = vld [vmem:[%s3 + $0x338] sm:$0xff]
  %v204 = vld [vmem:[%s3 + $0x340] sm:$0xff]
  %v205 = vld [vmem:[%s3 + $0x348] sm:$0xff]
  %v206 = vld [vmem:[%s3 + $0x350] sm:$0xff]
  %v207 = vld [vmem:[%s3 + $0x358] sm:$0xff]
  %v208 = vld [vmem:[%s3 + $0x360] sm:$0xff]
  %v209 = vld [vmem:[%s3 + $0x368] sm:$0xff]
  %v210 = vld [vmem:[%s3 + $0x370] sm:$0xff]
  %v211 = vld [vmem:[%s3 + $0x378] sm:$0xff]
  %v212 = vld [vmem:[%s3 + $0x380] sm:$0xff]
  %v213 = vld [vmem:[%s3 + $0x388] sm:$0xff]
  %v214 = vld [vmem:[%s3 + $0x390] sm:$0xff]
  %v215 = vld [vmem:[%s3 + $0x398] sm:$0xff]
  %v216 = vld [vmem:[%s3 + $0x3a0] sm:$0xff]
  %v217 = vld [vmem:[%s3 + $0x3a8] sm:$0xff]
  %v218 = vld [vmem:[%s3 + $0x3b0] sm:$0xff]
  %v219 = vld [vmem:[%s3 + $0x3b8] sm:$0xff]
  %v220 = vld [vmem:[%s3 + $0x3c0] sm:$0xff]
  %v221 = vld [vmem:[%s3 + $0x3c8] sm:$0xff]
  %v222 = vld [vmem:[%s3 + $0x3d0] sm:$0xff]
  %v223 = vld [vmem:[%s3 + $0x3d8] sm:$0xff]
  %v224 = vld [vmem:[%s3 + $0x3e0] sm:$0xff]
  %v225 = vld [vmem:[%s3 + $0x3e8] sm:$0xff]
  %v226 = vld [vmem:[%s3 + $0x3f0] sm:$0xff]
  %v227 = vld [vmem:[%s3 + $0x3f8] sm:$0xff]
  %v228 = vld [vmem:[%s4] sm:$0xff]
  %v230 = vlaneseq
  %v231 = vshrl.u32 %v230, 7
  %v232 = vsub.s32 0, %v231
  %v233 = vrot.slane %v228, %v232
  %v234 = vlaneseq
  %v235 = vshrl.u32 %v234, 7
  %v236 = vsub.s32 1, %v235
  %v237 = vrot.slane %v228, %v236
  %v238 = vlaneseq
  %v239 = vshrl.u32 %v238, 7
  %v240 = vsub.s32 2, %v239
  %v241 = vrot.slane %v228, %v240
  %v242 = vlaneseq
  %v243 = vshrl.u32 %v242, 7
  %v244 = vsub.s32 3, %v243
  %v245 = vrot.slane %v228, %v244
  %v246 = vlaneseq
  %v247 = vshrl.u32 %v246, 7
  %v248 = vsub.s32 4, %v247
  %v249 = vrot.slane %v228, %v248
  %v250 = vlaneseq
  %v251 = vshrl.u32 %v250, 7
  %v252 = vsub.s32 5, %v251
  %v253 = vrot.slane %v228, %v252
  %v254 = vlaneseq
  %v255 = vshrl.u32 %v254, 7
  %v256 = vsub.s32 6, %v255
  %v257 = vrot.slane %v228, %v256
  %v258 = vlaneseq
  %v259 = vshrl.u32 %v258, 7
  %v260 = vsub.s32 7, %v259
  %v261 = vrot.slane %v228, %v260
  %v398 = vunpack.c.l.b16 %v100
  %v399 = vunpack.c.h.b16 %v100
  %v400 = vunpack.c.l.b16 %v101
  %v401 = vunpack.c.h.b16 %v101
  %v402 = vunpack.c.l.b16 %v102
  %v403 = vunpack.c.h.b16 %v102
  %v404 = vunpack.c.l.b16 %v103
  %v405 = vunpack.c.h.b16 %v103
  %v406 = vunpack.c.l.b16 %v104
  %v407 = vunpack.c.h.b16 %v104
  %v408 = vunpack.c.l.b16 %v105
  %v409 = vunpack.c.h.b16 %v105
  %v410 = vunpack.c.l.b16 %v106
  %v411 = vunpack.c.h.b16 %v106
  %v412 = vunpack.c.l.b16 %v107
  %v413 = vunpack.c.h.b16 %v107
  %v414 = vunpack.c.l.b16 %v108
  %v415 = vunpack.c.h.b16 %v108
  %v416 = vunpack.c.l.b16 %v109
  %v417 = vunpack.c.h.b16 %v109
  %v418 = vunpack.c.l.b16 %v110
  %v419 = vunpack.c.h.b16 %v110
  %v420 = vunpack.c.l.b16 %v111
  %v421 = vunpack.c.h.b16 %v111
  %v422 = vunpack.c.l.b16 %v112
  %v423 = vunpack.c.h.b16 %v112
  %v424 = vunpack.c.l.b16 %v113
  %v425 = vunpack.c.h.b16 %v113
  %v426 = vunpack.c.l.b16 %v114
  %v427 = vunpack.c.h.b16 %v114
  %v428 = vunpack.c.l.b16 %v115
  %v429 = vunpack.c.h.b16 %v115
  %v430 = vunpack.c.l.b16 %v116
  %v431 = vunpack.c.h.b16 %v116
  %v432 = vunpack.c.l.b16 %v117
  %v433 = vunpack.c.h.b16 %v117
  %v434 = vunpack.c.l.b16 %v118
  %v435 = vunpack.c.h.b16 %v118
  %v436 = vunpack.c.l.b16 %v119
  %v437 = vunpack.c.h.b16 %v119
  %v438 = vunpack.c.l.b16 %v120
  %v439 = vunpack.c.h.b16 %v120
  %v440 = vunpack.c.l.b16 %v121
  %v441 = vunpack.c.h.b16 %v121
  %v442 = vunpack.c.l.b16 %v122
  %v443 = vunpack.c.h.b16 %v122
  %v444 = vunpack.c.l.b16 %v123
  %v445 = vunpack.c.h.b16 %v123
  %v446 = vunpack.c.l.b16 %v124
  %v447 = vunpack.c.h.b16 %v124
  %v448 = vunpack.c.l.b16 %v125
  %v449 = vunpack.c.h.b16 %v125
  %v450 = vunpack.c.l.b16 %v126
  %v451 = vunpack.c.h.b16 %v126
  %v452 = vunpack.c.l.b16 %v127
  %v453 = vunpack.c.h.b16 %v127
  %v454 = vunpack.c.l.b16 %v128
  %v455 = vunpack.c.h.b16 %v128
  %v456 = vunpack.c.l.b16 %v129
  %v457 = vunpack.c.h.b16 %v129
  %v458 = vunpack.c.l.b16 %v130
  %v459 = vunpack.c.h.b16 %v130
  %v460 = vunpack.c.l.b16 %v131
  %v461 = vunpack.c.h.b16 %v131
  %v462 = vunpack.c.l.b16 %v132
  %v463 = vunpack.c.h.b16 %v132
  %v464 = vunpack.c.l.b16 %v133
  %v465 = vunpack.c.h.b16 %v133
  %v466 = vunpack.c.l.b16 %v134
  %v467 = vunpack.c.h.b16 %v134
  %v468 = vunpack.c.l.b16 %v135
  %v469 = vunpack.c.h.b16 %v135
  %v470 = vunpack.c.l.b16 %v136
  %v471 = vunpack.c.h.b16 %v136
  %v472 = vunpack.c.l.b16 %v137
  %v473 = vunpack.c.h.b16 %v137
  %v474 = vunpack.c.l.b16 %v138
  %v475 = vunpack.c.h.b16 %v138
  %v476 = vunpack.c.l.b16 %v139
  %v477 = vunpack.c.h.b16 %v139
  %v478 = vunpack.c.l.b16 %v140
  %v479 = vunpack.c.h.b16 %v140
  %v480 = vunpack.c.l.b16 %v141
  %v481 = vunpack.c.h.b16 %v141
  %v482 = vunpack.c.l.b16 %v142
  %v483 = vunpack.c.h.b16 %v142
  %v484 = vunpack.c.l.b16 %v143
  %v485 = vunpack.c.h.b16 %v143
  %v486 = vunpack.c.l.b16 %v144
  %v487 = vunpack.c.h.b16 %v144
  %v488 = vunpack.c.l.b16 %v145
  %v489 = vunpack.c.h.b16 %v145
  %v490 = vunpack.c.l.b16 %v146
  %v491 = vunpack.c.h.b16 %v146
  %v492 = vunpack.c.l.b16 %v147
  %v493 = vunpack.c.h.b16 %v147
  %v494 = vunpack.c.l.b16 %v148
  %v495 = vunpack.c.h.b16 %v148
  %v496 = vunpack.c.l.b16 %v149
  %v497 = vunpack.c.h.b16 %v149
  %v498 = vunpack.c.l.b16 %v150
  %v499 = vunpack.c.h.b16 %v150
  %v500 = vunpack.c.l.b16 %v151
  %v501 = vunpack.c.h.b16 %v151
  %v502 = vunpack.c.l.b16 %v152
  %v503 = vunpack.c.h.b16 %v152
  %v504 = vunpack.c.l.b16 %v153
  %v505 = vunpack.c.h.b16 %v153
  %v506 = vunpack.c.l.b16 %v154
  %v507 = vunpack.c.h.b16 %v154
  %v508 = vunpack.c.l.b16 %v155
  %v509 = vunpack.c.h.b16 %v155
  %v510 = vunpack.c.l.b16 %v156
  %v511 = vunpack.c.h.b16 %v156
  %v512 = vunpack.c.l.b16 %v157
  %v513 = vunpack.c.h.b16 %v157
  %v514 = vunpack.c.l.b16 %v158
  %v515 = vunpack.c.h.b16 %v158
  %v516 = vunpack.c.l.b16 %v159
  %v517 = vunpack.c.h.b16 %v159
  %v518 = vunpack.c.l.b16 %v160
  %v519 = vunpack.c.h.b16 %v160
  %v520 = vunpack.c.l.b16 %v161
  %v521 = vunpack.c.h.b16 %v161
  %v522 = vunpack.c.l.b16 %v162
  %v523 = vunpack.c.h.b16 %v162
  %v524 = vunpack.c.l.b16 %v163
  %v525 = vunpack.c.h.b16 %v163
  %v526 = vunpack.c.l.b16 %v164
  %v527 = vunpack.c.h.b16 %v164
  %v528 = vunpack.c.l.b16 %v165
  %v529 = vunpack.c.h.b16 %v165
  %v530 = vunpack.c.l.b16 %v166
  %v531 = vunpack.c.h.b16 %v166
  %v532 = vunpack.c.l.b16 %v167
  %v533 = vunpack.c.h.b16 %v167
  %v534 = vunpack.c.l.b16 %v168
  %v535 = vunpack.c.h.b16 %v168
  %v536 = vunpack.c.l.b16 %v169
  %v537 = vunpack.c.h.b16 %v169
  %v538 = vunpack.c.l.b16 %v170
  %v539 = vunpack.c.h.b16 %v170
  %v540 = vunpack.c.l.b16 %v171
  %v541 = vunpack.c.h.b16 %v171
  %v542 = vunpack.c.l.b16 %v172
  %v543 = vunpack.c.h.b16 %v172
  %v544 = vunpack.c.l.b16 %v173
  %v545 = vunpack.c.h.b16 %v173
  %v546 = vunpack.c.l.b16 %v174
  %v547 = vunpack.c.h.b16 %v174
  %v548 = vunpack.c.l.b16 %v175
  %v549 = vunpack.c.h.b16 %v175
  %v550 = vunpack.c.l.b16 %v176
  %v551 = vunpack.c.h.b16 %v176
  %v552 = vunpack.c.l.b16 %v177
  %v553 = vunpack.c.h.b16 %v177
  %v554 = vunpack.c.l.b16 %v178
  %v555 = vunpack.c.h.b16 %v178
  %v556 = vunpack.c.l.b16 %v179
  %v557 = vunpack.c.h.b16 %v179
  %v558 = vunpack.c.l.b16 %v180
  %v559 = vunpack.c.h.b16 %v180
  %v560 = vunpack.c.l.b16 %v181
  %v561 = vunpack.c.h.b16 %v181
  %v562 = vunpack.c.l.b16 %v182
  %v563 = vunpack.c.h.b16 %v182
  %v564 = vunpack.c.l.b16 %v183
  %v565 = vunpack.c.h.b16 %v183
  %v566 = vunpack.c.l.b16 %v184
  %v567 = vunpack.c.h.b16 %v184
  %v568 = vunpack.c.l.b16 %v185
  %v569 = vunpack.c.h.b16 %v185
  %v570 = vunpack.c.l.b16 %v186
  %v571 = vunpack.c.h.b16 %v186
  %v572 = vunpack.c.l.b16 %v187
  %v573 = vunpack.c.h.b16 %v187
  %v574 = vunpack.c.l.b16 %v188
  %v575 = vunpack.c.h.b16 %v188
  %v576 = vunpack.c.l.b16 %v189
  %v577 = vunpack.c.h.b16 %v189
  %v578 = vunpack.c.l.b16 %v190
  %v579 = vunpack.c.h.b16 %v190
  %v580 = vunpack.c.l.b16 %v191
  %v581 = vunpack.c.h.b16 %v191
  %v582 = vunpack.c.l.b16 %v192
  %v583 = vunpack.c.h.b16 %v192
  %v584 = vunpack.c.l.b16 %v193
  %v585 = vunpack.c.h.b16 %v193
  %v586 = vunpack.c.l.b16 %v194
  %v587 = vunpack.c.h.b16 %v194
  %v588 = vunpack.c.l.b16 %v195
  %v589 = vunpack.c.h.b16 %v195
  %v590 = vunpack.c.l.b16 %v196
  %v591 = vunpack.c.h.b16 %v196
  %v592 = vunpack.c.l.b16 %v197
  %v593 = vunpack.c.h.b16 %v197
  %v594 = vunpack.c.l.b16 %v198
  %v595 = vunpack.c.h.b16 %v198
  %v596 = vunpack.c.l.b16 %v199
  %v597 = vunpack.c.h.b16 %v199
  %v598 = vunpack.c.l.b16 %v200
  %v599 = vunpack.c.h.b16 %v200
  %v600 = vunpack.c.l.b16 %v201
  %v601 = vunpack.c.h.b16 %v201
  %v602 = vunpack.c.l.b16 %v202
  %v603 = vunpack.c.h.b16 %v202
  %v604 = vunpack.c.l.b16 %v203
  %v605 = vunpack.c.h.b16 %v203
  %v606 = vunpack.c.l.b16 %v204
  %v607 = vunpack.c.h.b16 %v204
  %v608 = vunpack.c.l.b16 %v205
  %v609 = vunpack.c.h.b16 %v205
  %v610 = vunpack.c.l.b16 %v206
  %v611 = vunpack.c.h.b16 %v206
  %v612 = vunpack.c.l.b16 %v207
  %v613 = vunpack.c.h.b16 %v207
  %v614 = vunpack.c.l.b16 %v208
  %v615 = vunpack.c.h.b16 %v208
  %v616 = vunpack.c.l.b16 %v209
  %v617 = vunpack.c.h.b16 %v209
  %v618 = vunpack.c.l.b16 %v210
  %v619 = vunpack.c.h.b16 %v210
  %v620 = vunpack.c.l.b16 %v211
  %v621 = vunpack.c.h.b16 %v211
  %v622 = vunpack.c.l.b16 %v212
  %v623 = vunpack.c.h.b16 %v212
  %v624 = vunpack.c.l.b16 %v213
  %v625 = vunpack.c.h.b16 %v213
  %v626 = vunpack.c.l.b16 %v214
  %v627 = vunpack.c.h.b16 %v214
  %v628 = vunpack.c.l.b16 %v215
  %v629 = vunpack.c.h.b16 %v215
  %v630 = vunpack.c.l.b16 %v216
  %v631 = vunpack.c.h.b16 %v216
  %v632 = vunpack.c.l.b16 %v217
  %v633 = vunpack.c.h.b16 %v217
  %v634 = vunpack.c.l.b16 %v218
  %v635 = vunpack.c.h.b16 %v218
  %v636 = vunpack.c.l.b16 %v219
  %v637 = vunpack.c.h.b16 %v219
  %v638 = vunpack.c.l.b16 %v220
  %v639 = vunpack.c.h.b16 %v220
  %v640 = vunpack.c.l.b16 %v221
  %v641 = vunpack.c.h.b16 %v221
  %v642 = vunpack.c.l.b16 %v222
  %v643 = vunpack.c.h.b16 %v222
  %v644 = vunpack.c.l.b16 %v223
  %v645 = vunpack.c.h.b16 %v223
  %v646 = vunpack.c.l.b16 %v224
  %v647 = vunpack.c.h.b16 %v224
  %v648 = vunpack.c.l.b16 %v225
  %v649 = vunpack.c.h.b16 %v225
  %v650 = vunpack.c.l.b16 %v226
  %v651 = vunpack.c.h.b16 %v226
  %v652 = vunpack.c.l.b16 %v227
  %v653 = vunpack.c.h.b16 %v227
  %v654 = vpack.c.b16 %v406, %v398
  %v655 = vpack.c.b16 %v407, %v399
  %v656 = vpack.c.b16 %v408, %v400
  %v657 = vpack.c.b16 %v409, %v401
  %v658 = vpack.c.b16 %v410, %v402
  %v659 = vpack.c.b16 %v411, %v403
  %v660 = vpack.c.b16 %v412, %v404
  %v661 = vpack.c.b16 %v413, %v405
  %v662 = vpack.c.b16 %v422, %v414
  %v663 = vpack.c.b16 %v423, %v415
  %v664 = vpack.c.b16 %v424, %v416
  %v665 = vpack.c.b16 %v425, %v417
  %v666 = vpack.c.b16 %v426, %v418
  %v667 = vpack.c.b16 %v427, %v419
  %v668 = vpack.c.b16 %v428, %v420
  %v669 = vpack.c.b16 %v429, %v421
  %v670 = vpack.c.b16 %v438, %v430
  %v671 = vpack.c.b16 %v439, %v431
  %v672 = vpack.c.b16 %v440, %v432
  %v673 = vpack.c.b16 %v441, %v433
  %v674 = vpack.c.b16 %v442, %v434
  %v675 = vpack.c.b16 %v443, %v435
  %v676 = vpack.c.b16 %v444, %v436
  %v677 = vpack.c.b16 %v445, %v437
  %v678 = vpack.c.b16 %v454, %v446
  %v679 = vpack.c.b16 %v455, %v447
  %v680 = vpack.c.b16 %v456, %v448
  %v681 = vpack.c.b16 %v457, %v449
  %v682 = vpack.c.b16 %v458, %v450
  %v683 = vpack.c.b16 %v459, %v451
  %v684 = vpack.c.b16 %v460, %v452
  %v685 = vpack.c.b16 %v461, %v453
  %v686 = vpack.c.b16 %v470, %v462
  %v687 = vpack.c.b16 %v471, %v463
  %v688 = vpack.c.b16 %v472, %v464
  %v689 = vpack.c.b16 %v473, %v465
  %v690 = vpack.c.b16 %v474, %v466
  %v691 = vpack.c.b16 %v475, %v467
  %v692 = vpack.c.b16 %v476, %v468
  %v693 = vpack.c.b16 %v477, %v469
  %v694 = vpack.c.b16 %v486, %v478
  %v695 = vpack.c.b16 %v487, %v479
  %v696 = vpack.c.b16 %v488, %v480
  %v697 = vpack.c.b16 %v489, %v481
  %v698 = vpack.c.b16 %v490, %v482
  %v699 = vpack.c.b16 %v491, %v483
  %v700 = vpack.c.b16 %v492, %v484
  %v701 = vpack.c.b16 %v493, %v485
  %v702 = vpack.c.b16 %v502, %v494
  %v703 = vpack.c.b16 %v503, %v495
  %v704 = vpack.c.b16 %v504, %v496
  %v705 = vpack.c.b16 %v505, %v497
  %v706 = vpack.c.b16 %v506, %v498
  %v707 = vpack.c.b16 %v507, %v499
  %v708 = vpack.c.b16 %v508, %v500
  %v709 = vpack.c.b16 %v509, %v501
  %v710 = vpack.c.b16 %v518, %v510
  %v711 = vpack.c.b16 %v519, %v511
  %v712 = vpack.c.b16 %v520, %v512
  %v713 = vpack.c.b16 %v521, %v513
  %v714 = vpack.c.b16 %v522, %v514
  %v715 = vpack.c.b16 %v523, %v515
  %v716 = vpack.c.b16 %v524, %v516
  %v717 = vpack.c.b16 %v525, %v517
  %v718 = vpack.c.b16 %v534, %v526
  %v719 = vpack.c.b16 %v535, %v527
  %v720 = vpack.c.b16 %v536, %v528
  %v721 = vpack.c.b16 %v537, %v529
  %v722 = vpack.c.b16 %v538, %v530
  %v723 = vpack.c.b16 %v539, %v531
  %v724 = vpack.c.b16 %v540, %v532
  %v725 = vpack.c.b16 %v541, %v533
  %v726 = vpack.c.b16 %v550, %v542
  %v727 = vpack.c.b16 %v551, %v543
  %v728 = vpack.c.b16 %v552, %v544
  %v729 = vpack.c.b16 %v553, %v545
  %v730 = vpack.c.b16 %v554, %v546
  %v731 = vpack.c.b16 %v555, %v547
  %v732 = vpack.c.b16 %v556, %v548
  %v733 = vpack.c.b16 %v557, %v549
  %v734 = vpack.c.b16 %v566, %v558
  %v735 = vpack.c.b16 %v567, %v559
  %v736 = vpack.c.b16 %v568, %v560
  %v737 = vpack.c.b16 %v569, %v561
  %v738 = vpack.c.b16 %v570, %v562
  %v739 = vpack.c.b16 %v571, %v563
  %v740 = vpack.c.b16 %v572, %v564
  %v741 = vpack.c.b16 %v573, %v565
  %v742 = vpack.c.b16 %v582, %v574
  %v743 = vpack.c.b16 %v583, %v575
  %v744 = vpack.c.b16 %v584, %v576
  %v745 = vpack.c.b16 %v585, %v577
  %v746 = vpack.c.b16 %v586, %v578
  %v747 = vpack.c.b16 %v587, %v579
  %v748 = vpack.c.b16 %v588, %v580
  %v749 = vpack.c.b16 %v589, %v581
  %v750 = vpack.c.b16 %v598, %v590
  %v751 = vpack.c.b16 %v599, %v591
  %v752 = vpack.c.b16 %v600, %v592
  %v753 = vpack.c.b16 %v601, %v593
  %v754 = vpack.c.b16 %v602, %v594
  %v755 = vpack.c.b16 %v603, %v595
  %v756 = vpack.c.b16 %v604, %v596
  %v757 = vpack.c.b16 %v605, %v597
  %v758 = vpack.c.b16 %v614, %v606
  %v759 = vpack.c.b16 %v615, %v607
  %v760 = vpack.c.b16 %v616, %v608
  %v761 = vpack.c.b16 %v617, %v609
  %v762 = vpack.c.b16 %v618, %v610
  %v763 = vpack.c.b16 %v619, %v611
  %v764 = vpack.c.b16 %v620, %v612
  %v765 = vpack.c.b16 %v621, %v613
  %v766 = vpack.c.b16 %v630, %v622
  %v767 = vpack.c.b16 %v631, %v623
  %v768 = vpack.c.b16 %v632, %v624
  %v769 = vpack.c.b16 %v633, %v625
  %v770 = vpack.c.b16 %v634, %v626
  %v771 = vpack.c.b16 %v635, %v627
  %v772 = vpack.c.b16 %v636, %v628
  %v773 = vpack.c.b16 %v637, %v629
  %v774 = vpack.c.b16 %v646, %v638
  %v775 = vpack.c.b16 %v647, %v639
  %v776 = vpack.c.b16 %v648, %v640
  %v777 = vpack.c.b16 %v649, %v641
  %v778 = vpack.c.b16 %v650, %v642
  %v779 = vpack.c.b16 %v651, %v643
  %v780 = vpack.c.b16 %v652, %v644
  %v781 = vpack.c.b16 %v653, %v645
  %910 = vmatprep.subr.bf16.mxu0 %v655
  %911 = vmatpush1.bf16.msra.mxu0 %v654
  %912 = vmatprep.subr.bf16.mxu0 %v663
  %913 = vmatpush1.bf16.msra.mxu0 %v662
  %914 = vmatprep.subr.bf16.mxu0 %v671
  %915 = vmatpush1.bf16.msra.mxu0 %v670
  %916 = vmatprep.subr.bf16.mxu0 %v679
  %917 = vmatpush1.bf16.msra.mxu0 %v678
  %918 = vmatprep.subr.bf16.mxu0 %v687
  %919 = vmatpush1.bf16.msra.mxu0 %v686
  %920 = vmatprep.subr.bf16.mxu0 %v695
  %921 = vmatpush1.bf16.msra.mxu0 %v694
  %922 = vmatprep.subr.bf16.mxu0 %v703
  %923 = vmatpush1.bf16.msra.mxu0 %v702
  %924 = vmatprep.subr.bf16.mxu0 %v711
  %925 = vmatpush1.bf16.msra.mxu0 %v710
  %926 = vmatprep.subr.bf16.mxu0 %v719
  %927 = vmatpush1.bf16.msra.mxu0 %v718
  %928 = vmatprep.subr.bf16.mxu0 %v727
  %929 = vmatpush1.bf16.msra.mxu0 %v726
  %930 = vmatprep.subr.bf16.mxu0 %v735
  %931 = vmatpush1.bf16.msra.mxu0 %v734
  %932 = vmatprep.subr.bf16.mxu0 %v743
  %933 = vmatpush1.bf16.msra.mxu0 %v742
  %934 = vmatprep.subr.bf16.mxu0 %v751
  %935 = vmatpush1.bf16.msra.mxu0 %v750
  %936 = vmatprep.subr.bf16.mxu0 %v759
  %937 = vmatpush1.bf16.msra.mxu0 %v758
  %938 = vmatprep.subr.bf16.mxu0 %v767
  %939 = vmatpush1.bf16.msra.mxu0 %v766
  %940 = vmatprep.subr.bf16.mxu0 %v775
  %941 = vmatpush1.bf16.msra.mxu0 %v774
  %942 = vmatprep.mubr.bf16.mxu0 %v99
  %943 = vmatmul.mubr.bf16.gmra.mrb[0].mxu0 %v98
  %v944 = vpop.f32.mrb[0].mxu0
  %v945 = vadd.f32 %v233, %v944
  %v946 = vpop.f32.mrb[0].mxu0
  %v947 = vadd.f32 %v237, %v946
  %v948 = vpop.f32.mrb[0].mxu0
  %v949 = vpop.f32.mrb[0].mxu0
  %950 = vdwg.mxu0
  %951 = vmatprep.subr.bf16.mxu0 %v657
  %952 = vmatpush1.bf16.msra.mxu0 %v656
  %953 = vmatprep.subr.bf16.mxu0 %v665
  %954 = vmatpush1.bf16.msra.mxu0 %v664
  %955 = vmatprep.subr.bf16.mxu0 %v673
  %956 = vmatpush1.bf16.msra.mxu0 %v672
  %957 = vmatprep.subr.bf16.mxu0 %v681
  %958 = vmatpush1.bf16.msra.mxu0 %v680
  %959 = vmatprep.subr.bf16.mxu0 %v689
  %960 = vmatpush1.bf16.msra.mxu0 %v688
  %961 = vmatprep.subr.bf16.mxu0 %v697
  %962 = vmatpush1.bf16.msra.mxu0 %v696
  %963 = vmatprep.subr.bf16.mxu0 %v705
  %964 = vmatpush1.bf16.msra.mxu0 %v704
  %965 = vmatprep.subr.bf16.mxu0 %v713
  %966 = vmatpush1.bf16.msra.mxu0 %v712
  %967 = vmatprep.subr.bf16.mxu0 %v721
  %968 = vmatpush1.bf16.msra.mxu0 %v720
  %969 = vmatprep.subr.bf16.mxu0 %v729
  %970 = vmatpush1.bf16.msra.mxu0 %v728
  %971 = vmatprep.subr.bf16.mxu0 %v737
  %972 = vmatpush1.bf16.msra.mxu0 %v736
  %973 = vmatprep.subr.bf16.mxu0 %v745
  %974 = vmatpush1.bf16.msra.mxu0 %v744
  %975 = vmatprep.subr.bf16.mxu0 %v753
  %976 = vmatpush1.bf16.msra.mxu0 %v752
  %977 = vmatprep.subr.bf16.mxu0 %v761
  %978 = vmatpush1.bf16.msra.mxu0 %v760
  %979 = vmatprep.subr.bf16.mxu0 %v769
  %980 = vmatpush1.bf16.msra.mxu0 %v768
  %981 = vmatprep.subr.bf16.mxu0 %v777
  %982 = vmatpush1.bf16.msra.mxu0 %v776
  %983 = vmatprep.mubr.bf16.mxu0 %v99
  %984 = vmatmul.mubr.bf16.gmra.mrb[0].mxu0 %v98
  %v985 = vpop.f32.mrb[0].mxu0
  %v986 = vadd.f32 %v241, %v985
  %v987 = vpop.f32.mrb[0].mxu0
  %v988 = vadd.f32 %v245, %v987
  %v989 = vpop.f32.mrb[0].mxu0
  %v990 = vpop.f32.mrb[0].mxu0
  %991 = vdwg.mxu0
  %992 = vmatprep.subr.bf16.mxu0 %v659
  %993 = vmatpush1.bf16.msra.mxu0 %v658
  %994 = vmatprep.subr.bf16.mxu0 %v667
  %995 = vmatpush1.bf16.msra.mxu0 %v666
  %996 = vmatprep.subr.bf16.mxu0 %v675
  %997 = vmatpush1.bf16.msra.mxu0 %v674
  %998 = vmatprep.subr.bf16.mxu0 %v683
  %999 = vmatpush1.bf16.msra.mxu0 %v682
  %1000 = vmatprep.subr.bf16.mxu0 %v691
  %1001 = vmatpush1.bf16.msra.mxu0 %v690
  %1002 = vmatprep.subr.bf16.mxu0 %v699
  %1003 = vmatpush1.bf16.msra.mxu0 %v698
  %1004 = vmatprep.subr.bf16.mxu0 %v707
  %1005 = vmatpush1.bf16.msra.mxu0 %v706
  %1006 = vmatprep.subr.bf16.mxu0 %v715
  %1007 = vmatpush1.bf16.msra.mxu0 %v714
  %1008 = vmatprep.subr.bf16.mxu0 %v723
  %1009 = vmatpush1.bf16.msra.mxu0 %v722
  %1010 = vmatprep.subr.bf16.mxu0 %v731
  %1011 = vmatpush1.bf16.msra.mxu0 %v730
  %1012 = vmatprep.subr.bf16.mxu0 %v739
  %1013 = vmatpush1.bf16.msra.mxu0 %v738
  %1014 = vmatprep.subr.bf16.mxu0 %v747
  %1015 = vmatpush1.bf16.msra.mxu0 %v746
  %1016 = vmatprep.subr.bf16.mxu0 %v755
  %1017 = vmatpush1.bf16.msra.mxu0 %v754
  %1018 = vmatprep.subr.bf16.mxu0 %v763
  %1019 = vmatpush1.bf16.msra.mxu0 %v762
  %1020 = vmatprep.subr.bf16.mxu0 %v771
  %1021 = vmatpush1.bf16.msra.mxu0 %v770
  %1022 = vmatprep.subr.bf16.mxu0 %v779
  %1023 = vmatpush1.bf16.msra.mxu0 %v778
  %1024 = vmatprep.mubr.bf16.mxu0 %v99
  %1025 = vmatmul.mubr.bf16.gmra.mrb[0].mxu0 %v98
  %v1026 = vpop.f32.mrb[0].mxu0
  %v1027 = vadd.f32 %v249, %v1026
  %v1028 = vpop.f32.mrb[0].mxu0
  %v1029 = vadd.f32 %v253, %v1028
  %v1030 = vpop.f32.mrb[0].mxu0
  %v1031 = vpop.f32.mrb[0].mxu0
  %1032 = vdwg.mxu0
  %1033 = vmatprep.subr.bf16.mxu0 %v661
  %1034 = vmatpush1.bf16.msra.mxu0 %v660
  %1035 = vmatprep.subr.bf16.mxu0 %v669
  %1036 = vmatpush1.bf16.msra.mxu0 %v668
  %1037 = vmatprep.subr.bf16.mxu0 %v677
  %1038 = vmatpush1.bf16.msra.mxu0 %v676
  %1039 = vmatprep.subr.bf16.mxu0 %v685
  %1040 = vmatpush1.bf16.msra.mxu0 %v684
  %1041 = vmatprep.subr.bf16.mxu0 %v693
  %1042 = vmatpush1.bf16.msra.mxu0 %v692
  %1043 = vmatprep.subr.bf16.mxu0 %v701
  %1044 = vmatpush1.bf16.msra.mxu0 %v700
  %1045 = vmatprep.subr.bf16.mxu0 %v709
  %1046 = vmatpush1.bf16.msra.mxu0 %v708
  %1047 = vmatprep.subr.bf16.mxu0 %v717
  %1048 = vmatpush1.bf16.msra.mxu0 %v716
  %1049 = vmatprep.subr.bf16.mxu0 %v725
  %1050 = vmatpush1.bf16.msra.mxu0 %v724
  %1051 = vmatprep.subr.bf16.mxu0 %v733
  %1052 = vmatpush1.bf16.msra.mxu0 %v732
  %1053 = vmatprep.subr.bf16.mxu0 %v741
  %1054 = vmatpush1.bf16.msra.mxu0 %v740
  %1055 = vmatprep.subr.bf16.mxu0 %v749
  %1056 = vmatpush1.bf16.msra.mxu0 %v748
  %1057 = vmatprep.subr.bf16.mxu0 %v757
  %1058 = vmatpush1.bf16.msra.mxu0 %v756
  %1059 = vmatprep.subr.bf16.mxu0 %v765
  %1060 = vmatpush1.bf16.msra.mxu0 %v764
  %1061 = vmatprep.subr.bf16.mxu0 %v773
  %1062 = vmatpush1.bf16.msra.mxu0 %v772
  %1063 = vmatprep.subr.bf16.mxu0 %v781
  %1064 = vmatpush1.bf16.msra.mxu0 %v780
  %1065 = vmatprep.mubr.bf16.mxu0 %v99
  %1066 = vmatmul.mubr.bf16.gmra.mrb[0].mxu0 %v98
  %v1067 = vpop.f32.mrb[0].mxu0
  %v1068 = vadd.f32 %v257, %v1067
  %v1069 = vpop.f32.mrb[0].mxu0
  %v1070 = vadd.f32 %v261, %v1069
  %v1071 = vpop.f32.mrb[0].mxu0
  %v1072 = vpop.f32.mrb[0].mxu0
  %1073 = vdwg.mxu0
  %v1074 = vmax.f32 %v945, 0.0
  %v1075 = vmax.f32 %v947, 0.0
  %v1076 = vmax.f32 %v986, 0.0
  %v1077 = vmax.f32 %v988, 0.0
  %v1078 = vmax.f32 %v1027, 0.0
  %v1079 = vmax.f32 %v1029, 0.0
  %v1080 = vmax.f32 %v1068, 0.0
  %v1081 = vmax.f32 %v1070, 0.0
  %v1082 = vpack.c.bf16 %v1074, %v1074
  %v1083 = vpack.c.bf16 %v1075, %v1075
  %v1084 = vpack.c.bf16 %v1076, %v1076
  %v1085 = vpack.c.bf16 %v1077, %v1077
  %v1086 = vpack.c.bf16 %v1078, %v1078
  %v1087 = vpack.c.bf16 %v1079, %v1079
  %v1088 = vpack.c.bf16 %v1080, %v1080
  %v1089 = vpack.c.bf16 %v1081, %v1081
  %v1098 = vcombine.low %v1082, %v1083
  %v1099 = vcombine.low %v1084, %v1085
  %v1100 = vcombine.low %v1086, %v1087
  %v1101 = vcombine.low %v1088, %v1089
  %v1103 = vunpack.c.l.s4 1966171168
  %v1104 = vunpack.c.0.s8 %v1103
  %v1105 = vlaneseq
  %v1106 = vshrl.u32 %v1105, 7
  %v1107 = vsub.s32 %v1104, %v1106
  %v1108 = vrot.slane %v1098, %v1107
  %v1110 = vunpack.c.l.s4 1966171168
  %v1111 = vunpack.c.0.s8 %v1110
  %v1112 = vlaneseq
  %v1113 = vshrl.u32 %v1112, 7
  %v1114 = vsub.s32 %v1111, %v1113
  %v1115 = vrot.slane %v1099, %v1114
  %v1117 = vunpack.c.l.s4 1966171168
  %v1118 = vunpack.c.0.s8 %v1117
  %v1119 = vlaneseq
  %v1120 = vshrl.u32 %v1119, 7
  %v1121 = vsub.s32 %v1118, %v1120
  %v1122 = vrot.slane %v1100, %v1121
  %v1124 = vunpack.c.l.s4 1966171168
  %v1125 = vunpack.c.0.s8 %v1124
  %v1126 = vlaneseq
  %v1127 = vshrl.u32 %v1126, 7
  %v1128 = vsub.s32 %v1125, %v1127
  %v1129 = vrot.slane %v1101, %v1128
  %v1130 = vcombine.low %v1108, %v1115
  %v1131 = vcombine.low %v1122, %v1129
  %v1133 = vunpack.c.l.s4 1966171168
  %v1134 = vunpack.c.0.s8 %v1133
  %v1135 = vlaneseq
  %v1136 = vshrl.u32 %v1135, 7
  %v1137 = vsub.s32 %v1134, %v1136
  %v1138 = vrot.slane %v1130, %v1137
  %v1140 = vunpack.c.l.s4 1966171168
  %v1141 = vunpack.c.0.s8 %v1140
  %v1142 = vlaneseq
  %v1143 = vshrl.u32 %v1142, 7
  %v1144 = vsub.s32 %v1141, %v1143
  %v1145 = vrot.slane %v1131, %v1144
  %v1146 = vcombine.low %v1138, %v1145
  %1148 = vst [vmem:[%s5] sm:$0xff] %v1146
  // Predicated region
  $region22: #{ffvae_forward.15} parent=0 // pred_check
    _
  $region23: #{ffvae_forward.15} parent=0 // pred_check_branch
    %1150 = sbr.rel (0) target = $region25
  $region24: #{ffvae_forward.15} parent=0 // pred_region
    _
  $region25: #{ffvae_forward.15} parent=0 // pred_fallthru
    _
  // Predicated region
  $region26: #{ffvae_forward.15} parent=0 // pred_check
    _
  $region27: #{ffvae_forward.15} parent=0 // pred_check_branch
    %1152 = sbr.rel (0) target = $region29
  $region28: #{ffvae_forward.15} parent=0 // pred_region
    _
  $region29: #{ffvae_forward.15} parent=0 // pred_fallthru
    _

// kernel: ffvae_forward.16
$region0: #{ffvae_forward.16}
  #allocation0 [shape = 'u32[]', space=smem, size = 0x4, offset = 0x4, fixed_abs, tag = 'smem constant byte address 0x4 - core index']
  #allocation1 [shape = 'u32[144,128]{1,0:T(1,128)}', space=vmem, size = 0x12000, scoped, tag = 'internal scratch']
  %s0 = inlined_call_operand.vmem [shape: bf16[4,32,256], index: 0, kind: input, shape index: {}]
  %s1 = inlined_call_operand.vmem [shape: bf16[4,256,128], index: 1, kind: input, shape index: {}]
  %s2 = inlined_call_operand.vmem [shape: f32[1,1,128], index: 2, kind: input, shape index: {}]
  %s3 = inlined_call_operand.vmem [shape: bf16[4,32,128], index: 3, kind: output, shape index: {}]
  %s4 = sld [smem:[#allocation0]]
  $region45: #{ffvae_forward.16} parent=0
    _
  %s6 = ssub.s32 1, %s4
  %s7 = scalar_select 0, %s6, %s4
  loop: start=0, step=1, limit=6
  $region2: #{ffvae_forward.16} parent=0 // loop_pre_header
    _
  $region3: #{ffvae_forward.16} parent=0 // loop_header
    %s9 = sphi 0, %s13
    %p10 = scmp.ge.s32.totalorder %s9, 6
    %s16 = sphi 0, %s28
    %s17 = sphi 0, %s24
    %s18 = sphi 0, %s16
    %s19 = sphi 0, %s17
    %s20 = sphi 0, %s18
    %s21 = sphi 0, %s19
    %s33 = sphi 0, %s35
    %s36 = sphi 0, %s33
    %s37 = sphi 0, %s36
    %s53 = sphi 0, %s37
    %s59 = sphi 0, %s61
    %s62 = sphi 0, %s59
    %s63 = sphi 0, %s62
    %s79 = sphi 0, %s63
    %s83 = sphi 0, %s83
    %s85 = sphi 0, %s83
    %s86 = sphi 0, %s85
    %s100 = sphi 0, %s86
    %s108 = sphi 0, %s110
    %s111 = sphi 0, %s108
    %s112 = sphi 0, %s111
    %s128 = sphi 0, %s112
  $region4: #{ffvae_forward.16} parent=0 // loop_header_branch
    %12 = sbr.rel (%p10) target = $region8
  $region5: #{ffvae_forward.16} parent=0 // loop_body
    %s14 = ssub.s32 %s9, 1
    %s15 = ssub.s32 %s9, 2
    %s22 = sadd.s32 1, %s17
    %p23 = scmp.ge.s32.totalorder %s22, 1
    %s24 = scalar_select %p23, 0, %s22
    %s25 = sadd.s32 1, %s16
    %s26 = scalar_select %p23, %s25, %s16
    %p27 = scmp.ge.s32.totalorder %s26, 4
    %s28 = scalar_select %p27, 0, %s26
    %s29 = ssub.s32 %s16, %s28
    %s30 = ssub.s32 %s17, %s24
    %s31 = sor.u32 %s29, %s30
    %p32 = scmp.eq.s32.totalorder %s31, 0
    %s34 = sadd.s32 %s33, 1
    %s35 = scalar_select %p32, %s33, %s34
    %p38 = pneg %p32
    %p39 = scmp.eq.s32.totalorder %s9, 3
    %p40 = por %p38, %p39
    %p41 = scmp.ne.s32.totalorder %s33, %s36
    %p42 = scmp.eq.s32.totalorder %s9, 0
    %p43 = por %p41, %p42
    %p44 = scmp.ne.s32.totalorder %s33, %s36
    %p45 = scmp.eq.s32.totalorder %s14, 3
    %p46 = por %p44, %p45
    %p47 = scmp.ne.s32.totalorder %s36, %s37
    %p48 = scmp.eq.s32.totalorder %s14, 0
    %p49 = por %p47, %p48
    %p50 = scmp.ne.s32.totalorder %s36, %s37
    %p51 = scmp.eq.s32.totalorder %s15, 3
    %p52 = por %p50, %p51
    %p54 = scmp.ne.s32.totalorder %s37, %s53
    %p55 = scmp.eq.s32.totalorder %s15, 0
    %p56 = por %p54, %p55
    %s57 = ssub.s32 %s16, %s28
    %p58 = scmp.eq.s32.totalorder %s57, 0
    %s60 = sadd.s32 %s59, 1
    %s61 = scalar_select %p58, %s59, %s60
    %p64 = pneg %p58
    %p65 = scmp.eq.s32.totalorder %s9, 3
    %p66 = por %p64, %p65
    %p67 = scmp.ne.s32.totalorder %s59, %s62
    %p68 = scmp.eq.s32.totalorder %s9, 0
    %p69 = por %p67, %p68
    %p70 = scmp.ne.s32.totalorder %s59, %s62
    %p71 = scmp.eq.s32.totalorder %s14, 3
    %p72 = por %p70, %p71
    %p73 = scmp.ne.s32.totalorder %s62, %s63
    %p74 = scmp.eq.s32.totalorder %s14, 0
    %p75 = por %p73, %p74
    %p76 = scmp.ne.s32.totalorder %s62, %s63
    %p77 = scmp.eq.s32.totalorder %s15, 3
    %p78 = por %p76, %p77
    %p80 = scmp.ne.s32.totalorder %s63, %s79
    %p81 = scmp.eq.s32.totalorder %s15, 0
    %p82 = por %p80, %p81
    %s84 = sadd.s32 %s83, 1
    %p87 = scmp.eq.s32.totalorder %s9, 3
    %p88 = scmp.ne.s32.totalorder %s83, %s85
    %p89 = scmp.eq.s32.totalorder %s9, 0
    %p90 = por %p88, %p89
    %p91 = scmp.ne.s32.totalorder %s83, %s85
    %p92 = scmp.eq.s32.totalorder %s14, 3
    %p93 = por %p91, %p92
    %p94 = scmp.ne.s32.totalorder %s85, %s86
    %p95 = scmp.eq.s32.totalorder %s14, 0
    %p96 = por %p94, %p95
    %p97 = scmp.ne.s32.totalorder %s85, %s86
    %p98 = scmp.eq.s32.totalorder %s15, 3
    %p99 = por %p97, %p98
    %p101 = scmp.ne.s32.totalorder %s86, %s100
    %p102 = scmp.eq.s32.totalorder %s15, 0
    %p103 = por %p101, %p102
    %s104 = ssub.s32 %s16, %s28
    %s105 = ssub.s32 %s17, %s24
    %s106 = sor.u32 %s104, %s105
    %p107 = scmp.eq.s32.totalorder %s106, 0
    %s109 = sadd.s32 %s108, 1
    %s110 = scalar_select %p107, %s108, %s109
    %p113 = pneg %p107
    %p114 = scmp.eq.s32.totalorder %s9, 3
    %p115 = por %p113, %p114
    %p116 = scmp.ne.s32.totalorder %s108, %s111
    %p117 = scmp.eq.s32.totalorder %s9, 0
    %p118 = por %p116, %p117
    %p119 = scmp.ne.s32.totalorder %s108, %s111
    %p120 = scmp.eq.s32.totalorder %s14, 3
    %p121 = por %p119, %p120
    %p122 = scmp.ne.s32.totalorder %s111, %s112
    %p123 = scmp.eq.s32.totalorder %s14, 0
    %p124 = por %p122, %p123
    %p125 = scmp.ne.s32.totalorder %s111, %s112
    %p126 = scmp.eq.s32.totalorder %s15, 3
    %p127 = por %p125, %p126
    %p129 = scmp.ne.s32.totalorder %s112, %s128
    %p130 = scmp.eq.s32.totalorder %s15, 0
    %p131 = por %p129, %p130
    %p132 = scmp.le.s32.totalorder 1, %s9
    %p133 = scmp.lt.s32.totalorder %s9, 5
    %p134 = pnand %p132, %p133
    %p135 = pneg %p134
    // Predicated region
    $region9: #{ffvae_forward.16} parent=5 // pred_check
      _
    $region10: #{ffvae_forward.16} parent=5 // pred_check_branch
      %137 = sbr.rel (%p134) target = $region12
    $region11: #{ffvae_forward.16} parent=5 // pred_region
      %s138 = ssub.s32 %s9, 1
      // Predicated region
      $region13: #{ffvae_forward.16} parent=11 // pred_check
        %p139 = pneg %p96
      $region14: #{ffvae_forward.16} parent=11 // pred_check_branch
        %141 = sbr.rel (%p139) target = $region16
      $region15: #{ffvae_forward.16} parent=11 // pred_region
        _
      $region16: #{ffvae_forward.16} parent=11 // pred_fallthru
        _
    $region12: #{ffvae_forward.16} parent=5 // pred_fallthru
      _
    %p142 = scmp.lt.s32.totalorder %s9, 4
    // Predicated region
    $region17: #{ffvae_forward.16} parent=5 // pred_check
      %p143 = pneg %p142
    $region18: #{ffvae_forward.16} parent=5 // pred_check_branch
      %145 = sbr.rel (%p143) target = $region20
    $region19: #{ffvae_forward.16} parent=5 // pred_region
      // Predicated region
      $region21: #{ffvae_forward.16} parent=19 // pred_check
        %p146 = pneg %p43
      $region22: #{ffvae_forward.16} parent=19 // pred_check_branch
        %148 = sbr.rel (%p146) target = $region24
      $region23: #{ffvae_forward.16} parent=19 // pred_region
        %s149 = smul.u32 4, %s17
        %p150 = scmp.lt.s32.totalorder %s16, 3
        %s151 = scalar_select %p150, %s16, 3
        %p152 = scmp.lt.s32.totalorder %s149, 3
        %s153 = scalar_select %p152, %s149, 3
        %s154 = smul.addr %s153, 2
        %s155 = smul.addr %s151, 8
        %s156 = sadd.s32 %s154, %s155
        %s157 = smul.addr %s156, 4
        %s158 = scalar_lea.vmem %s0, %s157
        %s159 = smul.u32 4, %s17
      $region24: #{ffvae_forward.16} parent=19 // pred_fallthru
        _
      // Predicated region
      $region25: #{ffvae_forward.16} parent=19 // pred_check
        %p160 = pneg %p69
      $region26: #{ffvae_forward.16} parent=19 // pred_check_branch
        %162 = sbr.rel (%p160) target = $region28
      $region27: #{ffvae_forward.16} parent=19 // pred_region
        %p163 = scmp.lt.s32.totalorder %s16, 3
        %s164 = scalar_select %p163, %s16, 3
        %s165 = smul.addr %s164, 32
        %s166 = smul.addr %s165, 4
        %s167 = scalar_lea.vmem %s1, %s166
      $region28: #{ffvae_forward.16} parent=19 // pred_fallthru
        _
    $region20: #{ffvae_forward.16} parent=5 // pred_fallthru
      _
    %p168 = scmp.le.s32.totalorder 1, %s9
    %p169 = scmp.lt.s32.totalorder %s9, 5
    %p170 = pnand %p168, %p169
    %p171 = pneg %p170
    // Predicated region
    $region29: #{ffvae_forward.16} parent=5 // pred_check
      _
    $region30: #{ffvae_forward.16} parent=5 // pred_check_branch
      %173 = sbr.rel (%p170) target = $region32
    $region31: #{ffvae_forward.16} parent=5 // pred_region
      %s174 = ssub.s32 %s9, 1
      %s175 = smul.u32 4, %s19
      %p176 = scmp.lt.s32.totalorder %s18, 3
      %s177 = scalar_select %p176, %s18, 3
      %p178 = scmp.lt.s32.totalorder %s175, 3
      %s179 = scalar_select %p178, %s175, 3
      %s180 = smul.addr %s179, 2
      %s181 = smul.addr %s177, 8
      %s182 = sadd.s32 %s180, %s181
      %s183 = smul.addr %s182, 4
      %s184 = scalar_lea.vmem %s0, %s183
      %p185 = pneg %p49
      %p186 = pneg %p46
      %p187 = scmp.lt.s32.totalorder %s18, 3
      %s188 = scalar_select %p187, %s18, 3
      %s189 = smul.addr %s188, 32
      %s190 = smul.addr %s189, 4
      %s191 = scalar_lea.vmem %s1, %s190
      %p192 = pneg %p75
      %p193 = pneg %p72
      %p194 = pneg %p96
      %p195 = pneg %p93
      %p196 = pneg %p124
      %p197 = pneg %p121
      %s198 = smul.u32 4, %s19
      %p199 = scmp.lt.s32.totalorder %s18, 3
      %s200 = scalar_select %p199, %s18, 3
      %p201 = scmp.lt.s32.totalorder %s198, 3
      %s202 = scalar_select %p201, %s198, 3
      %s203 = smul.addr %s200, 4
      %s204 = sadd.s32 %s202, %s203
      %s205 = smul.addr %s204, 4
      %s206 = scalar_lea.vmem %s3, %s205
      %s207 = smul.u32 4, %s19
      %p208 = scmp.lt.s32.totalorder %s18, 3
      %s209 = scalar_select %p208, %s18, 3
      %p210 = scmp.lt.s32.totalorder %s207, 3
      %s211 = scalar_select %p210, %s207, 3
      %s212 = smul.addr %s211, 2
      %s213 = smul.addr %s209, 8
      %s214 = sadd.s32 %s212, %s213
      %s215 = smul.addr %s214, 4
      %s216 = scalar_lea.vmem %s0, %s215
      %s217 = smul.u32 4, %s19
      %p218 = scmp.lt.s32.totalorder %s18, 3
      %s219 = scalar_select %p218, %s18, 3
      %s220 = smul.addr %s219, 32
      %s221 = smul.addr %s220, 4
      %s222 = scalar_lea.vmem %s1, %s221
      %s223 = smul.u32 4, %s19
      %p224 = scmp.lt.s32.totalorder %s18, 3
      %s225 = scalar_select %p224, %s18, 3
      %p226 = scmp.lt.s32.totalorder %s223, 3
      %s227 = scalar_select %p226, %s223, 3
      %s228 = smul.addr %s225, 4
      %s229 = sadd.s32 %s227, %s228
      %s230 = smul.addr %s229, 4
      %s231 = scalar_lea.vmem %s3, %s230
      %s232 = smul.u32 4, %s19
      %v234 = vld [vmem:[%s216] sm:$0xff]
      %v235 = vld [vmem:[%s216 + $0x8] sm:$0xff]
      %v236 = vld [vmem:[%s216 + $0x10] sm:$0xff]
      %v237 = vld [vmem:[%s216 + $0x18] sm:$0xff]
      %v238 = vld [vmem:[%s222] sm:$0xf]
      %v239 = vld [vmem:[%s222 + $0x4] sm:$0xf]
      %v240 = vld [vmem:[%s222 + $0x8] sm:$0xf]
      %v241 = vld [vmem:[%s222 + $0xc] sm:$0xf]
      %v242 = vld [vmem:[%s222 + $0x10] sm:$0xf]
      %v243 = vld [vmem:[%s222 + $0x14] sm:$0xf]
      %v244 = vld [vmem:[%s222 + $0x18] sm:$0xf]
      %v245 = vld [vmem:[%s222 + $0x1c] sm:$0xf]
      %v246 = vld [vmem:[%s222 + $0x20] sm:$0xf]
      %v247 = vld [vmem:[%s222 + $0x24] sm:$0xf]
      %v248 = vld [vmem:[%s222 + $0x28] sm:$0xf]
      %v249 = vld [vmem:[%s222 + $0x2c] sm:$0xf]
      %v250 = vld [vmem:[%s222 + $0x30] sm:$0xf]
      %v251 = vld [vmem:[%s222 + $0x34] sm:$0xf]
      %v252 = vld [vmem:[%s222 + $0x38] sm:$0xf]
      %v253 = vld [vmem:[%s222 + $0x3c] sm:$0xf]
      %v254 = vld [vmem:[%s222 + $0x40] sm:$0xf]
      %v255 = vld [vmem:[%s222 + $0x44] sm:$0xf]
      %v256 = vld [vmem:[%s222 + $0x48] sm:$0xf]
      %v257 = vld [vmem:[%s222 + $0x4c] sm:$0xf]
      %v258 = vld [vmem:[%s222 + $0x50] sm:$0xf]
      %v259 = vld [vmem:[%s222 + $0x54] sm:$0xf]
      %v260 = vld [vmem:[%s222 + $0x58] sm:$0xf]
      %v261 = vld [vmem:[%s222 + $0x5c] sm:$0xf]
      %v262 = vld [vmem:[%s222 + $0x60] sm:$0xf]
      %v263 = vld [vmem:[%s222 + $0x64] sm:$0xf]
      %v264 = vld [vmem:[%s222 + $0x68] sm:$0xf]
      %v265 = vld [vmem:[%s222 + $0x6c] sm:$0xf]
      %v266 = vld [vmem:[%s222 + $0x70] sm:$0xf]
      %v267 = vld [vmem:[%s222 + $0x74] sm:$0xf]
      %v268 = vld [vmem:[%s222 + $0x78] sm:$0xf]
      %v269 = vld [vmem:[%s222 + $0x7c] sm:$0xf]
      %v270 = vld [vmem:[%s2] sm:$0x1]
      %v272 = vlaneseq
      %v273 = vshrl.u32 %v272, 7
      %v274 = vsub.s32 0, %v273
      %v275 = vrot.slane %v270, %v274
      %v281 = vunpack.c.l.b16 %v234
      %v282 = vunpack.c.h.b16 %v234
      %v283 = vunpack.c.l.b16 %v235
      %v284 = vunpack.c.h.b16 %v235
      %v285 = vunpack.c.l.b16 %v236
      %v286 = vunpack.c.h.b16 %v236
      %v287 = vunpack.c.l.b16 %v237
      %v288 = vunpack.c.h.b16 %v237
      %v289 = vpack.c.b16 %v283, %v281
      %v290 = vpack.c.b16 %v284, %v282
      %v291 = vpack.c.b16 %v287, %v285
      %v292 = vpack.c.b16 %v288, %v286
      %v329 = vunpack.c.l.b16 %v238
      %v330 = vunpack.c.l.b16 %v239
      %v331 = vunpack.c.l.b16 %v240
      %v332 = vunpack.c.l.b16 %v241
      %v333 = vunpack.c.l.b16 %v242
      %v334 = vunpack.c.l.b16 %v243
      %v335 = vunpack.c.l.b16 %v244
      %v336 = vunpack.c.l.b16 %v245
      %v337 = vunpack.c.l.b16 %v246
      %v338 = vunpack.c.l.b16 %v247
      %v339 = vunpack.c.l.b16 %v248
      %v340 = vunpack.c.l.b16 %v249
      %v341 = vunpack.c.l.b16 %v250
      %v342 = vunpack.c.l.b16 %v251
      %v343 = vunpack.c.l.b16 %v252
      %v344 = vunpack.c.l.b16 %v253
      %v345 = vunpack.c.l.b16 %v254
      %v346 = vunpack.c.l.b16 %v255
      %v347 = vunpack.c.l.b16 %v256
      %v348 = vunpack.c.l.b16 %v257
      %v349 = vunpack.c.l.b16 %v258
      %v350 = vunpack.c.l.b16 %v259
      %v351 = vunpack.c.l.b16 %v260
      %v352 = vunpack.c.l.b16 %v261
      %v353 = vunpack.c.l.b16 %v262
      %v354 = vunpack.c.l.b16 %v263
      %v355 = vunpack.c.l.b16 %v264
      %v356 = vunpack.c.l.b16 %v265
      %v357 = vunpack.c.l.b16 %v266
      %v358 = vunpack.c.l.b16 %v267
      %v359 = vunpack.c.l.b16 %v268
      %v360 = vunpack.c.l.b16 %v269
      %v361 = vpack.c.b16 %v330, %v329
      %v362 = vpack.c.b16 %v332, %v331
      %v363 = vpack.c.b16 %v334, %v333
      %v364 = vpack.c.b16 %v336, %v335
      %v365 = vpack.c.b16 %v338, %v337
      %v366 = vpack.c.b16 %v340, %v339
      %v367 = vpack.c.b16 %v342, %v341
      %v368 = vpack.c.b16 %v344, %v343
      %v369 = vpack.c.b16 %v346, %v345
      %v370 = vpack.c.b16 %v348, %v347
      %v371 = vpack.c.b16 %v350, %v349
      %v372 = vpack.c.b16 %v352, %v351
      %v373 = vpack.c.b16 %v354, %v353
      %v374 = vpack.c.b16 %v356, %v355
      %v375 = vpack.c.b16 %v358, %v357
      %v376 = vpack.c.b16 %v360, %v359
      %393 = vmatprep.subr.bf16.mxu0 0
      %394 = vmatpush1.bf16.msra.mxu0 %v361
      %395 = vmatprep.subr.bf16.mxu0 0
      %396 = vmatpush1.bf16.msra.mxu0 %v362
      %397 = vmatprep.subr.bf16.mxu0 0
      %398 = vmatpush1.bf16.msra.mxu0 %v363
      %399 = vmatprep.subr.bf16.mxu0 0
      %400 = vmatpush1.bf16.msra.mxu0 %v364
      %401 = vmatprep.subr.bf16.mxu0 0
      %402 = vmatpush1.bf16.msra.mxu0 %v365
      %403 = vmatprep.subr.bf16.mxu0 0
      %404 = vmatpush1.bf16.msra.mxu0 %v366
      %405 = vmatprep.subr.bf16.mxu0 0
      %406 = vmatpush1.bf16.msra.mxu0 %v367
      %407 = vmatprep.subr.bf16.mxu0 0
      %408 = vmatpush1.bf16.msra.mxu0 %v368
      %409 = vmatprep.subr.bf16.mxu0 0
      %410 = vmatpush1.bf16.msra.mxu0 %v369
      %411 = vmatprep.subr.bf16.mxu0 0
      %412 = vmatpush1.bf16.msra.mxu0 %v370
      %413 = vmatprep.subr.bf16.mxu0 0
      %414 = vmatpush1.bf16.msra.mxu0 %v371
      %415 = vmatprep.subr.bf16.mxu0 0
      %416 = vmatpush1.bf16.msra.mxu0 %v372
      %417 = vmatprep.subr.bf16.mxu0 0
      %418 = vmatpush1.bf16.msra.mxu0 %v373
      %419 = vmatprep.subr.bf16.mxu0 0
      %420 = vmatpush1.bf16.msra.mxu0 %v374
      %421 = vmatprep.subr.bf16.mxu0 0
      %422 = vmatpush1.bf16.msra.mxu0 %v375
      %423 = vmatprep.subr.bf16.mxu0 0
      %424 = vmatpush1.bf16.msra.mxu0 %v376
      %425 = vmatprep.mubr.bf16.mxu0 %v290
      %426 = vmatmul.mubr.bf16.gmra.mrb[0].mxu0 %v289
      %v427 = vpop.f32.mrb[0].mxu0
      %v428 = vadd.f32 %v275, %v427
      %v429 = vpop.f32.mrb[0].mxu0
      %v430 = vpop.f32.mrb[0].mxu0
      %v431 = vadd.f32 %v275, %v430
      %v432 = vpop.f32.mrb[0].mxu0
      %433 = vmatprep.mubr.bf16.mxu0 %v292
      %434 = vmatmul.mubr.bf16.gmra.mrb[0].mxu0 %v291
      %v435 = vpop.f32.mrb[0].mxu0
      %v436 = vadd.f32 %v275, %v435
      %v437 = vpop.f32.mrb[0].mxu0
      %v438 = vpop.f32.mrb[0].mxu0
      %v439 = vadd.f32 %v275, %v438
      %v440 = vpop.f32.mrb[0].mxu0
      %441 = vdwg.mxu0
      %v442 = vmax.f32 %v428, 0.0
      %v443 = vmax.f32 %v431, 0.0
      %v444 = vmax.f32 %v436, 0.0
      %v445 = vmax.f32 %v439, 0.0
      %v446 = vpack.c.bf16 %v443, %v442
      %v447 = vpack.c.bf16 %v445, %v444
      %v450 = vunpack.c.l.b16 %v446
      %v451 = vunpack.c.h.b16 %v446
      %v452 = vunpack.c.l.b16 %v447
      %v453 = vunpack.c.h.b16 %v447
      %v454 = vpack.c.b16 %v450, %v450
      %v455 = vpack.c.b16 %v451, %v451
      %v456 = vpack.c.b16 %v452, %v452
      %v457 = vpack.c.b16 %v453, %v453
      %462 = vst [vmem:[%s231] sm:$0xf] %v454
      %463 = vst [vmem:[%s231 + $0x4] sm:$0xf] %v455
      %464 = vst [vmem:[%s231 + $0x8] sm:$0xf] %v456
      %465 = vst [vmem:[%s231 + $0xc] sm:$0xf] %v457
      %s466 = smul.u32 4, %s19
      %p467 = scmp.lt.s32.totalorder %s18, 3
      %s468 = scalar_select %p467, %s18, 3
      %p469 = scmp.lt.s32.totalorder %s466, 3
      %s470 = scalar_select %p469, %s466, 3
      %s471 = smul.addr %s468, 4
      %s472 = sadd.s32 %s470, %s471
      %s473 = smul.addr %s472, 4
      %s474 = scalar_lea.vmem %s3, %s473
      // Predicated region
      $region33: #{ffvae_forward.16} parent=31 // pred_check
        %p475 = pneg %p121
      $region34: #{ffvae_forward.16} parent=31 // pred_check_branch
        %477 = sbr.rel (%p475) target = $region36
      $region35: #{ffvae_forward.16} parent=31 // pred_region
        %s478 = smul.u32 4, %s19
      $region36: #{ffvae_forward.16} parent=31 // pred_fallthru
        _
    $region32: #{ffvae_forward.16} parent=5 // pred_fallthru
      _
    %p479 = scmp.le.s32.totalorder 2, %s9
    // Predicated region
    $region37: #{ffvae_forward.16} parent=5 // pred_check
      %p480 = pneg %p479
    $region38: #{ffvae_forward.16} parent=5 // pred_check_branch
      %482 = sbr.rel (%p480) target = $region40
    $region39: #{ffvae_forward.16} parent=5 // pred_region
      %s483 = ssub.s32 %s9, 2
      // Predicated region
      $region41: #{ffvae_forward.16} parent=39 // pred_check
        %p484 = pneg %p127
      $region42: #{ffvae_forward.16} parent=39 // pred_check_branch
        %486 = sbr.rel (%p484) target = $region44
      $region43: #{ffvae_forward.16} parent=39 // pred_region
        %s487 = smul.u32 4, %s21
        %p488 = scmp.lt.s32.totalorder %s20, 3
        %s489 = scalar_select %p488, %s20, 3
        %p490 = scmp.lt.s32.totalorder %s487, 3
        %s491 = scalar_select %p490, %s487, 3
        %s492 = smul.addr %s489, 4
        %s493 = sadd.s32 %s491, %s492
        %s494 = smul.addr %s493, 4
        %s495 = scalar_lea.vmem %s3, %s494
      $region44: #{ffvae_forward.16} parent=39 // pred_fallthru
        _
    $region40: #{ffvae_forward.16} parent=5 // pred_fallthru
      _
  $region6: #{ffvae_forward.16} parent=0 // loop_footer
    %s13 = sadd.s32 1, %s9
  $region7: #{ffvae_forward.16} parent=0 // loop_footer_branch
    %8 = sbr.rel target = $region3
  $region8: #{ffvae_forward.16} parent=0 // loop_exit
    _

// kernel: ffvae_forward.17
$region0: #{ffvae_forward.17}
  #allocation0 [shape = 'u32[]', space=smem, size = 0x4, offset = 0x4, fixed_abs, tag = 'smem constant byte address 0x4 - core index']
  #allocation1 [shape = 'u32[144,128]{1,0:T(1,128)}', space=vmem, size = 0x12000, scoped, tag = 'internal scratch']
  %s0 = inlined_call_operand.vmem [shape: bf16[4,128,256], index: 0, kind: input, shape index: {}]
  %s1 = inlined_call_operand.vmem [shape: bf16[4,256,128], index: 1, kind: input, shape index: {}]
  %s2 = inlined_call_operand.vmem [shape: f32[1,1,128], index: 2, kind: input, shape index: {}]
  %s3 = inlined_call_operand.vmem [shape: bf16[4,128,128], index: 3, kind: output, shape index: {}]
  %s4 = sld [smem:[#allocation0]]
  $region45: #{ffvae_forward.17} parent=0
    _
  %s6 = ssub.s32 1, %s4
  %s7 = scalar_select 0, %s6, %s4
  loop: start=0, step=1, limit=6
  $region2: #{ffvae_forward.17} parent=0 // loop_pre_header
    _
  $region3: #{ffvae_forward.17} parent=0 // loop_header
    %s9 = sphi 0, %s13
    %p10 = scmp.ge.s32.totalorder %s9, 6
    %s16 = sphi 0, %s28
    %s17 = sphi 0, %s24
    %s18 = sphi 0, %s16
    %s19 = sphi 0, %s17
    %s20 = sphi 0, %s18
    %s21 = sphi 0, %s19
    %s33 = sphi 0, %s35
    %s36 = sphi 0, %s33
    %s37 = sphi 0, %s36
    %s53 = sphi 0, %s37
    %s59 = sphi 0, %s61
    %s62 = sphi 0, %s59
    %s63 = sphi 0, %s62
    %s79 = sphi 0, %s63
    %s83 = sphi 0, %s83
    %s85 = sphi 0, %s83
    %s86 = sphi 0, %s85
    %s100 = sphi 0, %s86
    %s108 = sphi 0, %s110
    %s111 = sphi 0, %s108
    %s112 = sphi 0, %s111
    %s128 = sphi 0, %s112
  $region4: #{ffvae_forward.17} parent=0 // loop_header_branch
    %12 = sbr.rel (%p10) target = $region8
  $region5: #{ffvae_forward.17} parent=0 // loop_body
    %s14 = ssub.s32 %s9, 1
    %s15 = ssub.s32 %s9, 2
    %s22 = sadd.s32 1, %s17
    %p23 = scmp.ge.s32.totalorder %s22, 1
    %s24 = scalar_select %p23, 0, %s22
    %s25 = sadd.s32 1, %s16
    %s26 = scalar_select %p23, %s25, %s16
    %p27 = scmp.ge.s32.totalorder %s26, 4
    %s28 = scalar_select %p27, 0, %s26
    %s29 = ssub.s32 %s16, %s28
    %s30 = ssub.s32 %s17, %s24
    %s31 = sor.u32 %s29, %s30
    %p32 = scmp.eq.s32.totalorder %s31, 0
    %s34 = sadd.s32 %s33, 1
    %s35 = scalar_select %p32, %s33, %s34
    %p38 = pneg %p32
    %p39 = scmp.eq.s32.totalorder %s9, 3
    %p40 = por %p38, %p39
    %p41 = scmp.ne.s32.totalorder %s33, %s36
    %p42 = scmp.eq.s32.totalorder %s9, 0
    %p43 = por %p41, %p42
    %p44 = scmp.ne.s32.totalorder %s33, %s36
    %p45 = scmp.eq.s32.totalorder %s14, 3
    %p46 = por %p44, %p45
    %p47 = scmp.ne.s32.totalorder %s36, %s37
    %p48 = scmp.eq.s32.totalorder %s14, 0
    %p49 = por %p47, %p48
    %p50 = scmp.ne.s32.totalorder %s36, %s37
    %p51 = scmp.eq.s32.totalorder %s15, 3
    %p52 = por %p50, %p51
    %p54 = scmp.ne.s32.totalorder %s37, %s53
    %p55 = scmp.eq.s32.totalorder %s15, 0
    %p56 = por %p54, %p55
    %s57 = ssub.s32 %s16, %s28
    %p58 = scmp.eq.s32.totalorder %s57, 0
    %s60 = sadd.s32 %s59, 1
    %s61 = scalar_select %p58, %s59, %s60
    %p64 = pneg %p58
    %p65 = scmp.eq.s32.totalorder %s9, 3
    %p66 = por %p64, %p65
    %p67 = scmp.ne.s32.totalorder %s59, %s62
    %p68 = scmp.eq.s32.totalorder %s9, 0
    %p69 = por %p67, %p68
    %p70 = scmp.ne.s32.totalorder %s59, %s62
    %p71 = scmp.eq.s32.totalorder %s14, 3
    %p72 = por %p70, %p71
    %p73 = scmp.ne.s32.totalorder %s62, %s63
    %p74 = scmp.eq.s32.totalorder %s14, 0
    %p75 = por %p73, %p74
    %p76 = scmp.ne.s32.totalorder %s62, %s63
    %p77 = scmp.eq.s32.totalorder %s15, 3
    %p78 = por %p76, %p77
    %p80 = scmp.ne.s32.totalorder %s63, %s79
    %p81 = scmp.eq.s32.totalorder %s15, 0
    %p82 = por %p80, %p81
    %s84 = sadd.s32 %s83, 1
    %p87 = scmp.eq.s32.totalorder %s9, 3
    %p88 = scmp.ne.s32.totalorder %s83, %s85
    %p89 = scmp.eq.s32.totalorder %s9, 0
    %p90 = por %p88, %p89
    %p91 = scmp.ne.s32.totalorder %s83, %s85
    %p92 = scmp.eq.s32.totalorder %s14, 3
    %p93 = por %p91, %p92
    %p94 = scmp.ne.s32.totalorder %s85, %s86
    %p95 = scmp.eq.s32.totalorder %s14, 0
    %p96 = por %p94, %p95
    %p97 = scmp.ne.s32.totalorder %s85, %s86
    %p98 = scmp.eq.s32.totalorder %s15, 3
    %p99 = por %p97, %p98
    %p101 = scmp.ne.s32.totalorder %s86, %s100
    %p102 = scmp.eq.s32.totalorder %s15, 0
    %p103 = por %p101, %p102
    %s104 = ssub.s32 %s16, %s28
    %s105 = ssub.s32 %s17, %s24
    %s106 = sor.u32 %s104, %s105
    %p107 = scmp.eq.s32.totalorder %s106, 0
    %s109 = sadd.s32 %s108, 1
    %s110 = scalar_select %p107, %s108, %s109
    %p113 = pneg %p107
    %p114 = scmp.eq.s32.totalorder %s9, 3
    %p115 = por %p113, %p114
    %p116 = scmp.ne.s32.totalorder %s108, %s111
    %p117 = scmp.eq.s32.totalorder %s9, 0
    %p118 = por %p116, %p117
    %p119 = scmp.ne.s32.totalorder %s108, %s111
    %p120 = scmp.eq.s32.totalorder %s14, 3
    %p121 = por %p119, %p120
    %p122 = scmp.ne.s32.totalorder %s111, %s112
    %p123 = scmp.eq.s32.totalorder %s14, 0
    %p124 = por %p122, %p123
    %p125 = scmp.ne.s32.totalorder %s111, %s112
    %p126 = scmp.eq.s32.totalorder %s15, 3
    %p127 = por %p125, %p126
    %p129 = scmp.ne.s32.totalorder %s112, %s128
    %p130 = scmp.eq.s32.totalorder %s15, 0
    %p131 = por %p129, %p130
    %p132 = scmp.le.s32.totalorder 1, %s9
    %p133 = scmp.lt.s32.totalorder %s9, 5
    %p134 = pnand %p132, %p133
    %p135 = pneg %p134
    // Predicated region
    $region9: #{ffvae_forward.17} parent=5 // pred_check
      _
    $region10: #{ffvae_forward.17} parent=5 // pred_check_branch
      %137 = sbr.rel (%p134) target = $region12
    $region11: #{ffvae_forward.17} parent=5 // pred_region
      %s138 = ssub.s32 %s9, 1
      // Predicated region
      $region13: #{ffvae_forward.17} parent=11 // pred_check
        %p139 = pneg %p96
      $region14: #{ffvae_forward.17} parent=11 // pred_check_branch
        %141 = sbr.rel (%p139) target = $region16
      $region15: #{ffvae_forward.17} parent=11 // pred_region
        _
      $region16: #{ffvae_forward.17} parent=11 // pred_fallthru
        _
    $region12: #{ffvae_forward.17} parent=5 // pred_fallthru
      _
    %p142 = scmp.lt.s32.totalorder %s9, 4
    // Predicated region
    $region17: #{ffvae_forward.17} parent=5 // pred_check
      %p143 = pneg %p142
    $region18: #{ffvae_forward.17} parent=5 // pred_check_branch
      %145 = sbr.rel (%p143) target = $region20
    $region19: #{ffvae_forward.17} parent=5 // pred_region
      // Predicated region
      $region21: #{ffvae_forward.17} parent=19 // pred_check
        %p146 = pneg %p43
      $region22: #{ffvae_forward.17} parent=19 // pred_check_branch
        %148 = sbr.rel (%p146) target = $region24
      $region23: #{ffvae_forward.17} parent=19 // pred_region
        %s149 = smul.u32 16, %s17
        %p150 = scmp.lt.s32.totalorder %s16, 3
        %s151 = scalar_select %p150, %s16, 3
        %p152 = scmp.lt.s32.totalorder %s149, 15
        %s153 = scalar_select %p152, %s149, 15
        %s154 = smul.addr %s153, 2
        %s155 = smul.addr %s151, 32
        %s156 = sadd.s32 %s154, %s155
        %s157 = smul.addr %s156, 4
        %s158 = scalar_lea.vmem %s0, %s157
        %s159 = smul.u32 16, %s17
      $region24: #{ffvae_forward.17} parent=19 // pred_fallthru
        _
      // Predicated region
      $region25: #{ffvae_forward.17} parent=19 // pred_check
        %p160 = pneg %p69
      $region26: #{ffvae_forward.17} parent=19 // pred_check_branch
        %162 = sbr.rel (%p160) target = $region28
      $region27: #{ffvae_forward.17} parent=19 // pred_region
        %p163 = scmp.lt.s32.totalorder %s16, 3
        %s164 = scalar_select %p163, %s16, 3
        %s165 = smul.addr %s164, 32
        %s166 = smul.addr %s165, 4
        %s167 = scalar_lea.vmem %s1, %s166
      $region28: #{ffvae_forward.17} parent=19 // pred_fallthru
        _
    $region20: #{ffvae_forward.17} parent=5 // pred_fallthru
      _
    %p168 = scmp.le.s32.totalorder 1, %s9
    %p169 = scmp.lt.s32.totalorder %s9, 5
    %p170 = pnand %p168, %p169
    %p171 = pneg %p170
    // Predicated region
    $region29: #{ffvae_forward.17} parent=5 // pred_check
      _
    $region30: #{ffvae_forward.17} parent=5 // pred_check_branch
      %173 = sbr.rel (%p170) target = $region32
    $region31: #{ffvae_forward.17} parent=5 // pred_region
      %s174 = ssub.s32 %s9, 1
      %s175 = smul.u32 16, %s19
      %p176 = scmp.lt.s32.totalorder %s18, 3
      %s177 = scalar_select %p176, %s18, 3
      %p178 = scmp.lt.s32.totalorder %s175, 15
      %s179 = scalar_select %p178, %s175, 15
      %s180 = smul.addr %s179, 2
      %s181 = smul.addr %s177, 32
      %s182 = sadd.s32 %s180, %s181
      %s183 = smul.addr %s182, 4
      %s184 = scalar_lea.vmem %s0, %s183
      %p185 = pneg %p49
      %p186 = pneg %p46
      %p187 = scmp.lt.s32.totalorder %s18, 3
      %s188 = scalar_select %p187, %s18, 3
      %s189 = smul.addr %s188, 32
      %s190 = smul.addr %s189, 4
      %s191 = scalar_lea.vmem %s1, %s190
      %p192 = pneg %p75
      %p193 = pneg %p72
      %p194 = pneg %p96
      %p195 = pneg %p93
      %p196 = pneg %p124
      %p197 = pneg %p121
      %s198 = smul.u32 16, %s19
      %p199 = scmp.lt.s32.totalorder %s18, 3
      %s200 = scalar_select %p199, %s18, 3
      %p201 = scmp.lt.s32.totalorder %s198, 15
      %s202 = scalar_select %p201, %s198, 15
      %s203 = smul.addr %s200, 16
      %s204 = sadd.s32 %s202, %s203
      %s205 = smul.addr %s204, 4
      %s206 = scalar_lea.vmem %s3, %s205
      %s207 = smul.u32 16, %s19
      %p208 = scmp.lt.s32.totalorder %s18, 3
      %s209 = scalar_select %p208, %s18, 3
      %p210 = scmp.lt.s32.totalorder %s207, 15
      %s211 = scalar_select %p210, %s207, 15
      %s212 = smul.addr %s211, 2
      %s213 = smul.addr %s209, 32
      %s214 = sadd.s32 %s212, %s213
      %s215 = smul.addr %s214, 4
      %s216 = scalar_lea.vmem %s0, %s215
      %s217 = smul.u32 16, %s19
      %p218 = scmp.lt.s32.totalorder %s18, 3
      %s219 = scalar_select %p218, %s18, 3
      %s220 = smul.addr %s219, 32
      %s221 = smul.addr %s220, 4
      %s222 = scalar_lea.vmem %s1, %s221
      %s223 = smul.u32 16, %s19
      %p224 = scmp.lt.s32.totalorder %s18, 3
      %s225 = scalar_select %p224, %s18, 3
      %p226 = scmp.lt.s32.totalorder %s223, 15
      %s227 = scalar_select %p226, %s223, 15
      %s228 = smul.addr %s225, 16
      %s229 = sadd.s32 %s227, %s228
      %s230 = smul.addr %s229, 4
      %s231 = scalar_lea.vmem %s3, %s230
      %s232 = smul.u32 16, %s19
      %v234 = vld [vmem:[%s216] sm:$0xff]
      %v235 = vld [vmem:[%s216 + $0x8] sm:$0xff]
      %v236 = vld [vmem:[%s216 + $0x10] sm:$0xff]
      %v237 = vld [vmem:[%s216 + $0x18] sm:$0xff]
      %v238 = vld [vmem:[%s216 + $0x20] sm:$0xff]
      %v239 = vld [vmem:[%s216 + $0x28] sm:$0xff]
      %v240 = vld [vmem:[%s216 + $0x30] sm:$0xff]
      %v241 = vld [vmem:[%s216 + $0x38] sm:$0xff]
      %v242 = vld [vmem:[%s216 + $0x40] sm:$0xff]
      %v243 = vld [vmem:[%s216 + $0x48] sm:$0xff]
      %v244 = vld [vmem:[%s216 + $0x50] sm:$0xff]
      %v245 = vld [vmem:[%s216 + $0x58] sm:$0xff]
      %v246 = vld [vmem:[%s216 + $0x60] sm:$0xff]
      %v247 = vld [vmem:[%s216 + $0x68] sm:$0xff]
      %v248 = vld [vmem:[%s216 + $0x70] sm:$0xff]
      %v249 = vld [vmem:[%s216 + $0x78] sm:$0xff]
      %v250 = vld [vmem:[%s222] sm:$0xf]
      %v251 = vld [vmem:[%s222 + $0x4] sm:$0xf]
      %v252 = vld [vmem:[%s222 + $0x8] sm:$0xf]
      %v253 = vld [vmem:[%s222 + $0xc] sm:$0xf]
      %v254 = vld [vmem:[%s222 + $0x10] sm:$0xf]
      %v255 = vld [vmem:[%s222 + $0x14] sm:$0xf]
      %v256 = vld [vmem:[%s222 + $0x18] sm:$0xf]
      %v257 = vld [vmem:[%s222 + $0x1c] sm:$0xf]
      %v258 = vld [vmem:[%s222 + $0x20] sm:$0xf]
      %v259 = vld [vmem:[%s222 + $0x24] sm:$0xf]
      %v260 = vld [vmem:[%s222 + $0x28] sm:$0xf]
      %v261 = vld [vmem:[%s222 + $0x2c] sm:$0xf]
      %v262 = vld [vmem:[%s222 + $0x30] sm:$0xf]
      %v263 = vld [vmem:[%s222 + $0x34] sm:$0xf]
      %v264 = vld [vmem:[%s222 + $0x38] sm:$0xf]
      %v265 = vld [vmem:[%s222 + $0x3c] sm:$0xf]
      %v266 = vld [vmem:[%s222 + $0x40] sm:$0xf]
      %v267 = vld [vmem:[%s222 + $0x44] sm:$0xf]
      %v268 = vld [vmem:[%s222 + $0x48] sm:$0xf]
      %v269 = vld [vmem:[%s222 + $0x4c] sm:$0xf]
      %v270 = vld [vmem:[%s222 + $0x50] sm:$0xf]
      %v271 = vld [vmem:[%s222 + $0x54] sm:$0xf]
      %v272 = vld [vmem:[%s222 + $0x58] sm:$0xf]
      %v273 = vld [vmem:[%s222 + $0x5c] sm:$0xf]
      %v274 = vld [vmem:[%s222 + $0x60] sm:$0xf]
      %v275 = vld [vmem:[%s222 + $0x64] sm:$0xf]
      %v276 = vld [vmem:[%s222 + $0x68] sm:$0xf]
      %v277 = vld [vmem:[%s222 + $0x6c] sm:$0xf]
      %v278 = vld [vmem:[%s222 + $0x70] sm:$0xf]
      %v279 = vld [vmem:[%s222 + $0x74] sm:$0xf]
      %v280 = vld [vmem:[%s222 + $0x78] sm:$0xf]
      %v281 = vld [vmem:[%s222 + $0x7c] sm:$0xf]
      %v282 = vld [vmem:[%s2] sm:$0x1]
      %v284 = vlaneseq
      %v285 = vshrl.u32 %v284, 7
      %v286 = vsub.s32 0, %v285
      %v287 = vrot.slane %v282, %v286
      %v305 = vunpack.c.l.b16 %v234
      %v306 = vunpack.c.h.b16 %v234
      %v307 = vunpack.c.l.b16 %v235
      %v308 = vunpack.c.h.b16 %v235
      %v309 = vunpack.c.l.b16 %v236
      %v310 = vunpack.c.h.b16 %v236
      %v311 = vunpack.c.l.b16 %v237
      %v312 = vunpack.c.h.b16 %v237
      %v313 = vunpack.c.l.b16 %v238
      %v314 = vunpack.c.h.b16 %v238
      %v315 = vunpack.c.l.b16 %v239
      %v316 = vunpack.c.h.b16 %v239
      %v317 = vunpack.c.l.b16 %v240
      %v318 = vunpack.c.h.b16 %v240
      %v319 = vunpack.c.l.b16 %v241
      %v320 = vunpack.c.h.b16 %v241
      %v321 = vunpack.c.l.b16 %v242
      %v322 = vunpack.c.h.b16 %v242
      %v323 = vunpack.c.l.b16 %v243
      %v324 = vunpack.c.h.b16 %v243
      %v325 = vunpack.c.l.b16 %v244
      %v326 = vunpack.c.h.b16 %v244
      %v327 = vunpack.c.l.b16 %v245
      %v328 = vunpack.c.h.b16 %v245
      %v329 = vunpack.c.l.b16 %v246
      %v330 = vunpack.c.h.b16 %v246
      %v331 = vunpack.c.l.b16 %v247
      %v332 = vunpack.c.h.b16 %v247
      %v333 = vunpack.c.l.b16 %v248
      %v334 = vunpack.c.h.b16 %v248
      %v335 = vunpack.c.l.b16 %v249
      %v336 = vunpack.c.h.b16 %v249
      %v337 = vpack.c.b16 %v307, %v305
      %v338 = vpack.c.b16 %v308, %v306
      %v339 = vpack.c.b16 %v311, %v309
      %v340 = vpack.c.b16 %v312, %v310
      %v341 = vpack.c.b16 %v315, %v313
      %v342 = vpack.c.b16 %v316, %v314
      %v343 = vpack.c.b16 %v319, %v317
      %v344 = vpack.c.b16 %v320, %v318
      %v345 = vpack.c.b16 %v323, %v321
      %v346 = vpack.c.b16 %v324, %v322
      %v347 = vpack.c.b16 %v327, %v325
      %v348 = vpack.c.b16 %v328, %v326
      %v349 = vpack.c.b16 %v331, %v329
      %v350 = vpack.c.b16 %v332, %v330
      %v351 = vpack.c.b16 %v335, %v333
      %v352 = vpack.c.b16 %v336, %v334
      %v401 = vunpack.c.l.b16 %v250
      %v402 = vunpack.c.l.b16 %v251
      %v403 = vunpack.c.l.b16 %v252
      %v404 = vunpack.c.l.b16 %v253
      %v405 = vunpack.c.l.b16 %v254
      %v406 = vunpack.c.l.b16 %v255
      %v407 = vunpack.c.l.b16 %v256
      %v408 = vunpack.c.l.b16 %v257
      %v409 = vunpack.c.l.b16 %v258
      %v410 = vunpack.c.l.b16 %v259
      %v411 = vunpack.c.l.b16 %v260
      %v412 = vunpack.c.l.b16 %v261
      %v413 = vunpack.c.l.b16 %v262
      %v414 = vunpack.c.l.b16 %v263
      %v415 = vunpack.c.l.b16 %v264
      %v416 = vunpack.c.l.b16 %v265
      %v417 = vunpack.c.l.b16 %v266
      %v418 = vunpack.c.l.b16 %v267
      %v419 = vunpack.c.l.b16 %v268
      %v420 = vunpack.c.l.b16 %v269
      %v421 = vunpack.c.l.b16 %v270
      %v422 = vunpack.c.l.b16 %v271
      %v423 = vunpack.c.l.b16 %v272
      %v424 = vunpack.c.l.b16 %v273
      %v425 = vunpack.c.l.b16 %v274
      %v426 = vunpack.c.l.b16 %v275
      %v427 = vunpack.c.l.b16 %v276
      %v428 = vunpack.c.l.b16 %v277
      %v429 = vunpack.c.l.b16 %v278
      %v430 = vunpack.c.l.b16 %v279
      %v431 = vunpack.c.l.b16 %v280
      %v432 = vunpack.c.l.b16 %v281
      %v433 = vpack.c.b16 %v402, %v401
      %v434 = vpack.c.b16 %v404, %v403
      %v435 = vpack.c.b16 %v406, %v405
      %v436 = vpack.c.b16 %v408, %v407
      %v437 = vpack.c.b16 %v410, %v409
      %v438 = vpack.c.b16 %v412, %v411
      %v439 = vpack.c.b16 %v414, %v413
      %v440 = vpack.c.b16 %v416, %v415
      %v441 = vpack.c.b16 %v418, %v417
      %v442 = vpack.c.b16 %v420, %v419
      %v443 = vpack.c.b16 %v422, %v421
      %v444 = vpack.c.b16 %v424, %v423
      %v445 = vpack.c.b16 %v426, %v425
      %v446 = vpack.c.b16 %v428, %v427
      %v447 = vpack.c.b16 %v430, %v429
      %v448 = vpack.c.b16 %v432, %v431
      %465 = vmatprep.subr.bf16.mxu0 0
      %466 = vmatpush1.bf16.msra.mxu0 %v433
      %467 = vmatprep.subr.bf16.mxu0 0
      %468 = vmatpush1.bf16.msra.mxu0 %v434
      %469 = vmatprep.subr.bf16.mxu0 0
      %470 = vmatpush1.bf16.msra.mxu0 %v435
      %471 = vmatprep.subr.bf16.mxu0 0
      %472 = vmatpush1.bf16.msra.mxu0 %v436
      %473 = vmatprep.subr.bf16.mxu0 0
      %474 = vmatpush1.bf16.msra.mxu0 %v437
      %475 = vmatprep.subr.bf16.mxu0 0
      %476 = vmatpush1.bf16.msra.mxu0 %v438
      %477 = vmatprep.subr.bf16.mxu0 0
      %478 = vmatpush1.bf16.msra.mxu0 %v439
      %479 = vmatprep.subr.bf16.mxu0 0
      %480 = vmatpush1.bf16.msra.mxu0 %v440
      %481 = vmatprep.subr.bf16.mxu0 0
      %482 = vmatpush1.bf16.msra.mxu0 %v441
      %483 = vmatprep.subr.bf16.mxu0 0
      %484 = vmatpush1.bf16.msra.mxu0 %v442
      %485 = vmatprep.subr.bf16.mxu0 0
      %486 = vmatpush1.bf16.msra.mxu0 %v443
      %487 = vmatprep.subr.bf16.mxu0 0
      %488 = vmatpush1.bf16.msra.mxu0 %v444
      %489 = vmatprep.subr.bf16.mxu0 0
      %490 = vmatpush1.bf16.msra.mxu0 %v445
      %491 = vmatprep.subr.bf16.mxu0 0
      %492 = vmatpush1.bf16.msra.mxu0 %v446
      %493 = vmatprep.subr.bf16.mxu0 0
      %494 = vmatpush1.bf16.msra.mxu0 %v447
      %495 = vmatprep.subr.bf16.mxu0 0
      %496 = vmatpush1.bf16.msra.mxu0 %v448
      %497 = vmatprep.mubr.bf16.mxu0 %v338
      %498 = vmatmul.mubr.bf16.gmra.mrb[0].mxu0 %v337
      %v499 = vpop.f32.mrb[0].mxu0
      %v500 = vadd.f32 %v287, %v499
      %v501 = vpop.f32.mrb[0].mxu0
      %v502 = vpop.f32.mrb[0].mxu0
      %v503 = vadd.f32 %v287, %v502
      %v504 = vpop.f32.mrb[0].mxu0
      %505 = vmatprep.mubr.bf16.mxu0 %v340
      %506 = vmatmul.mubr.bf16.gmra.mrb[0].mxu0 %v339
      %v507 = vpop.f32.mrb[0].mxu0
      %v508 = vadd.f32 %v287, %v507
      %v509 = vpop.f32.mrb[0].mxu0
      %v510 = vpop.f32.mrb[0].mxu0
      %v511 = vadd.f32 %v287, %v510
      %v512 = vpop.f32.mrb[0].mxu0
      %513 = vmatprep.mubr.bf16.mxu0 %v342
      %514 = vmatmul.mubr.bf16.gmra.mrb[0].mxu0 %v341
      %v515 = vpop.f32.mrb[0].mxu0
      %v516 = vadd.f32 %v287, %v515
      %v517 = vpop.f32.mrb[0].mxu0
      %v518 = vpop.f32.mrb[0].mxu0
      %v519 = vadd.f32 %v287, %v518
      %v520 = vpop.f32.mrb[0].mxu0
      %521 = vmatprep.mubr.bf16.mxu0 %v344
      %522 = vmatmul.mubr.bf16.gmra.mrb[0].mxu0 %v343
      %v523 = vpop.f32.mrb[0].mxu0
      %v524 = vadd.f32 %v287, %v523
      %v525 = vpop.f32.mrb[0].mxu0
      %v526 = vpop.f32.mrb[0].mxu0
      %v527 = vadd.f32 %v287, %v526
      %v528 = vpop.f32.mrb[0].mxu0
      %529 = vmatprep.mubr.bf16.mxu0 %v346
      %530 = vmatmul.mubr.bf16.gmra.mrb[0].mxu0 %v345
      %v531 = vpop.f32.mrb[0].mxu0
      %v532 = vadd.f32 %v287, %v531
      %v533 = vpop.f32.mrb[0].mxu0
      %v534 = vpop.f32.mrb[0].mxu0
      %v535 = vadd.f32 %v287, %v534
      %v536 = vpop.f32.mrb[0].mxu0
      %537 = vmatprep.mubr.bf16.mxu0 %v348
      %538 = vmatmul.mubr.bf16.gmra.mrb[0].mxu0 %v347
      %v539 = vpop.f32.mrb[0].mxu0
      %v540 = vadd.f32 %v287, %v539
      %v541 = vpop.f32.mrb[0].mxu0
      %v542 = vpop.f32.mrb[0].mxu0
      %v543 = vadd.f32 %v287, %v542
      %v544 = vpop.f32.mrb[0].mxu0
      %545 = vmatprep.mubr.bf16.mxu0 %v350
      %546 = vmatmul.mubr.bf16.gmra.mrb[0].mxu0 %v349
      %v547 = vpop.f32.mrb[0].mxu0
      %v548 = vadd.f32 %v287, %v547
      %v549 = vpop.f32.mrb[0].mxu0
      %v550 = vpop.f32.mrb[0].mxu0
      %v551 = vadd.f32 %v287, %v550
      %v552 = vpop.f32.mrb[0].mxu0
      %553 = vmatprep.mubr.bf16.mxu0 %v352
      %554 = vmatmul.mubr.bf16.gmra.mrb[0].mxu0 %v351
      %v555 = vpop.f32.mrb[0].mxu0
      %v556 = vadd.f32 %v287, %v555
      %v557 = vpop.f32.mrb[0].mxu0
      %v558 = vpop.f32.mrb[0].mxu0
      %v559 = vadd.f32 %v287, %v558
      %v560 = vpop.f32.mrb[0].mxu0
      %561 = vdwg.mxu0
      %v562 = vmax.f32 %v500, 0.0
      %v563 = vmax.f32 %v503, 0.0
      %v564 = vmax.f32 %v508, 0.0
      %v565 = vmax.f32 %v511, 0.0
      %v566 = vmax.f32 %v516, 0.0
      %v567 = vmax.f32 %v519, 0.0
      %v568 = vmax.f32 %v524, 0.0
      %v569 = vmax.f32 %v527, 0.0
      %v570 = vmax.f32 %v532, 0.0
      %v571 = vmax.f32 %v535, 0.0
      %v572 = vmax.f32 %v540, 0.0
      %v573 = vmax.f32 %v543, 0.0
      %v574 = vmax.f32 %v548, 0.0
      %v575 = vmax.f32 %v551, 0.0
      %v576 = vmax.f32 %v556, 0.0
      %v577 = vmax.f32 %v559, 0.0
      %v578 = vpack.c.bf16 %v563, %v562
      %v579 = vpack.c.bf16 %v565, %v564
      %v580 = vpack.c.bf16 %v567, %v566
      %v581 = vpack.c.bf16 %v569, %v568
      %v582 = vpack.c.bf16 %v571, %v570
      %v583 = vpack.c.bf16 %v573, %v572
      %v584 = vpack.c.bf16 %v575, %v574
      %v585 = vpack.c.bf16 %v577, %v576
      %v594 = vunpack.c.l.b16 %v578
      %v595 = vunpack.c.h.b16 %v578
      %v596 = vunpack.c.l.b16 %v579
      %v597 = vunpack.c.h.b16 %v579
      %v598 = vunpack.c.l.b16 %v580
      %v599 = vunpack.c.h.b16 %v580
      %v600 = vunpack.c.l.b16 %v581
      %v601 = vunpack.c.h.b16 %v581
      %v602 = vunpack.c.l.b16 %v582
      %v603 = vunpack.c.h.b16 %v582
      %v604 = vunpack.c.l.b16 %v583
      %v605 = vunpack.c.h.b16 %v583
      %v606 = vunpack.c.l.b16 %v584
      %v607 = vunpack.c.h.b16 %v584
      %v608 = vunpack.c.l.b16 %v585
      %v609 = vunpack.c.h.b16 %v585
      %v610 = vpack.c.b16 %v594, %v594
      %v611 = vpack.c.b16 %v595, %v595
      %v612 = vpack.c.b16 %v596, %v596
      %v613 = vpack.c.b16 %v597, %v597
      %v614 = vpack.c.b16 %v598, %v598
      %v615 = vpack.c.b16 %v599, %v599
      %v616 = vpack.c.b16 %v600, %v600
      %v617 = vpack.c.b16 %v601, %v601
      %v618 = vpack.c.b16 %v602, %v602
      %v619 = vpack.c.b16 %v603, %v603
      %v620 = vpack.c.b16 %v604, %v604
      %v621 = vpack.c.b16 %v605, %v605
      %v622 = vpack.c.b16 %v606, %v606
      %v623 = vpack.c.b16 %v607, %v607
      %v624 = vpack.c.b16 %v608, %v608
      %v625 = vpack.c.b16 %v609, %v609
      %642 = vst [vmem:[%s231] sm:$0xf] %v610
      %643 = vst [vmem:[%s231 + $0x4] sm:$0xf] %v611
      %644 = vst [vmem:[%s231 + $0x8] sm:$0xf] %v612
      %645 = vst [vmem:[%s231 + $0xc] sm:$0xf] %v613
      %646 = vst [vmem:[%s231 + $0x10] sm:$0xf] %v614
      %647 = vst [vmem:[%s231 + $0x14] sm:$0xf] %v615
      %648 = vst [vmem:[%s231 + $0x18] sm:$0xf] %v616
      %649 = vst [vmem:[%s231 + $0x1c] sm:$0xf] %v617
      %650 = vst [vmem:[%s231 + $0x20] sm:$0xf] %v618
      %651 = vst [vmem:[%s231 + $0x24] sm:$0xf] %v619
      %652 = vst [vmem:[%s231 + $0x28] sm:$0xf] %v620
      %653 = vst [vmem:[%s231 + $0x2c] sm:$0xf] %v621
      %654 = vst [vmem:[%s231 + $0x30] sm:$0xf] %v622
      %655 = vst [vmem:[%s231 + $0x34] sm:$0xf] %v623
      %656 = vst [vmem:[%s231 + $0x38] sm:$0xf] %v624
      %657 = vst [vmem:[%s231 + $0x3c] sm:$0xf] %v625
      %s658 = smul.u32 16, %s19
      %p659 = scmp.lt.s32.totalorder %s18, 3
      %s660 = scalar_select %p659, %s18, 3
      %p661 = scmp.lt.s32.totalorder %s658, 15
      %s662 = scalar_select %p661, %s658, 15
      %s663 = smul.addr %s660, 16
      %s664 = sadd.s32 %s662, %s663
      %s665 = smul.addr %s664, 4
      %s666 = scalar_lea.vmem %s3, %s665
      // Predicated region
      $region33: #{ffvae_forward.17} parent=31 // pred_check
        %p667 = pneg %p121
      $region34: #{ffvae_forward.17} parent=31 // pred_check_branch
        %669 = sbr.rel (%p667) target = $region36
      $region35: #{ffvae_forward.17} parent=31 // pred_region
        %s670 = smul.u32 16, %s19
      $region36: #{ffvae_forward.17} parent=31 // pred_fallthru
        _
    $region32: #{ffvae_forward.17} parent=5 // pred_fallthru
      _
    %p671 = scmp.le.s32.totalorder 2, %s9
    // Predicated region
    $region37: #{ffvae_forward.17} parent=5 // pred_check
      %p672 = pneg %p671
    $region38: #{ffvae_forward.17} parent=5 // pred_check_branch
      %674 = sbr.rel (%p672) target = $region40
    $region39: #{ffvae_forward.17} parent=5 // pred_region
      %s675 = ssub.s32 %s9, 2
      // Predicated region
      $region41: #{ffvae_forward.17} parent=39 // pred_check
        %p676 = pneg %p127
      $region42: #{ffvae_forward.17} parent=39 // pred_check_branch
        %678 = sbr.rel (%p676) target = $region44
      $region43: #{ffvae_forward.17} parent=39 // pred_region
        %s679 = smul.u32 16, %s21
        %p680 = scmp.lt.s32.totalorder %s20, 3
        %s681 = scalar_select %p680, %s20, 3
        %p682 = scmp.lt.s32.totalorder %s679, 15
        %s683 = scalar_select %p682, %s679, 15
        %s684 = smul.addr %s681, 16
        %s685 = sadd.s32 %s683, %s684
        %s686 = smul.addr %s685, 4
        %s687 = scalar_lea.vmem %s3, %s686
      $region44: #{ffvae_forward.17} parent=39 // pred_fallthru
        _
    $region40: #{ffvae_forward.17} parent=5 // pred_fallthru
      _
  $region6: #{ffvae_forward.17} parent=0 // loop_footer
    %s13 = sadd.s32 1, %s9
  $region7: #{ffvae_forward.17} parent=0 // loop_footer_branch
    %8 = sbr.rel target = $region3
  $region8: #{ffvae_forward.17} parent=0 // loop_exit
    _

// kernel: ffvae_forward.18
$region0: #{ffvae_forward.18}
  #allocation0 [shape = 'u32[]', space=smem, size = 0x4, offset = 0x4, fixed_abs, tag = 'smem constant byte address 0x4 - core index']
  #allocation1 [shape = 'u32[144,128]{1,0:T(1,128)}', space=vmem, size = 0x12000, scoped, tag = 'internal scratch']
  %s0 = inlined_call_operand.vmem [shape: bf16[4,512,128], index: 0, kind: input, shape index: {}]
  %s1 = inlined_call_operand.vmem [shape: bf16[4,128,128], index: 1, kind: input, shape index: {}]
  %s2 = inlined_call_operand.vmem [shape: f32[1,1,128], index: 2, kind: input, shape index: {}]
  %s3 = inlined_call_operand.vmem [shape: bf16[4,512,128], index: 3, kind: output, shape index: {}]
  %s4 = sld [smem:[#allocation0]]
  $region45: #{ffvae_forward.18} parent=0
    _
  %s6 = ssub.s32 1, %s4
  %s7 = scalar_select 0, %s6, %s4
  loop: start=0, step=1, limit=6
  $region2: #{ffvae_forward.18} parent=0 // loop_pre_header
    _
  $region3: #{ffvae_forward.18} parent=0 // loop_header
    %s9 = sphi 0, %s13
    %p10 = scmp.ge.s32.totalorder %s9, 6
    %s16 = sphi 0, %s28
    %s17 = sphi 0, %s24
    %s18 = sphi 0, %s16
    %s19 = sphi 0, %s17
    %s20 = sphi 0, %s18
    %s21 = sphi 0, %s19
    %s33 = sphi 0, %s35
    %s36 = sphi 0, %s33
    %s37 = sphi 0, %s36
    %s53 = sphi 0, %s37
    %s59 = sphi 0, %s61
    %s62 = sphi 0, %s59
    %s63 = sphi 0, %s62
    %s79 = sphi 0, %s63
    %s83 = sphi 0, %s83
    %s85 = sphi 0, %s83
    %s86 = sphi 0, %s85
    %s100 = sphi 0, %s86
    %s108 = sphi 0, %s110
    %s111 = sphi 0, %s108
    %s112 = sphi 0, %s111
    %s128 = sphi 0, %s112
  $region4: #{ffvae_forward.18} parent=0 // loop_header_branch
    %12 = sbr.rel (%p10) target = $region8
  $region5: #{ffvae_forward.18} parent=0 // loop_body
    %s14 = ssub.s32 %s9, 1
    %s15 = ssub.s32 %s9, 2
    %s22 = sadd.s32 1, %s17
    %p23 = scmp.ge.s32.totalorder %s22, 1
    %s24 = scalar_select %p23, 0, %s22
    %s25 = sadd.s32 1, %s16
    %s26 = scalar_select %p23, %s25, %s16
    %p27 = scmp.ge.s32.totalorder %s26, 4
    %s28 = scalar_select %p27, 0, %s26
    %s29 = ssub.s32 %s16, %s28
    %s30 = ssub.s32 %s17, %s24
    %s31 = sor.u32 %s29, %s30
    %p32 = scmp.eq.s32.totalorder %s31, 0
    %s34 = sadd.s32 %s33, 1
    %s35 = scalar_select %p32, %s33, %s34
    %p38 = pneg %p32
    %p39 = scmp.eq.s32.totalorder %s9, 3
    %p40 = por %p38, %p39
    %p41 = scmp.ne.s32.totalorder %s33, %s36
    %p42 = scmp.eq.s32.totalorder %s9, 0
    %p43 = por %p41, %p42
    %p44 = scmp.ne.s32.totalorder %s33, %s36
    %p45 = scmp.eq.s32.totalorder %s14, 3
    %p46 = por %p44, %p45
    %p47 = scmp.ne.s32.totalorder %s36, %s37
    %p48 = scmp.eq.s32.totalorder %s14, 0
    %p49 = por %p47, %p48
    %p50 = scmp.ne.s32.totalorder %s36, %s37
    %p51 = scmp.eq.s32.totalorder %s15, 3
    %p52 = por %p50, %p51
    %p54 = scmp.ne.s32.totalorder %s37, %s53
    %p55 = scmp.eq.s32.totalorder %s15, 0
    %p56 = por %p54, %p55
    %s57 = ssub.s32 %s16, %s28
    %p58 = scmp.eq.s32.totalorder %s57, 0
    %s60 = sadd.s32 %s59, 1
    %s61 = scalar_select %p58, %s59, %s60
    %p64 = pneg %p58
    %p65 = scmp.eq.s32.totalorder %s9, 3
    %p66 = por %p64, %p65
    %p67 = scmp.ne.s32.totalorder %s59, %s62
    %p68 = scmp.eq.s32.totalorder %s9, 0
    %p69 = por %p67, %p68
    %p70 = scmp.ne.s32.totalorder %s59, %s62
    %p71 = scmp.eq.s32.totalorder %s14, 3
    %p72 = por %p70, %p71
    %p73 = scmp.ne.s32.totalorder %s62, %s63
    %p74 = scmp.eq.s32.totalorder %s14, 0
    %p75 = por %p73, %p74
    %p76 = scmp.ne.s32.totalorder %s62, %s63
    %p77 = scmp.eq.s32.totalorder %s15, 3
    %p78 = por %p76, %p77
    %p80 = scmp.ne.s32.totalorder %s63, %s79
    %p81 = scmp.eq.s32.totalorder %s15, 0
    %p82 = por %p80, %p81
    %s84 = sadd.s32 %s83, 1
    %p87 = scmp.eq.s32.totalorder %s9, 3
    %p88 = scmp.ne.s32.totalorder %s83, %s85
    %p89 = scmp.eq.s32.totalorder %s9, 0
    %p90 = por %p88, %p89
    %p91 = scmp.ne.s32.totalorder %s83, %s85
    %p92 = scmp.eq.s32.totalorder %s14, 3
    %p93 = por %p91, %p92
    %p94 = scmp.ne.s32.totalorder %s85, %s86
    %p95 = scmp.eq.s32.totalorder %s14, 0
    %p96 = por %p94, %p95
    %p97 = scmp.ne.s32.totalorder %s85, %s86
    %p98 = scmp.eq.s32.totalorder %s15, 3
    %p99 = por %p97, %p98
    %p101 = scmp.ne.s32.totalorder %s86, %s100
    %p102 = scmp.eq.s32.totalorder %s15, 0
    %p103 = por %p101, %p102
    %s104 = ssub.s32 %s16, %s28
    %s105 = ssub.s32 %s17, %s24
    %s106 = sor.u32 %s104, %s105
    %p107 = scmp.eq.s32.totalorder %s106, 0
    %s109 = sadd.s32 %s108, 1
    %s110 = scalar_select %p107, %s108, %s109
    %p113 = pneg %p107
    %p114 = scmp.eq.s32.totalorder %s9, 3
    %p115 = por %p113, %p114
    %p116 = scmp.ne.s32.totalorder %s108, %s111
    %p117 = scmp.eq.s32.totalorder %s9, 0
    %p118 = por %p116, %p117
    %p119 = scmp.ne.s32.totalorder %s108, %s111
    %p120 = scmp.eq.s32.totalorder %s14, 3
    %p121 = por %p119, %p120
    %p122 = scmp.ne.s32.totalorder %s111, %s112
    %p123 = scmp.eq.s32.totalorder %s14, 0
    %p124 = por %p122, %p123
    %p125 = scmp.ne.s32.totalorder %s111, %s112
    %p126 = scmp.eq.s32.totalorder %s15, 3
    %p127 = por %p125, %p126
    %p129 = scmp.ne.s32.totalorder %s112, %s128
    %p130 = scmp.eq.s32.totalorder %s15, 0
    %p131 = por %p129, %p130
    %p132 = scmp.le.s32.totalorder 1, %s9
    %p133 = scmp.lt.s32.totalorder %s9, 5
    %p134 = pnand %p132, %p133
    %p135 = pneg %p134
    // Predicated region
    $region9: #{ffvae_forward.18} parent=5 // pred_check
      _
    $region10: #{ffvae_forward.18} parent=5 // pred_check_branch
      %137 = sbr.rel (%p134) target = $region12
    $region11: #{ffvae_forward.18} parent=5 // pred_region
      %s138 = ssub.s32 %s9, 1
      // Predicated region
      $region13: #{ffvae_forward.18} parent=11 // pred_check
        %p139 = pneg %p96
      $region14: #{ffvae_forward.18} parent=11 // pred_check_branch
        %141 = sbr.rel (%p139) target = $region16
      $region15: #{ffvae_forward.18} parent=11 // pred_region
        _
      $region16: #{ffvae_forward.18} parent=11 // pred_fallthru
        _
    $region12: #{ffvae_forward.18} parent=5 // pred_fallthru
      _
    %p142 = scmp.lt.s32.totalorder %s9, 4
    // Predicated region
    $region17: #{ffvae_forward.18} parent=5 // pred_check
      %p143 = pneg %p142
    $region18: #{ffvae_forward.18} parent=5 // pred_check_branch
      %145 = sbr.rel (%p143) target = $region20
    $region19: #{ffvae_forward.18} parent=5 // pred_region
      // Predicated region
      $region21: #{ffvae_forward.18} parent=19 // pred_check
        %p146 = pneg %p43
      $region22: #{ffvae_forward.18} parent=19 // pred_check_branch
        %148 = sbr.rel (%p146) target = $region24
      $region23: #{ffvae_forward.18} parent=19 // pred_region
        %s149 = smul.u32 64, %s17
        %p150 = scmp.lt.s32.totalorder %s16, 3
        %s151 = scalar_select %p150, %s16, 3
        %p152 = scmp.lt.s32.totalorder %s149, 63
        %s153 = scalar_select %p152, %s149, 63
        %s154 = smul.addr %s151, 64
        %s155 = sadd.s32 %s153, %s154
        %s156 = smul.addr %s155, 4
        %s157 = scalar_lea.vmem %s0, %s156
        %s158 = smul.u32 64, %s17
      $region24: #{ffvae_forward.18} parent=19 // pred_fallthru
        _
      // Predicated region
      $region25: #{ffvae_forward.18} parent=19 // pred_check
        %p159 = pneg %p69
      $region26: #{ffvae_forward.18} parent=19 // pred_check_branch
        %161 = sbr.rel (%p159) target = $region28
      $region27: #{ffvae_forward.18} parent=19 // pred_region
        %p162 = scmp.lt.s32.totalorder %s16, 3
        %s163 = scalar_select %p162, %s16, 3
        %s164 = smul.addr %s163, 16
        %s165 = smul.addr %s164, 4
        %s166 = scalar_lea.vmem %s1, %s165
      $region28: #{ffvae_forward.18} parent=19 // pred_fallthru
        _
    $region20: #{ffvae_forward.18} parent=5 // pred_fallthru
      _
    %p167 = scmp.le.s32.totalorder 1, %s9
    %p168 = scmp.lt.s32.totalorder %s9, 5
    %p169 = pnand %p167, %p168
    %p170 = pneg %p169
    // Predicated region
    $region29: #{ffvae_forward.18} parent=5 // pred_check
      _
    $region30: #{ffvae_forward.18} parent=5 // pred_check_branch
      %172 = sbr.rel (%p169) target = $region32
    $region31: #{ffvae_forward.18} parent=5 // pred_region
      %s173 = ssub.s32 %s9, 1
      %s174 = smul.u32 64, %s19
      %p175 = scmp.lt.s32.totalorder %s18, 3
      %s176 = scalar_select %p175, %s18, 3
      %p177 = scmp.lt.s32.totalorder %s174, 63
      %s178 = scalar_select %p177, %s174, 63
      %s179 = smul.addr %s176, 64
      %s180 = sadd.s32 %s178, %s179
      %s181 = smul.addr %s180, 4
      %s182 = scalar_lea.vmem %s0, %s181
      %p183 = pneg %p49
      %p184 = pneg %p46
      %p185 = scmp.lt.s32.totalorder %s18, 3
      %s186 = scalar_select %p185, %s18, 3
      %s187 = smul.addr %s186, 16
      %s188 = smul.addr %s187, 4
      %s189 = scalar_lea.vmem %s1, %s188
      %p190 = pneg %p75
      %p191 = pneg %p72
      %p192 = pneg %p96
      %p193 = pneg %p93
      %p194 = pneg %p124
      %p195 = pneg %p121
      %s196 = smul.u32 64, %s19
      %p197 = scmp.lt.s32.totalorder %s18, 3
      %s198 = scalar_select %p197, %s18, 3
      %p199 = scmp.lt.s32.totalorder %s196, 63
      %s200 = scalar_select %p199, %s196, 63
      %s201 = smul.addr %s198, 64
      %s202 = sadd.s32 %s200, %s201
      %s203 = smul.addr %s202, 4
      %s204 = scalar_lea.vmem %s3, %s203
      %s205 = smul.u32 64, %s19
      %p206 = scmp.lt.s32.totalorder %s18, 3
      %s207 = scalar_select %p206, %s18, 3
      %p208 = scmp.lt.s32.totalorder %s205, 63
      %s209 = scalar_select %p208, %s205, 63
      %s210 = smul.addr %s207, 64
      %s211 = sadd.s32 %s209, %s210
      %s212 = smul.addr %s211, 4
      %s213 = scalar_lea.vmem %s0, %s212
      %s214 = smul.u32 64, %s19
      %p215 = scmp.lt.s32.totalorder %s18, 3
      %s216 = scalar_select %p215, %s18, 3
      %s217 = smul.addr %s216, 16
      %s218 = smul.addr %s217, 4
      %s219 = scalar_lea.vmem %s1, %s218
      %s220 = smul.u32 64, %s19
      %p221 = scmp.lt.s32.totalorder %s18, 3
      %s222 = scalar_select %p221, %s18, 3
      %p223 = scmp.lt.s32.totalorder %s220, 63
      %s224 = scalar_select %p223, %s220, 63
      %s225 = smul.addr %s222, 64
      %s226 = sadd.s32 %s224, %s225
      %s227 = smul.addr %s226, 4
      %s228 = scalar_lea.vmem %s3, %s227
      %s229 = smul.u32 64, %s19
      %v231 = vld [vmem:[%s213] sm:$0xf]
      %v232 = vld [vmem:[%s213 + $0x4] sm:$0xf]
      %v233 = vld [vmem:[%s213 + $0x8] sm:$0xf]
      %v234 = vld [vmem:[%s213 + $0xc] sm:$0xf]
      %v235 = vld [vmem:[%s213 + $0x10] sm:$0xf]
      %v236 = vld [vmem:[%s213 + $0x14] sm:$0xf]
      %v237 = vld [vmem:[%s213 + $0x18] sm:$0xf]
      %v238 = vld [vmem:[%s213 + $0x1c] sm:$0xf]
      %v239 = vld [vmem:[%s213 + $0x20] sm:$0xf]
      %v240 = vld [vmem:[%s213 + $0x24] sm:$0xf]
      %v241 = vld [vmem:[%s213 + $0x28] sm:$0xf]
      %v242 = vld [vmem:[%s213 + $0x2c] sm:$0xf]
      %v243 = vld [vmem:[%s213 + $0x30] sm:$0xf]
      %v244 = vld [vmem:[%s213 + $0x34] sm:$0xf]
      %v245 = vld [vmem:[%s213 + $0x38] sm:$0xf]
      %v246 = vld [vmem:[%s213 + $0x3c] sm:$0xf]
      %v247 = vld [vmem:[%s213 + $0x40] sm:$0xf]
      %v248 = vld [vmem:[%s213 + $0x44] sm:$0xf]
      %v249 = vld [vmem:[%s213 + $0x48] sm:$0xf]
      %v250 = vld [vmem:[%s213 + $0x4c] sm:$0xf]
      %v251 = vld [vmem:[%s213 + $0x50] sm:$0xf]
      %v252 = vld [vmem:[%s213 + $0x54] sm:$0xf]
      %v253 = vld [vmem:[%s213 + $0x58] sm:$0xf]
      %v254 = vld [vmem:[%s213 + $0x5c] sm:$0xf]
      %v255 = vld [vmem:[%s213 + $0x60] sm:$0xf]
      %v256 = vld [vmem:[%s213 + $0x64] sm:$0xf]
      %v257 = vld [vmem:[%s213 + $0x68] sm:$0xf]
      %v258 = vld [vmem:[%s213 + $0x6c] sm:$0xf]
      %v259 = vld [vmem:[%s213 + $0x70] sm:$0xf]
      %v260 = vld [vmem:[%s213 + $0x74] sm:$0xf]
      %v261 = vld [vmem:[%s213 + $0x78] sm:$0xf]
      %v262 = vld [vmem:[%s213 + $0x7c] sm:$0xf]
      %v263 = vld [vmem:[%s213 + $0x80] sm:$0xf]
      %v264 = vld [vmem:[%s213 + $0x84] sm:$0xf]
      %v265 = vld [vmem:[%s213 + $0x88] sm:$0xf]
      %v266 = vld [vmem:[%s213 + $0x8c] sm:$0xf]
      %v267 = vld [vmem:[%s213 + $0x90] sm:$0xf]
      %v268 = vld [vmem:[%s213 + $0x94] sm:$0xf]
      %v269 = vld [vmem:[%s213 + $0x98] sm:$0xf]
      %v270 = vld [vmem:[%s213 + $0x9c] sm:$0xf]
      %v271 = vld [vmem:[%s213 + $0xa0] sm:$0xf]
      %v272 = vld [vmem:[%s213 + $0xa4] sm:$0xf]
      %v273 = vld [vmem:[%s213 + $0xa8] sm:$0xf]
      %v274 = vld [vmem:[%s213 + $0xac] sm:$0xf]
      %v275 = vld [vmem:[%s213 + $0xb0] sm:$0xf]
      %v276 = vld [vmem:[%s213 + $0xb4] sm:$0xf]
      %v277 = vld [vmem:[%s213 + $0xb8] sm:$0xf]
      %v278 = vld [vmem:[%s213 + $0xbc] sm:$0xf]
      %v279 = vld [vmem:[%s213 + $0xc0] sm:$0xf]
      %v280 = vld [vmem:[%s213 + $0xc4] sm:$0xf]
      %v281 = vld [vmem:[%s213 + $0xc8] sm:$0xf]
      %v282 = vld [vmem:[%s213 + $0xcc] sm:$0xf]
      %v283 = vld [vmem:[%s213 + $0xd0] sm:$0xf]
      %v284 = vld [vmem:[%s213 + $0xd4] sm:$0xf]
      %v285 = vld [vmem:[%s213 + $0xd8] sm:$0xf]
      %v286 = vld [vmem:[%s213 + $0xdc] sm:$0xf]
      %v287 = vld [vmem:[%s213 + $0xe0] sm:$0xf]
      %v288 = vld [vmem:[%s213 + $0xe4] sm:$0xf]
      %v289 = vld [vmem:[%s213 + $0xe8] sm:$0xf]
      %v290 = vld [vmem:[%s213 + $0xec] sm:$0xf]
      %v291 = vld [vmem:[%s213 + $0xf0] sm:$0xf]
      %v292 = vld [vmem:[%s213 + $0xf4] sm:$0xf]
      %v293 = vld [vmem:[%s213 + $0xf8] sm:$0xf]
      %v294 = vld [vmem:[%s213 + $0xfc] sm:$0xf]
      %v295 = vld [vmem:[%s219] sm:$0xf]
      %v296 = vld [vmem:[%s219 + $0x4] sm:$0xf]
      %v297 = vld [vmem:[%s219 + $0x8] sm:$0xf]
      %v298 = vld [vmem:[%s219 + $0xc] sm:$0xf]
      %v299 = vld [vmem:[%s219 + $0x10] sm:$0xf]
      %v300 = vld [vmem:[%s219 + $0x14] sm:$0xf]
      %v301 = vld [vmem:[%s219 + $0x18] sm:$0xf]
      %v302 = vld [vmem:[%s219 + $0x1c] sm:$0xf]
      %v303 = vld [vmem:[%s219 + $0x20] sm:$0xf]
      %v304 = vld [vmem:[%s219 + $0x24] sm:$0xf]
      %v305 = vld [vmem:[%s219 + $0x28] sm:$0xf]
      %v306 = vld [vmem:[%s219 + $0x2c] sm:$0xf]
      %v307 = vld [vmem:[%s219 + $0x30] sm:$0xf]
      %v308 = vld [vmem:[%s219 + $0x34] sm:$0xf]
      %v309 = vld [vmem:[%s219 + $0x38] sm:$0xf]
      %v310 = vld [vmem:[%s219 + $0x3c] sm:$0xf]
      %v311 = vld [vmem:[%s2] sm:$0x1]
      %v313 = vlaneseq
      %v314 = vshrl.u32 %v313, 7
      %v315 = vsub.s32 0, %v314
      %v316 = vrot.slane %v311, %v315
      %v382 = vunpack.c.l.b16 %v231
      %v383 = vunpack.c.l.b16 %v232
      %v384 = vunpack.c.l.b16 %v233
      %v385 = vunpack.c.l.b16 %v234
      %v386 = vunpack.c.l.b16 %v235
      %v387 = vunpack.c.l.b16 %v236
      %v388 = vunpack.c.l.b16 %v237
      %v389 = vunpack.c.l.b16 %v238
      %v390 = vunpack.c.l.b16 %v239
      %v391 = vunpack.c.l.b16 %v240
      %v392 = vunpack.c.l.b16 %v241
      %v393 = vunpack.c.l.b16 %v242
      %v394 = vunpack.c.l.b16 %v243
      %v395 = vunpack.c.l.b16 %v244
      %v396 = vunpack.c.l.b16 %v245
      %v397 = vunpack.c.l.b16 %v246
      %v398 = vunpack.c.l.b16 %v247
      %v399 = vunpack.c.l.b16 %v248
      %v400 = vunpack.c.l.b16 %v249
      %v401 = vunpack.c.l.b16 %v250
      %v402 = vunpack.c.l.b16 %v251
      %v403 = vunpack.c.l.b16 %v252
      %v404 = vunpack.c.l.b16 %v253
      %v405 = vunpack.c.l.b16 %v254
      %v406 = vunpack.c.l.b16 %v255
      %v407 = vunpack.c.l.b16 %v256
      %v408 = vunpack.c.l.b16 %v257
      %v409 = vunpack.c.l.b16 %v258
      %v410 = vunpack.c.l.b16 %v259
      %v411 = vunpack.c.l.b16 %v260
      %v412 = vunpack.c.l.b16 %v261
      %v413 = vunpack.c.l.b16 %v262
      %v414 = vunpack.c.l.b16 %v263
      %v415 = vunpack.c.l.b16 %v264
      %v416 = vunpack.c.l.b16 %v265
      %v417 = vunpack.c.l.b16 %v266
      %v418 = vunpack.c.l.b16 %v267
      %v419 = vunpack.c.l.b16 %v268
      %v420 = vunpack.c.l.b16 %v269
      %v421 = vunpack.c.l.b16 %v270
      %v422 = vunpack.c.l.b16 %v271
      %v423 = vunpack.c.l.b16 %v272
      %v424 = vunpack.c.l.b16 %v273
      %v425 = vunpack.c.l.b16 %v274
      %v426 = vunpack.c.l.b16 %v275
      %v427 = vunpack.c.l.b16 %v276
      %v428 = vunpack.c.l.b16 %v277
      %v429 = vunpack.c.l.b16 %v278
      %v430 = vunpack.c.l.b16 %v279
      %v431 = vunpack.c.l.b16 %v280
      %v432 = vunpack.c.l.b16 %v281
      %v433 = vunpack.c.l.b16 %v282
      %v434 = vunpack.c.l.b16 %v283
      %v435 = vunpack.c.l.b16 %v284
      %v436 = vunpack.c.l.b16 %v285
      %v437 = vunpack.c.l.b16 %v286
      %v438 = vunpack.c.l.b16 %v287
      %v439 = vunpack.c.l.b16 %v288
      %v440 = vunpack.c.l.b16 %v289
      %v441 = vunpack.c.l.b16 %v290
      %v442 = vunpack.c.l.b16 %v291
      %v443 = vunpack.c.l.b16 %v292
      %v444 = vunpack.c.l.b16 %v293
      %v445 = vunpack.c.l.b16 %v294
      %v446 = vpack.c.b16 %v383, %v382
      %v447 = vpack.c.b16 %v385, %v384
      %v448 = vpack.c.b16 %v387, %v386
      %v449 = vpack.c.b16 %v389, %v388
      %v450 = vpack.c.b16 %v391, %v390
      %v451 = vpack.c.b16 %v393, %v392
      %v452 = vpack.c.b16 %v395, %v394
      %v453 = vpack.c.b16 %v397, %v396
      %v454 = vpack.c.b16 %v399, %v398
      %v455 = vpack.c.b16 %v401, %v400
      %v456 = vpack.c.b16 %v403, %v402
      %v457 = vpack.c.b16 %v405, %v404
      %v458 = vpack.c.b16 %v407, %v406
      %v459 = vpack.c.b16 %v409, %v408
      %v460 = vpack.c.b16 %v411, %v410
      %v461 = vpack.c.b16 %v413, %v412
      %v462 = vpack.c.b16 %v415, %v414
      %v463 = vpack.c.b16 %v417, %v416
      %v464 = vpack.c.b16 %v419, %v418
      %v465 = vpack.c.b16 %v421, %v420
      %v466 = vpack.c.b16 %v423, %v422
      %v467 = vpack.c.b16 %v425, %v424
      %v468 = vpack.c.b16 %v427, %v426
      %v469 = vpack.c.b16 %v429, %v428
      %v470 = vpack.c.b16 %v431, %v430
      %v471 = vpack.c.b16 %v433, %v432
      %v472 = vpack.c.b16 %v435, %v434
      %v473 = vpack.c.b16 %v437, %v436
      %v474 = vpack.c.b16 %v439, %v438
      %v475 = vpack.c.b16 %v441, %v440
      %v476 = vpack.c.b16 %v443, %v442
      %v477 = vpack.c.b16 %v445, %v444
      %v526 = vunpack.c.l.b16 %v295
      %v527 = vunpack.c.l.b16 %v296
      %v528 = vunpack.c.l.b16 %v297
      %v529 = vunpack.c.l.b16 %v298
      %v530 = vunpack.c.l.b16 %v299
      %v531 = vunpack.c.l.b16 %v300
      %v532 = vunpack.c.l.b16 %v301
      %v533 = vunpack.c.l.b16 %v302
      %v534 = vunpack.c.l.b16 %v303
      %v535 = vunpack.c.l.b16 %v304
      %v536 = vunpack.c.l.b16 %v305
      %v537 = vunpack.c.l.b16 %v306
      %v538 = vunpack.c.l.b16 %v307
      %v539 = vunpack.c.l.b16 %v308
      %v540 = vunpack.c.l.b16 %v309
      %v541 = vunpack.c.l.b16 %v310
      %v542 = vpack.c.b16 %v527, %v526
      %v543 = vpack.c.b16 %v529, %v528
      %v544 = vpack.c.b16 %v531, %v530
      %v545 = vpack.c.b16 %v533, %v532
      %v546 = vpack.c.b16 %v535, %v534
      %v547 = vpack.c.b16 %v537, %v536
      %v548 = vpack.c.b16 %v539, %v538
      %v549 = vpack.c.b16 %v541, %v540
      %558 = vmatprep.subr.bf16.mxu0 0
      %559 = vmatpush1.bf16.msra.mxu0 %v542
      %560 = vmatprep.subr.bf16.mxu0 0
      %561 = vmatpush1.bf16.msra.mxu0 %v543
      %562 = vmatprep.subr.bf16.mxu0 0
      %563 = vmatpush1.bf16.msra.mxu0 %v544
      %564 = vmatprep.subr.bf16.mxu0 0
      %565 = vmatpush1.bf16.msra.mxu0 %v545
      %566 = vmatprep.subr.bf16.mxu0 0
      %567 = vmatpush1.bf16.msra.mxu0 %v546
      %568 = vmatprep.subr.bf16.mxu0 0
      %569 = vmatpush1.bf16.msra.mxu0 %v547
      %570 = vmatprep.subr.bf16.mxu0 0
      %571 = vmatpush1.bf16.msra.mxu0 %v548
      %572 = vmatprep.subr.bf16.mxu0 0
      %573 = vmatpush1.bf16.msra.mxu0 %v549
      %574 = vmatprep.subr.bf16.mxu0 0
      %575 = vmatpush1.bf16.msra.mxu0 0
      %576 = vmatprep.subr.bf16.mxu0 0
      %577 = vmatpush1.bf16.msra.mxu0 0
      %578 = vmatprep.subr.bf16.mxu0 0
      %579 = vmatpush1.bf16.msra.mxu0 0
      %580 = vmatprep.subr.bf16.mxu0 0
      %581 = vmatpush1.bf16.msra.mxu0 0
      %582 = vmatprep.subr.bf16.mxu0 0
      %583 = vmatpush1.bf16.msra.mxu0 0
      %584 = vmatprep.subr.bf16.mxu0 0
      %585 = vmatpush1.bf16.msra.mxu0 0
      %586 = vmatprep.subr.bf16.mxu0 0
      %587 = vmatpush1.bf16.msra.mxu0 0
      %588 = vmatprep.subr.bf16.mxu0 0
      %589 = vmatpush1.bf16.msra.mxu0 0
      %590 = vmatprep.mubr.bf16.mxu0 0
      %591 = vmatmul.mubr.bf16.gmra.mrb[0].mxu0 %v446
      %v592 = vpop.f32.mrb[0].mxu0
      %v593 = vadd.f32 %v316, %v592
      %v594 = vpop.f32.mrb[0].mxu0
      %v595 = vpop.f32.mrb[0].mxu0
      %v596 = vadd.f32 %v316, %v595
      %v597 = vpop.f32.mrb[0].mxu0
      %598 = vmatprep.mubr.bf16.mxu0 0
      %599 = vmatmul.mubr.bf16.gmra.mrb[0].mxu0 %v447
      %v600 = vpop.f32.mrb[0].mxu0
      %v601 = vadd.f32 %v316, %v600
      %v602 = vpop.f32.mrb[0].mxu0
      %v603 = vpop.f32.mrb[0].mxu0
      %v604 = vadd.f32 %v316, %v603
      %v605 = vpop.f32.mrb[0].mxu0
      %606 = vmatprep.mubr.bf16.mxu0 0
      %607 = vmatmul.mubr.bf16.gmra.mrb[0].mxu0 %v448
      %v608 = vpop.f32.mrb[0].mxu0
      %v609 = vadd.f32 %v316, %v608
      %v610 = vpop.f32.mrb[0].mxu0
      %v611 = vpop.f32.mrb[0].mxu0
      %v612 = vadd.f32 %v316, %v611
      %v613 = vpop.f32.mrb[0].mxu0
      %614 = vmatprep.mubr.bf16.mxu0 0
      %615 = vmatmul.mubr.bf16.gmra.mrb[0].mxu0 %v449
      %v616 = vpop.f32.mrb[0].mxu0
      %v617 = vadd.f32 %v316, %v616
      %v618 = vpop.f32.mrb[0].mxu0
      %v619 = vpop.f32.mrb[0].mxu0
      %v620 = vadd.f32 %v316, %v619
      %v621 = vpop.f32.mrb[0].mxu0
      %622 = vmatprep.mubr.bf16.mxu0 0
      %623 = vmatmul.mubr.bf16.gmra.mrb[0].mxu0 %v450
      %v624 = vpop.f32.mrb[0].mxu0
      %v625 = vadd.f32 %v316, %v624
      %v626 = vpop.f32.mrb[0].mxu0
      %v627 = vpop.f32.mrb[0].mxu0
      %v628 = vadd.f32 %v316, %v627
      %v629 = vpop.f32.mrb[0].mxu0
      %630 = vmatprep.mubr.bf16.mxu0 0
      %631 = vmatmul.mubr.bf16.gmra.mrb[0].mxu0 %v451
      %v632 = vpop.f32.mrb[0].mxu0
      %v633 = vadd.f32 %v316, %v632
      %v634 = vpop.f32.mrb[0].mxu0
      %v635 = vpop.f32.mrb[0].mxu0
      %v636 = vadd.f32 %v316, %v635
      %v637 = vpop.f32.mrb[0].mxu0
      %638 = vmatprep.mubr.bf16.mxu0 0
      %639 = vmatmul.mubr.bf16.gmra.mrb[0].mxu0 %v452
      %v640 = vpop.f32.mrb[0].mxu0
      %v641 = vadd.f32 %v316, %v640
      %v642 = vpop.f32.mrb[0].mxu0
      %v643 = vpop.f32.mrb[0].mxu0
      %v644 = vadd.f32 %v316, %v643
      %v645 = vpop.f32.mrb[0].mxu0
      %646 = vmatprep.mubr.bf16.mxu0 0
      %647 = vmatmul.mubr.bf16.gmra.mrb[0].mxu0 %v453
      %v648 = vpop.f32.mrb[0].mxu0
      %v649 = vadd.f32 %v316, %v648
      %v650 = vpop.f32.mrb[0].mxu0
      %v651 = vpop.f32.mrb[0].mxu0
      %v652 = vadd.f32 %v316, %v651
      %v653 = vpop.f32.mrb[0].mxu0
      %654 = vmatprep.mubr.bf16.mxu0 0
      %655 = vmatmul.mubr.bf16.gmra.mrb[0].mxu0 %v454
      %v656 = vpop.f32.mrb[0].mxu0
      %v657 = vadd.f32 %v316, %v656
      %v658 = vpop.f32.mrb[0].mxu0
      %v659 = vpop.f32.mrb[0].mxu0
      %v660 = vadd.f32 %v316, %v659
      %v661 = vpop.f32.mrb[0].mxu0
      %662 = vmatprep.mubr.bf16.mxu0 0
      %663 = vmatmul.mubr.bf16.gmra.mrb[0].mxu0 %v455
      %v664 = vpop.f32.mrb[0].mxu0
      %v665 = vadd.f32 %v316, %v664
      %v666 = vpop.f32.mrb[0].mxu0
      %v667 = vpop.f32.mrb[0].mxu0
      %v668 = vadd.f32 %v316, %v667
      %v669 = vpop.f32.mrb[0].mxu0
      %670 = vmatprep.mubr.bf16.mxu0 0
      %671 = vmatmul.mubr.bf16.gmra.mrb[0].mxu0 %v456
      %v672 = vpop.f32.mrb[0].mxu0
      %v673 = vadd.f32 %v316, %v672
      %v674 = vpop.f32.mrb[0].mxu0
      %v675 = vpop.f32.mrb[0].mxu0
      %v676 = vadd.f32 %v316, %v675
      %v677 = vpop.f32.mrb[0].mxu0
      %678 = vmatprep.mubr.bf16.mxu0 0
      %679 = vmatmul.mubr.bf16.gmra.mrb[0].mxu0 %v457
      %v680 = vpop.f32.mrb[0].mxu0
      %v681 = vadd.f32 %v316, %v680
      %v682 = vpop.f32.mrb[0].mxu0
      %v683 = vpop.f32.mrb[0].mxu0
      %v684 = vadd.f32 %v316, %v683
      %v685 = vpop.f32.mrb[0].mxu0
      %686 = vmatprep.mubr.bf16.mxu0 0
      %687 = vmatmul.mubr.bf16.gmra.mrb[0].mxu0 %v458
      %v688 = vpop.f32.mrb[0].mxu0
      %v689 = vadd.f32 %v316, %v688
      %v690 = vpop.f32.mrb[0].mxu0
      %v691 = vpop.f32.mrb[0].mxu0
      %v692 = vadd.f32 %v316, %v691
      %v693 = vpop.f32.mrb[0].mxu0
      %694 = vmatprep.mubr.bf16.mxu0 0
      %695 = vmatmul.mubr.bf16.gmra.mrb[0].mxu0 %v459
      %v696 = vpop.f32.mrb[0].mxu0
      %v697 = vadd.f32 %v316, %v696
      %v698 = vpop.f32.mrb[0].mxu0
      %v699 = vpop.f32.mrb[0].mxu0
      %v700 = vadd.f32 %v316, %v699
      %v701 = vpop.f32.mrb[0].mxu0
      %702 = vmatprep.mubr.bf16.mxu0 0
      %703 = vmatmul.mubr.bf16.gmra.mrb[0].mxu0 %v460
      %v704 = vpop.f32.mrb[0].mxu0
      %v705 = vadd.f32 %v316, %v704
      %v706 = vpop.f32.mrb[0].mxu0
      %v707 = vpop.f32.mrb[0].mxu0
      %v708 = vadd.f32 %v316, %v707
      %v709 = vpop.f32.mrb[0].mxu0
      %710 = vmatprep.mubr.bf16.mxu0 0
      %711 = vmatmul.mubr.bf16.gmra.mrb[0].mxu0 %v461
      %v712 = vpop.f32.mrb[0].mxu0
      %v713 = vadd.f32 %v316, %v712
      %v714 = vpop.f32.mrb[0].mxu0
      %v715 = vpop.f32.mrb[0].mxu0
      %v716 = vadd.f32 %v316, %v715
      %v717 = vpop.f32.mrb[0].mxu0
      %718 = vmatprep.mubr.bf16.mxu0 0
      %719 = vmatmul.mubr.bf16.gmra.mrb[0].mxu0 %v462
      %v720 = vpop.f32.mrb[0].mxu0
      %v721 = vadd.f32 %v316, %v720
      %v722 = vpop.f32.mrb[0].mxu0
      %v723 = vpop.f32.mrb[0].mxu0
      %v724 = vadd.f32 %v316, %v723
      %v725 = vpop.f32.mrb[0].mxu0
      %726 = vmatprep.mubr.bf16.mxu0 0
      %727 = vmatmul.mubr.bf16.gmra.mrb[0].mxu0 %v463
      %v728 = vpop.f32.mrb[0].mxu0
      %v729 = vadd.f32 %v316, %v728
      %v730 = vpop.f32.mrb[0].mxu0
      %v731 = vpop.f32.mrb[0].mxu0
      %v732 = vadd.f32 %v316, %v731
      %v733 = vpop.f32.mrb[0].mxu0
      %734 = vmatprep.mubr.bf16.mxu0 0
      %735 = vmatmul.mubr.bf16.gmra.mrb[0].mxu0 %v464
      %v736 = vpop.f32.mrb[0].mxu0
      %v737 = vadd.f32 %v316, %v736
      %v738 = vpop.f32.mrb[0].mxu0
      %v739 = vpop.f32.mrb[0].mxu0
      %v740 = vadd.f32 %v316, %v739
      %v741 = vpop.f32.mrb[0].mxu0
      %742 = vmatprep.mubr.bf16.mxu0 0
      %743 = vmatmul.mubr.bf16.gmra.mrb[0].mxu0 %v465
      %v744 = vpop.f32.mrb[0].mxu0
      %v745 = vadd.f32 %v316, %v744
      %v746 = vpop.f32.mrb[0].mxu0
      %v747 = vpop.f32.mrb[0].mxu0
      %v748 = vadd.f32 %v316, %v747
      %v749 = vpop.f32.mrb[0].mxu0
      %750 = vmatprep.mubr.bf16.mxu0 0
      %751 = vmatmul.mubr.bf16.gmra.mrb[0].mxu0 %v466
      %v752 = vpop.f32.mrb[0].mxu0
      %v753 = vadd.f32 %v316, %v752
      %v754 = vpop.f32.mrb[0].mxu0
      %v755 = vpop.f32.mrb[0].mxu0
      %v756 = vadd.f32 %v316, %v755
      %v757 = vpop.f32.mrb[0].mxu0
      %758 = vmatprep.mubr.bf16.mxu0 0
      %759 = vmatmul.mubr.bf16.gmra.mrb[0].mxu0 %v467
      %v760 = vpop.f32.mrb[0].mxu0
      %v761 = vadd.f32 %v316, %v760
      %v762 = vpop.f32.mrb[0].mxu0
      %v763 = vpop.f32.mrb[0].mxu0
      %v764 = vadd.f32 %v316, %v763
      %v765 = vpop.f32.mrb[0].mxu0
      %766 = vmatprep.mubr.bf16.mxu0 0
      %767 = vmatmul.mubr.bf16.gmra.mrb[0].mxu0 %v468
      %v768 = vpop.f32.mrb[0].mxu0
      %v769 = vadd.f32 %v316, %v768
      %v770 = vpop.f32.mrb[0].mxu0
      %v771 = vpop.f32.mrb[0].mxu0
      %v772 = vadd.f32 %v316, %v771
      %v773 = vpop.f32.mrb[0].mxu0
      %774 = vmatprep.mubr.bf16.mxu0 0
      %775 = vmatmul.mubr.bf16.gmra.mrb[0].mxu0 %v469
      %v776 = vpop.f32.mrb[0].mxu0
      %v777 = vadd.f32 %v316, %v776
      %v778 = vpop.f32.mrb[0].mxu0
      %v779 = vpop.f32.mrb[0].mxu0
      %v780 = vadd.f32 %v316, %v779
      %v781 = vpop.f32.mrb[0].mxu0
      %782 = vmatprep.mubr.bf16.mxu0 0
      %783 = vmatmul.mubr.bf16.gmra.mrb[0].mxu0 %v470
      %v784 = vpop.f32.mrb[0].mxu0
      %v785 = vadd.f32 %v316, %v784
      %v786 = vpop.f32.mrb[0].mxu0
      %v787 = vpop.f32.mrb[0].mxu0
      %v788 = vadd.f32 %v316, %v787
      %v789 = vpop.f32.mrb[0].mxu0
      %790 = vmatprep.mubr.bf16.mxu0 0
      %791 = vmatmul.mubr.bf16.gmra.mrb[0].mxu0 %v471
      %v792 = vpop.f32.mrb[0].mxu0
      %v793 = vadd.f32 %v316, %v792
      %v794 = vpop.f32.mrb[0].mxu0
      %v795 = vpop.f32.mrb[0].mxu0
      %v796 = vadd.f32 %v316, %v795
      %v797 = vpop.f32.mrb[0].mxu0
      %798 = vmatprep.mubr.bf16.mxu0 0
      %799 = vmatmul.mubr.bf16.gmra.mrb[0].mxu0 %v472
      %v800 = vpop.f32.mrb[0].mxu0
      %v801 = vadd.f32 %v316, %v800
      %v802 = vpop.f32.mrb[0].mxu0
      %v803 = vpop.f32.mrb[0].mxu0
      %v804 = vadd.f32 %v316, %v803
      %v805 = vpop.f32.mrb[0].mxu0
      %806 = vmatprep.mubr.bf16.mxu0 0
      %807 = vmatmul.mubr.bf16.gmra.mrb[0].mxu0 %v473
      %v808 = vpop.f32.mrb[0].mxu0
      %v809 = vadd.f32 %v316, %v808
      %v810 = vpop.f32.mrb[0].mxu0
      %v811 = vpop.f32.mrb[0].mxu0
      %v812 = vadd.f32 %v316, %v811
      %v813 = vpop.f32.mrb[0].mxu0
      %814 = vmatprep.mubr.bf16.mxu0 0
      %815 = vmatmul.mubr.bf16.gmra.mrb[0].mxu0 %v474
      %v816 = vpop.f32.mrb[0].mxu0
      %v817 = vadd.f32 %v316, %v816
      %v818 = vpop.f32.mrb[0].mxu0
      %v819 = vpop.f32.mrb[0].mxu0
      %v820 = vadd.f32 %v316, %v819
      %v821 = vpop.f32.mrb[0].mxu0
      %822 = vmatprep.mubr.bf16.mxu0 0
      %823 = vmatmul.mubr.bf16.gmra.mrb[0].mxu0 %v475
      %v824 = vpop.f32.mrb[0].mxu0
      %v825 = vadd.f32 %v316, %v824
      %v826 = vpop.f32.mrb[0].mxu0
      %v827 = vpop.f32.mrb[0].mxu0
      %v828 = vadd.f32 %v316, %v827
      %v829 = vpop.f32.mrb[0].mxu0
      %830 = vmatprep.mubr.bf16.mxu0 0
      %831 = vmatmul.mubr.bf16.gmra.mrb[0].mxu0 %v476
      %v832 = vpop.f32.mrb[0].mxu0
      %v833 = vadd.f32 %v316, %v832
      %v834 = vpop.f32.mrb[0].mxu0
      %v835 = vpop.f32.mrb[0].mxu0
      %v836 = vadd.f32 %v316, %v835
      %v837 = vpop.f32.mrb[0].mxu0
      %838 = vmatprep.mubr.bf16.mxu0 0
      %839 = vmatmul.mubr.bf16.gmra.mrb[0].mxu0 %v477
      %v840 = vpop.f32.mrb[0].mxu0
      %v841 = vadd.f32 %v316, %v840
      %v842 = vpop.f32.mrb[0].mxu0
      %v843 = vpop.f32.mrb[0].mxu0
      %v844 = vadd.f32 %v316, %v843
      %v845 = vpop.f32.mrb[0].mxu0
      %846 = vdwg.mxu0
      %v847 = vmax.f32 %v593, 0.0
      %v848 = vmax.f32 %v596, 0.0
      %v849 = vmax.f32 %v601, 0.0
      %v850 = vmax.f32 %v604, 0.0
      %v851 = vmax.f32 %v609, 0.0
      %v852 = vmax.f32 %v612, 0.0
      %v853 = vmax.f32 %v617, 0.0
      %v854 = vmax.f32 %v620, 0.0
      %v855 = vmax.f32 %v625, 0.0
      %v856 = vmax.f32 %v628, 0.0
      %v857 = vmax.f32 %v633, 0.0
      %v858 = vmax.f32 %v636, 0.0
      %v859 = vmax.f32 %v641, 0.0
      %v860 = vmax.f32 %v644, 0.0
      %v861 = vmax.f32 %v649, 0.0
      %v862 = vmax.f32 %v652, 0.0
      %v863 = vmax.f32 %v657, 0.0
      %v864 = vmax.f32 %v660, 0.0
      %v865 = vmax.f32 %v665, 0.0
      %v866 = vmax.f32 %v668, 0.0
      %v867 = vmax.f32 %v673, 0.0
      %v868 = vmax.f32 %v676, 0.0
      %v869 = vmax.f32 %v681, 0.0
      %v870 = vmax.f32 %v684, 0.0
      %v871 = vmax.f32 %v689, 0.0
      %v872 = vmax.f32 %v692, 0.0
      %v873 = vmax.f32 %v697, 0.0
      %v874 = vmax.f32 %v700, 0.0
      %v875 = vmax.f32 %v705, 0.0
      %v876 = vmax.f32 %v708, 0.0
      %v877 = vmax.f32 %v713, 0.0
      %v878 = vmax.f32 %v716, 0.0
      %v879 = vmax.f32 %v721, 0.0
      %v880 = vmax.f32 %v724, 0.0
      %v881 = vmax.f32 %v729, 0.0
      %v882 = vmax.f32 %v732, 0.0
      %v883 = vmax.f32 %v737, 0.0
      %v884 = vmax.f32 %v740, 0.0
      %v885 = vmax.f32 %v745, 0.0
      %v886 = vmax.f32 %v748, 0.0
      %v887 = vmax.f32 %v753, 0.0
      %v888 = vmax.f32 %v756, 0.0
      %v889 = vmax.f32 %v761, 0.0
      %v890 = vmax.f32 %v764, 0.0
      %v891 = vmax.f32 %v769, 0.0
      %v892 = vmax.f32 %v772, 0.0
      %v893 = vmax.f32 %v777, 0.0
      %v894 = vmax.f32 %v780, 0.0
      %v895 = vmax.f32 %v785, 0.0
      %v896 = vmax.f32 %v788, 0.0
      %v897 = vmax.f32 %v793, 0.0
      %v898 = vmax.f32 %v796, 0.0
      %v899 = vmax.f32 %v801, 0.0
      %v900 = vmax.f32 %v804, 0.0
      %v901 = vmax.f32 %v809, 0.0
      %v902 = vmax.f32 %v812, 0.0
      %v903 = vmax.f32 %v817, 0.0
      %v904 = vmax.f32 %v820, 0.0
      %v905 = vmax.f32 %v825, 0.0
      %v906 = vmax.f32 %v828, 0.0
      %v907 = vmax.f32 %v833, 0.0
      %v908 = vmax.f32 %v836, 0.0
      %v909 = vmax.f32 %v841, 0.0
      %v910 = vmax.f32 %v844, 0.0
      %v911 = vpack.c.bf16 %v848, %v847
      %v912 = vpack.c.bf16 %v850, %v849
      %v913 = vpack.c.bf16 %v852, %v851
      %v914 = vpack.c.bf16 %v854, %v853
      %v915 = vpack.c.bf16 %v856, %v855
      %v916 = vpack.c.bf16 %v858, %v857
      %v917 = vpack.c.bf16 %v860, %v859
      %v918 = vpack.c.bf16 %v862, %v861
      %v919 = vpack.c.bf16 %v864, %v863
      %v920 = vpack.c.bf16 %v866, %v865
      %v921 = vpack.c.bf16 %v868, %v867
      %v922 = vpack.c.bf16 %v870, %v869
      %v923 = vpack.c.bf16 %v872, %v871
      %v924 = vpack.c.bf16 %v874, %v873
      %v925 = vpack.c.bf16 %v876, %v875
      %v926 = vpack.c.bf16 %v878, %v877
      %v927 = vpack.c.bf16 %v880, %v879
      %v928 = vpack.c.bf16 %v882, %v881
      %v929 = vpack.c.bf16 %v884, %v883
      %v930 = vpack.c.bf16 %v886, %v885
      %v931 = vpack.c.bf16 %v888, %v887
      %v932 = vpack.c.bf16 %v890, %v889
      %v933 = vpack.c.bf16 %v892, %v891
      %v934 = vpack.c.bf16 %v894, %v893
      %v935 = vpack.c.bf16 %v896, %v895
      %v936 = vpack.c.bf16 %v898, %v897
      %v937 = vpack.c.bf16 %v900, %v899
      %v938 = vpack.c.bf16 %v902, %v901
      %v939 = vpack.c.bf16 %v904, %v903
      %v940 = vpack.c.bf16 %v906, %v905
      %v941 = vpack.c.bf16 %v908, %v907
      %v942 = vpack.c.bf16 %v910, %v909
      %v975 = vunpack.c.l.b16 %v911
      %v976 = vunpack.c.h.b16 %v911
      %v977 = vunpack.c.l.b16 %v912
      %v978 = vunpack.c.h.b16 %v912
      %v979 = vunpack.c.l.b16 %v913
      %v980 = vunpack.c.h.b16 %v913
      %v981 = vunpack.c.l.b16 %v914
      %v982 = vunpack.c.h.b16 %v914
      %v983 = vunpack.c.l.b16 %v915
      %v984 = vunpack.c.h.b16 %v915
      %v985 = vunpack.c.l.b16 %v916
      %v986 = vunpack.c.h.b16 %v916
      %v987 = vunpack.c.l.b16 %v917
      %v988 = vunpack.c.h.b16 %v917
      %v989 = vunpack.c.l.b16 %v918
      %v990 = vunpack.c.h.b16 %v918
      %v991 = vunpack.c.l.b16 %v919
      %v992 = vunpack.c.h.b16 %v919
      %v993 = vunpack.c.l.b16 %v920
      %v994 = vunpack.c.h.b16 %v920
      %v995 = vunpack.c.l.b16 %v921
      %v996 = vunpack.c.h.b16 %v921
      %v997 = vunpack.c.l.b16 %v922
      %v998 = vunpack.c.h.b16 %v922
      %v999 = vunpack.c.l.b16 %v923
      %v1000 = vunpack.c.h.b16 %v923
      %v1001 = vunpack.c.l.b16 %v924
      %v1002 = vunpack.c.h.b16 %v924
      %v1003 = vunpack.c.l.b16 %v925
      %v1004 = vunpack.c.h.b16 %v925
      %v1005 = vunpack.c.l.b16 %v926
      %v1006 = vunpack.c.h.b16 %v926
      %v1007 = vunpack.c.l.b16 %v927
      %v1008 = vunpack.c.h.b16 %v927
      %v1009 = vunpack.c.l.b16 %v928
      %v1010 = vunpack.c.h.b16 %v928
      %v1011 = vunpack.c.l.b16 %v929
      %v1012 = vunpack.c.h.b16 %v929
      %v1013 = vunpack.c.l.b16 %v930
      %v1014 = vunpack.c.h.b16 %v930
      %v1015 = vunpack.c.l.b16 %v931
      %v1016 = vunpack.c.h.b16 %v931
      %v1017 = vunpack.c.l.b16 %v932
      %v1018 = vunpack.c.h.b16 %v932
      %v1019 = vunpack.c.l.b16 %v933
      %v1020 = vunpack.c.h.b16 %v933
      %v1021 = vunpack.c.l.b16 %v934
      %v1022 = vunpack.c.h.b16 %v934
      %v1023 = vunpack.c.l.b16 %v935
      %v1024 = vunpack.c.h.b16 %v935
      %v1025 = vunpack.c.l.b16 %v936
      %v1026 = vunpack.c.h.b16 %v936
      %v1027 = vunpack.c.l.b16 %v937
      %v1028 = vunpack.c.h.b16 %v937
      %v1029 = vunpack.c.l.b16 %v938
      %v1030 = vunpack.c.h.b16 %v938
      %v1031 = vunpack.c.l.b16 %v939
      %v1032 = vunpack.c.h.b16 %v939
      %v1033 = vunpack.c.l.b16 %v940
      %v1034 = vunpack.c.h.b16 %v940
      %v1035 = vunpack.c.l.b16 %v941
      %v1036 = vunpack.c.h.b16 %v941
      %v1037 = vunpack.c.l.b16 %v942
      %v1038 = vunpack.c.h.b16 %v942
      %v1039 = vpack.c.b16 %v975, %v975
      %v1040 = vpack.c.b16 %v976, %v976
      %v1041 = vpack.c.b16 %v977, %v977
      %v1042 = vpack.c.b16 %v978, %v978
      %v1043 = vpack.c.b16 %v979, %v979
      %v1044 = vpack.c.b16 %v980, %v980
      %v1045 = vpack.c.b16 %v981, %v981
      %v1046 = vpack.c.b16 %v982, %v982
      %v1047 = vpack.c.b16 %v983, %v983
      %v1048 = vpack.c.b16 %v984, %v984
      %v1049 = vpack.c.b16 %v985, %v985
      %v1050 = vpack.c.b16 %v986, %v986
      %v1051 = vpack.c.b16 %v987, %v987
      %v1052 = vpack.c.b16 %v988, %v988
      %v1053 = vpack.c.b16 %v989, %v989
      %v1054 = vpack.c.b16 %v990, %v990
      %v1055 = vpack.c.b16 %v991, %v991
      %v1056 = vpack.c.b16 %v992, %v992
      %v1057 = vpack.c.b16 %v993, %v993
      %v1058 = vpack.c.b16 %v994, %v994
      %v1059 = vpack.c.b16 %v995, %v995
      %v1060 = vpack.c.b16 %v996, %v996
      %v1061 = vpack.c.b16 %v997, %v997
      %v1062 = vpack.c.b16 %v998, %v998
      %v1063 = vpack.c.b16 %v999, %v999
      %v1064 = vpack.c.b16 %v1000, %v1000
      %v1065 = vpack.c.b16 %v1001, %v1001
      %v1066 = vpack.c.b16 %v1002, %v1002
      %v1067 = vpack.c.b16 %v1003, %v1003
      %v1068 = vpack.c.b16 %v1004, %v1004
      %v1069 = vpack.c.b16 %v1005, %v1005
      %v1070 = vpack.c.b16 %v1006, %v1006
      %v1071 = vpack.c.b16 %v1007, %v1007
      %v1072 = vpack.c.b16 %v1008, %v1008
      %v1073 = vpack.c.b16 %v1009, %v1009
      %v1074 = vpack.c.b16 %v1010, %v1010
      %v1075 = vpack.c.b16 %v1011, %v1011
      %v1076 = vpack.c.b16 %v1012, %v1012
      %v1077 = vpack.c.b16 %v1013, %v1013
      %v1078 = vpack.c.b16 %v1014, %v1014
      %v1079 = vpack.c.b16 %v1015, %v1015
      %v1080 = vpack.c.b16 %v1016, %v1016
      %v1081 = vpack.c.b16 %v1017, %v1017
      %v1082 = vpack.c.b16 %v1018, %v1018
      %v1083 = vpack.c.b16 %v1019, %v1019
      %v1084 = vpack.c.b16 %v1020, %v1020
      %v1085 = vpack.c.b16 %v1021, %v1021
      %v1086 = vpack.c.b16 %v1022, %v1022
      %v1087 = vpack.c.b16 %v1023, %v1023
      %v1088 = vpack.c.b16 %v1024, %v1024
      %v1089 = vpack.c.b16 %v1025, %v1025
      %v1090 = vpack.c.b16 %v1026, %v1026
      %v1091 = vpack.c.b16 %v1027, %v1027
      %v1092 = vpack.c.b16 %v1028, %v1028
      %v1093 = vpack.c.b16 %v1029, %v1029
      %v1094 = vpack.c.b16 %v1030, %v1030
      %v1095 = vpack.c.b16 %v1031, %v1031
      %v1096 = vpack.c.b16 %v1032, %v1032
      %v1097 = vpack.c.b16 %v1033, %v1033
      %v1098 = vpack.c.b16 %v1034, %v1034
      %v1099 = vpack.c.b16 %v1035, %v1035
      %v1100 = vpack.c.b16 %v1036, %v1036
      %v1101 = vpack.c.b16 %v1037, %v1037
      %v1102 = vpack.c.b16 %v1038, %v1038
      %1167 = vst [vmem:[%s228] sm:$0xf] %v1039
      %1168 = vst [vmem:[%s228 + $0x4] sm:$0xf] %v1040
      %1169 = vst [vmem:[%s228 + $0x8] sm:$0xf] %v1041
      %1170 = vst [vmem:[%s228 + $0xc] sm:$0xf] %v1042
      %1171 = vst [vmem:[%s228 + $0x10] sm:$0xf] %v1043
      %1172 = vst [vmem:[%s228 + $0x14] sm:$0xf] %v1044
      %1173 = vst [vmem:[%s228 + $0x18] sm:$0xf] %v1045
      %1174 = vst [vmem:[%s228 + $0x1c] sm:$0xf] %v1046
      %1175 = vst [vmem:[%s228 + $0x20] sm:$0xf] %v1047
      %1176 = vst [vmem:[%s228 + $0x24] sm:$0xf] %v1048
      %1177 = vst [vmem:[%s228 + $0x28] sm:$0xf] %v1049
      %1178 = vst [vmem:[%s228 + $0x2c] sm:$0xf] %v1050
      %1179 = vst [vmem:[%s228 + $0x30] sm:$0xf] %v1051
      %1180 = vst [vmem:[%s228 + $0x34] sm:$0xf] %v1052
      %1181 = vst [vmem:[%s228 + $0x38] sm:$0xf] %v1053
      %1182 = vst [vmem:[%s228 + $0x3c] sm:$0xf] %v1054
      %1183 = vst [vmem:[%s228 + $0x40] sm:$0xf] %v1055
      %1184 = vst [vmem:[%s228 + $0x44] sm:$0xf] %v1056
      %1185 = vst [vmem:[%s228 + $0x48] sm:$0xf] %v1057
      %1186 = vst [vmem:[%s228 + $0x4c] sm:$0xf] %v1058
      %1187 = vst [vmem:[%s228 + $0x50] sm:$0xf] %v1059
      %1188 = vst [vmem:[%s228 + $0x54] sm:$0xf] %v1060
      %1189 = vst [vmem:[%s228 + $0x58] sm:$0xf] %v1061
      %1190 = vst [vmem:[%s228 + $0x5c] sm:$0xf] %v1062
      %1191 = vst [vmem:[%s228 + $0x60] sm:$0xf] %v1063
      %1192 = vst [vmem:[%s228 + $0x64] sm:$0xf] %v1064
      %1193 = vst [vmem:[%s228 + $0x68] sm:$0xf] %v1065
      %1194 = vst [vmem:[%s228 + $0x6c] sm:$0xf] %v1066
      %1195 = vst [vmem:[%s228 + $0x70] sm:$0xf] %v1067
      %1196 = vst [vmem:[%s228 + $0x74] sm:$0xf] %v1068
      %1197 = vst [vmem:[%s228 + $0x78] sm:$0xf] %v1069
      %1198 = vst [vmem:[%s228 + $0x7c] sm:$0xf] %v1070
      %1199 = vst [vmem:[%s228 + $0x80] sm:$0xf] %v1071
      %1200 = vst [vmem:[%s228 + $0x84] sm:$0xf] %v1072
      %1201 = vst [vmem:[%s228 + $0x88] sm:$0xf] %v1073
      %1202 = vst [vmem:[%s228 + $0x8c] sm:$0xf] %v1074
      %1203 = vst [vmem:[%s228 + $0x90] sm:$0xf] %v1075
      %1204 = vst [vmem:[%s228 + $0x94] sm:$0xf] %v1076
      %1205 = vst [vmem:[%s228 + $0x98] sm:$0xf] %v1077
      %1206 = vst [vmem:[%s228 + $0x9c] sm:$0xf] %v1078
      %1207 = vst [vmem:[%s228 + $0xa0] sm:$0xf] %v1079
      %1208 = vst [vmem:[%s228 + $0xa4] sm:$0xf] %v1080
      %1209 = vst [vmem:[%s228 + $0xa8] sm:$0xf] %v1081
      %1210 = vst [vmem:[%s228 + $0xac] sm:$0xf] %v1082
      %1211 = vst [vmem:[%s228 + $0xb0] sm:$0xf] %v1083
      %1212 = vst [vmem:[%s228 + $0xb4] sm:$0xf] %v1084
      %1213 = vst [vmem:[%s228 + $0xb8] sm:$0xf] %v1085
      %1214 = vst [vmem:[%s228 + $0xbc] sm:$0xf] %v1086
      %1215 = vst [vmem:[%s228 + $0xc0] sm:$0xf] %v1087
      %1216 = vst [vmem:[%s228 + $0xc4] sm:$0xf] %v1088
      %1217 = vst [vmem:[%s228 + $0xc8] sm:$0xf] %v1089
      %1218 = vst [vmem:[%s228 + $0xcc] sm:$0xf] %v1090
      %1219 = vst [vmem:[%s228 + $0xd0] sm:$0xf] %v1091
      %1220 = vst [vmem:[%s228 + $0xd4] sm:$0xf] %v1092
      %1221 = vst [vmem:[%s228 + $0xd8] sm:$0xf] %v1093
      %1222 = vst [vmem:[%s228 + $0xdc] sm:$0xf] %v1094
      %1223 = vst [vmem:[%s228 + $0xe0] sm:$0xf] %v1095
      %1224 = vst [vmem:[%s228 + $0xe4] sm:$0xf] %v1096
      %1225 = vst [vmem:[%s228 + $0xe8] sm:$0xf] %v1097
      %1226 = vst [vmem:[%s228 + $0xec] sm:$0xf] %v1098
      %1227 = vst [vmem:[%s228 + $0xf0] sm:$0xf] %v1099
      %1228 = vst [vmem:[%s228 + $0xf4] sm:$0xf] %v1100
      %1229 = vst [vmem:[%s228 + $0xf8] sm:$0xf] %v1101
      %1230 = vst [vmem:[%s228 + $0xfc] sm:$0xf] %v1102
      %s1231 = smul.u32 64, %s19
      %p1232 = scmp.lt.s32.totalorder %s18, 3
      %s1233 = scalar_select %p1232, %s18, 3
      %p1234 = scmp.lt.s32.totalorder %s1231, 63
      %s1235 = scalar_select %p1234, %s1231, 63
      %s1236 = smul.addr %s1233, 64
      %s1237 = sadd.s32 %s1235, %s1236
      %s1238 = smul.addr %s1237, 4
      %s1239 = scalar_lea.vmem %s3, %s1238
      // Predicated region
      $region33: #{ffvae_forward.18} parent=31 // pred_check
        %p1240 = pneg %p121
      $region34: #{ffvae_forward.18} parent=31 // pred_check_branch
        %1242 = sbr.rel (%p1240) target = $region36
      $region35: #{ffvae_forward.18} parent=31 // pred_region
        %s1243 = smul.u32 64, %s19
      $region36: #{ffvae_forward.18} parent=31 // pred_fallthru
        _
    $region32: #{ffvae_forward.18} parent=5 // pred_fallthru
      _
    %p1244 = scmp.le.s32.totalorder 2, %s9
    // Predicated region
    $region37: #{ffvae_forward.18} parent=5 // pred_check
      %p1245 = pneg %p1244
    $region38: #{ffvae_forward.18} parent=5 // pred_check_branch
      %1247 = sbr.rel (%p1245) target = $region40
    $region39: #{ffvae_forward.18} parent=5 // pred_region
      %s1248 = ssub.s32 %s9, 2
      // Predicated region
      $region41: #{ffvae_forward.18} parent=39 // pred_check
        %p1249 = pneg %p127
      $region42: #{ffvae_forward.18} parent=39 // pred_check_branch
        %1251 = sbr.rel (%p1249) target = $region44
      $region43: #{ffvae_forward.18} parent=39 // pred_region
        %s1252 = smul.u32 64, %s21
        %p1253 = scmp.lt.s32.totalorder %s20, 3
        %s1254 = scalar_select %p1253, %s20, 3
        %p1255 = scmp.lt.s32.totalorder %s1252, 63
        %s1256 = scalar_select %p1255, %s1252, 63
        %s1257 = smul.addr %s1254, 64
        %s1258 = sadd.s32 %s1256, %s1257
        %s1259 = smul.addr %s1258, 4
        %s1260 = scalar_lea.vmem %s3, %s1259
      $region44: #{ffvae_forward.18} parent=39 // pred_fallthru
        _
    $region40: #{ffvae_forward.18} parent=5 // pred_fallthru
      _
  $region6: #{ffvae_forward.18} parent=0 // loop_footer
    %s13 = sadd.s32 1, %s9
  $region7: #{ffvae_forward.18} parent=0 // loop_footer_branch
    %8 = sbr.rel target = $region3
  $region8: #{ffvae_forward.18} parent=0 // loop_exit
    _

// kernel: ffvae_forward.19
$region0: #{ffvae_forward.19}
  #allocation0 [shape = 'u32[]', space=smem, size = 0x4, offset = 0x4, fixed_abs, tag = 'smem constant byte address 0x4 - core index']
  #allocation1 [shape = 'u32[144,128]{1,0:T(1,128)}', space=vmem, size = 0x12000, scoped, tag = 'internal scratch']
  %s0 = inlined_call_operand.vmem [shape: bf16[4,2048,128], index: 0, kind: input, shape index: {}]
  %s1 = inlined_call_operand.vmem [shape: bf16[4,128,128], index: 1, kind: input, shape index: {}]
  %s2 = inlined_call_operand.vmem [shape: f32[1,1,128], index: 2, kind: input, shape index: {}]
  %s3 = inlined_call_operand.vmem [shape: f32[4,2048,128], index: 3, kind: output, shape index: {}]
  %s4 = sld [smem:[#allocation0]]
  $region45: #{ffvae_forward.19} parent=0
    _
  %s6 = ssub.s32 1, %s4
  %s7 = scalar_select 0, %s6, %s4
  loop: start=0, step=1, limit=18
  $region2: #{ffvae_forward.19} parent=0 // loop_pre_header
    _
  $region3: #{ffvae_forward.19} parent=0 // loop_header
    %s9 = sphi 0, %s13
    %p10 = scmp.ge.s32.totalorder %s9, 18
    %s16 = sphi 0, %s28
    %s17 = sphi 0, %s24
    %s18 = sphi 0, %s16
    %s19 = sphi 0, %s17
    %s20 = sphi 0, %s18
    %s21 = sphi 0, %s19
    %s33 = sphi 0, %s35
    %s36 = sphi 0, %s33
    %s37 = sphi 0, %s36
    %s53 = sphi 0, %s37
    %s59 = sphi 0, %s61
    %s62 = sphi 0, %s59
    %s63 = sphi 0, %s62
    %s79 = sphi 0, %s63
    %s83 = sphi 0, %s83
    %s85 = sphi 0, %s83
    %s86 = sphi 0, %s85
    %s100 = sphi 0, %s86
    %s108 = sphi 0, %s110
    %s111 = sphi 0, %s108
    %s112 = sphi 0, %s111
    %s128 = sphi 0, %s112
  $region4: #{ffvae_forward.19} parent=0 // loop_header_branch
    %12 = sbr.rel (%p10) target = $region8
  $region5: #{ffvae_forward.19} parent=0 // loop_body
    %s14 = ssub.s32 %s9, 1
    %s15 = ssub.s32 %s9, 2
    %s22 = sadd.s32 1, %s17
    %p23 = scmp.ge.s32.totalorder %s22, 4
    %s24 = scalar_select %p23, 0, %s22
    %s25 = sadd.s32 1, %s16
    %s26 = scalar_select %p23, %s25, %s16
    %p27 = scmp.ge.s32.totalorder %s26, 4
    %s28 = scalar_select %p27, 0, %s26
    %s29 = ssub.s32 %s16, %s28
    %s30 = ssub.s32 %s17, %s24
    %s31 = sor.u32 %s29, %s30
    %p32 = scmp.eq.s32.totalorder %s31, 0
    %s34 = sadd.s32 %s33, 1
    %s35 = scalar_select %p32, %s33, %s34
    %p38 = pneg %p32
    %p39 = scmp.eq.s32.totalorder %s9, 15
    %p40 = por %p38, %p39
    %p41 = scmp.ne.s32.totalorder %s33, %s36
    %p42 = scmp.eq.s32.totalorder %s9, 0
    %p43 = por %p41, %p42
    %p44 = scmp.ne.s32.totalorder %s33, %s36
    %p45 = scmp.eq.s32.totalorder %s14, 15
    %p46 = por %p44, %p45
    %p47 = scmp.ne.s32.totalorder %s36, %s37
    %p48 = scmp.eq.s32.totalorder %s14, 0
    %p49 = por %p47, %p48
    %p50 = scmp.ne.s32.totalorder %s36, %s37
    %p51 = scmp.eq.s32.totalorder %s15, 15
    %p52 = por %p50, %p51
    %p54 = scmp.ne.s32.totalorder %s37, %s53
    %p55 = scmp.eq.s32.totalorder %s15, 0
    %p56 = por %p54, %p55
    %s57 = ssub.s32 %s16, %s28
    %p58 = scmp.eq.s32.totalorder %s57, 0
    %s60 = sadd.s32 %s59, 1
    %s61 = scalar_select %p58, %s59, %s60
    %p64 = pneg %p58
    %p65 = scmp.eq.s32.totalorder %s9, 15
    %p66 = por %p64, %p65
    %p67 = scmp.ne.s32.totalorder %s59, %s62
    %p68 = scmp.eq.s32.totalorder %s9, 0
    %p69 = por %p67, %p68
    %p70 = scmp.ne.s32.totalorder %s59, %s62
    %p71 = scmp.eq.s32.totalorder %s14, 15
    %p72 = por %p70, %p71
    %p73 = scmp.ne.s32.totalorder %s62, %s63
    %p74 = scmp.eq.s32.totalorder %s14, 0
    %p75 = por %p73, %p74
    %p76 = scmp.ne.s32.totalorder %s62, %s63
    %p77 = scmp.eq.s32.totalorder %s15, 15
    %p78 = por %p76, %p77
    %p80 = scmp.ne.s32.totalorder %s63, %s79
    %p81 = scmp.eq.s32.totalorder %s15, 0
    %p82 = por %p80, %p81
    %s84 = sadd.s32 %s83, 1
    %p87 = scmp.eq.s32.totalorder %s9, 15
    %p88 = scmp.ne.s32.totalorder %s83, %s85
    %p89 = scmp.eq.s32.totalorder %s9, 0
    %p90 = por %p88, %p89
    %p91 = scmp.ne.s32.totalorder %s83, %s85
    %p92 = scmp.eq.s32.totalorder %s14, 15
    %p93 = por %p91, %p92
    %p94 = scmp.ne.s32.totalorder %s85, %s86
    %p95 = scmp.eq.s32.totalorder %s14, 0
    %p96 = por %p94, %p95
    %p97 = scmp.ne.s32.totalorder %s85, %s86
    %p98 = scmp.eq.s32.totalorder %s15, 15
    %p99 = por %p97, %p98
    %p101 = scmp.ne.s32.totalorder %s86, %s100
    %p102 = scmp.eq.s32.totalorder %s15, 0
    %p103 = por %p101, %p102
    %s104 = ssub.s32 %s16, %s28
    %s105 = ssub.s32 %s17, %s24
    %s106 = sor.u32 %s104, %s105
    %p107 = scmp.eq.s32.totalorder %s106, 0
    %s109 = sadd.s32 %s108, 1
    %s110 = scalar_select %p107, %s108, %s109
    %p113 = pneg %p107
    %p114 = scmp.eq.s32.totalorder %s9, 15
    %p115 = por %p113, %p114
    %p116 = scmp.ne.s32.totalorder %s108, %s111
    %p117 = scmp.eq.s32.totalorder %s9, 0
    %p118 = por %p116, %p117
    %p119 = scmp.ne.s32.totalorder %s108, %s111
    %p120 = scmp.eq.s32.totalorder %s14, 15
    %p121 = por %p119, %p120
    %p122 = scmp.ne.s32.totalorder %s111, %s112
    %p123 = scmp.eq.s32.totalorder %s14, 0
    %p124 = por %p122, %p123
    %p125 = scmp.ne.s32.totalorder %s111, %s112
    %p126 = scmp.eq.s32.totalorder %s15, 15
    %p127 = por %p125, %p126
    %p129 = scmp.ne.s32.totalorder %s112, %s128
    %p130 = scmp.eq.s32.totalorder %s15, 0
    %p131 = por %p129, %p130
    %p132 = scmp.le.s32.totalorder 1, %s9
    %p133 = scmp.lt.s32.totalorder %s9, 17
    %p134 = pnand %p132, %p133
    %p135 = pneg %p134
    // Predicated region
    $region9: #{ffvae_forward.19} parent=5 // pred_check
      _
    $region10: #{ffvae_forward.19} parent=5 // pred_check_branch
      %137 = sbr.rel (%p134) target = $region12
    $region11: #{ffvae_forward.19} parent=5 // pred_region
      %s138 = ssub.s32 %s9, 1
      // Predicated region
      $region13: #{ffvae_forward.19} parent=11 // pred_check
        %p139 = pneg %p96
      $region14: #{ffvae_forward.19} parent=11 // pred_check_branch
        %141 = sbr.rel (%p139) target = $region16
      $region15: #{ffvae_forward.19} parent=11 // pred_region
        _
      $region16: #{ffvae_forward.19} parent=11 // pred_fallthru
        _
    $region12: #{ffvae_forward.19} parent=5 // pred_fallthru
      _
    %p142 = scmp.lt.s32.totalorder %s9, 16
    // Predicated region
    $region17: #{ffvae_forward.19} parent=5 // pred_check
      %p143 = pneg %p142
    $region18: #{ffvae_forward.19} parent=5 // pred_check_branch
      %145 = sbr.rel (%p143) target = $region20
    $region19: #{ffvae_forward.19} parent=5 // pred_region
      // Predicated region
      $region21: #{ffvae_forward.19} parent=19 // pred_check
        %p146 = pneg %p43
      $region22: #{ffvae_forward.19} parent=19 // pred_check_branch
        %148 = sbr.rel (%p146) target = $region24
      $region23: #{ffvae_forward.19} parent=19 // pred_region
        %s149 = smul.u32 64, %s17
        %p150 = scmp.lt.s32.totalorder %s16, 3
        %s151 = scalar_select %p150, %s16, 3
        %p152 = scmp.lt.s32.totalorder %s149, 255
        %s153 = scalar_select %p152, %s149, 255
        %s154 = smul.addr %s151, 256
        %s155 = sadd.s32 %s153, %s154
        %s156 = smul.addr %s155, 4
        %s157 = scalar_lea.vmem %s0, %s156
        %s158 = smul.u32 64, %s17
      $region24: #{ffvae_forward.19} parent=19 // pred_fallthru
        _
      // Predicated region
      $region25: #{ffvae_forward.19} parent=19 // pred_check
        %p159 = pneg %p69
      $region26: #{ffvae_forward.19} parent=19 // pred_check_branch
        %161 = sbr.rel (%p159) target = $region28
      $region27: #{ffvae_forward.19} parent=19 // pred_region
        %p162 = scmp.lt.s32.totalorder %s16, 3
        %s163 = scalar_select %p162, %s16, 3
        %s164 = smul.addr %s163, 16
        %s165 = smul.addr %s164, 4
        %s166 = scalar_lea.vmem %s1, %s165
      $region28: #{ffvae_forward.19} parent=19 // pred_fallthru
        _
    $region20: #{ffvae_forward.19} parent=5 // pred_fallthru
      _
    %p167 = scmp.le.s32.totalorder 1, %s9
    %p168 = scmp.lt.s32.totalorder %s9, 17
    %p169 = pnand %p167, %p168
    %p170 = pneg %p169
    // Predicated region
    $region29: #{ffvae_forward.19} parent=5 // pred_check
      _
    $region30: #{ffvae_forward.19} parent=5 // pred_check_branch
      %172 = sbr.rel (%p169) target = $region32
    $region31: #{ffvae_forward.19} parent=5 // pred_region
      %s173 = ssub.s32 %s9, 1
      %s174 = smul.u32 64, %s19
      %p175 = scmp.lt.s32.totalorder %s18, 3
      %s176 = scalar_select %p175, %s18, 3
      %p177 = scmp.lt.s32.totalorder %s174, 255
      %s178 = scalar_select %p177, %s174, 255
      %s179 = smul.addr %s176, 256
      %s180 = sadd.s32 %s178, %s179
      %s181 = smul.addr %s180, 4
      %s182 = scalar_lea.vmem %s0, %s181
      %p183 = pneg %p49
      %p184 = pneg %p46
      %p185 = scmp.lt.s32.totalorder %s18, 3
      %s186 = scalar_select %p185, %s18, 3
      %s187 = smul.addr %s186, 16
      %s188 = smul.addr %s187, 4
      %s189 = scalar_lea.vmem %s1, %s188
      %p190 = pneg %p75
      %p191 = pneg %p72
      %p192 = pneg %p96
      %p193 = pneg %p93
      %p194 = pneg %p124
      %p195 = pneg %p121
      %s196 = smul.u32 64, %s19
      %p197 = scmp.lt.s32.totalorder %s18, 3
      %s198 = scalar_select %p197, %s18, 3
      %p199 = scmp.lt.s32.totalorder %s196, 255
      %s200 = scalar_select %p199, %s196, 255
      %s201 = smul.addr %s198, 256
      %s202 = sadd.s32 %s200, %s201
      %s203 = smul.addr %s202, 8
      %s204 = scalar_lea.vmem %s3, %s203
      %s205 = smul.u32 64, %s19
      %p206 = scmp.lt.s32.totalorder %s18, 3
      %s207 = scalar_select %p206, %s18, 3
      %p208 = scmp.lt.s32.totalorder %s205, 255
      %s209 = scalar_select %p208, %s205, 255
      %s210 = smul.addr %s207, 256
      %s211 = sadd.s32 %s209, %s210
      %s212 = smul.addr %s211, 4
      %s213 = scalar_lea.vmem %s0, %s212
      %s214 = smul.u32 64, %s19
      %p215 = scmp.lt.s32.totalorder %s18, 3
      %s216 = scalar_select %p215, %s18, 3
      %s217 = smul.addr %s216, 16
      %s218 = smul.addr %s217, 4
      %s219 = scalar_lea.vmem %s1, %s218
      %s220 = smul.u32 64, %s19
      %p221 = scmp.lt.s32.totalorder %s18, 3
      %s222 = scalar_select %p221, %s18, 3
      %p223 = scmp.lt.s32.totalorder %s220, 255
      %s224 = scalar_select %p223, %s220, 255
      %s225 = smul.addr %s222, 256
      %s226 = sadd.s32 %s224, %s225
      %s227 = smul.addr %s226, 8
      %s228 = scalar_lea.vmem %s3, %s227
      %s229 = smul.u32 64, %s19
      %v231 = vld [vmem:[%s213] sm:$0xf]
      %v232 = vld [vmem:[%s213 + $0x4] sm:$0xf]
      %v233 = vld [vmem:[%s213 + $0x8] sm:$0xf]
      %v234 = vld [vmem:[%s213 + $0xc] sm:$0xf]
      %v235 = vld [vmem:[%s213 + $0x10] sm:$0xf]
      %v236 = vld [vmem:[%s213 + $0x14] sm:$0xf]
      %v237 = vld [vmem:[%s213 + $0x18] sm:$0xf]
      %v238 = vld [vmem:[%s213 + $0x1c] sm:$0xf]
      %v239 = vld [vmem:[%s213 + $0x20] sm:$0xf]
      %v240 = vld [vmem:[%s213 + $0x24] sm:$0xf]
      %v241 = vld [vmem:[%s213 + $0x28] sm:$0xf]
      %v242 = vld [vmem:[%s213 + $0x2c] sm:$0xf]
      %v243 = vld [vmem:[%s213 + $0x30] sm:$0xf]
      %v244 = vld [vmem:[%s213 + $0x34] sm:$0xf]
      %v245 = vld [vmem:[%s213 + $0x38] sm:$0xf]
      %v246 = vld [vmem:[%s213 + $0x3c] sm:$0xf]
      %v247 = vld [vmem:[%s213 + $0x40] sm:$0xf]
      %v248 = vld [vmem:[%s213 + $0x44] sm:$0xf]
      %v249 = vld [vmem:[%s213 + $0x48] sm:$0xf]
      %v250 = vld [vmem:[%s213 + $0x4c] sm:$0xf]
      %v251 = vld [vmem:[%s213 + $0x50] sm:$0xf]
      %v252 = vld [vmem:[%s213 + $0x54] sm:$0xf]
      %v253 = vld [vmem:[%s213 + $0x58] sm:$0xf]
      %v254 = vld [vmem:[%s213 + $0x5c] sm:$0xf]
      %v255 = vld [vmem:[%s213 + $0x60] sm:$0xf]
      %v256 = vld [vmem:[%s213 + $0x64] sm:$0xf]
      %v257 = vld [vmem:[%s213 + $0x68] sm:$0xf]
      %v258 = vld [vmem:[%s213 + $0x6c] sm:$0xf]
      %v259 = vld [vmem:[%s213 + $0x70] sm:$0xf]
      %v260 = vld [vmem:[%s213 + $0x74] sm:$0xf]
      %v261 = vld [vmem:[%s213 + $0x78] sm:$0xf]
      %v262 = vld [vmem:[%s213 + $0x7c] sm:$0xf]
      %v263 = vld [vmem:[%s213 + $0x80] sm:$0xf]
      %v264 = vld [vmem:[%s213 + $0x84] sm:$0xf]
      %v265 = vld [vmem:[%s213 + $0x88] sm:$0xf]
      %v266 = vld [vmem:[%s213 + $0x8c] sm:$0xf]
      %v267 = vld [vmem:[%s213 + $0x90] sm:$0xf]
      %v268 = vld [vmem:[%s213 + $0x94] sm:$0xf]
      %v269 = vld [vmem:[%s213 + $0x98] sm:$0xf]
      %v270 = vld [vmem:[%s213 + $0x9c] sm:$0xf]
      %v271 = vld [vmem:[%s213 + $0xa0] sm:$0xf]
      %v272 = vld [vmem:[%s213 + $0xa4] sm:$0xf]
      %v273 = vld [vmem:[%s213 + $0xa8] sm:$0xf]
      %v274 = vld [vmem:[%s213 + $0xac] sm:$0xf]
      %v275 = vld [vmem:[%s213 + $0xb0] sm:$0xf]
      %v276 = vld [vmem:[%s213 + $0xb4] sm:$0xf]
      %v277 = vld [vmem:[%s213 + $0xb8] sm:$0xf]
      %v278 = vld [vmem:[%s213 + $0xbc] sm:$0xf]
      %v279 = vld [vmem:[%s213 + $0xc0] sm:$0xf]
      %v280 = vld [vmem:[%s213 + $0xc4] sm:$0xf]
      %v281 = vld [vmem:[%s213 + $0xc8] sm:$0xf]
      %v282 = vld [vmem:[%s213 + $0xcc] sm:$0xf]
      %v283 = vld [vmem:[%s213 + $0xd0] sm:$0xf]
      %v284 = vld [vmem:[%s213 + $0xd4] sm:$0xf]
      %v285 = vld [vmem:[%s213 + $0xd8] sm:$0xf]
      %v286 = vld [vmem:[%s213 + $0xdc] sm:$0xf]
      %v287 = vld [vmem:[%s213 + $0xe0] sm:$0xf]
      %v288 = vld [vmem:[%s213 + $0xe4] sm:$0xf]
      %v289 = vld [vmem:[%s213 + $0xe8] sm:$0xf]
      %v290 = vld [vmem:[%s213 + $0xec] sm:$0xf]
      %v291 = vld [vmem:[%s213 + $0xf0] sm:$0xf]
      %v292 = vld [vmem:[%s213 + $0xf4] sm:$0xf]
      %v293 = vld [vmem:[%s213 + $0xf8] sm:$0xf]
      %v294 = vld [vmem:[%s213 + $0xfc] sm:$0xf]
      %v295 = vld [vmem:[%s219] sm:$0xf]
      %v296 = vld [vmem:[%s219 + $0x4] sm:$0xf]
      %v297 = vld [vmem:[%s219 + $0x8] sm:$0xf]
      %v298 = vld [vmem:[%s219 + $0xc] sm:$0xf]
      %v299 = vld [vmem:[%s219 + $0x10] sm:$0xf]
      %v300 = vld [vmem:[%s219 + $0x14] sm:$0xf]
      %v301 = vld [vmem:[%s219 + $0x18] sm:$0xf]
      %v302 = vld [vmem:[%s219 + $0x1c] sm:$0xf]
      %v303 = vld [vmem:[%s219 + $0x20] sm:$0xf]
      %v304 = vld [vmem:[%s219 + $0x24] sm:$0xf]
      %v305 = vld [vmem:[%s219 + $0x28] sm:$0xf]
      %v306 = vld [vmem:[%s219 + $0x2c] sm:$0xf]
      %v307 = vld [vmem:[%s219 + $0x30] sm:$0xf]
      %v308 = vld [vmem:[%s219 + $0x34] sm:$0xf]
      %v309 = vld [vmem:[%s219 + $0x38] sm:$0xf]
      %v310 = vld [vmem:[%s219 + $0x3c] sm:$0xf]
      %v311 = vld [vmem:[%s2] sm:$0x1]
      %v313 = vlaneseq
      %v314 = vshrl.u32 %v313, 7
      %v315 = vsub.s32 0, %v314
      %v316 = vrot.slane %v311, %v315
      %v382 = vunpack.c.l.b16 %v231
      %v383 = vunpack.c.l.b16 %v232
      %v384 = vunpack.c.l.b16 %v233
      %v385 = vunpack.c.l.b16 %v234
      %v386 = vunpack.c.l.b16 %v235
      %v387 = vunpack.c.l.b16 %v236
      %v388 = vunpack.c.l.b16 %v237
      %v389 = vunpack.c.l.b16 %v238
      %v390 = vunpack.c.l.b16 %v239
      %v391 = vunpack.c.l.b16 %v240
      %v392 = vunpack.c.l.b16 %v241
      %v393 = vunpack.c.l.b16 %v242
      %v394 = vunpack.c.l.b16 %v243
      %v395 = vunpack.c.l.b16 %v244
      %v396 = vunpack.c.l.b16 %v245
      %v397 = vunpack.c.l.b16 %v246
      %v398 = vunpack.c.l.b16 %v247
      %v399 = vunpack.c.l.b16 %v248
      %v400 = vunpack.c.l.b16 %v249
      %v401 = vunpack.c.l.b16 %v250
      %v402 = vunpack.c.l.b16 %v251
      %v403 = vunpack.c.l.b16 %v252
      %v404 = vunpack.c.l.b16 %v253
      %v405 = vunpack.c.l.b16 %v254
      %v406 = vunpack.c.l.b16 %v255
      %v407 = vunpack.c.l.b16 %v256
      %v408 = vunpack.c.l.b16 %v257
      %v409 = vunpack.c.l.b16 %v258
      %v410 = vunpack.c.l.b16 %v259
      %v411 = vunpack.c.l.b16 %v260
      %v412 = vunpack.c.l.b16 %v261
      %v413 = vunpack.c.l.b16 %v262
      %v414 = vunpack.c.l.b16 %v263
      %v415 = vunpack.c.l.b16 %v264
      %v416 = vunpack.c.l.b16 %v265
      %v417 = vunpack.c.l.b16 %v266
      %v418 = vunpack.c.l.b16 %v267
      %v419 = vunpack.c.l.b16 %v268
      %v420 = vunpack.c.l.b16 %v269
      %v421 = vunpack.c.l.b16 %v270
      %v422 = vunpack.c.l.b16 %v271
      %v423 = vunpack.c.l.b16 %v272
      %v424 = vunpack.c.l.b16 %v273
      %v425 = vunpack.c.l.b16 %v274
      %v426 = vunpack.c.l.b16 %v275
      %v427 = vunpack.c.l.b16 %v276
      %v428 = vunpack.c.l.b16 %v277
      %v429 = vunpack.c.l.b16 %v278
      %v430 = vunpack.c.l.b16 %v279
      %v431 = vunpack.c.l.b16 %v280
      %v432 = vunpack.c.l.b16 %v281
      %v433 = vunpack.c.l.b16 %v282
      %v434 = vunpack.c.l.b16 %v283
      %v435 = vunpack.c.l.b16 %v284
      %v436 = vunpack.c.l.b16 %v285
      %v437 = vunpack.c.l.b16 %v286
      %v438 = vunpack.c.l.b16 %v287
      %v439 = vunpack.c.l.b16 %v288
      %v440 = vunpack.c.l.b16 %v289
      %v441 = vunpack.c.l.b16 %v290
      %v442 = vunpack.c.l.b16 %v291
      %v443 = vunpack.c.l.b16 %v292
      %v444 = vunpack.c.l.b16 %v293
      %v445 = vunpack.c.l.b16 %v294
      %v446 = vpack.c.b16 %v383, %v382
      %v447 = vpack.c.b16 %v385, %v384
      %v448 = vpack.c.b16 %v387, %v386
      %v449 = vpack.c.b16 %v389, %v388
      %v450 = vpack.c.b16 %v391, %v390
      %v451 = vpack.c.b16 %v393, %v392
      %v452 = vpack.c.b16 %v395, %v394
      %v453 = vpack.c.b16 %v397, %v396
      %v454 = vpack.c.b16 %v399, %v398
      %v455 = vpack.c.b16 %v401, %v400
      %v456 = vpack.c.b16 %v403, %v402
      %v457 = vpack.c.b16 %v405, %v404
      %v458 = vpack.c.b16 %v407, %v406
      %v459 = vpack.c.b16 %v409, %v408
      %v460 = vpack.c.b16 %v411, %v410
      %v461 = vpack.c.b16 %v413, %v412
      %v462 = vpack.c.b16 %v415, %v414
      %v463 = vpack.c.b16 %v417, %v416
      %v464 = vpack.c.b16 %v419, %v418
      %v465 = vpack.c.b16 %v421, %v420
      %v466 = vpack.c.b16 %v423, %v422
      %v467 = vpack.c.b16 %v425, %v424
      %v468 = vpack.c.b16 %v427, %v426
      %v469 = vpack.c.b16 %v429, %v428
      %v470 = vpack.c.b16 %v431, %v430
      %v471 = vpack.c.b16 %v433, %v432
      %v472 = vpack.c.b16 %v435, %v434
      %v473 = vpack.c.b16 %v437, %v436
      %v474 = vpack.c.b16 %v439, %v438
      %v475 = vpack.c.b16 %v441, %v440
      %v476 = vpack.c.b16 %v443, %v442
      %v477 = vpack.c.b16 %v445, %v444
      %v526 = vunpack.c.l.b16 %v295
      %v527 = vunpack.c.l.b16 %v296
      %v528 = vunpack.c.l.b16 %v297
      %v529 = vunpack.c.l.b16 %v298
      %v530 = vunpack.c.l.b16 %v299
      %v531 = vunpack.c.l.b16 %v300
      %v532 = vunpack.c.l.b16 %v301
      %v533 = vunpack.c.l.b16 %v302
      %v534 = vunpack.c.l.b16 %v303
      %v535 = vunpack.c.l.b16 %v304
      %v536 = vunpack.c.l.b16 %v305
      %v537 = vunpack.c.l.b16 %v306
      %v538 = vunpack.c.l.b16 %v307
      %v539 = vunpack.c.l.b16 %v308
      %v540 = vunpack.c.l.b16 %v309
      %v541 = vunpack.c.l.b16 %v310
      %v542 = vpack.c.b16 %v527, %v526
      %v543 = vpack.c.b16 %v529, %v528
      %v544 = vpack.c.b16 %v531, %v530
      %v545 = vpack.c.b16 %v533, %v532
      %v546 = vpack.c.b16 %v535, %v534
      %v547 = vpack.c.b16 %v537, %v536
      %v548 = vpack.c.b16 %v539, %v538
      %v549 = vpack.c.b16 %v541, %v540
      %558 = vmatprep.subr.bf16.mxu0 0
      %559 = vmatpush1.bf16.msra.mxu0 %v542
      %560 = vmatprep.subr.bf16.mxu0 0
      %561 = vmatpush1.bf16.msra.mxu0 %v543
      %562 = vmatprep.subr.bf16.mxu0 0
      %563 = vmatpush1.bf16.msra.mxu0 %v544
      %564 = vmatprep.subr.bf16.mxu0 0
      %565 = vmatpush1.bf16.msra.mxu0 %v545
      %566 = vmatprep.subr.bf16.mxu0 0
      %567 = vmatpush1.bf16.msra.mxu0 %v546
      %568 = vmatprep.subr.bf16.mxu0 0
      %569 = vmatpush1.bf16.msra.mxu0 %v547
      %570 = vmatprep.subr.bf16.mxu0 0
      %571 = vmatpush1.bf16.msra.mxu0 %v548
      %572 = vmatprep.subr.bf16.mxu0 0
      %573 = vmatpush1.bf16.msra.mxu0 %v549
      %574 = vmatprep.subr.bf16.mxu0 0
      %575 = vmatpush1.bf16.msra.mxu0 0
      %576 = vmatprep.subr.bf16.mxu0 0
      %577 = vmatpush1.bf16.msra.mxu0 0
      %578 = vmatprep.subr.bf16.mxu0 0
      %579 = vmatpush1.bf16.msra.mxu0 0
      %580 = vmatprep.subr.bf16.mxu0 0
      %581 = vmatpush1.bf16.msra.mxu0 0
      %582 = vmatprep.subr.bf16.mxu0 0
      %583 = vmatpush1.bf16.msra.mxu0 0
      %584 = vmatprep.subr.bf16.mxu0 0
      %585 = vmatpush1.bf16.msra.mxu0 0
      %586 = vmatprep.subr.bf16.mxu0 0
      %587 = vmatpush1.bf16.msra.mxu0 0
      %588 = vmatprep.subr.bf16.mxu0 0
      %589 = vmatpush1.bf16.msra.mxu0 0
      %590 = vmatprep.mubr.bf16.mxu0 0
      %591 = vmatmul.mubr.bf16.gmra.mrb[0].mxu0 %v446
      %v592 = vpop.f32.mrb[0].mxu0
      %v593 = vadd.f32 %v316, %v592
      %v594 = vpop.f32.mrb[0].mxu0
      %v595 = vpop.f32.mrb[0].mxu0
      %v596 = vadd.f32 %v316, %v595
      %v597 = vpop.f32.mrb[0].mxu0
      %598 = vmatprep.mubr.bf16.mxu0 0
      %599 = vmatmul.mubr.bf16.gmra.mrb[0].mxu0 %v447
      %v600 = vpop.f32.mrb[0].mxu0
      %v601 = vadd.f32 %v316, %v600
      %v602 = vpop.f32.mrb[0].mxu0
      %v603 = vpop.f32.mrb[0].mxu0
      %v604 = vadd.f32 %v316, %v603
      %v605 = vpop.f32.mrb[0].mxu0
      %606 = vmatprep.mubr.bf16.mxu0 0
      %607 = vmatmul.mubr.bf16.gmra.mrb[0].mxu0 %v448
      %v608 = vpop.f32.mrb[0].mxu0
      %v609 = vadd.f32 %v316, %v608
      %v610 = vpop.f32.mrb[0].mxu0
      %v611 = vpop.f32.mrb[0].mxu0
      %v612 = vadd.f32 %v316, %v611
      %v613 = vpop.f32.mrb[0].mxu0
      %614 = vmatprep.mubr.bf16.mxu0 0
      %615 = vmatmul.mubr.bf16.gmra.mrb[0].mxu0 %v449
      %v616 = vpop.f32.mrb[0].mxu0
      %v617 = vadd.f32 %v316, %v616
      %v618 = vpop.f32.mrb[0].mxu0
      %v619 = vpop.f32.mrb[0].mxu0
      %v620 = vadd.f32 %v316, %v619
      %v621 = vpop.f32.mrb[0].mxu0
      %622 = vmatprep.mubr.bf16.mxu0 0
      %623 = vmatmul.mubr.bf16.gmra.mrb[0].mxu0 %v450
      %v624 = vpop.f32.mrb[0].mxu0
      %v625 = vadd.f32 %v316, %v624
      %v626 = vpop.f32.mrb[0].mxu0
      %v627 = vpop.f32.mrb[0].mxu0
      %v628 = vadd.f32 %v316, %v627
      %v629 = vpop.f32.mrb[0].mxu0
      %630 = vmatprep.mubr.bf16.mxu0 0
      %631 = vmatmul.mubr.bf16.gmra.mrb[0].mxu0 %v451
      %v632 = vpop.f32.mrb[0].mxu0
      %v633 = vadd.f32 %v316, %v632
      %v634 = vpop.f32.mrb[0].mxu0
      %v635 = vpop.f32.mrb[0].mxu0
      %v636 = vadd.f32 %v316, %v635
      %v637 = vpop.f32.mrb[0].mxu0
      %638 = vmatprep.mubr.bf16.mxu0 0
      %639 = vmatmul.mubr.bf16.gmra.mrb[0].mxu0 %v452
      %v640 = vpop.f32.mrb[0].mxu0
      %v641 = vadd.f32 %v316, %v640
      %v642 = vpop.f32.mrb[0].mxu0
      %v643 = vpop.f32.mrb[0].mxu0
      %v644 = vadd.f32 %v316, %v643
      %v645 = vpop.f32.mrb[0].mxu0
      %646 = vmatprep.mubr.bf16.mxu0 0
      %647 = vmatmul.mubr.bf16.gmra.mrb[0].mxu0 %v453
      %v648 = vpop.f32.mrb[0].mxu0
      %v649 = vadd.f32 %v316, %v648
      %v650 = vpop.f32.mrb[0].mxu0
      %v651 = vpop.f32.mrb[0].mxu0
      %v652 = vadd.f32 %v316, %v651
      %v653 = vpop.f32.mrb[0].mxu0
      %654 = vmatprep.mubr.bf16.mxu0 0
      %655 = vmatmul.mubr.bf16.gmra.mrb[0].mxu0 %v454
      %v656 = vpop.f32.mrb[0].mxu0
      %v657 = vadd.f32 %v316, %v656
      %v658 = vpop.f32.mrb[0].mxu0
      %v659 = vpop.f32.mrb[0].mxu0
      %v660 = vadd.f32 %v316, %v659
      %v661 = vpop.f32.mrb[0].mxu0
      %662 = vmatprep.mubr.bf16.mxu0 0
      %663 = vmatmul.mubr.bf16.gmra.mrb[0].mxu0 %v455
      %v664 = vpop.f32.mrb[0].mxu0
      %v665 = vadd.f32 %v316, %v664
      %v666 = vpop.f32.mrb[0].mxu0
      %v667 = vpop.f32.mrb[0].mxu0
      %v668 = vadd.f32 %v316, %v667
      %v669 = vpop.f32.mrb[0].mxu0
      %670 = vmatprep.mubr.bf16.mxu0 0
      %671 = vmatmul.mubr.bf16.gmra.mrb[0].mxu0 %v456
      %v672 = vpop.f32.mrb[0].mxu0
      %v673 = vadd.f32 %v316, %v672
      %v674 = vpop.f32.mrb[0].mxu0
      %v675 = vpop.f32.mrb[0].mxu0
      %v676 = vadd.f32 %v316, %v675
      %v677 = vpop.f32.mrb[0].mxu0
      %678 = vmatprep.mubr.bf16.mxu0 0
      %679 = vmatmul.mubr.bf16.gmra.mrb[0].mxu0 %v457
      %v680 = vpop.f32.mrb[0].mxu0
      %v681 = vadd.f32 %v316, %v680
      %v682 = vpop.f32.mrb[0].mxu0
      %v683 = vpop.f32.mrb[0].mxu0
      %v684 = vadd.f32 %v316, %v683
      %v685 = vpop.f32.mrb[0].mxu0
      %686 = vmatprep.mubr.bf16.mxu0 0
      %687 = vmatmul.mubr.bf16.gmra.mrb[0].mxu0 %v458
      %v688 = vpop.f32.mrb[0].mxu0
      %v689 = vadd.f32 %v316, %v688
      %v690 = vpop.f32.mrb[0].mxu0
      %v691 = vpop.f32.mrb[0].mxu0
      %v692 = vadd.f32 %v316, %v691
      %v693 = vpop.f32.mrb[0].mxu0
      %694 = vmatprep.mubr.bf16.mxu0 0
      %695 = vmatmul.mubr.bf16.gmra.mrb[0].mxu0 %v459
      %v696 = vpop.f32.mrb[0].mxu0
      %v697 = vadd.f32 %v316, %v696
      %v698 = vpop.f32.mrb[0].mxu0
      %v699 = vpop.f32.mrb[0].mxu0
      %v700 = vadd.f32 %v316, %v699
      %v701 = vpop.f32.mrb[0].mxu0
      %702 = vmatprep.mubr.bf16.mxu0 0
      %703 = vmatmul.mubr.bf16.gmra.mrb[0].mxu0 %v460
      %v704 = vpop.f32.mrb[0].mxu0
      %v705 = vadd.f32 %v316, %v704
      %v706 = vpop.f32.mrb[0].mxu0
      %v707 = vpop.f32.mrb[0].mxu0
      %v708 = vadd.f32 %v316, %v707
      %v709 = vpop.f32.mrb[0].mxu0
      %710 = vmatprep.mubr.bf16.mxu0 0
      %711 = vmatmul.mubr.bf16.gmra.mrb[0].mxu0 %v461
      %v712 = vpop.f32.mrb[0].mxu0
      %v713 = vadd.f32 %v316, %v712
      %v714 = vpop.f32.mrb[0].mxu0
      %v715 = vpop.f32.mrb[0].mxu0
      %v716 = vadd.f32 %v316, %v715
      %v717 = vpop.f32.mrb[0].mxu0
      %718 = vmatprep.mubr.bf16.mxu0 0
      %719 = vmatmul.mubr.bf16.gmra.mrb[0].mxu0 %v462
      %v720 = vpop.f32.mrb[0].mxu0
      %v721 = vadd.f32 %v316, %v720
      %v722 = vpop.f32.mrb[0].mxu0
      %v723 = vpop.f32.mrb[0].mxu0
      %v724 = vadd.f32 %v316, %v723
      %v725 = vpop.f32.mrb[0].mxu0
      %726 = vmatprep.mubr.bf16.mxu0 0
      %727 = vmatmul.mubr.bf16.gmra.mrb[0].mxu0 %v463
      %v728 = vpop.f32.mrb[0].mxu0
      %v729 = vadd.f32 %v316, %v728
      %v730 = vpop.f32.mrb[0].mxu0
      %v731 = vpop.f32.mrb[0].mxu0
      %v732 = vadd.f32 %v316, %v731
      %v733 = vpop.f32.mrb[0].mxu0
      %734 = vmatprep.mubr.bf16.mxu0 0
      %735 = vmatmul.mubr.bf16.gmra.mrb[0].mxu0 %v464
      %v736 = vpop.f32.mrb[0].mxu0
      %v737 = vadd.f32 %v316, %v736
      %v738 = vpop.f32.mrb[0].mxu0
      %v739 = vpop.f32.mrb[0].mxu0
      %v740 = vadd.f32 %v316, %v739
      %v741 = vpop.f32.mrb[0].mxu0
      %742 = vmatprep.mubr.bf16.mxu0 0
      %743 = vmatmul.mubr.bf16.gmra.mrb[0].mxu0 %v465
      %v744 = vpop.f32.mrb[0].mxu0
      %v745 = vadd.f32 %v316, %v744
      %v746 = vpop.f32.mrb[0].mxu0
      %v747 = vpop.f32.mrb[0].mxu0
      %v748 = vadd.f32 %v316, %v747
      %v749 = vpop.f32.mrb[0].mxu0
      %750 = vmatprep.mubr.bf16.mxu0 0
      %751 = vmatmul.mubr.bf16.gmra.mrb[0].mxu0 %v466
      %v752 = vpop.f32.mrb[0].mxu0
      %v753 = vadd.f32 %v316, %v752
      %v754 = vpop.f32.mrb[0].mxu0
      %v755 = vpop.f32.mrb[0].mxu0
      %v756 = vadd.f32 %v316, %v755
      %v757 = vpop.f32.mrb[0].mxu0
      %758 = vmatprep.mubr.bf16.mxu0 0
      %759 = vmatmul.mubr.bf16.gmra.mrb[0].mxu0 %v467
      %v760 = vpop.f32.mrb[0].mxu0
      %v761 = vadd.f32 %v316, %v760
      %v762 = vpop.f32.mrb[0].mxu0
      %v763 = vpop.f32.mrb[0].mxu0
      %v764 = vadd.f32 %v316, %v763
      %v765 = vpop.f32.mrb[0].mxu0
      %766 = vmatprep.mubr.bf16.mxu0 0
      %767 = vmatmul.mubr.bf16.gmra.mrb[0].mxu0 %v468
      %v768 = vpop.f32.mrb[0].mxu0
      %v769 = vadd.f32 %v316, %v768
      %v770 = vpop.f32.mrb[0].mxu0
      %v771 = vpop.f32.mrb[0].mxu0
      %v772 = vadd.f32 %v316, %v771
      %v773 = vpop.f32.mrb[0].mxu0
      %774 = vmatprep.mubr.bf16.mxu0 0
      %775 = vmatmul.mubr.bf16.gmra.mrb[0].mxu0 %v469
      %v776 = vpop.f32.mrb[0].mxu0
      %v777 = vadd.f32 %v316, %v776
      %v778 = vpop.f32.mrb[0].mxu0
      %v779 = vpop.f32.mrb[0].mxu0
      %v780 = vadd.f32 %v316, %v779
      %v781 = vpop.f32.mrb[0].mxu0
      %782 = vmatprep.mubr.bf16.mxu0 0
      %783 = vmatmul.mubr.bf16.gmra.mrb[0].mxu0 %v470
      %v784 = vpop.f32.mrb[0].mxu0
      %v785 = vadd.f32 %v316, %v784
      %v786 = vpop.f32.mrb[0].mxu0
      %v787 = vpop.f32.mrb[0].mxu0
      %v788 = vadd.f32 %v316, %v787
      %v789 = vpop.f32.mrb[0].mxu0
      %790 = vmatprep.mubr.bf16.mxu0 0
      %791 = vmatmul.mubr.bf16.gmra.mrb[0].mxu0 %v471
      %v792 = vpop.f32.mrb[0].mxu0
      %v793 = vadd.f32 %v316, %v792
      %v794 = vpop.f32.mrb[0].mxu0
      %v795 = vpop.f32.mrb[0].mxu0
      %v796 = vadd.f32 %v316, %v795
      %v797 = vpop.f32.mrb[0].mxu0
      %798 = vmatprep.mubr.bf16.mxu0 0
      %799 = vmatmul.mubr.bf16.gmra.mrb[0].mxu0 %v472
      %v800 = vpop.f32.mrb[0].mxu0
      %v801 = vadd.f32 %v316, %v800
      %v802 = vpop.f32.mrb[0].mxu0
      %v803 = vpop.f32.mrb[0].mxu0
      %v804 = vadd.f32 %v316, %v803
      %v805 = vpop.f32.mrb[0].mxu0
      %806 = vmatprep.mubr.bf16.mxu0 0
      %807 = vmatmul.mubr.bf16.gmra.mrb[0].mxu0 %v473
      %v808 = vpop.f32.mrb[0].mxu0
      %v809 = vadd.f32 %v316, %v808
      %v810 = vpop.f32.mrb[0].mxu0
      %v811 = vpop.f32.mrb[0].mxu0
      %v812 = vadd.f32 %v316, %v811
      %v813 = vpop.f32.mrb[0].mxu0
      %814 = vmatprep.mubr.bf16.mxu0 0
      %815 = vmatmul.mubr.bf16.gmra.mrb[0].mxu0 %v474
      %v816 = vpop.f32.mrb[0].mxu0
      %v817 = vadd.f32 %v316, %v816
      %v818 = vpop.f32.mrb[0].mxu0
      %v819 = vpop.f32.mrb[0].mxu0
      %v820 = vadd.f32 %v316, %v819
      %v821 = vpop.f32.mrb[0].mxu0
      %822 = vmatprep.mubr.bf16.mxu0 0
      %823 = vmatmul.mubr.bf16.gmra.mrb[0].mxu0 %v475
      %v824 = vpop.f32.mrb[0].mxu0
      %v825 = vadd.f32 %v316, %v824
      %v826 = vpop.f32.mrb[0].mxu0
      %v827 = vpop.f32.mrb[0].mxu0
      %v828 = vadd.f32 %v316, %v827
      %v829 = vpop.f32.mrb[0].mxu0
      %830 = vmatprep.mubr.bf16.mxu0 0
      %831 = vmatmul.mubr.bf16.gmra.mrb[0].mxu0 %v476
      %v832 = vpop.f32.mrb[0].mxu0
      %v833 = vadd.f32 %v316, %v832
      %v834 = vpop.f32.mrb[0].mxu0
      %v835 = vpop.f32.mrb[0].mxu0
      %v836 = vadd.f32 %v316, %v835
      %v837 = vpop.f32.mrb[0].mxu0
      %838 = vmatprep.mubr.bf16.mxu0 0
      %839 = vmatmul.mubr.bf16.gmra.mrb[0].mxu0 %v477
      %v840 = vpop.f32.mrb[0].mxu0
      %v841 = vadd.f32 %v316, %v840
      %v842 = vpop.f32.mrb[0].mxu0
      %v843 = vpop.f32.mrb[0].mxu0
      %v844 = vadd.f32 %v316, %v843
      %v845 = vpop.f32.mrb[0].mxu0
      %846 = vdwg.mxu0
      %847 = vst [vmem:[%s228] sm:$0xff] %v593
      %848 = vst [vmem:[%s228 + $0x8] sm:$0xff] %v596
      %849 = vst [vmem:[%s228 + $0x10] sm:$0xff] %v601
      %850 = vst [vmem:[%s228 + $0x18] sm:$0xff] %v604
      %851 = vst [vmem:[%s228 + $0x20] sm:$0xff] %v609
      %852 = vst [vmem:[%s228 + $0x28] sm:$0xff] %v612
      %853 = vst [vmem:[%s228 + $0x30] sm:$0xff] %v617
      %854 = vst [vmem:[%s228 + $0x38] sm:$0xff] %v620
      %855 = vst [vmem:[%s228 + $0x40] sm:$0xff] %v625
      %856 = vst [vmem:[%s228 + $0x48] sm:$0xff] %v628
      %857 = vst [vmem:[%s228 + $0x50] sm:$0xff] %v633
      %858 = vst [vmem:[%s228 + $0x58] sm:$0xff] %v636
      %859 = vst [vmem:[%s228 + $0x60] sm:$0xff] %v641
      %860 = vst [vmem:[%s228 + $0x68] sm:$0xff] %v644
      %861 = vst [vmem:[%s228 + $0x70] sm:$0xff] %v649
      %862 = vst [vmem:[%s228 + $0x78] sm:$0xff] %v652
      %863 = vst [vmem:[%s228 + $0x80] sm:$0xff] %v657
      %864 = vst [vmem:[%s228 + $0x88] sm:$0xff] %v660
      %865 = vst [vmem:[%s228 + $0x90] sm:$0xff] %v665
      %866 = vst [vmem:[%s228 + $0x98] sm:$0xff] %v668
      %867 = vst [vmem:[%s228 + $0xa0] sm:$0xff] %v673
      %868 = vst [vmem:[%s228 + $0xa8] sm:$0xff] %v676
      %869 = vst [vmem:[%s228 + $0xb0] sm:$0xff] %v681
      %870 = vst [vmem:[%s228 + $0xb8] sm:$0xff] %v684
      %871 = vst [vmem:[%s228 + $0xc0] sm:$0xff] %v689
      %872 = vst [vmem:[%s228 + $0xc8] sm:$0xff] %v692
      %873 = vst [vmem:[%s228 + $0xd0] sm:$0xff] %v697
      %874 = vst [vmem:[%s228 + $0xd8] sm:$0xff] %v700
      %875 = vst [vmem:[%s228 + $0xe0] sm:$0xff] %v705
      %876 = vst [vmem:[%s228 + $0xe8] sm:$0xff] %v708
      %877 = vst [vmem:[%s228 + $0xf0] sm:$0xff] %v713
      %878 = vst [vmem:[%s228 + $0xf8] sm:$0xff] %v716
      %879 = vst [vmem:[%s228 + $0x100] sm:$0xff] %v721
      %880 = vst [vmem:[%s228 + $0x108] sm:$0xff] %v724
      %881 = vst [vmem:[%s228 + $0x110] sm:$0xff] %v729
      %882 = vst [vmem:[%s228 + $0x118] sm:$0xff] %v732
      %883 = vst [vmem:[%s228 + $0x120] sm:$0xff] %v737
      %884 = vst [vmem:[%s228 + $0x128] sm:$0xff] %v740
      %885 = vst [vmem:[%s228 + $0x130] sm:$0xff] %v745
      %886 = vst [vmem:[%s228 + $0x138] sm:$0xff] %v748
      %887 = vst [vmem:[%s228 + $0x140] sm:$0xff] %v753
      %888 = vst [vmem:[%s228 + $0x148] sm:$0xff] %v756
      %889 = vst [vmem:[%s228 + $0x150] sm:$0xff] %v761
      %890 = vst [vmem:[%s228 + $0x158] sm:$0xff] %v764
      %891 = vst [vmem:[%s228 + $0x160] sm:$0xff] %v769
      %892 = vst [vmem:[%s228 + $0x168] sm:$0xff] %v772
      %893 = vst [vmem:[%s228 + $0x170] sm:$0xff] %v777
      %894 = vst [vmem:[%s228 + $0x178] sm:$0xff] %v780
      %895 = vst [vmem:[%s228 + $0x180] sm:$0xff] %v785
      %896 = vst [vmem:[%s228 + $0x188] sm:$0xff] %v788
      %897 = vst [vmem:[%s228 + $0x190] sm:$0xff] %v793
      %898 = vst [vmem:[%s228 + $0x198] sm:$0xff] %v796
      %899 = vst [vmem:[%s228 + $0x1a0] sm:$0xff] %v801
      %900 = vst [vmem:[%s228 + $0x1a8] sm:$0xff] %v804
      %901 = vst [vmem:[%s228 + $0x1b0] sm:$0xff] %v809
      %902 = vst [vmem:[%s228 + $0x1b8] sm:$0xff] %v812
      %903 = vst [vmem:[%s228 + $0x1c0] sm:$0xff] %v817
      %904 = vst [vmem:[%s228 + $0x1c8] sm:$0xff] %v820
      %905 = vst [vmem:[%s228 + $0x1d0] sm:$0xff] %v825
      %906 = vst [vmem:[%s228 + $0x1d8] sm:$0xff] %v828
      %907 = vst [vmem:[%s228 + $0x1e0] sm:$0xff] %v833
      %908 = vst [vmem:[%s228 + $0x1e8] sm:$0xff] %v836
      %909 = vst [vmem:[%s228 + $0x1f0] sm:$0xff] %v841
      %910 = vst [vmem:[%s228 + $0x1f8] sm:$0xff] %v844
      %s911 = smul.u32 64, %s19
      %p912 = scmp.lt.s32.totalorder %s18, 3
      %s913 = scalar_select %p912, %s18, 3
      %p914 = scmp.lt.s32.totalorder %s911, 255
      %s915 = scalar_select %p914, %s911, 255
      %s916 = smul.addr %s913, 256
      %s917 = sadd.s32 %s915, %s916
      %s918 = smul.addr %s917, 8
      %s919 = scalar_lea.vmem %s3, %s918
      // Predicated region
      $region33: #{ffvae_forward.19} parent=31 // pred_check
        %p920 = pneg %p121
      $region34: #{ffvae_forward.19} parent=31 // pred_check_branch
        %922 = sbr.rel (%p920) target = $region36
      $region35: #{ffvae_forward.19} parent=31 // pred_region
        %s923 = smul.u32 64, %s19
      $region36: #{ffvae_forward.19} parent=31 // pred_fallthru
        _
    $region32: #{ffvae_forward.19} parent=5 // pred_fallthru
      _
    %p924 = scmp.le.s32.totalorder 2, %s9
    // Predicated region
    $region37: #{ffvae_forward.19} parent=5 // pred_check
      %p925 = pneg %p924
    $region38: #{ffvae_forward.19} parent=5 // pred_check_branch
      %927 = sbr.rel (%p925) target = $region40
    $region39: #{ffvae_forward.19} parent=5 // pred_region
      %s928 = ssub.s32 %s9, 2
      // Predicated region
      $region41: #{ffvae_forward.19} parent=39 // pred_check
        %p929 = pneg %p127
      $region42: #{ffvae_forward.19} parent=39 // pred_check_branch
        %931 = sbr.rel (%p929) target = $region44
      $region43: #{ffvae_forward.19} parent=39 // pred_region
        %s932 = smul.u32 64, %s21
        %p933 = scmp.lt.s32.totalorder %s20, 3
        %s934 = scalar_select %p933, %s20, 3
        %p935 = scmp.lt.s32.totalorder %s932, 255
        %s936 = scalar_select %p935, %s932, 255
        %s937 = smul.addr %s934, 256
        %s938 = sadd.s32 %s936, %s937
        %s939 = smul.addr %s938, 8
        %s940 = scalar_lea.vmem %s3, %s939
      $region44: #{ffvae_forward.19} parent=39 // pred_fallthru
        _
    $region40: #{ffvae_forward.19} parent=5 // pred_fallthru
      _
  $region6: #{ffvae_forward.19} parent=0 // loop_footer
    %s13 = sadd.s32 1, %s9
  $region7: #{ffvae_forward.19} parent=0 // loop_footer_branch
    %8 = sbr.rel target = $region3
  $region8: #{ffvae_forward.19} parent=0 // loop_exit
    _

</llo_original>
